<compile_context>
chip_gen: v7x
topology: tpu7x:2x2x1
jax: 0.10.0
libtpu: 0.0.40
codegen_flags: <defaults>
</compile_context>

<pallas_src>
import functools
import math

import jax
import jax.numpy as jnp
from jax.experimental import pallas as pl
from jax.experimental.pallas import tpu as pltpu

HIDDEN = 64
INPUT = 28
NCLASS = 10
GATE_PAD = 128                 # lanes per gate block (lane-aligned slices)
NGATES = 4
GATE_W = NGATES * GATE_PAD     # 512 gate lanes total
NOUT_PAD = 128                 # lane-dense classifier width


# ----------------------------------------------------------------------------
# Fused forward kernel: input projection + LSTM recurrence + Linear +
# log_softmax, everything resident in VMEM.
# ----------------------------------------------------------------------------
def _lstm_head_kernel(x_ref, w_ihb_ref, w_hh_ref, w_out_ref, b_out_ref,
                      o_ref, xproj_ref, *, seq, batch, hidden, nclass):
    H = hidden
    GP = GATE_PAD

    # ---- Stage 1: all-timestep input projection in one MXU matmul ----------
    # (seq*batch, 29) @ (29, 512) -> VMEM scratch; bias rides the ones column.
    xproj_ref[...] = jnp.dot(x_ref[...], w_ihb_ref[...],
                             preferred_element_type=jnp.float32)

    # ---- Stage 2: serial LSTM recurrence, fully unrolled --------------------
    h = jnp.zeros((batch, H), jnp.float32)
    c = jnp.zeros((batch, H), jnp.float32)
    for t in range(seq):
        # W_hh re-read from VMEM each step (cheap vld; avoids pinning 32 vregs
        # across the unrolled chain and risking spills on the critical path).
        gates = xproj_ref[pl.ds(t * batch, batch), :] + jnp.dot(
            h, w_hh_ref[...], preferred_element_type=jnp.float32)  # (batch,512)
        # Gate layout [ i | f | o | g ], one 128-lane block each -> every
        # slice below starts at lane offset 0 of its vreg (no XLU rotates).
        sfo = jax.nn.sigmoid(gates[:, :3 * GP])          # 3 aligned EUP pushes
        i_g = sfo[:, 0 * GP:0 * GP + H]
        f_g = sfo[:, 1 * GP:1 * GP + H]
        o_g = sfo[:, 2 * GP:2 * GP + H]
        g_g = jnp.tanh(gates[:, 3 * GP:3 * GP + H])      # 1 aligned EUP push
        c = f_g * c + i_g * g_g
        h = o_g * jnp.tanh(c)

    # ---- Stage 3: classifier + masked, max-stabilized log_softmax ----------
    z = jnp.dot(h, w_out_ref[...],
                preferred_element_type=jnp.float32) + b_out_ref[...]
    lane = jax.lax.broadcasted_iota(jnp.int32, z.shape, 1)
    z = jnp.where(lane < nclass, z, jnp.float32(-1e30))   # kill padded lanes
    m = jnp.max(z, axis=-1, keepdims=True)
    e = jnp.exp(z - m)
    s = jnp.sum(e, axis=-1, keepdims=True)
    o_ref[...] = z - m - jnp.log(s)                        # lane-dense store


def _spec2d(shape):
    return pl.BlockSpec(shape, lambda i: (0, 0))


@jax.jit
def rnn_forward(params, x):
    """x: (B, T, 28) float32 -> (B, 10) log-probabilities."""
    B, T, I = x.shape
    bp = max(8, ((B + 7) // 8) * 8)   # sublane-dense batch padding

    # Tiny one-time XLA glue: time-major, batch padded to a multiple of 8,
    # ones column appended for the folded bias.
    xp = jnp.zeros((T, bp, I + 1), jnp.float32)
    xp = xp.at[:, :B, :I].set(x.transpose(1, 0, 2))
    xp = xp.at[:, :, I].set(1.0)
    x_flat = xp.reshape(T * bp, I + 1)

    kernel = functools.partial(_lstm_head_kernel, seq=T, batch=bp,
                               hidden=HIDDEN, nclass=NCLASS)

    out = pl.pallas_call(
        kernel,
        out_shape=jax.ShapeDtypeStruct((bp, NOUT_PAD), jnp.float32),
        grid=(1,),
        in_specs=[
            _spec2d((T * bp, I + 1)),       # x (time-major, + ones column)
            _spec2d((I + 1, GATE_W)),       # [W_ih ; b] packed, gate-padded
            _spec2d((HIDDEN, GATE_W)),      # W_hh packed, gate-padded
            _spec2d((HIDDEN, NOUT_PAD)),    # W_out.T, lane-padded
            _spec2d((1, NOUT_PAD)),         # b_out, lane-padded
        ],
        out_specs=_spec2d((bp, NOUT_PAD)),
        scratch_shapes=[pltpu.VMEM((T * bp, GATE_W), jnp.float32)],
        compiler_params=pltpu.CompilerParams(
            dimension_semantics=("arbitrary",)),
    )(x_flat, params["w_ihb"], params["w_hh"], params["w_out"],
      params["b_out"])

    return out[:B, :NCLASS]


# ----------------------------------------------------------------------------
# Parameter init (PyTorch-style uniform(-1/sqrt(H), 1/sqrt(H))) + one-time
# packing into the kernel's lane-aligned layout.
# ----------------------------------------------------------------------------
def init_raw_params(key):
    H, I, NC = HIDDEN, INPUT, NCLASS
    stdv = 1.0 / math.sqrt(H)   # LSTM init; Linear(64,10) uses the same bound
    ks = jax.random.split(key, 6)

    def u(k, shape):
        return jax.random.uniform(k, shape, jnp.float32, -stdv, stdv)

    return {
        "w_ih": u(ks[0], (4 * H, I)),   # PyTorch layout (4H, in), rows [i,f,g,o]
        "w_hh": u(ks[1], (4 * H, H)),
        "b_ih": u(ks[2], (4 * H,)),
        "b_hh": u(ks[3], (4 * H,)),
        "w_out": u(ks[4], (NC, H)),     # PyTorch Linear layout (out, in)
        "b_out": u(ks[5], (NC,)),
    }


def _pack_gate_cols(w_t):
    """(in_dim, 4H) columns in PyTorch gate order [i,f,g,o] ->
    (in_dim, 4*128) in kernel order [i,f,o,g], each gate 128-lane aligned.
    Pad lanes are exactly zero (keeps padded gate/state lanes inert)."""
    H = HIDDEN
    in_dim = w_t.shape[0]
    out = jnp.zeros((in_dim, GATE_W), jnp.float32)
    src = {"i": 0, "f": 1, "g": 2, "o": 3}   # PyTorch column blocks
    dst = {"i": 0, "f": 1, "o": 2, "g": 3}   # kernel column blocks
    for k in ("i", "f", "g", "o"):
        out = out.at[:, dst[k] * GATE_PAD: dst[k] * GATE_PAD + H].set(
            w_t[:, src[k] * H:(src[k] + 1) * H])
    return out


def pack_params(raw):
    """One-time repack: transpose / combine / gate-pad / lane-pad weights."""
    H, NC = HIDDEN, NCLASS
    w_ih_t = _pack_gate_cols(raw["w_ih"].T)                               # (28, 512)
    b = _pack_gate_cols((raw["b_ih"] + raw["b_hh"]).reshape(1, 4 * H))    # (1, 512)
    w_ihb = jnp.concatenate([w_ih_t, b], axis=0)                          # (29, 512)
    w_hh = _pack_gate_cols(raw["w_hh"].T)                                 # (64, 512)
    w_out = jnp.zeros((H, NOUT_PAD), jnp.float32).at[:, :NC].set(raw["w_out"].T)
    b_out = jnp.zeros((1, NOUT_PAD), jnp.float32).at[0, :NC].set(raw["b_out"])
    return {"w_ihb": w_ihb, "w_hh": w_hh, "w_out": w_out, "b_out": b_out}


# ----------------------------------------------------------------------------
# Pure-JAX reference on the RAW (PyTorch-layout) weights — also validates the
# packing step.  Gate order i,f,g,o matches PyTorch.
# ----------------------------------------------------------------------------
def rnn_forward_ref(raw, x):
    H = HIDDEN
    w_ih, w_hh = raw["w_ih"].T, raw["w_hh"].T
    b = raw["b_ih"] + raw["b_hh"]

    def step(carry, x_t):
        h, c = carry
        gates = x_t @ w_ih + h @ w_hh + b
        i = jax.nn.sigmoid(gates[:, 0 * H:1 * H])
        f = jax.nn.sigmoid(gates[:, 1 * H:2 * H])
        g = jnp.tanh(gates[:, 2 * H:3 * H])
        o = jax.nn.sigmoid(gates[:, 3 * H:4 * H])
        c = f * c + i * g
        h = o * jnp.tanh(c)
        return (h, c), None

    B = x.shape[0]
    h0 = jnp.zeros((B, H), jnp.float32)
    (h_last, _), _ = jax.lax.scan(step, (h0, h0), x.transpose(1, 0, 2))
    z = h_last @ raw["w_out"].T + raw["b_out"]
    return jax.nn.log_softmax(z, axis=1)


if __name__ == "__main__":
    key = jax.random.PRNGKey(0)
    pkey, xkey = jax.random.split(key)
    raw = init_raw_params(pkey)
    params = pack_params(raw)
    # batch=2, seq=28, input=28 (MNIST rows fed to the LSTM, as the module implies)
    x = jax.random.normal(xkey, (2, 28, 28), jnp.float32)

    out = jax.block_until_ready(rnn_forward(params, x))
    ref = rnn_forward_ref(raw, x)

    assert out.shape == (2, 10)
    assert jnp.allclose(out, ref, rtol=5e-4, atol=5e-4), "mismatch vs reference"
    print("KERNEL_OK")
</pallas_src>

<mosaic_0001>
module attributes {stable_mosaic.version = 11 : i64} {
  func.func @_lstm_head_kernel(%arg0: i32, %arg1: memref<224x29xf32, #tpu.memory_space<vmem>>, %arg2: memref<29x512xf32, #tpu.memory_space<vmem>>, %arg3: memref<64x512xf32, #tpu.memory_space<vmem>>, %arg4: memref<64x128xf32, #tpu.memory_space<vmem>>, %arg5: memref<1x128xf32, #tpu.memory_space<vmem>>, %arg6: memref<8x128xf32, #tpu.memory_space<vmem>>, %arg7: memref<224x512xf32, #tpu.memory_space<vmem>>) attributes {dimension_semantics = [#tpu.dimension_semantics<arbitrary>], iteration_bounds = array<i64: 1>, scalar_prefetch = 0 : i64, scratch_operands = 1 : i64, tpu.core_type = #tpu.core_type<tc>, window_params = [{pipeline_mode = #tpu.pipeline_mode<synchronous>, transform_indices = @transform_0, window_bounds = array<i64: 224, 29>}, {pipeline_mode = #tpu.pipeline_mode<synchronous>, transform_indices = @transform_1, window_bounds = array<i64: 29, 512>}, {pipeline_mode = #tpu.pipeline_mode<synchronous>, transform_indices = @transform_2, window_bounds = array<i64: 64, 512>}, {pipeline_mode = #tpu.pipeline_mode<synchronous>, transform_indices = @transform_3, window_bounds = array<i64: 64, 128>}, {pipeline_mode = #tpu.pipeline_mode<synchronous>, transform_indices = @transform_4, window_bounds = array<i64: 1, 128>}, {pipeline_mode = #tpu.pipeline_mode<synchronous>, transform_indices = @transform_5, window_bounds = array<i64: 8, 128>}]} {
    %c0 = arith.constant 0 : index
    %c0_0 = arith.constant 0 : index
    %0 = vector.load %arg1[%c0, %c0_0] : memref<224x29xf32, #tpu.memory_space<vmem>>, vector<224x29xf32>
    %c0_1 = arith.constant 0 : index
    %c0_2 = arith.constant 0 : index
    %1 = vector.load %arg2[%c0_1, %c0_2] : memref<29x512xf32, #tpu.memory_space<vmem>>, vector<29x512xf32>
    %cst = arith.constant dense<0.000000e+00> : vector<224x512xf32>
    %2 = tpu.matmul %0, %1, %cst {dimension_numbers = #tpu.dot_dimension_numbers<[1], [0], [0], [1], [0, 0, 1, 1], [], []>} : vector<224x29xf32>, vector<29x512xf32>, vector<224x512xf32> -> vector<224x512xf32>
    %c0_3 = arith.constant 0 : index
    %c0_4 = arith.constant 0 : index
    %3 = vector.load %arg7[%c0_3, %c0_4] : memref<224x512xf32, #tpu.memory_space<vmem>>, vector<224x512xf32>
    tpu.vector_store %arg7[%c0_3, %c0_4], %2 {strides = array<i32>} : memref<224x512xf32, #tpu.memory_space<vmem>>, vector<224x512xf32>,
    %cst_5 = arith.constant 0.000000e+00 : f32
    %4 = vector.broadcast %cst_5 : f32 to vector<8x64xf32>
    %cst_6 = arith.constant 0.000000e+00 : f32
    %5 = vector.broadcast %cst_6 : f32 to vector<8x64xf32>
    %c0_7 = arith.constant 0 : index
    %c0_8 = arith.constant 0 : index
    %6 = vector.load %arg7[%c0_7, %c0_8] : memref<224x512xf32, #tpu.memory_space<vmem>>, vector<8x512xf32>
    %c0_9 = arith.constant 0 : index
    %c0_10 = arith.constant 0 : index
    %7 = vector.load %arg3[%c0_9, %c0_10] : memref<64x512xf32, #tpu.memory_space<vmem>>, vector<64x512xf32>
    %cst_11 = arith.constant dense<0.000000e+00> : vector<8x512xf32>
    %8 = tpu.matmul %4, %7, %cst_11 {dimension_numbers = #tpu.dot_dimension_numbers<[1], [0], [0], [1], [0, 0, 1, 1], [], []>} : vector<8x64xf32>, vector<64x512xf32>, vector<8x512xf32> -> vector<8x512xf32>
    %9 = arith.addf %6, %8 : vector<8x512xf32>
    %10 = vector.extract_strided_slice %9 {offsets = [0, 0], sizes = [8, 384], strides = [1, 1]} : vector<8x512xf32> to vector<8x384xf32>
    %11 = arith.negf %10 : vector<8x384xf32>
    %12 = math.exp %11 : vector<8x384xf32>
    %cst_12 = arith.constant 1.000000e+00 : f32
    %13 = vector.broadcast %cst_12 : f32 to vector<8x384xf32>
    %14 = arith.addf %13, %12 : vector<8x384xf32>
    %15 = arith.divf %13, %14 : vector<8x384xf32>
    %16 = vector.extract_strided_slice %15 {offsets = [0, 0], sizes = [8, 64], strides = [1, 1]} : vector<8x384xf32> to vector<8x64xf32>
    %17 = vector.extract_strided_slice %15 {offsets = [0, 128], sizes = [8, 64], strides = [1, 1]} : vector<8x384xf32> to vector<8x64xf32>
    %18 = vector.extract_strided_slice %15 {offsets = [0, 256], sizes = [8, 64], strides = [1, 1]} : vector<8x384xf32> to vector<8x64xf32>
    %19 = vector.extract_strided_slice %9 {offsets = [0, 384], sizes = [8, 64], strides = [1, 1]} : vector<8x512xf32> to vector<8x64xf32>
    %20 = math.tanh %19 : vector<8x64xf32>
    %21 = arith.mulf %17, %5 : vector<8x64xf32>
    %22 = arith.mulf %16, %20 : vector<8x64xf32>
    %23 = arith.addf %21, %22 : vector<8x64xf32>
    %24 = math.tanh %23 : vector<8x64xf32>
    %25 = arith.mulf %18, %24 : vector<8x64xf32>
    %c8 = arith.constant 8 : index
    %c0_13 = arith.constant 0 : index
    %26 = vector.load %arg7[%c8, %c0_13] : memref<224x512xf32, #tpu.memory_space<vmem>>, vector<8x512xf32>
    %c0_14 = arith.constant 0 : index
    %c0_15 = arith.constant 0 : index
    %27 = vector.load %arg3[%c0_14, %c0_15] : memref<64x512xf32, #tpu.memory_space<vmem>>, vector<64x512xf32>
    %cst_16 = arith.constant dense<0.000000e+00> : vector<8x512xf32>
    %28 = tpu.matmul %25, %27, %cst_16 {dimension_numbers = #tpu.dot_dimension_numbers<[1], [0], [0], [1], [0, 0, 1, 1], [], []>} : vector<8x64xf32>, vector<64x512xf32>, vector<8x512xf32> -> vector<8x512xf32>
    %29 = arith.addf %26, %28 : vector<8x512xf32>
    %30 = vector.extract_strided_slice %29 {offsets = [0, 0], sizes = [8, 384], strides = [1, 1]} : vector<8x512xf32> to vector<8x384xf32>
    %31 = arith.negf %30 : vector<8x384xf32>
    %32 = math.exp %31 : vector<8x384xf32>
    %cst_17 = arith.constant 1.000000e+00 : f32
    %33 = vector.broadcast %cst_17 : f32 to vector<8x384xf32>
    %34 = arith.addf %33, %32 : vector<8x384xf32>
    %35 = arith.divf %33, %34 : vector<8x384xf32>
    %36 = vector.extract_strided_slice %35 {offsets = [0, 0], sizes = [8, 64], strides = [1, 1]} : vector<8x384xf32> to vector<8x64xf32>
    %37 = vector.extract_strided_slice %35 {offsets = [0, 128], sizes = [8, 64], strides = [1, 1]} : vector<8x384xf32> to vector<8x64xf32>
    %38 = vector.extract_strided_slice %35 {offsets = [0, 256], sizes = [8, 64], strides = [1, 1]} : vector<8x384xf32> to vector<8x64xf32>
    %39 = vector.extract_strided_slice %29 {offsets = [0, 384], sizes = [8, 64], strides = [1, 1]} : vector<8x512xf32> to vector<8x64xf32>
    %40 = math.tanh %39 : vector<8x64xf32>
    %41 = arith.mulf %37, %23 : vector<8x64xf32>
    %42 = arith.mulf %36, %40 : vector<8x64xf32>
    %43 = arith.addf %41, %42 : vector<8x64xf32>
    %44 = math.tanh %43 : vector<8x64xf32>
    %45 = arith.mulf %38, %44 : vector<8x64xf32>
    %c16 = arith.constant 16 : index
    %c0_18 = arith.constant 0 : index
    %46 = vector.load %arg7[%c16, %c0_18] : memref<224x512xf32, #tpu.memory_space<vmem>>, vector<8x512xf32>
    %c0_19 = arith.constant 0 : index
    %c0_20 = arith.constant 0 : index
    %47 = vector.load %arg3[%c0_19, %c0_20] : memref<64x512xf32, #tpu.memory_space<vmem>>, vector<64x512xf32>
    %cst_21 = arith.constant dense<0.000000e+00> : vector<8x512xf32>
    %48 = tpu.matmul %45, %47, %cst_21 {dimension_numbers = #tpu.dot_dimension_numbers<[1], [0], [0], [1], [0, 0, 1, 1], [], []>} : vector<8x64xf32>, vector<64x512xf32>, vector<8x512xf32> -> vector<8x512xf32>
    %49 = arith.addf %46, %48 : vector<8x512xf32>
    %50 = vector.extract_strided_slice %49 {offsets = [0, 0], sizes = [8, 384], strides = [1, 1]} : vector<8x512xf32> to vector<8x384xf32>
    %51 = arith.negf %50 : vector<8x384xf32>
    %52 = math.exp %51 : vector<8x384xf32>
    %cst_22 = arith.constant 1.000000e+00 : f32
    %53 = vector.broadcast %cst_22 : f32 to vector<8x384xf32>
    %54 = arith.addf %53, %52 : vector<8x384xf32>
    %55 = arith.divf %53, %54 : vector<8x384xf32>
    %56 = vector.extract_strided_slice %55 {offsets = [0, 0], sizes = [8, 64], strides = [1, 1]} : vector<8x384xf32> to vector<8x64xf32>
    %57 = vector.extract_strided_slice %55 {offsets = [0, 128], sizes = [8, 64], strides = [1, 1]} : vector<8x384xf32> to vector<8x64xf32>
    %58 = vector.extract_strided_slice %55 {offsets = [0, 256], sizes = [8, 64], strides = [1, 1]} : vector<8x384xf32> to vector<8x64xf32>
    %59 = vector.extract_strided_slice %49 {offsets = [0, 384], sizes = [8, 64], strides = [1, 1]} : vector<8x512xf32> to vector<8x64xf32>
    %60 = math.tanh %59 : vector<8x64xf32>
    %61 = arith.mulf %57, %43 : vector<8x64xf32>
    %62 = arith.mulf %56, %60 : vector<8x64xf32>
    %63 = arith.addf %61, %62 : vector<8x64xf32>
    %64 = math.tanh %63 : vector<8x64xf32>
    %65 = arith.mulf %58, %64 : vector<8x64xf32>
    %c24 = arith.constant 24 : index
    %c0_23 = arith.constant 0 : index
    %66 = vector.load %arg7[%c24, %c0_23] : memref<224x512xf32, #tpu.memory_space<vmem>>, vector<8x512xf32>
    %c0_24 = arith.constant 0 : index
    %c0_25 = arith.constant 0 : index
    %67 = vector.load %arg3[%c0_24, %c0_25] : memref<64x512xf32, #tpu.memory_space<vmem>>, vector<64x512xf32>
    %cst_26 = arith.constant dense<0.000000e+00> : vector<8x512xf32>
    %68 = tpu.matmul %65, %67, %cst_26 {dimension_numbers = #tpu.dot_dimension_numbers<[1], [0], [0], [1], [0, 0, 1, 1], [], []>} : vector<8x64xf32>, vector<64x512xf32>, vector<8x512xf32> -> vector<8x512xf32>
    %69 = arith.addf %66, %68 : vector<8x512xf32>
    %70 = vector.extract_strided_slice %69 {offsets = [0, 0], sizes = [8, 384], strides = [1, 1]} : vector<8x512xf32> to vector<8x384xf32>
    %71 = arith.negf %70 : vector<8x384xf32>
    %72 = math.exp %71 : vector<8x384xf32>
    %cst_27 = arith.constant 1.000000e+00 : f32
    %73 = vector.broadcast %cst_27 : f32 to vector<8x384xf32>
    %74 = arith.addf %73, %72 : vector<8x384xf32>
    %75 = arith.divf %73, %74 : vector<8x384xf32>
    %76 = vector.extract_strided_slice %75 {offsets = [0, 0], sizes = [8, 64], strides = [1, 1]} : vector<8x384xf32> to vector<8x64xf32>
    %77 = vector.extract_strided_slice %75 {offsets = [0, 128], sizes = [8, 64], strides = [1, 1]} : vector<8x384xf32> to vector<8x64xf32>
    %78 = vector.extract_strided_slice %75 {offsets = [0, 256], sizes = [8, 64], strides = [1, 1]} : vector<8x384xf32> to vector<8x64xf32>
    %79 = vector.extract_strided_slice %69 {offsets = [0, 384], sizes = [8, 64], strides = [1, 1]} : vector<8x512xf32> to vector<8x64xf32>
    %80 = math.tanh %79 : vector<8x64xf32>
    %81 = arith.mulf %77, %63 : vector<8x64xf32>
    %82 = arith.mulf %76, %80 : vector<8x64xf32>
    %83 = arith.addf %81, %82 : vector<8x64xf32>
    %84 = math.tanh %83 : vector<8x64xf32>
    %85 = arith.mulf %78, %84 : vector<8x64xf32>
    %c32 = arith.constant 32 : index
    %c0_28 = arith.constant 0 : index
    %86 = vector.load %arg7[%c32, %c0_28] : memref<224x512xf32, #tpu.memory_space<vmem>>, vector<8x512xf32>
    %c0_29 = arith.constant 0 : index
    %c0_30 = arith.constant 0 : index
    %87 = vector.load %arg3[%c0_29, %c0_30] : memref<64x512xf32, #tpu.memory_space<vmem>>, vector<64x512xf32>
    %cst_31 = arith.constant dense<0.000000e+00> : vector<8x512xf32>
    %88 = tpu.matmul %85, %87, %cst_31 {dimension_numbers = #tpu.dot_dimension_numbers<[1], [0], [0], [1], [0, 0, 1, 1], [], []>} : vector<8x64xf32>, vector<64x512xf32>, vector<8x512xf32> -> vector<8x512xf32>
    %89 = arith.addf %86, %88 : vector<8x512xf32>
    %90 = vector.extract_strided_slice %89 {offsets = [0, 0], sizes = [8, 384], strides = [1, 1]} : vector<8x512xf32> to vector<8x384xf32>
    %91 = arith.negf %90 : vector<8x384xf32>
    %92 = math.exp %91 : vector<8x384xf32>
    %cst_32 = arith.constant 1.000000e+00 : f32
    %93 = vector.broadcast %cst_32 : f32 to vector<8x384xf32>
    %94 = arith.addf %93, %92 : vector<8x384xf32>
    %95 = arith.divf %93, %94 : vector<8x384xf32>
    %96 = vector.extract_strided_slice %95 {offsets = [0, 0], sizes = [8, 64], strides = [1, 1]} : vector<8x384xf32> to vector<8x64xf32>
    %97 = vector.extract_strided_slice %95 {offsets = [0, 128], sizes = [8, 64], strides = [1, 1]} : vector<8x384xf32> to vector<8x64xf32>
    %98 = vector.extract_strided_slice %95 {offsets = [0, 256], sizes = [8, 64], strides = [1, 1]} : vector<8x384xf32> to vector<8x64xf32>
    %99 = vector.extract_strided_slice %89 {offsets = [0, 384], sizes = [8, 64], strides = [1, 1]} : vector<8x512xf32> to vector<8x64xf32>
    %100 = math.tanh %99 : vector<8x64xf32>
    %101 = arith.mulf %97, %83 : vector<8x64xf32>
    %102 = arith.mulf %96, %100 : vector<8x64xf32>
    %103 = arith.addf %101, %102 : vector<8x64xf32>
    %104 = math.tanh %103 : vector<8x64xf32>
    %105 = arith.mulf %98, %104 : vector<8x64xf32>
    %c40 = arith.constant 40 : index
    %c0_33 = arith.constant 0 : index
    %106 = vector.load %arg7[%c40, %c0_33] : memref<224x512xf32, #tpu.memory_space<vmem>>, vector<8x512xf32>
    %c0_34 = arith.constant 0 : index
    %c0_35 = arith.constant 0 : index
    %107 = vector.load %arg3[%c0_34, %c0_35] : memref<64x512xf32, #tpu.memory_space<vmem>>, vector<64x512xf32>
    %cst_36 = arith.constant dense<0.000000e+00> : vector<8x512xf32>
    %108 = tpu.matmul %105, %107, %cst_36 {dimension_numbers = #tpu.dot_dimension_numbers<[1], [0], [0], [1], [0, 0, 1, 1], [], []>} : vector<8x64xf32>, vector<64x512xf32>, vector<8x512xf32> -> vector<8x512xf32>
    %109 = arith.addf %106, %108 : vector<8x512xf32>
    %110 = vector.extract_strided_slice %109 {offsets = [0, 0], sizes = [8, 384], strides = [1, 1]} : vector<8x512xf32> to vector<8x384xf32>
    %111 = arith.negf %110 : vector<8x384xf32>
    %112 = math.exp %111 : vector<8x384xf32>
    %cst_37 = arith.constant 1.000000e+00 : f32
    %113 = vector.broadcast %cst_37 : f32 to vector<8x384xf32>
    %114 = arith.addf %113, %112 : vector<8x384xf32>
    %115 = arith.divf %113, %114 : vector<8x384xf32>
    %116 = vector.extract_strided_slice %115 {offsets = [0, 0], sizes = [8, 64], strides = [1, 1]} : vector<8x384xf32> to vector<8x64xf32>
    %117 = vector.extract_strided_slice %115 {offsets = [0, 128], sizes = [8, 64], strides = [1, 1]} : vector<8x384xf32> to vector<8x64xf32>
    %118 = vector.extract_strided_slice %115 {offsets = [0, 256], sizes = [8, 64], strides = [1, 1]} : vector<8x384xf32> to vector<8x64xf32>
    %119 = vector.extract_strided_slice %109 {offsets = [0, 384], sizes = [8, 64], strides = [1, 1]} : vector<8x512xf32> to vector<8x64xf32>
    %120 = math.tanh %119 : vector<8x64xf32>
    %121 = arith.mulf %117, %103 : vector<8x64xf32>
    %122 = arith.mulf %116, %120 : vector<8x64xf32>
    %123 = arith.addf %121, %122 : vector<8x64xf32>
    %124 = math.tanh %123 : vector<8x64xf32>
    %125 = arith.mulf %118, %124 : vector<8x64xf32>
    %c48 = arith.constant 48 : index
    %c0_38 = arith.constant 0 : index
    %126 = vector.load %arg7[%c48, %c0_38] : memref<224x512xf32, #tpu.memory_space<vmem>>, vector<8x512xf32>
    %c0_39 = arith.constant 0 : index
    %c0_40 = arith.constant 0 : index
    %127 = vector.load %arg3[%c0_39, %c0_40] : memref<64x512xf32, #tpu.memory_space<vmem>>, vector<64x512xf32>
    %cst_41 = arith.constant dense<0.000000e+00> : vector<8x512xf32>
    %128 = tpu.matmul %125, %127, %cst_41 {dimension_numbers = #tpu.dot_dimension_numbers<[1], [0], [0], [1], [0, 0, 1, 1], [], []>} : vector<8x64xf32>, vector<64x512xf32>, vector<8x512xf32> -> vector<8x512xf32>
    %129 = arith.addf %126, %128 : vector<8x512xf32>
    %130 = vector.extract_strided_slice %129 {offsets = [0, 0], sizes = [8, 384], strides = [1, 1]} : vector<8x512xf32> to vector<8x384xf32>
    %131 = arith.negf %130 : vector<8x384xf32>
    %132 = math.exp %131 : vector<8x384xf32>
    %cst_42 = arith.constant 1.000000e+00 : f32
    %133 = vector.broadcast %cst_42 : f32 to vector<8x384xf32>
    %134 = arith.addf %133, %132 : vector<8x384xf32>
    %135 = arith.divf %133, %134 : vector<8x384xf32>
    %136 = vector.extract_strided_slice %135 {offsets = [0, 0], sizes = [8, 64], strides = [1, 1]} : vector<8x384xf32> to vector<8x64xf32>
    %137 = vector.extract_strided_slice %135 {offsets = [0, 128], sizes = [8, 64], strides = [1, 1]} : vector<8x384xf32> to vector<8x64xf32>
    %138 = vector.extract_strided_slice %135 {offsets = [0, 256], sizes = [8, 64], strides = [1, 1]} : vector<8x384xf32> to vector<8x64xf32>
    %139 = vector.extract_strided_slice %129 {offsets = [0, 384], sizes = [8, 64], strides = [1, 1]} : vector<8x512xf32> to vector<8x64xf32>
    %140 = math.tanh %139 : vector<8x64xf32>
    %141 = arith.mulf %137, %123 : vector<8x64xf32>
    %142 = arith.mulf %136, %140 : vector<8x64xf32>
    %143 = arith.addf %141, %142 : vector<8x64xf32>
    %144 = math.tanh %143 : vector<8x64xf32>
    %145 = arith.mulf %138, %144 : vector<8x64xf32>
    %c56 = arith.constant 56 : index
    %c0_43 = arith.constant 0 : index
    %146 = vector.load %arg7[%c56, %c0_43] : memref<224x512xf32, #tpu.memory_space<vmem>>, vector<8x512xf32>
    %c0_44 = arith.constant 0 : index
    %c0_45 = arith.constant 0 : index
    %147 = vector.load %arg3[%c0_44, %c0_45] : memref<64x512xf32, #tpu.memory_space<vmem>>, vector<64x512xf32>
    %cst_46 = arith.constant dense<0.000000e+00> : vector<8x512xf32>
    %148 = tpu.matmul %145, %147, %cst_46 {dimension_numbers = #tpu.dot_dimension_numbers<[1], [0], [0], [1], [0, 0, 1, 1], [], []>} : vector<8x64xf32>, vector<64x512xf32>, vector<8x512xf32> -> vector<8x512xf32>
    %149 = arith.addf %146, %148 : vector<8x512xf32>
    %150 = vector.extract_strided_slice %149 {offsets = [0, 0], sizes = [8, 384], strides = [1, 1]} : vector<8x512xf32> to vector<8x384xf32>
    %151 = arith.negf %150 : vector<8x384xf32>
    %152 = math.exp %151 : vector<8x384xf32>
    %cst_47 = arith.constant 1.000000e+00 : f32
    %153 = vector.broadcast %cst_47 : f32 to vector<8x384xf32>
    %154 = arith.addf %153, %152 : vector<8x384xf32>
    %155 = arith.divf %153, %154 : vector<8x384xf32>
    %156 = vector.extract_strided_slice %155 {offsets = [0, 0], sizes = [8, 64], strides = [1, 1]} : vector<8x384xf32> to vector<8x64xf32>
    %157 = vector.extract_strided_slice %155 {offsets = [0, 128], sizes = [8, 64], strides = [1, 1]} : vector<8x384xf32> to vector<8x64xf32>
    %158 = vector.extract_strided_slice %155 {offsets = [0, 256], sizes = [8, 64], strides = [1, 1]} : vector<8x384xf32> to vector<8x64xf32>
    %159 = vector.extract_strided_slice %149 {offsets = [0, 384], sizes = [8, 64], strides = [1, 1]} : vector<8x512xf32> to vector<8x64xf32>
    %160 = math.tanh %159 : vector<8x64xf32>
    %161 = arith.mulf %157, %143 : vector<8x64xf32>
    %162 = arith.mulf %156, %160 : vector<8x64xf32>
    %163 = arith.addf %161, %162 : vector<8x64xf32>
    %164 = math.tanh %163 : vector<8x64xf32>
    %165 = arith.mulf %158, %164 : vector<8x64xf32>
    %c64 = arith.constant 64 : index
    %c0_48 = arith.constant 0 : index
    %166 = vector.load %arg7[%c64, %c0_48] : memref<224x512xf32, #tpu.memory_space<vmem>>, vector<8x512xf32>
    %c0_49 = arith.constant 0 : index
    %c0_50 = arith.constant 0 : index
    %167 = vector.load %arg3[%c0_49, %c0_50] : memref<64x512xf32, #tpu.memory_space<vmem>>, vector<64x512xf32>
    %cst_51 = arith.constant dense<0.000000e+00> : vector<8x512xf32>
    %168 = tpu.matmul %165, %167, %cst_51 {dimension_numbers = #tpu.dot_dimension_numbers<[1], [0], [0], [1], [0, 0, 1, 1], [], []>} : vector<8x64xf32>, vector<64x512xf32>, vector<8x512xf32> -> vector<8x512xf32>
    %169 = arith.addf %166, %168 : vector<8x512xf32>
    %170 = vector.extract_strided_slice %169 {offsets = [0, 0], sizes = [8, 384], strides = [1, 1]} : vector<8x512xf32> to vector<8x384xf32>
    %171 = arith.negf %170 : vector<8x384xf32>
    %172 = math.exp %171 : vector<8x384xf32>
    %cst_52 = arith.constant 1.000000e+00 : f32
    %173 = vector.broadcast %cst_52 : f32 to vector<8x384xf32>
    %174 = arith.addf %173, %172 : vector<8x384xf32>
    %175 = arith.divf %173, %174 : vector<8x384xf32>
    %176 = vector.extract_strided_slice %175 {offsets = [0, 0], sizes = [8, 64], strides = [1, 1]} : vector<8x384xf32> to vector<8x64xf32>
    %177 = vector.extract_strided_slice %175 {offsets = [0, 128], sizes = [8, 64], strides = [1, 1]} : vector<8x384xf32> to vector<8x64xf32>
    %178 = vector.extract_strided_slice %175 {offsets = [0, 256], sizes = [8, 64], strides = [1, 1]} : vector<8x384xf32> to vector<8x64xf32>
    %179 = vector.extract_strided_slice %169 {offsets = [0, 384], sizes = [8, 64], strides = [1, 1]} : vector<8x512xf32> to vector<8x64xf32>
    %180 = math.tanh %179 : vector<8x64xf32>
    %181 = arith.mulf %177, %163 : vector<8x64xf32>
    %182 = arith.mulf %176, %180 : vector<8x64xf32>
    %183 = arith.addf %181, %182 : vector<8x64xf32>
    %184 = math.tanh %183 : vector<8x64xf32>
    %185 = arith.mulf %178, %184 : vector<8x64xf32>
    %c72 = arith.constant 72 : index
    %c0_53 = arith.constant 0 : index
    %186 = vector.load %arg7[%c72, %c0_53] : memref<224x512xf32, #tpu.memory_space<vmem>>, vector<8x512xf32>
    %c0_54 = arith.constant 0 : index
    %c0_55 = arith.constant 0 : index
    %187 = vector.load %arg3[%c0_54, %c0_55] : memref<64x512xf32, #tpu.memory_space<vmem>>, vector<64x512xf32>
    %cst_56 = arith.constant dense<0.000000e+00> : vector<8x512xf32>
    %188 = tpu.matmul %185, %187, %cst_56 {dimension_numbers = #tpu.dot_dimension_numbers<[1], [0], [0], [1], [0, 0, 1, 1], [], []>} : vector<8x64xf32>, vector<64x512xf32>, vector<8x512xf32> -> vector<8x512xf32>
    %189 = arith.addf %186, %188 : vector<8x512xf32>
    %190 = vector.extract_strided_slice %189 {offsets = [0, 0], sizes = [8, 384], strides = [1, 1]} : vector<8x512xf32> to vector<8x384xf32>
    %191 = arith.negf %190 : vector<8x384xf32>
    %192 = math.exp %191 : vector<8x384xf32>
    %cst_57 = arith.constant 1.000000e+00 : f32
    %193 = vector.broadcast %cst_57 : f32 to vector<8x384xf32>
    %194 = arith.addf %193, %192 : vector<8x384xf32>
    %195 = arith.divf %193, %194 : vector<8x384xf32>
    %196 = vector.extract_strided_slice %195 {offsets = [0, 0], sizes = [8, 64], strides = [1, 1]} : vector<8x384xf32> to vector<8x64xf32>
    %197 = vector.extract_strided_slice %195 {offsets = [0, 128], sizes = [8, 64], strides = [1, 1]} : vector<8x384xf32> to vector<8x64xf32>
    %198 = vector.extract_strided_slice %195 {offsets = [0, 256], sizes = [8, 64], strides = [1, 1]} : vector<8x384xf32> to vector<8x64xf32>
    %199 = vector.extract_strided_slice %189 {offsets = [0, 384], sizes = [8, 64], strides = [1, 1]} : vector<8x512xf32> to vector<8x64xf32>
    %200 = math.tanh %199 : vector<8x64xf32>
    %201 = arith.mulf %197, %183 : vector<8x64xf32>
    %202 = arith.mulf %196, %200 : vector<8x64xf32>
    %203 = arith.addf %201, %202 : vector<8x64xf32>
    %204 = math.tanh %203 : vector<8x64xf32>
    %205 = arith.mulf %198, %204 : vector<8x64xf32>
    %c80 = arith.constant 80 : index
    %c0_58 = arith.constant 0 : index
    %206 = vector.load %arg7[%c80, %c0_58] : memref<224x512xf32, #tpu.memory_space<vmem>>, vector<8x512xf32>
    %c0_59 = arith.constant 0 : index
    %c0_60 = arith.constant 0 : index
    %207 = vector.load %arg3[%c0_59, %c0_60] : memref<64x512xf32, #tpu.memory_space<vmem>>, vector<64x512xf32>
    %cst_61 = arith.constant dense<0.000000e+00> : vector<8x512xf32>
    %208 = tpu.matmul %205, %207, %cst_61 {dimension_numbers = #tpu.dot_dimension_numbers<[1], [0], [0], [1], [0, 0, 1, 1], [], []>} : vector<8x64xf32>, vector<64x512xf32>, vector<8x512xf32> -> vector<8x512xf32>
    %209 = arith.addf %206, %208 : vector<8x512xf32>
    %210 = vector.extract_strided_slice %209 {offsets = [0, 0], sizes = [8, 384], strides = [1, 1]} : vector<8x512xf32> to vector<8x384xf32>
    %211 = arith.negf %210 : vector<8x384xf32>
    %212 = math.exp %211 : vector<8x384xf32>
    %cst_62 = arith.constant 1.000000e+00 : f32
    %213 = vector.broadcast %cst_62 : f32 to vector<8x384xf32>
    %214 = arith.addf %213, %212 : vector<8x384xf32>
    %215 = arith.divf %213, %214 : vector<8x384xf32>
    %216 = vector.extract_strided_slice %215 {offsets = [0, 0], sizes = [8, 64], strides = [1, 1]} : vector<8x384xf32> to vector<8x64xf32>
    %217 = vector.extract_strided_slice %215 {offsets = [0, 128], sizes = [8, 64], strides = [1, 1]} : vector<8x384xf32> to vector<8x64xf32>
    %218 = vector.extract_strided_slice %215 {offsets = [0, 256], sizes = [8, 64], strides = [1, 1]} : vector<8x384xf32> to vector<8x64xf32>
    %219 = vector.extract_strided_slice %209 {offsets = [0, 384], sizes = [8, 64], strides = [1, 1]} : vector<8x512xf32> to vector<8x64xf32>
    %220 = math.tanh %219 : vector<8x64xf32>
    %221 = arith.mulf %217, %203 : vector<8x64xf32>
    %222 = arith.mulf %216, %220 : vector<8x64xf32>
    %223 = arith.addf %221, %222 : vector<8x64xf32>
    %224 = math.tanh %223 : vector<8x64xf32>
    %225 = arith.mulf %218, %224 : vector<8x64xf32>
    %c88 = arith.constant 88 : index
    %c0_63 = arith.constant 0 : index
    %226 = vector.load %arg7[%c88, %c0_63] : memref<224x512xf32, #tpu.memory_space<vmem>>, vector<8x512xf32>
    %c0_64 = arith.constant 0 : index
    %c0_65 = arith.constant 0 : index
    %227 = vector.load %arg3[%c0_64, %c0_65] : memref<64x512xf32, #tpu.memory_space<vmem>>, vector<64x512xf32>
    %cst_66 = arith.constant dense<0.000000e+00> : vector<8x512xf32>
    %228 = tpu.matmul %225, %227, %cst_66 {dimension_numbers = #tpu.dot_dimension_numbers<[1], [0], [0], [1], [0, 0, 1, 1], [], []>} : vector<8x64xf32>, vector<64x512xf32>, vector<8x512xf32> -> vector<8x512xf32>
    %229 = arith.addf %226, %228 : vector<8x512xf32>
    %230 = vector.extract_strided_slice %229 {offsets = [0, 0], sizes = [8, 384], strides = [1, 1]} : vector<8x512xf32> to vector<8x384xf32>
    %231 = arith.negf %230 : vector<8x384xf32>
    %232 = math.exp %231 : vector<8x384xf32>
    %cst_67 = arith.constant 1.000000e+00 : f32
    %233 = vector.broadcast %cst_67 : f32 to vector<8x384xf32>
    %234 = arith.addf %233, %232 : vector<8x384xf32>
    %235 = arith.divf %233, %234 : vector<8x384xf32>
    %236 = vector.extract_strided_slice %235 {offsets = [0, 0], sizes = [8, 64], strides = [1, 1]} : vector<8x384xf32> to vector<8x64xf32>
    %237 = vector.extract_strided_slice %235 {offsets = [0, 128], sizes = [8, 64], strides = [1, 1]} : vector<8x384xf32> to vector<8x64xf32>
    %238 = vector.extract_strided_slice %235 {offsets = [0, 256], sizes = [8, 64], strides = [1, 1]} : vector<8x384xf32> to vector<8x64xf32>
    %239 = vector.extract_strided_slice %229 {offsets = [0, 384], sizes = [8, 64], strides = [1, 1]} : vector<8x512xf32> to vector<8x64xf32>
    %240 = math.tanh %239 : vector<8x64xf32>
    %241 = arith.mulf %237, %223 : vector<8x64xf32>
    %242 = arith.mulf %236, %240 : vector<8x64xf32>
    %243 = arith.addf %241, %242 : vector<8x64xf32>
    %244 = math.tanh %243 : vector<8x64xf32>
    %245 = arith.mulf %238, %244 : vector<8x64xf32>
    %c96 = arith.constant 96 : index
    %c0_68 = arith.constant 0 : index
    %246 = vector.load %arg7[%c96, %c0_68] : memref<224x512xf32, #tpu.memory_space<vmem>>, vector<8x512xf32>
    %c0_69 = arith.constant 0 : index
    %c0_70 = arith.constant 0 : index
    %247 = vector.load %arg3[%c0_69, %c0_70] : memref<64x512xf32, #tpu.memory_space<vmem>>, vector<64x512xf32>
    %cst_71 = arith.constant dense<0.000000e+00> : vector<8x512xf32>
    %248 = tpu.matmul %245, %247, %cst_71 {dimension_numbers = #tpu.dot_dimension_numbers<[1], [0], [0], [1], [0, 0, 1, 1], [], []>} : vector<8x64xf32>, vector<64x512xf32>, vector<8x512xf32> -> vector<8x512xf32>
    %249 = arith.addf %246, %248 : vector<8x512xf32>
    %250 = vector.extract_strided_slice %249 {offsets = [0, 0], sizes = [8, 384], strides = [1, 1]} : vector<8x512xf32> to vector<8x384xf32>
    %251 = arith.negf %250 : vector<8x384xf32>
    %252 = math.exp %251 : vector<8x384xf32>
    %cst_72 = arith.constant 1.000000e+00 : f32
    %253 = vector.broadcast %cst_72 : f32 to vector<8x384xf32>
    %254 = arith.addf %253, %252 : vector<8x384xf32>
    %255 = arith.divf %253, %254 : vector<8x384xf32>
    %256 = vector.extract_strided_slice %255 {offsets = [0, 0], sizes = [8, 64], strides = [1, 1]} : vector<8x384xf32> to vector<8x64xf32>
    %257 = vector.extract_strided_slice %255 {offsets = [0, 128], sizes = [8, 64], strides = [1, 1]} : vector<8x384xf32> to vector<8x64xf32>
    %258 = vector.extract_strided_slice %255 {offsets = [0, 256], sizes = [8, 64], strides = [1, 1]} : vector<8x384xf32> to vector<8x64xf32>
    %259 = vector.extract_strided_slice %249 {offsets = [0, 384], sizes = [8, 64], strides = [1, 1]} : vector<8x512xf32> to vector<8x64xf32>
    %260 = math.tanh %259 : vector<8x64xf32>
    %261 = arith.mulf %257, %243 : vector<8x64xf32>
    %262 = arith.mulf %256, %260 : vector<8x64xf32>
    %263 = arith.addf %261, %262 : vector<8x64xf32>
    %264 = math.tanh %263 : vector<8x64xf32>
    %265 = arith.mulf %258, %264 : vector<8x64xf32>
    %c104 = arith.constant 104 : index
    %c0_73 = arith.constant 0 : index
    %266 = vector.load %arg7[%c104, %c0_73] : memref<224x512xf32, #tpu.memory_space<vmem>>, vector<8x512xf32>
    %c0_74 = arith.constant 0 : index
    %c0_75 = arith.constant 0 : index
    %267 = vector.load %arg3[%c0_74, %c0_75] : memref<64x512xf32, #tpu.memory_space<vmem>>, vector<64x512xf32>
    %cst_76 = arith.constant dense<0.000000e+00> : vector<8x512xf32>
    %268 = tpu.matmul %265, %267, %cst_76 {dimension_numbers = #tpu.dot_dimension_numbers<[1], [0], [0], [1], [0, 0, 1, 1], [], []>} : vector<8x64xf32>, vector<64x512xf32>, vector<8x512xf32> -> vector<8x512xf32>
    %269 = arith.addf %266, %268 : vector<8x512xf32>
    %270 = vector.extract_strided_slice %269 {offsets = [0, 0], sizes = [8, 384], strides = [1, 1]} : vector<8x512xf32> to vector<8x384xf32>
    %271 = arith.negf %270 : vector<8x384xf32>
    %272 = math.exp %271 : vector<8x384xf32>
    %cst_77 = arith.constant 1.000000e+00 : f32
    %273 = vector.broadcast %cst_77 : f32 to vector<8x384xf32>
    %274 = arith.addf %273, %272 : vector<8x384xf32>
    %275 = arith.divf %273, %274 : vector<8x384xf32>
    %276 = vector.extract_strided_slice %275 {offsets = [0, 0], sizes = [8, 64], strides = [1, 1]} : vector<8x384xf32> to vector<8x64xf32>
    %277 = vector.extract_strided_slice %275 {offsets = [0, 128], sizes = [8, 64], strides = [1, 1]} : vector<8x384xf32> to vector<8x64xf32>
    %278 = vector.extract_strided_slice %275 {offsets = [0, 256], sizes = [8, 64], strides = [1, 1]} : vector<8x384xf32> to vector<8x64xf32>
    %279 = vector.extract_strided_slice %269 {offsets = [0, 384], sizes = [8, 64], strides = [1, 1]} : vector<8x512xf32> to vector<8x64xf32>
    %280 = math.tanh %279 : vector<8x64xf32>
    %281 = arith.mulf %277, %263 : vector<8x64xf32>
    %282 = arith.mulf %276, %280 : vector<8x64xf32>
    %283 = arith.addf %281, %282 : vector<8x64xf32>
    %284 = math.tanh %283 : vector<8x64xf32>
    %285 = arith.mulf %278, %284 : vector<8x64xf32>
    %c112 = arith.constant 112 : index
    %c0_78 = arith.constant 0 : index
    %286 = vector.load %arg7[%c112, %c0_78] : memref<224x512xf32, #tpu.memory_space<vmem>>, vector<8x512xf32>
    %c0_79 = arith.constant 0 : index
    %c0_80 = arith.constant 0 : index
    %287 = vector.load %arg3[%c0_79, %c0_80] : memref<64x512xf32, #tpu.memory_space<vmem>>, vector<64x512xf32>
    %cst_81 = arith.constant dense<0.000000e+00> : vector<8x512xf32>
    %288 = tpu.matmul %285, %287, %cst_81 {dimension_numbers = #tpu.dot_dimension_numbers<[1], [0], [0], [1], [0, 0, 1, 1], [], []>} : vector<8x64xf32>, vector<64x512xf32>, vector<8x512xf32> -> vector<8x512xf32>
    %289 = arith.addf %286, %288 : vector<8x512xf32>
    %290 = vector.extract_strided_slice %289 {offsets = [0, 0], sizes = [8, 384], strides = [1, 1]} : vector<8x512xf32> to vector<8x384xf32>
    %291 = arith.negf %290 : vector<8x384xf32>
    %292 = math.exp %291 : vector<8x384xf32>
    %cst_82 = arith.constant 1.000000e+00 : f32
    %293 = vector.broadcast %cst_82 : f32 to vector<8x384xf32>
    %294 = arith.addf %293, %292 : vector<8x384xf32>
    %295 = arith.divf %293, %294 : vector<8x384xf32>
    %296 = vector.extract_strided_slice %295 {offsets = [0, 0], sizes = [8, 64], strides = [1, 1]} : vector<8x384xf32> to vector<8x64xf32>
    %297 = vector.extract_strided_slice %295 {offsets = [0, 128], sizes = [8, 64], strides = [1, 1]} : vector<8x384xf32> to vector<8x64xf32>
    %298 = vector.extract_strided_slice %295 {offsets = [0, 256], sizes = [8, 64], strides = [1, 1]} : vector<8x384xf32> to vector<8x64xf32>
    %299 = vector.extract_strided_slice %289 {offsets = [0, 384], sizes = [8, 64], strides = [1, 1]} : vector<8x512xf32> to vector<8x64xf32>
    %300 = math.tanh %299 : vector<8x64xf32>
    %301 = arith.mulf %297, %283 : vector<8x64xf32>
    %302 = arith.mulf %296, %300 : vector<8x64xf32>
    %303 = arith.addf %301, %302 : vector<8x64xf32>
    %304 = math.tanh %303 : vector<8x64xf32>
    %305 = arith.mulf %298, %304 : vector<8x64xf32>
    %c120 = arith.constant 120 : index
    %c0_83 = arith.constant 0 : index
    %306 = vector.load %arg7[%c120, %c0_83] : memref<224x512xf32, #tpu.memory_space<vmem>>, vector<8x512xf32>
    %c0_84 = arith.constant 0 : index
    %c0_85 = arith.constant 0 : index
    %307 = vector.load %arg3[%c0_84, %c0_85] : memref<64x512xf32, #tpu.memory_space<vmem>>, vector<64x512xf32>
    %cst_86 = arith.constant dense<0.000000e+00> : vector<8x512xf32>
    %308 = tpu.matmul %305, %307, %cst_86 {dimension_numbers = #tpu.dot_dimension_numbers<[1], [0], [0], [1], [0, 0, 1, 1], [], []>} : vector<8x64xf32>, vector<64x512xf32>, vector<8x512xf32> -> vector<8x512xf32>
    %309 = arith.addf %306, %308 : vector<8x512xf32>
    %310 = vector.extract_strided_slice %309 {offsets = [0, 0], sizes = [8, 384], strides = [1, 1]} : vector<8x512xf32> to vector<8x384xf32>
    %311 = arith.negf %310 : vector<8x384xf32>
    %312 = math.exp %311 : vector<8x384xf32>
    %cst_87 = arith.constant 1.000000e+00 : f32
    %313 = vector.broadcast %cst_87 : f32 to vector<8x384xf32>
    %314 = arith.addf %313, %312 : vector<8x384xf32>
    %315 = arith.divf %313, %314 : vector<8x384xf32>
    %316 = vector.extract_strided_slice %315 {offsets = [0, 0], sizes = [8, 64], strides = [1, 1]} : vector<8x384xf32> to vector<8x64xf32>
    %317 = vector.extract_strided_slice %315 {offsets = [0, 128], sizes = [8, 64], strides = [1, 1]} : vector<8x384xf32> to vector<8x64xf32>
    %318 = vector.extract_strided_slice %315 {offsets = [0, 256], sizes = [8, 64], strides = [1, 1]} : vector<8x384xf32> to vector<8x64xf32>
    %319 = vector.extract_strided_slice %309 {offsets = [0, 384], sizes = [8, 64], strides = [1, 1]} : vector<8x512xf32> to vector<8x64xf32>
    %320 = math.tanh %319 : vector<8x64xf32>
    %321 = arith.mulf %317, %303 : vector<8x64xf32>
    %322 = arith.mulf %316, %320 : vector<8x64xf32>
    %323 = arith.addf %321, %322 : vector<8x64xf32>
    %324 = math.tanh %323 : vector<8x64xf32>
    %325 = arith.mulf %318, %324 : vector<8x64xf32>
    %c128 = arith.constant 128 : index
    %c0_88 = arith.constant 0 : index
    %326 = vector.load %arg7[%c128, %c0_88] : memref<224x512xf32, #tpu.memory_space<vmem>>, vector<8x512xf32>
    %c0_89 = arith.constant 0 : index
    %c0_90 = arith.constant 0 : index
    %327 = vector.load %arg3[%c0_89, %c0_90] : memref<64x512xf32, #tpu.memory_space<vmem>>, vector<64x512xf32>
    %cst_91 = arith.constant dense<0.000000e+00> : vector<8x512xf32>
    %328 = tpu.matmul %325, %327, %cst_91 {dimension_numbers = #tpu.dot_dimension_numbers<[1], [0], [0], [1], [0, 0, 1, 1], [], []>} : vector<8x64xf32>, vector<64x512xf32>, vector<8x512xf32> -> vector<8x512xf32>
    %329 = arith.addf %326, %328 : vector<8x512xf32>
    %330 = vector.extract_strided_slice %329 {offsets = [0, 0], sizes = [8, 384], strides = [1, 1]} : vector<8x512xf32> to vector<8x384xf32>
    %331 = arith.negf %330 : vector<8x384xf32>
    %332 = math.exp %331 : vector<8x384xf32>
    %cst_92 = arith.constant 1.000000e+00 : f32
    %333 = vector.broadcast %cst_92 : f32 to vector<8x384xf32>
    %334 = arith.addf %333, %332 : vector<8x384xf32>
    %335 = arith.divf %333, %334 : vector<8x384xf32>
    %336 = vector.extract_strided_slice %335 {offsets = [0, 0], sizes = [8, 64], strides = [1, 1]} : vector<8x384xf32> to vector<8x64xf32>
    %337 = vector.extract_strided_slice %335 {offsets = [0, 128], sizes = [8, 64], strides = [1, 1]} : vector<8x384xf32> to vector<8x64xf32>
    %338 = vector.extract_strided_slice %335 {offsets = [0, 256], sizes = [8, 64], strides = [1, 1]} : vector<8x384xf32> to vector<8x64xf32>
    %339 = vector.extract_strided_slice %329 {offsets = [0, 384], sizes = [8, 64], strides = [1, 1]} : vector<8x512xf32> to vector<8x64xf32>
    %340 = math.tanh %339 : vector<8x64xf32>
    %341 = arith.mulf %337, %323 : vector<8x64xf32>
    %342 = arith.mulf %336, %340 : vector<8x64xf32>
    %343 = arith.addf %341, %342 : vector<8x64xf32>
    %344 = math.tanh %343 : vector<8x64xf32>
    %345 = arith.mulf %338, %344 : vector<8x64xf32>
    %c136 = arith.constant 136 : index
    %c0_93 = arith.constant 0 : index
    %346 = vector.load %arg7[%c136, %c0_93] : memref<224x512xf32, #tpu.memory_space<vmem>>, vector<8x512xf32>
    %c0_94 = arith.constant 0 : index
    %c0_95 = arith.constant 0 : index
    %347 = vector.load %arg3[%c0_94, %c0_95] : memref<64x512xf32, #tpu.memory_space<vmem>>, vector<64x512xf32>
    %cst_96 = arith.constant dense<0.000000e+00> : vector<8x512xf32>
    %348 = tpu.matmul %345, %347, %cst_96 {dimension_numbers = #tpu.dot_dimension_numbers<[1], [0], [0], [1], [0, 0, 1, 1], [], []>} : vector<8x64xf32>, vector<64x512xf32>, vector<8x512xf32> -> vector<8x512xf32>
    %349 = arith.addf %346, %348 : vector<8x512xf32>
    %350 = vector.extract_strided_slice %349 {offsets = [0, 0], sizes = [8, 384], strides = [1, 1]} : vector<8x512xf32> to vector<8x384xf32>
    %351 = arith.negf %350 : vector<8x384xf32>
    %352 = math.exp %351 : vector<8x384xf32>
    %cst_97 = arith.constant 1.000000e+00 : f32
    %353 = vector.broadcast %cst_97 : f32 to vector<8x384xf32>
    %354 = arith.addf %353, %352 : vector<8x384xf32>
    %355 = arith.divf %353, %354 : vector<8x384xf32>
    %356 = vector.extract_strided_slice %355 {offsets = [0, 0], sizes = [8, 64], strides = [1, 1]} : vector<8x384xf32> to vector<8x64xf32>
    %357 = vector.extract_strided_slice %355 {offsets = [0, 128], sizes = [8, 64], strides = [1, 1]} : vector<8x384xf32> to vector<8x64xf32>
    %358 = vector.extract_strided_slice %355 {offsets = [0, 256], sizes = [8, 64], strides = [1, 1]} : vector<8x384xf32> to vector<8x64xf32>
    %359 = vector.extract_strided_slice %349 {offsets = [0, 384], sizes = [8, 64], strides = [1, 1]} : vector<8x512xf32> to vector<8x64xf32>
    %360 = math.tanh %359 : vector<8x64xf32>
    %361 = arith.mulf %357, %343 : vector<8x64xf32>
    %362 = arith.mulf %356, %360 : vector<8x64xf32>
    %363 = arith.addf %361, %362 : vector<8x64xf32>
    %364 = math.tanh %363 : vector<8x64xf32>
    %365 = arith.mulf %358, %364 : vector<8x64xf32>
    %c144 = arith.constant 144 : index
    %c0_98 = arith.constant 0 : index
    %366 = vector.load %arg7[%c144, %c0_98] : memref<224x512xf32, #tpu.memory_space<vmem>>, vector<8x512xf32>
    %c0_99 = arith.constant 0 : index
    %c0_100 = arith.constant 0 : index
    %367 = vector.load %arg3[%c0_99, %c0_100] : memref<64x512xf32, #tpu.memory_space<vmem>>, vector<64x512xf32>
    %cst_101 = arith.constant dense<0.000000e+00> : vector<8x512xf32>
    %368 = tpu.matmul %365, %367, %cst_101 {dimension_numbers = #tpu.dot_dimension_numbers<[1], [0], [0], [1], [0, 0, 1, 1], [], []>} : vector<8x64xf32>, vector<64x512xf32>, vector<8x512xf32> -> vector<8x512xf32>
    %369 = arith.addf %366, %368 : vector<8x512xf32>
    %370 = vector.extract_strided_slice %369 {offsets = [0, 0], sizes = [8, 384], strides = [1, 1]} : vector<8x512xf32> to vector<8x384xf32>
    %371 = arith.negf %370 : vector<8x384xf32>
    %372 = math.exp %371 : vector<8x384xf32>
    %cst_102 = arith.constant 1.000000e+00 : f32
    %373 = vector.broadcast %cst_102 : f32 to vector<8x384xf32>
    %374 = arith.addf %373, %372 : vector<8x384xf32>
    %375 = arith.divf %373, %374 : vector<8x384xf32>
    %376 = vector.extract_strided_slice %375 {offsets = [0, 0], sizes = [8, 64], strides = [1, 1]} : vector<8x384xf32> to vector<8x64xf32>
    %377 = vector.extract_strided_slice %375 {offsets = [0, 128], sizes = [8, 64], strides = [1, 1]} : vector<8x384xf32> to vector<8x64xf32>
    %378 = vector.extract_strided_slice %375 {offsets = [0, 256], sizes = [8, 64], strides = [1, 1]} : vector<8x384xf32> to vector<8x64xf32>
    %379 = vector.extract_strided_slice %369 {offsets = [0, 384], sizes = [8, 64], strides = [1, 1]} : vector<8x512xf32> to vector<8x64xf32>
    %380 = math.tanh %379 : vector<8x64xf32>
    %381 = arith.mulf %377, %363 : vector<8x64xf32>
    %382 = arith.mulf %376, %380 : vector<8x64xf32>
    %383 = arith.addf %381, %382 : vector<8x64xf32>
    %384 = math.tanh %383 : vector<8x64xf32>
    %385 = arith.mulf %378, %384 : vector<8x64xf32>
    %c152 = arith.constant 152 : index
    %c0_103 = arith.constant 0 : index
    %386 = vector.load %arg7[%c152, %c0_103] : memref<224x512xf32, #tpu.memory_space<vmem>>, vector<8x512xf32>
    %c0_104 = arith.constant 0 : index
    %c0_105 = arith.constant 0 : index
    %387 = vector.load %arg3[%c0_104, %c0_105] : memref<64x512xf32, #tpu.memory_space<vmem>>, vector<64x512xf32>
    %cst_106 = arith.constant dense<0.000000e+00> : vector<8x512xf32>
    %388 = tpu.matmul %385, %387, %cst_106 {dimension_numbers = #tpu.dot_dimension_numbers<[1], [0], [0], [1], [0, 0, 1, 1], [], []>} : vector<8x64xf32>, vector<64x512xf32>, vector<8x512xf32> -> vector<8x512xf32>
    %389 = arith.addf %386, %388 : vector<8x512xf32>
    %390 = vector.extract_strided_slice %389 {offsets = [0, 0], sizes = [8, 384], strides = [1, 1]} : vector<8x512xf32> to vector<8x384xf32>
    %391 = arith.negf %390 : vector<8x384xf32>
    %392 = math.exp %391 : vector<8x384xf32>
    %cst_107 = arith.constant 1.000000e+00 : f32
    %393 = vector.broadcast %cst_107 : f32 to vector<8x384xf32>
    %394 = arith.addf %393, %392 : vector<8x384xf32>
    %395 = arith.divf %393, %394 : vector<8x384xf32>
    %396 = vector.extract_strided_slice %395 {offsets = [0, 0], sizes = [8, 64], strides = [1, 1]} : vector<8x384xf32> to vector<8x64xf32>
    %397 = vector.extract_strided_slice %395 {offsets = [0, 128], sizes = [8, 64], strides = [1, 1]} : vector<8x384xf32> to vector<8x64xf32>
    %398 = vector.extract_strided_slice %395 {offsets = [0, 256], sizes = [8, 64], strides = [1, 1]} : vector<8x384xf32> to vector<8x64xf32>
    %399 = vector.extract_strided_slice %389 {offsets = [0, 384], sizes = [8, 64], strides = [1, 1]} : vector<8x512xf32> to vector<8x64xf32>
    %400 = math.tanh %399 : vector<8x64xf32>
    %401 = arith.mulf %397, %383 : vector<8x64xf32>
    %402 = arith.mulf %396, %400 : vector<8x64xf32>
    %403 = arith.addf %401, %402 : vector<8x64xf32>
    %404 = math.tanh %403 : vector<8x64xf32>
    %405 = arith.mulf %398, %404 : vector<8x64xf32>
    %c160 = arith.constant 160 : index
    %c0_108 = arith.constant 0 : index
    %406 = vector.load %arg7[%c160, %c0_108] : memref<224x512xf32, #tpu.memory_space<vmem>>, vector<8x512xf32>
    %c0_109 = arith.constant 0 : index
    %c0_110 = arith.constant 0 : index
    %407 = vector.load %arg3[%c0_109, %c0_110] : memref<64x512xf32, #tpu.memory_space<vmem>>, vector<64x512xf32>
    %cst_111 = arith.constant dense<0.000000e+00> : vector<8x512xf32>
    %408 = tpu.matmul %405, %407, %cst_111 {dimension_numbers = #tpu.dot_dimension_numbers<[1], [0], [0], [1], [0, 0, 1, 1], [], []>} : vector<8x64xf32>, vector<64x512xf32>, vector<8x512xf32> -> vector<8x512xf32>
    %409 = arith.addf %406, %408 : vector<8x512xf32>
    %410 = vector.extract_strided_slice %409 {offsets = [0, 0], sizes = [8, 384], strides = [1, 1]} : vector<8x512xf32> to vector<8x384xf32>
    %411 = arith.negf %410 : vector<8x384xf32>
    %412 = math.exp %411 : vector<8x384xf32>
    %cst_112 = arith.constant 1.000000e+00 : f32
    %413 = vector.broadcast %cst_112 : f32 to vector<8x384xf32>
    %414 = arith.addf %413, %412 : vector<8x384xf32>
    %415 = arith.divf %413, %414 : vector<8x384xf32>
    %416 = vector.extract_strided_slice %415 {offsets = [0, 0], sizes = [8, 64], strides = [1, 1]} : vector<8x384xf32> to vector<8x64xf32>
    %417 = vector.extract_strided_slice %415 {offsets = [0, 128], sizes = [8, 64], strides = [1, 1]} : vector<8x384xf32> to vector<8x64xf32>
    %418 = vector.extract_strided_slice %415 {offsets = [0, 256], sizes = [8, 64], strides = [1, 1]} : vector<8x384xf32> to vector<8x64xf32>
    %419 = vector.extract_strided_slice %409 {offsets = [0, 384], sizes = [8, 64], strides = [1, 1]} : vector<8x512xf32> to vector<8x64xf32>
    %420 = math.tanh %419 : vector<8x64xf32>
    %421 = arith.mulf %417, %403 : vector<8x64xf32>
    %422 = arith.mulf %416, %420 : vector<8x64xf32>
    %423 = arith.addf %421, %422 : vector<8x64xf32>
    %424 = math.tanh %423 : vector<8x64xf32>
    %425 = arith.mulf %418, %424 : vector<8x64xf32>
    %c168 = arith.constant 168 : index
    %c0_113 = arith.constant 0 : index
    %426 = vector.load %arg7[%c168, %c0_113] : memref<224x512xf32, #tpu.memory_space<vmem>>, vector<8x512xf32>
    %c0_114 = arith.constant 0 : index
    %c0_115 = arith.constant 0 : index
    %427 = vector.load %arg3[%c0_114, %c0_115] : memref<64x512xf32, #tpu.memory_space<vmem>>, vector<64x512xf32>
    %cst_116 = arith.constant dense<0.000000e+00> : vector<8x512xf32>
    %428 = tpu.matmul %425, %427, %cst_116 {dimension_numbers = #tpu.dot_dimension_numbers<[1], [0], [0], [1], [0, 0, 1, 1], [], []>} : vector<8x64xf32>, vector<64x512xf32>, vector<8x512xf32> -> vector<8x512xf32>
    %429 = arith.addf %426, %428 : vector<8x512xf32>
    %430 = vector.extract_strided_slice %429 {offsets = [0, 0], sizes = [8, 384], strides = [1, 1]} : vector<8x512xf32> to vector<8x384xf32>
    %431 = arith.negf %430 : vector<8x384xf32>
    %432 = math.exp %431 : vector<8x384xf32>
    %cst_117 = arith.constant 1.000000e+00 : f32
    %433 = vector.broadcast %cst_117 : f32 to vector<8x384xf32>
    %434 = arith.addf %433, %432 : vector<8x384xf32>
    %435 = arith.divf %433, %434 : vector<8x384xf32>
    %436 = vector.extract_strided_slice %435 {offsets = [0, 0], sizes = [8, 64], strides = [1, 1]} : vector<8x384xf32> to vector<8x64xf32>
    %437 = vector.extract_strided_slice %435 {offsets = [0, 128], sizes = [8, 64], strides = [1, 1]} : vector<8x384xf32> to vector<8x64xf32>
    %438 = vector.extract_strided_slice %435 {offsets = [0, 256], sizes = [8, 64], strides = [1, 1]} : vector<8x384xf32> to vector<8x64xf32>
    %439 = vector.extract_strided_slice %429 {offsets = [0, 384], sizes = [8, 64], strides = [1, 1]} : vector<8x512xf32> to vector<8x64xf32>
    %440 = math.tanh %439 : vector<8x64xf32>
    %441 = arith.mulf %437, %423 : vector<8x64xf32>
    %442 = arith.mulf %436, %440 : vector<8x64xf32>
    %443 = arith.addf %441, %442 : vector<8x64xf32>
    %444 = math.tanh %443 : vector<8x64xf32>
    %445 = arith.mulf %438, %444 : vector<8x64xf32>
    %c176 = arith.constant 176 : index
    %c0_118 = arith.constant 0 : index
    %446 = vector.load %arg7[%c176, %c0_118] : memref<224x512xf32, #tpu.memory_space<vmem>>, vector<8x512xf32>
    %c0_119 = arith.constant 0 : index
    %c0_120 = arith.constant 0 : index
    %447 = vector.load %arg3[%c0_119, %c0_120] : memref<64x512xf32, #tpu.memory_space<vmem>>, vector<64x512xf32>
    %cst_121 = arith.constant dense<0.000000e+00> : vector<8x512xf32>
    %448 = tpu.matmul %445, %447, %cst_121 {dimension_numbers = #tpu.dot_dimension_numbers<[1], [0], [0], [1], [0, 0, 1, 1], [], []>} : vector<8x64xf32>, vector<64x512xf32>, vector<8x512xf32> -> vector<8x512xf32>
    %449 = arith.addf %446, %448 : vector<8x512xf32>
    %450 = vector.extract_strided_slice %449 {offsets = [0, 0], sizes = [8, 384], strides = [1, 1]} : vector<8x512xf32> to vector<8x384xf32>
    %451 = arith.negf %450 : vector<8x384xf32>
    %452 = math.exp %451 : vector<8x384xf32>
    %cst_122 = arith.constant 1.000000e+00 : f32
    %453 = vector.broadcast %cst_122 : f32 to vector<8x384xf32>
    %454 = arith.addf %453, %452 : vector<8x384xf32>
    %455 = arith.divf %453, %454 : vector<8x384xf32>
    %456 = vector.extract_strided_slice %455 {offsets = [0, 0], sizes = [8, 64], strides = [1, 1]} : vector<8x384xf32> to vector<8x64xf32>
    %457 = vector.extract_strided_slice %455 {offsets = [0, 128], sizes = [8, 64], strides = [1, 1]} : vector<8x384xf32> to vector<8x64xf32>
    %458 = vector.extract_strided_slice %455 {offsets = [0, 256], sizes = [8, 64], strides = [1, 1]} : vector<8x384xf32> to vector<8x64xf32>
    %459 = vector.extract_strided_slice %449 {offsets = [0, 384], sizes = [8, 64], strides = [1, 1]} : vector<8x512xf32> to vector<8x64xf32>
    %460 = math.tanh %459 : vector<8x64xf32>
    %461 = arith.mulf %457, %443 : vector<8x64xf32>
    %462 = arith.mulf %456, %460 : vector<8x64xf32>
    %463 = arith.addf %461, %462 : vector<8x64xf32>
    %464 = math.tanh %463 : vector<8x64xf32>
    %465 = arith.mulf %458, %464 : vector<8x64xf32>
    %c184 = arith.constant 184 : index
    %c0_123 = arith.constant 0 : index
    %466 = vector.load %arg7[%c184, %c0_123] : memref<224x512xf32, #tpu.memory_space<vmem>>, vector<8x512xf32>
    %c0_124 = arith.constant 0 : index
    %c0_125 = arith.constant 0 : index
    %467 = vector.load %arg3[%c0_124, %c0_125] : memref<64x512xf32, #tpu.memory_space<vmem>>, vector<64x512xf32>
    %cst_126 = arith.constant dense<0.000000e+00> : vector<8x512xf32>
    %468 = tpu.matmul %465, %467, %cst_126 {dimension_numbers = #tpu.dot_dimension_numbers<[1], [0], [0], [1], [0, 0, 1, 1], [], []>} : vector<8x64xf32>, vector<64x512xf32>, vector<8x512xf32> -> vector<8x512xf32>
    %469 = arith.addf %466, %468 : vector<8x512xf32>
    %470 = vector.extract_strided_slice %469 {offsets = [0, 0], sizes = [8, 384], strides = [1, 1]} : vector<8x512xf32> to vector<8x384xf32>
    %471 = arith.negf %470 : vector<8x384xf32>
    %472 = math.exp %471 : vector<8x384xf32>
    %cst_127 = arith.constant 1.000000e+00 : f32
    %473 = vector.broadcast %cst_127 : f32 to vector<8x384xf32>
    %474 = arith.addf %473, %472 : vector<8x384xf32>
    %475 = arith.divf %473, %474 : vector<8x384xf32>
    %476 = vector.extract_strided_slice %475 {offsets = [0, 0], sizes = [8, 64], strides = [1, 1]} : vector<8x384xf32> to vector<8x64xf32>
    %477 = vector.extract_strided_slice %475 {offsets = [0, 128], sizes = [8, 64], strides = [1, 1]} : vector<8x384xf32> to vector<8x64xf32>
    %478 = vector.extract_strided_slice %475 {offsets = [0, 256], sizes = [8, 64], strides = [1, 1]} : vector<8x384xf32> to vector<8x64xf32>
    %479 = vector.extract_strided_slice %469 {offsets = [0, 384], sizes = [8, 64], strides = [1, 1]} : vector<8x512xf32> to vector<8x64xf32>
    %480 = math.tanh %479 : vector<8x64xf32>
    %481 = arith.mulf %477, %463 : vector<8x64xf32>
    %482 = arith.mulf %476, %480 : vector<8x64xf32>
    %483 = arith.addf %481, %482 : vector<8x64xf32>
    %484 = math.tanh %483 : vector<8x64xf32>
    %485 = arith.mulf %478, %484 : vector<8x64xf32>
    %c192 = arith.constant 192 : index
    %c0_128 = arith.constant 0 : index
    %486 = vector.load %arg7[%c192, %c0_128] : memref<224x512xf32, #tpu.memory_space<vmem>>, vector<8x512xf32>
    %c0_129 = arith.constant 0 : index
    %c0_130 = arith.constant 0 : index
    %487 = vector.load %arg3[%c0_129, %c0_130] : memref<64x512xf32, #tpu.memory_space<vmem>>, vector<64x512xf32>
    %cst_131 = arith.constant dense<0.000000e+00> : vector<8x512xf32>
    %488 = tpu.matmul %485, %487, %cst_131 {dimension_numbers = #tpu.dot_dimension_numbers<[1], [0], [0], [1], [0, 0, 1, 1], [], []>} : vector<8x64xf32>, vector<64x512xf32>, vector<8x512xf32> -> vector<8x512xf32>
    %489 = arith.addf %486, %488 : vector<8x512xf32>
    %490 = vector.extract_strided_slice %489 {offsets = [0, 0], sizes = [8, 384], strides = [1, 1]} : vector<8x512xf32> to vector<8x384xf32>
    %491 = arith.negf %490 : vector<8x384xf32>
    %492 = math.exp %491 : vector<8x384xf32>
    %cst_132 = arith.constant 1.000000e+00 : f32
    %493 = vector.broadcast %cst_132 : f32 to vector<8x384xf32>
    %494 = arith.addf %493, %492 : vector<8x384xf32>
    %495 = arith.divf %493, %494 : vector<8x384xf32>
    %496 = vector.extract_strided_slice %495 {offsets = [0, 0], sizes = [8, 64], strides = [1, 1]} : vector<8x384xf32> to vector<8x64xf32>
    %497 = vector.extract_strided_slice %495 {offsets = [0, 128], sizes = [8, 64], strides = [1, 1]} : vector<8x384xf32> to vector<8x64xf32>
    %498 = vector.extract_strided_slice %495 {offsets = [0, 256], sizes = [8, 64], strides = [1, 1]} : vector<8x384xf32> to vector<8x64xf32>
    %499 = vector.extract_strided_slice %489 {offsets = [0, 384], sizes = [8, 64], strides = [1, 1]} : vector<8x512xf32> to vector<8x64xf32>
    %500 = math.tanh %499 : vector<8x64xf32>
    %501 = arith.mulf %497, %483 : vector<8x64xf32>
    %502 = arith.mulf %496, %500 : vector<8x64xf32>
    %503 = arith.addf %501, %502 : vector<8x64xf32>
    %504 = math.tanh %503 : vector<8x64xf32>
    %505 = arith.mulf %498, %504 : vector<8x64xf32>
    %c200 = arith.constant 200 : index
    %c0_133 = arith.constant 0 : index
    %506 = vector.load %arg7[%c200, %c0_133] : memref<224x512xf32, #tpu.memory_space<vmem>>, vector<8x512xf32>
    %c0_134 = arith.constant 0 : index
    %c0_135 = arith.constant 0 : index
    %507 = vector.load %arg3[%c0_134, %c0_135] : memref<64x512xf32, #tpu.memory_space<vmem>>, vector<64x512xf32>
    %cst_136 = arith.constant dense<0.000000e+00> : vector<8x512xf32>
    %508 = tpu.matmul %505, %507, %cst_136 {dimension_numbers = #tpu.dot_dimension_numbers<[1], [0], [0], [1], [0, 0, 1, 1], [], []>} : vector<8x64xf32>, vector<64x512xf32>, vector<8x512xf32> -> vector<8x512xf32>
    %509 = arith.addf %506, %508 : vector<8x512xf32>
    %510 = vector.extract_strided_slice %509 {offsets = [0, 0], sizes = [8, 384], strides = [1, 1]} : vector<8x512xf32> to vector<8x384xf32>
    %511 = arith.negf %510 : vector<8x384xf32>
    %512 = math.exp %511 : vector<8x384xf32>
    %cst_137 = arith.constant 1.000000e+00 : f32
    %513 = vector.broadcast %cst_137 : f32 to vector<8x384xf32>
    %514 = arith.addf %513, %512 : vector<8x384xf32>
    %515 = arith.divf %513, %514 : vector<8x384xf32>
    %516 = vector.extract_strided_slice %515 {offsets = [0, 0], sizes = [8, 64], strides = [1, 1]} : vector<8x384xf32> to vector<8x64xf32>
    %517 = vector.extract_strided_slice %515 {offsets = [0, 128], sizes = [8, 64], strides = [1, 1]} : vector<8x384xf32> to vector<8x64xf32>
    %518 = vector.extract_strided_slice %515 {offsets = [0, 256], sizes = [8, 64], strides = [1, 1]} : vector<8x384xf32> to vector<8x64xf32>
    %519 = vector.extract_strided_slice %509 {offsets = [0, 384], sizes = [8, 64], strides = [1, 1]} : vector<8x512xf32> to vector<8x64xf32>
    %520 = math.tanh %519 : vector<8x64xf32>
    %521 = arith.mulf %517, %503 : vector<8x64xf32>
    %522 = arith.mulf %516, %520 : vector<8x64xf32>
    %523 = arith.addf %521, %522 : vector<8x64xf32>
    %524 = math.tanh %523 : vector<8x64xf32>
    %525 = arith.mulf %518, %524 : vector<8x64xf32>
    %c208 = arith.constant 208 : index
    %c0_138 = arith.constant 0 : index
    %526 = vector.load %arg7[%c208, %c0_138] : memref<224x512xf32, #tpu.memory_space<vmem>>, vector<8x512xf32>
    %c0_139 = arith.constant 0 : index
    %c0_140 = arith.constant 0 : index
    %527 = vector.load %arg3[%c0_139, %c0_140] : memref<64x512xf32, #tpu.memory_space<vmem>>, vector<64x512xf32>
    %cst_141 = arith.constant dense<0.000000e+00> : vector<8x512xf32>
    %528 = tpu.matmul %525, %527, %cst_141 {dimension_numbers = #tpu.dot_dimension_numbers<[1], [0], [0], [1], [0, 0, 1, 1], [], []>} : vector<8x64xf32>, vector<64x512xf32>, vector<8x512xf32> -> vector<8x512xf32>
    %529 = arith.addf %526, %528 : vector<8x512xf32>
    %530 = vector.extract_strided_slice %529 {offsets = [0, 0], sizes = [8, 384], strides = [1, 1]} : vector<8x512xf32> to vector<8x384xf32>
    %531 = arith.negf %530 : vector<8x384xf32>
    %532 = math.exp %531 : vector<8x384xf32>
    %cst_142 = arith.constant 1.000000e+00 : f32
    %533 = vector.broadcast %cst_142 : f32 to vector<8x384xf32>
    %534 = arith.addf %533, %532 : vector<8x384xf32>
    %535 = arith.divf %533, %534 : vector<8x384xf32>
    %536 = vector.extract_strided_slice %535 {offsets = [0, 0], sizes = [8, 64], strides = [1, 1]} : vector<8x384xf32> to vector<8x64xf32>
    %537 = vector.extract_strided_slice %535 {offsets = [0, 128], sizes = [8, 64], strides = [1, 1]} : vector<8x384xf32> to vector<8x64xf32>
    %538 = vector.extract_strided_slice %535 {offsets = [0, 256], sizes = [8, 64], strides = [1, 1]} : vector<8x384xf32> to vector<8x64xf32>
    %539 = vector.extract_strided_slice %529 {offsets = [0, 384], sizes = [8, 64], strides = [1, 1]} : vector<8x512xf32> to vector<8x64xf32>
    %540 = math.tanh %539 : vector<8x64xf32>
    %541 = arith.mulf %537, %523 : vector<8x64xf32>
    %542 = arith.mulf %536, %540 : vector<8x64xf32>
    %543 = arith.addf %541, %542 : vector<8x64xf32>
    %544 = math.tanh %543 : vector<8x64xf32>
    %545 = arith.mulf %538, %544 : vector<8x64xf32>
    %c216 = arith.constant 216 : index
    %c0_143 = arith.constant 0 : index
    %546 = vector.load %arg7[%c216, %c0_143] : memref<224x512xf32, #tpu.memory_space<vmem>>, vector<8x512xf32>
    %c0_144 = arith.constant 0 : index
    %c0_145 = arith.constant 0 : index
    %547 = vector.load %arg3[%c0_144, %c0_145] : memref<64x512xf32, #tpu.memory_space<vmem>>, vector<64x512xf32>
    %cst_146 = arith.constant dense<0.000000e+00> : vector<8x512xf32>
    %548 = tpu.matmul %545, %547, %cst_146 {dimension_numbers = #tpu.dot_dimension_numbers<[1], [0], [0], [1], [0, 0, 1, 1], [], []>} : vector<8x64xf32>, vector<64x512xf32>, vector<8x512xf32> -> vector<8x512xf32>
    %549 = arith.addf %546, %548 : vector<8x512xf32>
    %550 = vector.extract_strided_slice %549 {offsets = [0, 0], sizes = [8, 384], strides = [1, 1]} : vector<8x512xf32> to vector<8x384xf32>
    %551 = arith.negf %550 : vector<8x384xf32>
    %552 = math.exp %551 : vector<8x384xf32>
    %cst_147 = arith.constant 1.000000e+00 : f32
    %553 = vector.broadcast %cst_147 : f32 to vector<8x384xf32>
    %554 = arith.addf %553, %552 : vector<8x384xf32>
    %555 = arith.divf %553, %554 : vector<8x384xf32>
    %556 = vector.extract_strided_slice %555 {offsets = [0, 0], sizes = [8, 64], strides = [1, 1]} : vector<8x384xf32> to vector<8x64xf32>
    %557 = vector.extract_strided_slice %555 {offsets = [0, 128], sizes = [8, 64], strides = [1, 1]} : vector<8x384xf32> to vector<8x64xf32>
    %558 = vector.extract_strided_slice %555 {offsets = [0, 256], sizes = [8, 64], strides = [1, 1]} : vector<8x384xf32> to vector<8x64xf32>
    %559 = vector.extract_strided_slice %549 {offsets = [0, 384], sizes = [8, 64], strides = [1, 1]} : vector<8x512xf32> to vector<8x64xf32>
    %560 = math.tanh %559 : vector<8x64xf32>
    %561 = arith.mulf %557, %543 : vector<8x64xf32>
    %562 = arith.mulf %556, %560 : vector<8x64xf32>
    %563 = arith.addf %561, %562 : vector<8x64xf32>
    %564 = math.tanh %563 : vector<8x64xf32>
    %565 = arith.mulf %558, %564 : vector<8x64xf32>
    %c0_148 = arith.constant 0 : index
    %c0_149 = arith.constant 0 : index
    %566 = vector.load %arg4[%c0_148, %c0_149] : memref<64x128xf32, #tpu.memory_space<vmem>>, vector<64x128xf32>
    %cst_150 = arith.constant dense<0.000000e+00> : vector<8x128xf32>
    %567 = tpu.matmul %565, %566, %cst_150 {dimension_numbers = #tpu.dot_dimension_numbers<[1], [0], [0], [1], [0, 0, 1, 1], [], []>} : vector<8x64xf32>, vector<64x128xf32>, vector<8x128xf32> -> vector<8x128xf32>
    %c0_151 = arith.constant 0 : index
    %c0_152 = arith.constant 0 : index
    %568 = vector.load %arg5[%c0_151, %c0_152] : memref<1x128xf32, #tpu.memory_space<vmem>>, vector<1x128xf32>
    %569 = vector.broadcast %568 : vector<1x128xf32> to vector<8x128xf32>
    %570 = arith.addf %567, %569 : vector<8x128xf32>
    %571 = tpu.iota {dimensions = array<i32: 1>} : vector<8x128xi32>
    %c10_i32 = arith.constant 10 : i32
    %572 = vector.broadcast %c10_i32 : i32 to vector<8x128xi32>
    %573 = arith.cmpi slt, %571, %572 : vector<8x128xi32>
    %cst_153 = arith.constant -1.000000e+30 : f32
    %574 = vector.broadcast %cst_153 : f32 to vector<8x128xf32>
    %575 = arith.select %573, %570, %574 : vector<8x128xi1>, vector<8x128xf32>
    %cst_154 = arith.constant dense<0xFF800000> : vector<8xf32>
    %576 = vector.multi_reduction <maximumf>, %575, %cst_154 [1] : vector<8x128xf32> to vector<8xf32>
    %577 = vector.shape_cast %576 : vector<8xf32> to vector<8x1xf32>
    %578 = vector.broadcast %577 : vector<8x1xf32> to vector<8x128xf32>
    %579 = arith.subf %575, %578 : vector<8x128xf32>
    %580 = math.exp %579 : vector<8x128xf32>
    %cst_155 = arith.constant dense<0.000000e+00> : vector<8xf32>
    %581 = vector.multi_reduction <add>, %580, %cst_155 [1] : vector<8x128xf32> to vector<8xf32>
    %582 = vector.shape_cast %581 : vector<8xf32> to vector<8x1xf32>
    %583 = vector.broadcast %577 : vector<8x1xf32> to vector<8x128xf32>
    %584 = arith.subf %575, %583 : vector<8x128xf32>
    %585 = math.log %582 : vector<8x1xf32>
    %586 = vector.broadcast %585 : vector<8x1xf32> to vector<8x128xf32>
    %587 = arith.subf %584, %586 : vector<8x128xf32>
    %c0_156 = arith.constant 0 : index
    %c0_157 = arith.constant 0 : index
    %588 = vector.load %arg6[%c0_156, %c0_157] : memref<8x128xf32, #tpu.memory_space<vmem>>, vector<8x128xf32>
    tpu.vector_store %arg6[%c0_156, %c0_157], %587 {strides = array<i32>} : memref<8x128xf32, #tpu.memory_space<vmem>>, vector<8x128xf32>,
    return
  }
  func.func @transform_0(%arg0: i32) -> (i32, i32) {
    %c0_i32 = arith.constant 0 : i32
    %c0_i32_0 = arith.constant 0 : i32
    %c0_i32_1 = arith.constant 0 : i32
    return %c0_i32, %c0_i32_0 : i32, i32
  }
  func.func @transform_1(%arg0: i32) -> (i32, i32) {
    %c0_i32 = arith.constant 0 : i32
    %c0_i32_0 = arith.constant 0 : i32
    %c0_i32_1 = arith.constant 0 : i32
    return %c0_i32, %c0_i32_0 : i32, i32
  }
  func.func @transform_2(%arg0: i32) -> (i32, i32) {
    %c0_i32 = arith.constant 0 : i32
    %c0_i32_0 = arith.constant 0 : i32
    %c0_i32_1 = arith.constant 0 : i32
    return %c0_i32, %c0_i32_0 : i32, i32
  }
  func.func @transform_3(%arg0: i32) -> (i32, i32) {
    %c0_i32 = arith.constant 0 : i32
    %c0_i32_0 = arith.constant 0 : i32
    %c0_i32_1 = arith.constant 0 : i32
    return %c0_i32, %c0_i32_0 : i32, i32
  }
  func.func @transform_4(%arg0: i32) -> (i32, i32) {
    %c0_i32 = arith.constant 0 : i32
    %c0_i32_0 = arith.constant 0 : i32
    %c0_i32_1 = arith.constant 0 : i32
    return %c0_i32, %c0_i32_0 : i32, i32
  }
  func.func @transform_5(%arg0: i32) -> (i32, i32) {
    %c0_i32 = arith.constant 0 : i32
    %c0_i32_0 = arith.constant 0 : i32
    %c0_i32_1 = arith.constant 0 : i32
    return %c0_i32, %c0_i32_0 : i32, i32
  }
}

</mosaic_0001>

<llo_original>
// kernel: rnn_forward.1
$region0: #{rnn_forward.1}
  #allocation0 [shape = 'u32[]', space=smem, size = 0x4, offset = 0x4, fixed_abs, tag = 'smem constant byte address 0x4 - core index']
  #allocation1 [shape = 'u32[144,128]{1,0:T(1,128)}', space=vmem, size = 0x12000, scoped, tag = 'internal scratch']
  #allocation2 [shape = 'f32[224,512]{1,0:T(8,128)}', space=vmem, size = 0x70000, scoped, tag = 'scratch operand']
  %s0 = inlined_call_operand.vmem [shape: f32[224,29], index: 0, kind: input, shape index: {}]
  %s1 = inlined_call_operand.vmem [shape: f32[29,512], index: 1, kind: input, shape index: {}]
  %s2 = inlined_call_operand.vmem [shape: f32[64,512], index: 2, kind: input, shape index: {}]
  %s3 = inlined_call_operand.vmem [shape: f32[64,128], index: 3, kind: input, shape index: {}]
  %s4 = inlined_call_operand.vmem [shape: f32[1,128], index: 4, kind: input, shape index: {}]
  %s5 = inlined_call_operand.vmem [shape: f32[8,128], index: 5, kind: output, shape index: {}]
  %s6 = sld [smem:[#allocation0]]
  $region30: #{rnn_forward.1} parent=0
    _
  %s8 = ssub.s32 1, %s6
  %s9 = scalar_select 0, %s8, %s6
  // Predicated region
  $region2: #{rnn_forward.1} parent=0 // pred_check
    _
  $region3: #{rnn_forward.1} parent=0 // pred_check_branch
    %11 = sbr.rel (0) target = $region5
  $region4: #{rnn_forward.1} parent=0 // pred_region
    _
  $region5: #{rnn_forward.1} parent=0 // pred_fallthru
    _
  // Predicated region
  $region6: #{rnn_forward.1} parent=0 // pred_check
    _
  $region7: #{rnn_forward.1} parent=0 // pred_check_branch
    %13 = sbr.rel (0) target = $region9
  $region8: #{rnn_forward.1} parent=0 // pred_region
    _
  $region9: #{rnn_forward.1} parent=0 // pred_fallthru
    _
  // Predicated region
  $region10: #{rnn_forward.1} parent=0 // pred_check
    _
  $region11: #{rnn_forward.1} parent=0 // pred_check_branch
    %15 = sbr.rel (0) target = $region13
  $region12: #{rnn_forward.1} parent=0 // pred_region
    _
  $region13: #{rnn_forward.1} parent=0 // pred_fallthru
    _
  // Predicated region
  $region14: #{rnn_forward.1} parent=0 // pred_check
    _
  $region15: #{rnn_forward.1} parent=0 // pred_check_branch
    %17 = sbr.rel (0) target = $region17
  $region16: #{rnn_forward.1} parent=0 // pred_region
    _
  $region17: #{rnn_forward.1} parent=0 // pred_fallthru
    _
  // Predicated region
  $region18: #{rnn_forward.1} parent=0 // pred_check
    _
  $region19: #{rnn_forward.1} parent=0 // pred_check_branch
    %19 = sbr.rel (0) target = $region21
  $region20: #{rnn_forward.1} parent=0 // pred_region
    _
  $region21: #{rnn_forward.1} parent=0 // pred_fallthru
    _
  %v20 = vld [vmem:[%s0] sm:$0xff]
  %v21 = vld [vmem:[%s0 + $0x8] sm:$0xff]
  %v22 = vld [vmem:[%s0 + $0x10] sm:$0xff]
  %v23 = vld [vmem:[%s0 + $0x18] sm:$0xff]
  %v24 = vld [vmem:[%s0 + $0x20] sm:$0xff]
  %v25 = vld [vmem:[%s0 + $0x28] sm:$0xff]
  %v26 = vld [vmem:[%s0 + $0x30] sm:$0xff]
  %v27 = vld [vmem:[%s0 + $0x38] sm:$0xff]
  %v28 = vld [vmem:[%s0 + $0x40] sm:$0xff]
  %v29 = vld [vmem:[%s0 + $0x48] sm:$0xff]
  %v30 = vld [vmem:[%s0 + $0x50] sm:$0xff]
  %v31 = vld [vmem:[%s0 + $0x58] sm:$0xff]
  %v32 = vld [vmem:[%s0 + $0x60] sm:$0xff]
  %v33 = vld [vmem:[%s0 + $0x68] sm:$0xff]
  %v34 = vld [vmem:[%s0 + $0x70] sm:$0xff]
  %v35 = vld [vmem:[%s0 + $0x78] sm:$0xff]
  %v36 = vld [vmem:[%s0 + $0x80] sm:$0xff]
  %v37 = vld [vmem:[%s0 + $0x88] sm:$0xff]
  %v38 = vld [vmem:[%s0 + $0x90] sm:$0xff]
  %v39 = vld [vmem:[%s0 + $0x98] sm:$0xff]
  %v40 = vld [vmem:[%s0 + $0xa0] sm:$0xff]
  %v41 = vld [vmem:[%s0 + $0xa8] sm:$0xff]
  %v42 = vld [vmem:[%s0 + $0xb0] sm:$0xff]
  %v43 = vld [vmem:[%s0 + $0xb8] sm:$0xff]
  %v44 = vld [vmem:[%s0 + $0xc0] sm:$0xff]
  %v45 = vld [vmem:[%s0 + $0xc8] sm:$0xff]
  %v46 = vld [vmem:[%s0 + $0xd0] sm:$0xff]
  %v47 = vld [vmem:[%s0 + $0xd8] sm:$0xff]
  %v48 = vld [vmem:[%s1] sm:$0xff]
  %v49 = vld [vmem:[%s1 + $0x8] sm:$0xff]
  %v50 = vld [vmem:[%s1 + $0x10] sm:$0xff]
  %v51 = vld [vmem:[%s1 + $0x18] sm:$0xff]
  %v52 = vld [vmem:[%s1 + $0x20] sm:$0xff]
  %v53 = vld [vmem:[%s1 + $0x28] sm:$0xff]
  %v54 = vld [vmem:[%s1 + $0x30] sm:$0xff]
  %v55 = vld [vmem:[%s1 + $0x38] sm:$0xff]
  %v56 = vld [vmem:[%s1 + $0x40] sm:$0xff]
  %v57 = vld [vmem:[%s1 + $0x48] sm:$0xff]
  %v58 = vld [vmem:[%s1 + $0x50] sm:$0xff]
  %v59 = vld [vmem:[%s1 + $0x58] sm:$0xff]
  %v60 = vld [vmem:[%s1 + $0x60] sm:$0x1f]
  %v61 = vld [vmem:[%s1 + $0x68] sm:$0x1f]
  %v62 = vld [vmem:[%s1 + $0x70] sm:$0x1f]
  %v63 = vld [vmem:[%s1 + $0x78] sm:$0x1f]
  %vm64 = vcmask 236544
  %v66 = vsel %vm64, %v20, 0
  %v69 = vsel %vm64, %v21, 0
  %v72 = vsel %vm64, %v22, 0
  %v75 = vsel %vm64, %v23, 0
  %v78 = vsel %vm64, %v24, 0
  %v81 = vsel %vm64, %v25, 0
  %v84 = vsel %vm64, %v26, 0
  %v87 = vsel %vm64, %v27, 0
  %v90 = vsel %vm64, %v28, 0
  %v93 = vsel %vm64, %v29, 0
  %v96 = vsel %vm64, %v30, 0
  %v99 = vsel %vm64, %v31, 0
  %v102 = vsel %vm64, %v32, 0
  %v105 = vsel %vm64, %v33, 0
  %v108 = vsel %vm64, %v34, 0
  %v111 = vsel %vm64, %v35, 0
  %v114 = vsel %vm64, %v36, 0
  %v117 = vsel %vm64, %v37, 0
  %v120 = vsel %vm64, %v38, 0
  %v123 = vsel %vm64, %v39, 0
  %v126 = vsel %vm64, %v40, 0
  %v129 = vsel %vm64, %v41, 0
  %v132 = vsel %vm64, %v42, 0
  %v135 = vsel %vm64, %v43, 0
  %v138 = vsel %vm64, %v44, 0
  %v141 = vsel %vm64, %v45, 0
  %v144 = vsel %vm64, %v46, 0
  %v147 = vsel %vm64, %v47, 0
  %vm149 = vcmask 1044480
  %v151 = vsel %vm149, %v60, 0
  %v154 = vsel %vm149, %v61, 0
  %v157 = vsel %vm149, %v62, 0
  %v160 = vsel %vm149, %v63, 0
  %162 = vmatprep.subr.mxu0 %v49
  %163 = vmatpush1.msra.mxu0 %v48
  %164 = vmatprep.subr.mxu0 %v53
  %165 = vmatpush1.msra.mxu0 %v52
  %166 = vmatprep.subr.mxu0 %v57
  %167 = vmatpush1.msra.mxu0 %v56
  %168 = vmatprep.subr.mxu0 %v154
  %169 = vmatpush1.msra.mxu0 %v151
  %170 = vmatprep.subr.mxu0 0.0
  %171 = vmatpush1.msra.mxu0 0.0
  %172 = vmatprep.subr.mxu0 0.0
  %173 = vmatpush1.msra.mxu0 0.0
  %174 = vmatprep.subr.mxu0 0.0
  %175 = vmatpush1.msra.mxu0 0.0
  %176 = vmatprep.subr.mxu0 0.0
  %177 = vmatpush1.msra.mxu0 0.0
  %178 = vmatprep.subr.mxu0 0.0
  %179 = vmatpush1.msra.mxu0 0.0
  %180 = vmatprep.subr.mxu0 0.0
  %181 = vmatpush1.msra.mxu0 0.0
  %182 = vmatprep.subr.mxu0 0.0
  %183 = vmatpush1.msra.mxu0 0.0
  %184 = vmatprep.subr.mxu0 0.0
  %185 = vmatpush1.msra.mxu0 0.0
  %186 = vmatprep.subr.mxu0 0.0
  %187 = vmatpush1.msra.mxu0 0.0
  %188 = vmatprep.subr.mxu0 0.0
  %189 = vmatpush1.msra.mxu0 0.0
  %190 = vmatprep.subr.mxu0 0.0
  %191 = vmatpush1.msra.mxu0 0.0
  %192 = vmatprep.subr.mxu0 0.0
  %193 = vmatpush1.msra.mxu0 0.0
  %194 = vmatprep.subr.mxu0 0.0
  %195 = vmatpush1.msra.mxu0 0.0
  %196 = vmatprep.subr.mxu0 0.0
  %197 = vmatpush1.msra.mxu0 0.0
  %198 = vmatprep.subr.mxu0 0.0
  %199 = vmatpush1.msra.mxu0 0.0
  %200 = vmatprep.subr.mxu0 0.0
  %201 = vmatpush1.msra.mxu0 0.0
  %202 = vmatprep.subr.mxu0 0.0
  %203 = vmatpush1.msra.mxu0 0.0
  %204 = vmatprep.subr.mxu0 0.0
  %205 = vmatpush1.msra.mxu0 0.0
  %206 = vmatprep.subr.mxu0 0.0
  %207 = vmatpush1.msra.mxu0 0.0
  %208 = vmatprep.subr.mxu0 0.0
  %209 = vmatpush1.msra.mxu0 0.0
  %210 = vmatprep.subr.mxu0 0.0
  %211 = vmatpush1.msra.mxu0 0.0
  %212 = vmatprep.subr.mxu0 0.0
  %213 = vmatpush1.msra.mxu0 0.0
  %214 = vmatprep.subr.mxu0 0.0
  %215 = vmatpush1.msra.mxu0 0.0
  %216 = vmatprep.subr.mxu0 0.0
  %217 = vmatpush1.msra.mxu0 0.0
  %218 = vmatprep.subr.mxu0 0.0
  %219 = vmatpush1.msra.mxu0 0.0
  %220 = vmatprep.subr.mxu0 0.0
  %221 = vmatpush1.msra.mxu0 0.0
  %222 = vmatprep.subr.mxu0 0.0
  %223 = vmatpush1.msra.mxu0 0.0
  %224 = vmatprep.subr.mxu0 0.0
  %225 = vmatpush1.msra.mxu0 0.0
  %226 = vmatprep.mubr.f32.mxu0 0.0
  %227 = vmatmul.mubr.f32.gmra.mrb[0].mxu0 %v66
  %v228 = vpop.f32.mrb[0].mxu0
  %v229 = vadd.f32 0.0, %v228
  %v230 = vpop.f32.mrb[0].mxu0
  %v231 = vadd.f32 0.0, %v230
  %232 = vmatprep.mubr.f32.mxu0 0.0
  %233 = vmatmul.mubr.f32.gmra.mrb[0].mxu0 %v69
  %v234 = vpop.f32.mrb[0].mxu0
  %v235 = vadd.f32 0.0, %v234
  %v236 = vpop.f32.mrb[0].mxu0
  %v237 = vadd.f32 0.0, %v236
  %238 = vmatprep.mubr.f32.mxu0 0.0
  %239 = vmatmul.mubr.f32.gmra.mrb[0].mxu0 %v72
  %v240 = vpop.f32.mrb[0].mxu0
  %v241 = vadd.f32 0.0, %v240
  %v242 = vpop.f32.mrb[0].mxu0
  %v243 = vadd.f32 0.0, %v242
  %244 = vmatprep.mubr.f32.mxu0 0.0
  %245 = vmatmul.mubr.f32.gmra.mrb[0].mxu0 %v75
  %v246 = vpop.f32.mrb[0].mxu0
  %v247 = vadd.f32 0.0, %v246
  %v248 = vpop.f32.mrb[0].mxu0
  %v249 = vadd.f32 0.0, %v248
  %250 = vmatprep.mubr.f32.mxu0 0.0
  %251 = vmatmul.mubr.f32.gmra.mrb[0].mxu0 %v78
  %v252 = vpop.f32.mrb[0].mxu0
  %v253 = vadd.f32 0.0, %v252
  %v254 = vpop.f32.mrb[0].mxu0
  %v255 = vadd.f32 0.0, %v254
  %256 = vmatprep.mubr.f32.mxu0 0.0
  %257 = vmatmul.mubr.f32.gmra.mrb[0].mxu0 %v81
  %v258 = vpop.f32.mrb[0].mxu0
  %v259 = vadd.f32 0.0, %v258
  %v260 = vpop.f32.mrb[0].mxu0
  %v261 = vadd.f32 0.0, %v260
  %262 = vmatprep.mubr.f32.mxu0 0.0
  %263 = vmatmul.mubr.f32.gmra.mrb[0].mxu0 %v84
  %v264 = vpop.f32.mrb[0].mxu0
  %v265 = vadd.f32 0.0, %v264
  %v266 = vpop.f32.mrb[0].mxu0
  %v267 = vadd.f32 0.0, %v266
  %268 = vmatprep.mubr.f32.mxu0 0.0
  %269 = vmatmul.mubr.f32.gmra.mrb[0].mxu0 %v87
  %v270 = vpop.f32.mrb[0].mxu0
  %v271 = vadd.f32 0.0, %v270
  %v272 = vpop.f32.mrb[0].mxu0
  %v273 = vadd.f32 0.0, %v272
  %274 = vmatprep.mubr.f32.mxu0 0.0
  %275 = vmatmul.mubr.f32.gmra.mrb[0].mxu0 %v90
  %v276 = vpop.f32.mrb[0].mxu0
  %v277 = vadd.f32 0.0, %v276
  %v278 = vpop.f32.mrb[0].mxu0
  %v279 = vadd.f32 0.0, %v278
  %280 = vmatprep.mubr.f32.mxu0 0.0
  %281 = vmatmul.mubr.f32.gmra.mrb[0].mxu0 %v93
  %v282 = vpop.f32.mrb[0].mxu0
  %v283 = vadd.f32 0.0, %v282
  %v284 = vpop.f32.mrb[0].mxu0
  %v285 = vadd.f32 0.0, %v284
  %286 = vmatprep.mubr.f32.mxu0 0.0
  %287 = vmatmul.mubr.f32.gmra.mrb[0].mxu0 %v96
  %v288 = vpop.f32.mrb[0].mxu0
  %v289 = vadd.f32 0.0, %v288
  %v290 = vpop.f32.mrb[0].mxu0
  %v291 = vadd.f32 0.0, %v290
  %292 = vmatprep.mubr.f32.mxu0 0.0
  %293 = vmatmul.mubr.f32.gmra.mrb[0].mxu0 %v99
  %v294 = vpop.f32.mrb[0].mxu0
  %v295 = vadd.f32 0.0, %v294
  %v296 = vpop.f32.mrb[0].mxu0
  %v297 = vadd.f32 0.0, %v296
  %298 = vmatprep.mubr.f32.mxu0 0.0
  %299 = vmatmul.mubr.f32.gmra.mrb[0].mxu0 %v102
  %v300 = vpop.f32.mrb[0].mxu0
  %v301 = vadd.f32 0.0, %v300
  %v302 = vpop.f32.mrb[0].mxu0
  %v303 = vadd.f32 0.0, %v302
  %304 = vmatprep.mubr.f32.mxu0 0.0
  %305 = vmatmul.mubr.f32.gmra.mrb[0].mxu0 %v105
  %v306 = vpop.f32.mrb[0].mxu0
  %v307 = vadd.f32 0.0, %v306
  %v308 = vpop.f32.mrb[0].mxu0
  %v309 = vadd.f32 0.0, %v308
  %310 = vmatprep.mubr.f32.mxu0 0.0
  %311 = vmatmul.mubr.f32.gmra.mrb[0].mxu0 %v108
  %v312 = vpop.f32.mrb[0].mxu0
  %v313 = vadd.f32 0.0, %v312
  %v314 = vpop.f32.mrb[0].mxu0
  %v315 = vadd.f32 0.0, %v314
  %316 = vmatprep.mubr.f32.mxu0 0.0
  %317 = vmatmul.mubr.f32.gmra.mrb[0].mxu0 %v111
  %v318 = vpop.f32.mrb[0].mxu0
  %v319 = vadd.f32 0.0, %v318
  %v320 = vpop.f32.mrb[0].mxu0
  %v321 = vadd.f32 0.0, %v320
  %322 = vmatprep.mubr.f32.mxu0 0.0
  %323 = vmatmul.mubr.f32.gmra.mrb[0].mxu0 %v114
  %v324 = vpop.f32.mrb[0].mxu0
  %v325 = vadd.f32 0.0, %v324
  %v326 = vpop.f32.mrb[0].mxu0
  %v327 = vadd.f32 0.0, %v326
  %328 = vmatprep.mubr.f32.mxu0 0.0
  %329 = vmatmul.mubr.f32.gmra.mrb[0].mxu0 %v117
  %v330 = vpop.f32.mrb[0].mxu0
  %v331 = vadd.f32 0.0, %v330
  %v332 = vpop.f32.mrb[0].mxu0
  %v333 = vadd.f32 0.0, %v332
  %334 = vmatprep.mubr.f32.mxu0 0.0
  %335 = vmatmul.mubr.f32.gmra.mrb[0].mxu0 %v120
  %v336 = vpop.f32.mrb[0].mxu0
  %v337 = vadd.f32 0.0, %v336
  %v338 = vpop.f32.mrb[0].mxu0
  %v339 = vadd.f32 0.0, %v338
  %340 = vmatprep.mubr.f32.mxu0 0.0
  %341 = vmatmul.mubr.f32.gmra.mrb[0].mxu0 %v123
  %v342 = vpop.f32.mrb[0].mxu0
  %v343 = vadd.f32 0.0, %v342
  %v344 = vpop.f32.mrb[0].mxu0
  %v345 = vadd.f32 0.0, %v344
  %346 = vmatprep.mubr.f32.mxu0 0.0
  %347 = vmatmul.mubr.f32.gmra.mrb[0].mxu0 %v126
  %v348 = vpop.f32.mrb[0].mxu0
  %v349 = vadd.f32 0.0, %v348
  %v350 = vpop.f32.mrb[0].mxu0
  %v351 = vadd.f32 0.0, %v350
  %352 = vmatprep.mubr.f32.mxu0 0.0
  %353 = vmatmul.mubr.f32.gmra.mrb[0].mxu0 %v129
  %v354 = vpop.f32.mrb[0].mxu0
  %v355 = vadd.f32 0.0, %v354
  %v356 = vpop.f32.mrb[0].mxu0
  %v357 = vadd.f32 0.0, %v356
  %358 = vmatprep.mubr.f32.mxu0 0.0
  %359 = vmatmul.mubr.f32.gmra.mrb[0].mxu0 %v132
  %v360 = vpop.f32.mrb[0].mxu0
  %v361 = vadd.f32 0.0, %v360
  %v362 = vpop.f32.mrb[0].mxu0
  %v363 = vadd.f32 0.0, %v362
  %364 = vmatprep.mubr.f32.mxu0 0.0
  %365 = vmatmul.mubr.f32.gmra.mrb[0].mxu0 %v135
  %v366 = vpop.f32.mrb[0].mxu0
  %v367 = vadd.f32 0.0, %v366
  %v368 = vpop.f32.mrb[0].mxu0
  %v369 = vadd.f32 0.0, %v368
  %370 = vmatprep.mubr.f32.mxu0 0.0
  %371 = vmatmul.mubr.f32.gmra.mrb[0].mxu0 %v138
  %v372 = vpop.f32.mrb[0].mxu0
  %v373 = vadd.f32 0.0, %v372
  %v374 = vpop.f32.mrb[0].mxu0
  %v375 = vadd.f32 0.0, %v374
  %376 = vmatprep.mubr.f32.mxu0 0.0
  %377 = vmatmul.mubr.f32.gmra.mrb[0].mxu0 %v141
  %v378 = vpop.f32.mrb[0].mxu0
  %v379 = vadd.f32 0.0, %v378
  %v380 = vpop.f32.mrb[0].mxu0
  %v381 = vadd.f32 0.0, %v380
  %382 = vmatprep.mubr.f32.mxu0 0.0
  %383 = vmatmul.mubr.f32.gmra.mrb[0].mxu0 %v144
  %v384 = vpop.f32.mrb[0].mxu0
  %v385 = vadd.f32 0.0, %v384
  %v386 = vpop.f32.mrb[0].mxu0
  %v387 = vadd.f32 0.0, %v386
  %388 = vmatprep.mubr.f32.mxu0 0.0
  %389 = vmatmul.mubr.f32.gmra.mrb[0].mxu0 %v147
  %v390 = vpop.f32.mrb[0].mxu0
  %v391 = vadd.f32 0.0, %v390
  %v392 = vpop.f32.mrb[0].mxu0
  %v393 = vadd.f32 0.0, %v392
  %394 = vdwg.mxu0
  %395 = vmatprep.subr.mxu0 %v51
  %396 = vmatpush1.msra.mxu0 %v50
  %397 = vmatprep.subr.mxu0 %v55
  %398 = vmatpush1.msra.mxu0 %v54
  %399 = vmatprep.subr.mxu0 %v59
  %400 = vmatpush1.msra.mxu0 %v58
  %401 = vmatprep.subr.mxu0 %v160
  %402 = vmatpush1.msra.mxu0 %v157
  %403 = vmatprep.subr.mxu0 0.0
  %404 = vmatpush1.msra.mxu0 0.0
  %405 = vmatprep.subr.mxu0 0.0
  %406 = vmatpush1.msra.mxu0 0.0
  %407 = vmatprep.subr.mxu0 0.0
  %408 = vmatpush1.msra.mxu0 0.0
  %409 = vmatprep.subr.mxu0 0.0
  %410 = vmatpush1.msra.mxu0 0.0
  %411 = vmatprep.subr.mxu0 0.0
  %412 = vmatpush1.msra.mxu0 0.0
  %413 = vmatprep.subr.mxu0 0.0
  %414 = vmatpush1.msra.mxu0 0.0
  %415 = vmatprep.subr.mxu0 0.0
  %416 = vmatpush1.msra.mxu0 0.0
  %417 = vmatprep.subr.mxu0 0.0
  %418 = vmatpush1.msra.mxu0 0.0
  %419 = vmatprep.subr.mxu0 0.0
  %420 = vmatpush1.msra.mxu0 0.0
  %421 = vmatprep.subr.mxu0 0.0
  %422 = vmatpush1.msra.mxu0 0.0
  %423 = vmatprep.subr.mxu0 0.0
  %424 = vmatpush1.msra.mxu0 0.0
  %425 = vmatprep.subr.mxu0 0.0
  %426 = vmatpush1.msra.mxu0 0.0
  %427 = vmatprep.subr.mxu0 0.0
  %428 = vmatpush1.msra.mxu0 0.0
  %429 = vmatprep.subr.mxu0 0.0
  %430 = vmatpush1.msra.mxu0 0.0
  %431 = vmatprep.subr.mxu0 0.0
  %432 = vmatpush1.msra.mxu0 0.0
  %433 = vmatprep.subr.mxu0 0.0
  %434 = vmatpush1.msra.mxu0 0.0
  %435 = vmatprep.subr.mxu0 0.0
  %436 = vmatpush1.msra.mxu0 0.0
  %437 = vmatprep.subr.mxu0 0.0
  %438 = vmatpush1.msra.mxu0 0.0
  %439 = vmatprep.subr.mxu0 0.0
  %440 = vmatpush1.msra.mxu0 0.0
  %441 = vmatprep.subr.mxu0 0.0
  %442 = vmatpush1.msra.mxu0 0.0
  %443 = vmatprep.subr.mxu0 0.0
  %444 = vmatpush1.msra.mxu0 0.0
  %445 = vmatprep.subr.mxu0 0.0
  %446 = vmatpush1.msra.mxu0 0.0
  %447 = vmatprep.subr.mxu0 0.0
  %448 = vmatpush1.msra.mxu0 0.0
  %449 = vmatprep.subr.mxu0 0.0
  %450 = vmatpush1.msra.mxu0 0.0
  %451 = vmatprep.subr.mxu0 0.0
  %452 = vmatpush1.msra.mxu0 0.0
  %453 = vmatprep.subr.mxu0 0.0
  %454 = vmatpush1.msra.mxu0 0.0
  %455 = vmatprep.subr.mxu0 0.0
  %456 = vmatpush1.msra.mxu0 0.0
  %457 = vmatprep.subr.mxu0 0.0
  %458 = vmatpush1.msra.mxu0 0.0
  %459 = vmatprep.mubr.f32.mxu0 0.0
  %460 = vmatmul.mubr.f32.gmra.mrb[0].mxu0 %v66
  %v461 = vpop.f32.mrb[0].mxu0
  %v462 = vadd.f32 0.0, %v461
  %v463 = vpop.f32.mrb[0].mxu0
  %v464 = vadd.f32 0.0, %v463
  %465 = vmatprep.mubr.f32.mxu0 0.0
  %466 = vmatmul.mubr.f32.gmra.mrb[0].mxu0 %v69
  %v467 = vpop.f32.mrb[0].mxu0
  %v468 = vadd.f32 0.0, %v467
  %v469 = vpop.f32.mrb[0].mxu0
  %v470 = vadd.f32 0.0, %v469
  %471 = vmatprep.mubr.f32.mxu0 0.0
  %472 = vmatmul.mubr.f32.gmra.mrb[0].mxu0 %v72
  %v473 = vpop.f32.mrb[0].mxu0
  %v474 = vadd.f32 0.0, %v473
  %v475 = vpop.f32.mrb[0].mxu0
  %v476 = vadd.f32 0.0, %v475
  %477 = vmatprep.mubr.f32.mxu0 0.0
  %478 = vmatmul.mubr.f32.gmra.mrb[0].mxu0 %v75
  %v479 = vpop.f32.mrb[0].mxu0
  %v480 = vadd.f32 0.0, %v479
  %v481 = vpop.f32.mrb[0].mxu0
  %v482 = vadd.f32 0.0, %v481
  %483 = vmatprep.mubr.f32.mxu0 0.0
  %484 = vmatmul.mubr.f32.gmra.mrb[0].mxu0 %v78
  %v485 = vpop.f32.mrb[0].mxu0
  %v486 = vadd.f32 0.0, %v485
  %v487 = vpop.f32.mrb[0].mxu0
  %v488 = vadd.f32 0.0, %v487
  %489 = vmatprep.mubr.f32.mxu0 0.0
  %490 = vmatmul.mubr.f32.gmra.mrb[0].mxu0 %v81
  %v491 = vpop.f32.mrb[0].mxu0
  %v492 = vadd.f32 0.0, %v491
  %v493 = vpop.f32.mrb[0].mxu0
  %v494 = vadd.f32 0.0, %v493
  %495 = vmatprep.mubr.f32.mxu0 0.0
  %496 = vmatmul.mubr.f32.gmra.mrb[0].mxu0 %v84
  %v497 = vpop.f32.mrb[0].mxu0
  %v498 = vadd.f32 0.0, %v497
  %v499 = vpop.f32.mrb[0].mxu0
  %v500 = vadd.f32 0.0, %v499
  %501 = vmatprep.mubr.f32.mxu0 0.0
  %502 = vmatmul.mubr.f32.gmra.mrb[0].mxu0 %v87
  %v503 = vpop.f32.mrb[0].mxu0
  %v504 = vadd.f32 0.0, %v503
  %v505 = vpop.f32.mrb[0].mxu0
  %v506 = vadd.f32 0.0, %v505
  %507 = vmatprep.mubr.f32.mxu0 0.0
  %508 = vmatmul.mubr.f32.gmra.mrb[0].mxu0 %v90
  %v509 = vpop.f32.mrb[0].mxu0
  %v510 = vadd.f32 0.0, %v509
  %v511 = vpop.f32.mrb[0].mxu0
  %v512 = vadd.f32 0.0, %v511
  %513 = vmatprep.mubr.f32.mxu0 0.0
  %514 = vmatmul.mubr.f32.gmra.mrb[0].mxu0 %v93
  %v515 = vpop.f32.mrb[0].mxu0
  %v516 = vadd.f32 0.0, %v515
  %v517 = vpop.f32.mrb[0].mxu0
  %v518 = vadd.f32 0.0, %v517
  %519 = vmatprep.mubr.f32.mxu0 0.0
  %520 = vmatmul.mubr.f32.gmra.mrb[0].mxu0 %v96
  %v521 = vpop.f32.mrb[0].mxu0
  %v522 = vadd.f32 0.0, %v521
  %v523 = vpop.f32.mrb[0].mxu0
  %v524 = vadd.f32 0.0, %v523
  %525 = vmatprep.mubr.f32.mxu0 0.0
  %526 = vmatmul.mubr.f32.gmra.mrb[0].mxu0 %v99
  %v527 = vpop.f32.mrb[0].mxu0
  %v528 = vadd.f32 0.0, %v527
  %v529 = vpop.f32.mrb[0].mxu0
  %v530 = vadd.f32 0.0, %v529
  %531 = vmatprep.mubr.f32.mxu0 0.0
  %532 = vmatmul.mubr.f32.gmra.mrb[0].mxu0 %v102
  %v533 = vpop.f32.mrb[0].mxu0
  %v534 = vadd.f32 0.0, %v533
  %v535 = vpop.f32.mrb[0].mxu0
  %v536 = vadd.f32 0.0, %v535
  %537 = vmatprep.mubr.f32.mxu0 0.0
  %538 = vmatmul.mubr.f32.gmra.mrb[0].mxu0 %v105
  %v539 = vpop.f32.mrb[0].mxu0
  %v540 = vadd.f32 0.0, %v539
  %v541 = vpop.f32.mrb[0].mxu0
  %v542 = vadd.f32 0.0, %v541
  %543 = vmatprep.mubr.f32.mxu0 0.0
  %544 = vmatmul.mubr.f32.gmra.mrb[0].mxu0 %v108
  %v545 = vpop.f32.mrb[0].mxu0
  %v546 = vadd.f32 0.0, %v545
  %v547 = vpop.f32.mrb[0].mxu0
  %v548 = vadd.f32 0.0, %v547
  %549 = vmatprep.mubr.f32.mxu0 0.0
  %550 = vmatmul.mubr.f32.gmra.mrb[0].mxu0 %v111
  %v551 = vpop.f32.mrb[0].mxu0
  %v552 = vadd.f32 0.0, %v551
  %v553 = vpop.f32.mrb[0].mxu0
  %v554 = vadd.f32 0.0, %v553
  %555 = vmatprep.mubr.f32.mxu0 0.0
  %556 = vmatmul.mubr.f32.gmra.mrb[0].mxu0 %v114
  %v557 = vpop.f32.mrb[0].mxu0
  %v558 = vadd.f32 0.0, %v557
  %v559 = vpop.f32.mrb[0].mxu0
  %v560 = vadd.f32 0.0, %v559
  %561 = vmatprep.mubr.f32.mxu0 0.0
  %562 = vmatmul.mubr.f32.gmra.mrb[0].mxu0 %v117
  %v563 = vpop.f32.mrb[0].mxu0
  %v564 = vadd.f32 0.0, %v563
  %v565 = vpop.f32.mrb[0].mxu0
  %v566 = vadd.f32 0.0, %v565
  %567 = vmatprep.mubr.f32.mxu0 0.0
  %568 = vmatmul.mubr.f32.gmra.mrb[0].mxu0 %v120
  %v569 = vpop.f32.mrb[0].mxu0
  %v570 = vadd.f32 0.0, %v569
  %v571 = vpop.f32.mrb[0].mxu0
  %v572 = vadd.f32 0.0, %v571
  %573 = vmatprep.mubr.f32.mxu0 0.0
  %574 = vmatmul.mubr.f32.gmra.mrb[0].mxu0 %v123
  %v575 = vpop.f32.mrb[0].mxu0
  %v576 = vadd.f32 0.0, %v575
  %v577 = vpop.f32.mrb[0].mxu0
  %v578 = vadd.f32 0.0, %v577
  %579 = vmatprep.mubr.f32.mxu0 0.0
  %580 = vmatmul.mubr.f32.gmra.mrb[0].mxu0 %v126
  %v581 = vpop.f32.mrb[0].mxu0
  %v582 = vadd.f32 0.0, %v581
  %v583 = vpop.f32.mrb[0].mxu0
  %v584 = vadd.f32 0.0, %v583
  %585 = vmatprep.mubr.f32.mxu0 0.0
  %586 = vmatmul.mubr.f32.gmra.mrb[0].mxu0 %v129
  %v587 = vpop.f32.mrb[0].mxu0
  %v588 = vadd.f32 0.0, %v587
  %v589 = vpop.f32.mrb[0].mxu0
  %v590 = vadd.f32 0.0, %v589
  %591 = vmatprep.mubr.f32.mxu0 0.0
  %592 = vmatmul.mubr.f32.gmra.mrb[0].mxu0 %v132
  %v593 = vpop.f32.mrb[0].mxu0
  %v594 = vadd.f32 0.0, %v593
  %v595 = vpop.f32.mrb[0].mxu0
  %v596 = vadd.f32 0.0, %v595
  %597 = vmatprep.mubr.f32.mxu0 0.0
  %598 = vmatmul.mubr.f32.gmra.mrb[0].mxu0 %v135
  %v599 = vpop.f32.mrb[0].mxu0
  %v600 = vadd.f32 0.0, %v599
  %v601 = vpop.f32.mrb[0].mxu0
  %v602 = vadd.f32 0.0, %v601
  %603 = vmatprep.mubr.f32.mxu0 0.0
  %604 = vmatmul.mubr.f32.gmra.mrb[0].mxu0 %v138
  %v605 = vpop.f32.mrb[0].mxu0
  %v606 = vadd.f32 0.0, %v605
  %v607 = vpop.f32.mrb[0].mxu0
  %v608 = vadd.f32 0.0, %v607
  %609 = vmatprep.mubr.f32.mxu0 0.0
  %610 = vmatmul.mubr.f32.gmra.mrb[0].mxu0 %v141
  %v611 = vpop.f32.mrb[0].mxu0
  %v612 = vadd.f32 0.0, %v611
  %v613 = vpop.f32.mrb[0].mxu0
  %v614 = vadd.f32 0.0, %v613
  %615 = vmatprep.mubr.f32.mxu0 0.0
  %616 = vmatmul.mubr.f32.gmra.mrb[0].mxu0 %v144
  %v617 = vpop.f32.mrb[0].mxu0
  %v618 = vadd.f32 0.0, %v617
  %v619 = vpop.f32.mrb[0].mxu0
  %v620 = vadd.f32 0.0, %v619
  %621 = vmatprep.mubr.f32.mxu0 0.0
  %622 = vmatmul.mubr.f32.gmra.mrb[0].mxu0 %v147
  %v623 = vpop.f32.mrb[0].mxu0
  %v624 = vadd.f32 0.0, %v623
  %v625 = vpop.f32.mrb[0].mxu0
  %v626 = vadd.f32 0.0, %v625
  %627 = vdwg.mxu0
  %628 = vst [vmem:[#allocation2] sm:$0xff] %v229
  %629 = vst [vmem:[#allocation2 + $0x8] sm:$0xff] %v231
  %630 = vst [vmem:[#allocation2 + $0x10] sm:$0xff] %v462
  %631 = vst [vmem:[#allocation2 + $0x18] sm:$0xff] %v464
  %632 = vst [vmem:[#allocation2 + $0x20] sm:$0xff] %v235
  %633 = vst [vmem:[#allocation2 + $0x28] sm:$0xff] %v237
  %634 = vst [vmem:[#allocation2 + $0x30] sm:$0xff] %v468
  %635 = vst [vmem:[#allocation2 + $0x38] sm:$0xff] %v470
  %636 = vst [vmem:[#allocation2 + $0x40] sm:$0xff] %v241
  %637 = vst [vmem:[#allocation2 + $0x48] sm:$0xff] %v243
  %638 = vst [vmem:[#allocation2 + $0x50] sm:$0xff] %v474
  %639 = vst [vmem:[#allocation2 + $0x58] sm:$0xff] %v476
  %640 = vst [vmem:[#allocation2 + $0x60] sm:$0xff] %v247
  %641 = vst [vmem:[#allocation2 + $0x68] sm:$0xff] %v249
  %642 = vst [vmem:[#allocation2 + $0x70] sm:$0xff] %v480
  %643 = vst [vmem:[#allocation2 + $0x78] sm:$0xff] %v482
  %644 = vst [vmem:[#allocation2 + $0x80] sm:$0xff] %v253
  %645 = vst [vmem:[#allocation2 + $0x88] sm:$0xff] %v255
  %646 = vst [vmem:[#allocation2 + $0x90] sm:$0xff] %v486
  %647 = vst [vmem:[#allocation2 + $0x98] sm:$0xff] %v488
  %648 = vst [vmem:[#allocation2 + $0xa0] sm:$0xff] %v259
  %649 = vst [vmem:[#allocation2 + $0xa8] sm:$0xff] %v261
  %650 = vst [vmem:[#allocation2 + $0xb0] sm:$0xff] %v492
  %651 = vst [vmem:[#allocation2 + $0xb8] sm:$0xff] %v494
  %652 = vst [vmem:[#allocation2 + $0xc0] sm:$0xff] %v265
  %653 = vst [vmem:[#allocation2 + $0xc8] sm:$0xff] %v267
  %654 = vst [vmem:[#allocation2 + $0xd0] sm:$0xff] %v498
  %655 = vst [vmem:[#allocation2 + $0xd8] sm:$0xff] %v500
  %656 = vst [vmem:[#allocation2 + $0xe0] sm:$0xff] %v271
  %657 = vst [vmem:[#allocation2 + $0xe8] sm:$0xff] %v273
  %658 = vst [vmem:[#allocation2 + $0xf0] sm:$0xff] %v504
  %659 = vst [vmem:[#allocation2 + $0xf8] sm:$0xff] %v506
  %660 = vst [vmem:[#allocation2 + $0x100] sm:$0xff] %v277
  %661 = vst [vmem:[#allocation2 + $0x108] sm:$0xff] %v279
  %662 = vst [vmem:[#allocation2 + $0x110] sm:$0xff] %v510
  %663 = vst [vmem:[#allocation2 + $0x118] sm:$0xff] %v512
  %664 = vst [vmem:[#allocation2 + $0x120] sm:$0xff] %v283
  %665 = vst [vmem:[#allocation2 + $0x128] sm:$0xff] %v285
  %666 = vst [vmem:[#allocation2 + $0x130] sm:$0xff] %v516
  %667 = vst [vmem:[#allocation2 + $0x138] sm:$0xff] %v518
  %668 = vst [vmem:[#allocation2 + $0x140] sm:$0xff] %v289
  %669 = vst [vmem:[#allocation2 + $0x148] sm:$0xff] %v291
  %670 = vst [vmem:[#allocation2 + $0x150] sm:$0xff] %v522
  %671 = vst [vmem:[#allocation2 + $0x158] sm:$0xff] %v524
  %672 = vst [vmem:[#allocation2 + $0x160] sm:$0xff] %v295
  %673 = vst [vmem:[#allocation2 + $0x168] sm:$0xff] %v297
  %674 = vst [vmem:[#allocation2 + $0x170] sm:$0xff] %v528
  %675 = vst [vmem:[#allocation2 + $0x178] sm:$0xff] %v530
  %676 = vst [vmem:[#allocation2 + $0x180] sm:$0xff] %v301
  %677 = vst [vmem:[#allocation2 + $0x188] sm:$0xff] %v303
  %678 = vst [vmem:[#allocation2 + $0x190] sm:$0xff] %v534
  %679 = vst [vmem:[#allocation2 + $0x198] sm:$0xff] %v536
  %680 = vst [vmem:[#allocation2 + $0x1a0] sm:$0xff] %v307
  %681 = vst [vmem:[#allocation2 + $0x1a8] sm:$0xff] %v309
  %682 = vst [vmem:[#allocation2 + $0x1b0] sm:$0xff] %v540
  %683 = vst [vmem:[#allocation2 + $0x1b8] sm:$0xff] %v542
  %684 = vst [vmem:[#allocation2 + $0x1c0] sm:$0xff] %v313
  %685 = vst [vmem:[#allocation2 + $0x1c8] sm:$0xff] %v315
  %686 = vst [vmem:[#allocation2 + $0x1d0] sm:$0xff] %v546
  %687 = vst [vmem:[#allocation2 + $0x1d8] sm:$0xff] %v548
  %688 = vst [vmem:[#allocation2 + $0x1e0] sm:$0xff] %v319
  %689 = vst [vmem:[#allocation2 + $0x1e8] sm:$0xff] %v321
  %690 = vst [vmem:[#allocation2 + $0x1f0] sm:$0xff] %v552
  %691 = vst [vmem:[#allocation2 + $0x1f8] sm:$0xff] %v554
  %692 = vst [vmem:[#allocation2 + $0x200] sm:$0xff] %v325
  %693 = vst [vmem:[#allocation2 + $0x208] sm:$0xff] %v327
  %694 = vst [vmem:[#allocation2 + $0x210] sm:$0xff] %v558
  %695 = vst [vmem:[#allocation2 + $0x218] sm:$0xff] %v560
  %696 = vst [vmem:[#allocation2 + $0x220] sm:$0xff] %v331
  %697 = vst [vmem:[#allocation2 + $0x228] sm:$0xff] %v333
  %698 = vst [vmem:[#allocation2 + $0x230] sm:$0xff] %v564
  %699 = vst [vmem:[#allocation2 + $0x238] sm:$0xff] %v566
  %700 = vst [vmem:[#allocation2 + $0x240] sm:$0xff] %v337
  %701 = vst [vmem:[#allocation2 + $0x248] sm:$0xff] %v339
  %702 = vst [vmem:[#allocation2 + $0x250] sm:$0xff] %v570
  %703 = vst [vmem:[#allocation2 + $0x258] sm:$0xff] %v572
  %704 = vst [vmem:[#allocation2 + $0x260] sm:$0xff] %v343
  %705 = vst [vmem:[#allocation2 + $0x268] sm:$0xff] %v345
  %706 = vst [vmem:[#allocation2 + $0x270] sm:$0xff] %v576
  %707 = vst [vmem:[#allocation2 + $0x278] sm:$0xff] %v578
  %708 = vst [vmem:[#allocation2 + $0x280] sm:$0xff] %v349
  %709 = vst [vmem:[#allocation2 + $0x288] sm:$0xff] %v351
  %710 = vst [vmem:[#allocation2 + $0x290] sm:$0xff] %v582
  %711 = vst [vmem:[#allocation2 + $0x298] sm:$0xff] %v584
  %712 = vst [vmem:[#allocation2 + $0x2a0] sm:$0xff] %v355
  %713 = vst [vmem:[#allocation2 + $0x2a8] sm:$0xff] %v357
  %714 = vst [vmem:[#allocation2 + $0x2b0] sm:$0xff] %v588
  %715 = vst [vmem:[#allocation2 + $0x2b8] sm:$0xff] %v590
  %716 = vst [vmem:[#allocation2 + $0x2c0] sm:$0xff] %v361
  %717 = vst [vmem:[#allocation2 + $0x2c8] sm:$0xff] %v363
  %718 = vst [vmem:[#allocation2 + $0x2d0] sm:$0xff] %v594
  %719 = vst [vmem:[#allocation2 + $0x2d8] sm:$0xff] %v596
  %720 = vst [vmem:[#allocation2 + $0x2e0] sm:$0xff] %v367
  %721 = vst [vmem:[#allocation2 + $0x2e8] sm:$0xff] %v369
  %722 = vst [vmem:[#allocation2 + $0x2f0] sm:$0xff] %v600
  %723 = vst [vmem:[#allocation2 + $0x2f8] sm:$0xff] %v602
  %724 = vst [vmem:[#allocation2 + $0x300] sm:$0xff] %v373
  %725 = vst [vmem:[#allocation2 + $0x308] sm:$0xff] %v375
  %726 = vst [vmem:[#allocation2 + $0x310] sm:$0xff] %v606
  %727 = vst [vmem:[#allocation2 + $0x318] sm:$0xff] %v608
  %728 = vst [vmem:[#allocation2 + $0x320] sm:$0xff] %v379
  %729 = vst [vmem:[#allocation2 + $0x328] sm:$0xff] %v381
  %730 = vst [vmem:[#allocation2 + $0x330] sm:$0xff] %v612
  %731 = vst [vmem:[#allocation2 + $0x338] sm:$0xff] %v614
  %732 = vst [vmem:[#allocation2 + $0x340] sm:$0xff] %v385
  %733 = vst [vmem:[#allocation2 + $0x348] sm:$0xff] %v387
  %734 = vst [vmem:[#allocation2 + $0x350] sm:$0xff] %v618
  %735 = vst [vmem:[#allocation2 + $0x358] sm:$0xff] %v620
  %736 = vst [vmem:[#allocation2 + $0x360] sm:$0xff] %v391
  %737 = vst [vmem:[#allocation2 + $0x368] sm:$0xff] %v393
  %738 = vst [vmem:[#allocation2 + $0x370] sm:$0xff] %v624
  %739 = vst [vmem:[#allocation2 + $0x378] sm:$0xff] %v626
  %v740 = vld [vmem:[#allocation2] sm:$0xff]
  %v741 = vld [vmem:[#allocation2 + $0x8] sm:$0xff]
  %v742 = vld [vmem:[#allocation2 + $0x10] sm:$0xff]
  %v743 = vld [vmem:[#allocation2 + $0x18] sm:$0xff]
  %v744 = vld [vmem:[%s2] sm:$0xff]
  %v745 = vld [vmem:[%s2 + $0x8] sm:$0xff]
  %v746 = vld [vmem:[%s2 + $0x10] sm:$0xff]
  %v747 = vld [vmem:[%s2 + $0x18] sm:$0xff]
  %v748 = vld [vmem:[%s2 + $0x20] sm:$0xff]
  %v749 = vld [vmem:[%s2 + $0x28] sm:$0xff]
  %v750 = vld [vmem:[%s2 + $0x30] sm:$0xff]
  %v751 = vld [vmem:[%s2 + $0x38] sm:$0xff]
  %v752 = vld [vmem:[%s2 + $0x40] sm:$0xff]
  %v753 = vld [vmem:[%s2 + $0x48] sm:$0xff]
  %v754 = vld [vmem:[%s2 + $0x50] sm:$0xff]
  %v755 = vld [vmem:[%s2 + $0x58] sm:$0xff]
  %v756 = vld [vmem:[%s2 + $0x60] sm:$0xff]
  %v757 = vld [vmem:[%s2 + $0x68] sm:$0xff]
  %v758 = vld [vmem:[%s2 + $0x70] sm:$0xff]
  %v759 = vld [vmem:[%s2 + $0x78] sm:$0xff]
  %v760 = vld [vmem:[%s2 + $0x80] sm:$0xff]
  %v761 = vld [vmem:[%s2 + $0x88] sm:$0xff]
  %v762 = vld [vmem:[%s2 + $0x90] sm:$0xff]
  %v763 = vld [vmem:[%s2 + $0x98] sm:$0xff]
  %v764 = vld [vmem:[%s2 + $0xa0] sm:$0xff]
  %v765 = vld [vmem:[%s2 + $0xa8] sm:$0xff]
  %v766 = vld [vmem:[%s2 + $0xb0] sm:$0xff]
  %v767 = vld [vmem:[%s2 + $0xb8] sm:$0xff]
  %v768 = vld [vmem:[%s2 + $0xc0] sm:$0xff]
  %v769 = vld [vmem:[%s2 + $0xc8] sm:$0xff]
  %v770 = vld [vmem:[%s2 + $0xd0] sm:$0xff]
  %v771 = vld [vmem:[%s2 + $0xd8] sm:$0xff]
  %v772 = vld [vmem:[%s2 + $0xe0] sm:$0xff]
  %v773 = vld [vmem:[%s2 + $0xe8] sm:$0xff]
  %v774 = vld [vmem:[%s2 + $0xf0] sm:$0xff]
  %v775 = vld [vmem:[%s2 + $0xf8] sm:$0xff]
  %vm776 = vcmask 523264
  %v778 = vsel %vm776, 0.0, 0
  %780 = vmatprep.subr.mxu0 %v745
  %781 = vmatpush1.msra.mxu0 %v744
  %782 = vmatprep.subr.mxu0 %v749
  %783 = vmatpush1.msra.mxu0 %v748
  %784 = vmatprep.subr.mxu0 %v753
  %785 = vmatpush1.msra.mxu0 %v752
  %786 = vmatprep.subr.mxu0 %v757
  %787 = vmatpush1.msra.mxu0 %v756
  %788 = vmatprep.subr.mxu0 %v761
  %789 = vmatpush1.msra.mxu0 %v760
  %790 = vmatprep.subr.mxu0 %v765
  %791 = vmatpush1.msra.mxu0 %v764
  %792 = vmatprep.subr.mxu0 %v769
  %793 = vmatpush1.msra.mxu0 %v768
  %794 = vmatprep.subr.mxu0 %v773
  %795 = vmatpush1.msra.mxu0 %v772
  %796 = vmatprep.subr.mxu0 0.0
  %797 = vmatpush1.msra.mxu0 0.0
  %798 = vmatprep.subr.mxu0 0.0
  %799 = vmatpush1.msra.mxu0 0.0
  %800 = vmatprep.subr.mxu0 0.0
  %801 = vmatpush1.msra.mxu0 0.0
  %802 = vmatprep.subr.mxu0 0.0
  %803 = vmatpush1.msra.mxu0 0.0
  %804 = vmatprep.subr.mxu0 0.0
  %805 = vmatpush1.msra.mxu0 0.0
  %806 = vmatprep.subr.mxu0 0.0
  %807 = vmatpush1.msra.mxu0 0.0
  %808 = vmatprep.subr.mxu0 0.0
  %809 = vmatpush1.msra.mxu0 0.0
  %810 = vmatprep.subr.mxu0 0.0
  %811 = vmatpush1.msra.mxu0 0.0
  %812 = vmatprep.subr.mxu0 0.0
  %813 = vmatpush1.msra.mxu0 0.0
  %814 = vmatprep.subr.mxu0 0.0
  %815 = vmatpush1.msra.mxu0 0.0
  %816 = vmatprep.subr.mxu0 0.0
  %817 = vmatpush1.msra.mxu0 0.0
  %818 = vmatprep.subr.mxu0 0.0
  %819 = vmatpush1.msra.mxu0 0.0
  %820 = vmatprep.subr.mxu0 0.0
  %821 = vmatpush1.msra.mxu0 0.0
  %822 = vmatprep.subr.mxu0 0.0
  %823 = vmatpush1.msra.mxu0 0.0
  %824 = vmatprep.subr.mxu0 0.0
  %825 = vmatpush1.msra.mxu0 0.0
  %826 = vmatprep.subr.mxu0 0.0
  %827 = vmatpush1.msra.mxu0 0.0
  %828 = vmatprep.subr.mxu0 0.0
  %829 = vmatpush1.msra.mxu0 0.0
  %830 = vmatprep.subr.mxu0 0.0
  %831 = vmatpush1.msra.mxu0 0.0
  %832 = vmatprep.subr.mxu0 0.0
  %833 = vmatpush1.msra.mxu0 0.0
  %834 = vmatprep.subr.mxu0 0.0
  %835 = vmatpush1.msra.mxu0 0.0
  %836 = vmatprep.subr.mxu0 0.0
  %837 = vmatpush1.msra.mxu0 0.0
  %838 = vmatprep.subr.mxu0 0.0
  %839 = vmatpush1.msra.mxu0 0.0
  %840 = vmatprep.subr.mxu0 0.0
  %841 = vmatpush1.msra.mxu0 0.0
  %842 = vmatprep.subr.mxu0 0.0
  %843 = vmatpush1.msra.mxu0 0.0
  %844 = vmatprep.mubr.f32.mxu0 0.0
  %845 = vmatmul.mubr.f32.gmra.mrb[0].mxu0 %v778
  %v846 = vpop.f32.mrb[0].mxu0
  %v847 = vadd.f32 0.0, %v846
  %v848 = vpop.f32.mrb[0].mxu0
  %v849 = vadd.f32 0.0, %v848
  %850 = vdwg.mxu0
  %851 = vmatprep.subr.mxu0 %v747
  %852 = vmatpush1.msra.mxu0 %v746
  %853 = vmatprep.subr.mxu0 %v751
  %854 = vmatpush1.msra.mxu0 %v750
  %855 = vmatprep.subr.mxu0 %v755
  %856 = vmatpush1.msra.mxu0 %v754
  %857 = vmatprep.subr.mxu0 %v759
  %858 = vmatpush1.msra.mxu0 %v758
  %859 = vmatprep.subr.mxu0 %v763
  %860 = vmatpush1.msra.mxu0 %v762
  %861 = vmatprep.subr.mxu0 %v767
  %862 = vmatpush1.msra.mxu0 %v766
  %863 = vmatprep.subr.mxu0 %v771
  %864 = vmatpush1.msra.mxu0 %v770
  %865 = vmatprep.subr.mxu0 %v775
  %866 = vmatpush1.msra.mxu0 %v774
  %867 = vmatprep.subr.mxu0 0.0
  %868 = vmatpush1.msra.mxu0 0.0
  %869 = vmatprep.subr.mxu0 0.0
  %870 = vmatpush1.msra.mxu0 0.0
  %871 = vmatprep.subr.mxu0 0.0
  %872 = vmatpush1.msra.mxu0 0.0
  %873 = vmatprep.subr.mxu0 0.0
  %874 = vmatpush1.msra.mxu0 0.0
  %875 = vmatprep.subr.mxu0 0.0
  %876 = vmatpush1.msra.mxu0 0.0
  %877 = vmatprep.subr.mxu0 0.0
  %878 = vmatpush1.msra.mxu0 0.0
  %879 = vmatprep.subr.mxu0 0.0
  %880 = vmatpush1.msra.mxu0 0.0
  %881 = vmatprep.subr.mxu0 0.0
  %882 = vmatpush1.msra.mxu0 0.0
  %883 = vmatprep.subr.mxu0 0.0
  %884 = vmatpush1.msra.mxu0 0.0
  %885 = vmatprep.subr.mxu0 0.0
  %886 = vmatpush1.msra.mxu0 0.0
  %887 = vmatprep.subr.mxu0 0.0
  %888 = vmatpush1.msra.mxu0 0.0
  %889 = vmatprep.subr.mxu0 0.0
  %890 = vmatpush1.msra.mxu0 0.0
  %891 = vmatprep.subr.mxu0 0.0
  %892 = vmatpush1.msra.mxu0 0.0
  %893 = vmatprep.subr.mxu0 0.0
  %894 = vmatpush1.msra.mxu0 0.0
  %895 = vmatprep.subr.mxu0 0.0
  %896 = vmatpush1.msra.mxu0 0.0
  %897 = vmatprep.subr.mxu0 0.0
  %898 = vmatpush1.msra.mxu0 0.0
  %899 = vmatprep.subr.mxu0 0.0
  %900 = vmatpush1.msra.mxu0 0.0
  %901 = vmatprep.subr.mxu0 0.0
  %902 = vmatpush1.msra.mxu0 0.0
  %903 = vmatprep.subr.mxu0 0.0
  %904 = vmatpush1.msra.mxu0 0.0
  %905 = vmatprep.subr.mxu0 0.0
  %906 = vmatpush1.msra.mxu0 0.0
  %907 = vmatprep.subr.mxu0 0.0
  %908 = vmatpush1.msra.mxu0 0.0
  %909 = vmatprep.subr.mxu0 0.0
  %910 = vmatpush1.msra.mxu0 0.0
  %911 = vmatprep.subr.mxu0 0.0
  %912 = vmatpush1.msra.mxu0 0.0
  %913 = vmatprep.subr.mxu0 0.0
  %914 = vmatpush1.msra.mxu0 0.0
  %915 = vmatprep.mubr.f32.mxu0 0.0
  %916 = vmatmul.mubr.f32.gmra.mrb[0].mxu0 %v778
  %v917 = vpop.f32.mrb[0].mxu0
  %v918 = vadd.f32 0.0, %v917
  %v919 = vpop.f32.mrb[0].mxu0
  %v920 = vadd.f32 0.0, %v919
  %921 = vdwg.mxu0
  %v922 = vadd.f32 %v740, %v847
  %v923 = vadd.f32 %v741, %v849
  %v924 = vadd.f32 %v742, %v918
  %v925 = vadd.f32 %v743, %v920
  %v926 = vxor.u32 %v922, 2147483648
  %v927 = vxor.u32 %v923, 2147483648
  %v928 = vxor.u32 %v924, 2147483648
  %v929 = vmul.f32 %v926, 1.442695
  %v930 = vpow.pop %v929
  %v931 = vmul.f32 %v927, 1.442695
  %v932 = vpow.pop %v931
  %v933 = vmul.f32 %v928, 1.442695
  %v934 = vpow.pop %v933
  %v935 = vadd.f32 %v930, 1.0
  %v936 = vadd.f32 %v932, 1.0
  %v937 = vadd.f32 %v934, 1.0
  %v938 = vrcp.pop %v935
  %v939 = vmul.f32 1.0, %v938
  %v940 = vrcp.pop %v936
  %v941 = vmul.f32 1.0, %v940
  %v942 = vrcp.pop %v937
  %v943 = vmul.f32 1.0, %v942
  %v944 = vtanh.pop %v925
  %v945 = vmul.f32 %v941, 0.0
  %v946 = vmul.f32 %v939, %v944
  %v947 = vadd.f32 %v945, %v946
  %v948 = vtanh.pop %v947
  %v949 = vmul.f32 %v943, %v948
  %v950 = vld [vmem:[#allocation2 + $0x20] sm:$0xff]
  %v951 = vld [vmem:[#allocation2 + $0x28] sm:$0xff]
  %v952 = vld [vmem:[#allocation2 + $0x30] sm:$0xff]
  %v953 = vld [vmem:[#allocation2 + $0x38] sm:$0xff]
  %v955 = vsel %vm776, %v949, 0
  %957 = vmatprep.subr.mxu0 %v745
  %958 = vmatpush1.msra.mxu0 %v744
  %959 = vmatprep.subr.mxu0 %v749
  %960 = vmatpush1.msra.mxu0 %v748
  %961 = vmatprep.subr.mxu0 %v753
  %962 = vmatpush1.msra.mxu0 %v752
  %963 = vmatprep.subr.mxu0 %v757
  %964 = vmatpush1.msra.mxu0 %v756
  %965 = vmatprep.subr.mxu0 %v761
  %966 = vmatpush1.msra.mxu0 %v760
  %967 = vmatprep.subr.mxu0 %v765
  %968 = vmatpush1.msra.mxu0 %v764
  %969 = vmatprep.subr.mxu0 %v769
  %970 = vmatpush1.msra.mxu0 %v768
  %971 = vmatprep.subr.mxu0 %v773
  %972 = vmatpush1.msra.mxu0 %v772
  %973 = vmatprep.subr.mxu0 0.0
  %974 = vmatpush1.msra.mxu0 0.0
  %975 = vmatprep.subr.mxu0 0.0
  %976 = vmatpush1.msra.mxu0 0.0
  %977 = vmatprep.subr.mxu0 0.0
  %978 = vmatpush1.msra.mxu0 0.0
  %979 = vmatprep.subr.mxu0 0.0
  %980 = vmatpush1.msra.mxu0 0.0
  %981 = vmatprep.subr.mxu0 0.0
  %982 = vmatpush1.msra.mxu0 0.0
  %983 = vmatprep.subr.mxu0 0.0
  %984 = vmatpush1.msra.mxu0 0.0
  %985 = vmatprep.subr.mxu0 0.0
  %986 = vmatpush1.msra.mxu0 0.0
  %987 = vmatprep.subr.mxu0 0.0
  %988 = vmatpush1.msra.mxu0 0.0
  %989 = vmatprep.subr.mxu0 0.0
  %990 = vmatpush1.msra.mxu0 0.0
  %991 = vmatprep.subr.mxu0 0.0
  %992 = vmatpush1.msra.mxu0 0.0
  %993 = vmatprep.subr.mxu0 0.0
  %994 = vmatpush1.msra.mxu0 0.0
  %995 = vmatprep.subr.mxu0 0.0
  %996 = vmatpush1.msra.mxu0 0.0
  %997 = vmatprep.subr.mxu0 0.0
  %998 = vmatpush1.msra.mxu0 0.0
  %999 = vmatprep.subr.mxu0 0.0
  %1000 = vmatpush1.msra.mxu0 0.0
  %1001 = vmatprep.subr.mxu0 0.0
  %1002 = vmatpush1.msra.mxu0 0.0
  %1003 = vmatprep.subr.mxu0 0.0
  %1004 = vmatpush1.msra.mxu0 0.0
  %1005 = vmatprep.subr.mxu0 0.0
  %1006 = vmatpush1.msra.mxu0 0.0
  %1007 = vmatprep.subr.mxu0 0.0
  %1008 = vmatpush1.msra.mxu0 0.0
  %1009 = vmatprep.subr.mxu0 0.0
  %1010 = vmatpush1.msra.mxu0 0.0
  %1011 = vmatprep.subr.mxu0 0.0
  %1012 = vmatpush1.msra.mxu0 0.0
  %1013 = vmatprep.subr.mxu0 0.0
  %1014 = vmatpush1.msra.mxu0 0.0
  %1015 = vmatprep.subr.mxu0 0.0
  %1016 = vmatpush1.msra.mxu0 0.0
  %1017 = vmatprep.subr.mxu0 0.0
  %1018 = vmatpush1.msra.mxu0 0.0
  %1019 = vmatprep.subr.mxu0 0.0
  %1020 = vmatpush1.msra.mxu0 0.0
  %1021 = vmatprep.mubr.f32.mxu0 0.0
  %1022 = vmatmul.mubr.f32.gmra.mrb[0].mxu0 %v955
  %v1023 = vpop.f32.mrb[0].mxu0
  %v1024 = vadd.f32 0.0, %v1023
  %v1025 = vpop.f32.mrb[0].mxu0
  %v1026 = vadd.f32 0.0, %v1025
  %1027 = vdwg.mxu0
  %1028 = vmatprep.subr.mxu0 %v747
  %1029 = vmatpush1.msra.mxu0 %v746
  %1030 = vmatprep.subr.mxu0 %v751
  %1031 = vmatpush1.msra.mxu0 %v750
  %1032 = vmatprep.subr.mxu0 %v755
  %1033 = vmatpush1.msra.mxu0 %v754
  %1034 = vmatprep.subr.mxu0 %v759
  %1035 = vmatpush1.msra.mxu0 %v758
  %1036 = vmatprep.subr.mxu0 %v763
  %1037 = vmatpush1.msra.mxu0 %v762
  %1038 = vmatprep.subr.mxu0 %v767
  %1039 = vmatpush1.msra.mxu0 %v766
  %1040 = vmatprep.subr.mxu0 %v771
  %1041 = vmatpush1.msra.mxu0 %v770
  %1042 = vmatprep.subr.mxu0 %v775
  %1043 = vmatpush1.msra.mxu0 %v774
  %1044 = vmatprep.subr.mxu0 0.0
  %1045 = vmatpush1.msra.mxu0 0.0
  %1046 = vmatprep.subr.mxu0 0.0
  %1047 = vmatpush1.msra.mxu0 0.0
  %1048 = vmatprep.subr.mxu0 0.0
  %1049 = vmatpush1.msra.mxu0 0.0
  %1050 = vmatprep.subr.mxu0 0.0
  %1051 = vmatpush1.msra.mxu0 0.0
  %1052 = vmatprep.subr.mxu0 0.0
  %1053 = vmatpush1.msra.mxu0 0.0
  %1054 = vmatprep.subr.mxu0 0.0
  %1055 = vmatpush1.msra.mxu0 0.0
  %1056 = vmatprep.subr.mxu0 0.0
  %1057 = vmatpush1.msra.mxu0 0.0
  %1058 = vmatprep.subr.mxu0 0.0
  %1059 = vmatpush1.msra.mxu0 0.0
  %1060 = vmatprep.subr.mxu0 0.0
  %1061 = vmatpush1.msra.mxu0 0.0
  %1062 = vmatprep.subr.mxu0 0.0
  %1063 = vmatpush1.msra.mxu0 0.0
  %1064 = vmatprep.subr.mxu0 0.0
  %1065 = vmatpush1.msra.mxu0 0.0
  %1066 = vmatprep.subr.mxu0 0.0
  %1067 = vmatpush1.msra.mxu0 0.0
  %1068 = vmatprep.subr.mxu0 0.0
  %1069 = vmatpush1.msra.mxu0 0.0
  %1070 = vmatprep.subr.mxu0 0.0
  %1071 = vmatpush1.msra.mxu0 0.0
  %1072 = vmatprep.subr.mxu0 0.0
  %1073 = vmatpush1.msra.mxu0 0.0
  %1074 = vmatprep.subr.mxu0 0.0
  %1075 = vmatpush1.msra.mxu0 0.0
  %1076 = vmatprep.subr.mxu0 0.0
  %1077 = vmatpush1.msra.mxu0 0.0
  %1078 = vmatprep.subr.mxu0 0.0
  %1079 = vmatpush1.msra.mxu0 0.0
  %1080 = vmatprep.subr.mxu0 0.0
  %1081 = vmatpush1.msra.mxu0 0.0
  %1082 = vmatprep.subr.mxu0 0.0
  %1083 = vmatpush1.msra.mxu0 0.0
  %1084 = vmatprep.subr.mxu0 0.0
  %1085 = vmatpush1.msra.mxu0 0.0
  %1086 = vmatprep.subr.mxu0 0.0
  %1087 = vmatpush1.msra.mxu0 0.0
  %1088 = vmatprep.subr.mxu0 0.0
  %1089 = vmatpush1.msra.mxu0 0.0
  %1090 = vmatprep.subr.mxu0 0.0
  %1091 = vmatpush1.msra.mxu0 0.0
  %1092 = vmatprep.mubr.f32.mxu0 0.0
  %1093 = vmatmul.mubr.f32.gmra.mrb[0].mxu0 %v955
  %v1094 = vpop.f32.mrb[0].mxu0
  %v1095 = vadd.f32 0.0, %v1094
  %v1096 = vpop.f32.mrb[0].mxu0
  %v1097 = vadd.f32 0.0, %v1096
  %1098 = vdwg.mxu0
  %v1099 = vadd.f32 %v950, %v1024
  %v1100 = vadd.f32 %v951, %v1026
  %v1101 = vadd.f32 %v952, %v1095
  %v1102 = vadd.f32 %v953, %v1097
  %v1103 = vxor.u32 %v1099, 2147483648
  %v1104 = vxor.u32 %v1100, 2147483648
  %v1105 = vxor.u32 %v1101, 2147483648
  %v1106 = vmul.f32 %v1103, 1.442695
  %v1107 = vpow.pop %v1106
  %v1108 = vmul.f32 %v1104, 1.442695
  %v1109 = vpow.pop %v1108
  %v1110 = vmul.f32 %v1105, 1.442695
  %v1111 = vpow.pop %v1110
  %v1112 = vadd.f32 %v1107, 1.0
  %v1113 = vadd.f32 %v1109, 1.0
  %v1114 = vadd.f32 %v1111, 1.0
  %v1115 = vrcp.pop %v1112
  %v1116 = vmul.f32 1.0, %v1115
  %v1117 = vrcp.pop %v1113
  %v1118 = vmul.f32 1.0, %v1117
  %v1119 = vrcp.pop %v1114
  %v1120 = vmul.f32 1.0, %v1119
  %v1121 = vtanh.pop %v1102
  %v1122 = vmul.f32 %v1118, %v947
  %v1123 = vmul.f32 %v1116, %v1121
  %v1124 = vadd.f32 %v1122, %v1123
  %v1125 = vtanh.pop %v1124
  %v1126 = vmul.f32 %v1120, %v1125
  %v1127 = vld [vmem:[#allocation2 + $0x40] sm:$0xff]
  %v1128 = vld [vmem:[#allocation2 + $0x48] sm:$0xff]
  %v1129 = vld [vmem:[#allocation2 + $0x50] sm:$0xff]
  %v1130 = vld [vmem:[#allocation2 + $0x58] sm:$0xff]
  %v1132 = vsel %vm776, %v1126, 0
  %1134 = vmatprep.subr.mxu0 %v745
  %1135 = vmatpush1.msra.mxu0 %v744
  %1136 = vmatprep.subr.mxu0 %v749
  %1137 = vmatpush1.msra.mxu0 %v748
  %1138 = vmatprep.subr.mxu0 %v753
  %1139 = vmatpush1.msra.mxu0 %v752
  %1140 = vmatprep.subr.mxu0 %v757
  %1141 = vmatpush1.msra.mxu0 %v756
  %1142 = vmatprep.subr.mxu0 %v761
  %1143 = vmatpush1.msra.mxu0 %v760
  %1144 = vmatprep.subr.mxu0 %v765
  %1145 = vmatpush1.msra.mxu0 %v764
  %1146 = vmatprep.subr.mxu0 %v769
  %1147 = vmatpush1.msra.mxu0 %v768
  %1148 = vmatprep.subr.mxu0 %v773
  %1149 = vmatpush1.msra.mxu0 %v772
  %1150 = vmatprep.subr.mxu0 0.0
  %1151 = vmatpush1.msra.mxu0 0.0
  %1152 = vmatprep.subr.mxu0 0.0
  %1153 = vmatpush1.msra.mxu0 0.0
  %1154 = vmatprep.subr.mxu0 0.0
  %1155 = vmatpush1.msra.mxu0 0.0
  %1156 = vmatprep.subr.mxu0 0.0
  %1157 = vmatpush1.msra.mxu0 0.0
  %1158 = vmatprep.subr.mxu0 0.0
  %1159 = vmatpush1.msra.mxu0 0.0
  %1160 = vmatprep.subr.mxu0 0.0
  %1161 = vmatpush1.msra.mxu0 0.0
  %1162 = vmatprep.subr.mxu0 0.0
  %1163 = vmatpush1.msra.mxu0 0.0
  %1164 = vmatprep.subr.mxu0 0.0
  %1165 = vmatpush1.msra.mxu0 0.0
  %1166 = vmatprep.subr.mxu0 0.0
  %1167 = vmatpush1.msra.mxu0 0.0
  %1168 = vmatprep.subr.mxu0 0.0
  %1169 = vmatpush1.msra.mxu0 0.0
  %1170 = vmatprep.subr.mxu0 0.0
  %1171 = vmatpush1.msra.mxu0 0.0
  %1172 = vmatprep.subr.mxu0 0.0
  %1173 = vmatpush1.msra.mxu0 0.0
  %1174 = vmatprep.subr.mxu0 0.0
  %1175 = vmatpush1.msra.mxu0 0.0
  %1176 = vmatprep.subr.mxu0 0.0
  %1177 = vmatpush1.msra.mxu0 0.0
  %1178 = vmatprep.subr.mxu0 0.0
  %1179 = vmatpush1.msra.mxu0 0.0
  %1180 = vmatprep.subr.mxu0 0.0
  %1181 = vmatpush1.msra.mxu0 0.0
  %1182 = vmatprep.subr.mxu0 0.0
  %1183 = vmatpush1.msra.mxu0 0.0
  %1184 = vmatprep.subr.mxu0 0.0
  %1185 = vmatpush1.msra.mxu0 0.0
  %1186 = vmatprep.subr.mxu0 0.0
  %1187 = vmatpush1.msra.mxu0 0.0
  %1188 = vmatprep.subr.mxu0 0.0
  %1189 = vmatpush1.msra.mxu0 0.0
  %1190 = vmatprep.subr.mxu0 0.0
  %1191 = vmatpush1.msra.mxu0 0.0
  %1192 = vmatprep.subr.mxu0 0.0
  %1193 = vmatpush1.msra.mxu0 0.0
  %1194 = vmatprep.subr.mxu0 0.0
  %1195 = vmatpush1.msra.mxu0 0.0
  %1196 = vmatprep.subr.mxu0 0.0
  %1197 = vmatpush1.msra.mxu0 0.0
  %1198 = vmatprep.mubr.f32.mxu0 0.0
  %1199 = vmatmul.mubr.f32.gmra.mrb[0].mxu0 %v1132
  %v1200 = vpop.f32.mrb[0].mxu0
  %v1201 = vadd.f32 0.0, %v1200
  %v1202 = vpop.f32.mrb[0].mxu0
  %v1203 = vadd.f32 0.0, %v1202
  %1204 = vdwg.mxu0
  %1205 = vmatprep.subr.mxu0 %v747
  %1206 = vmatpush1.msra.mxu0 %v746
  %1207 = vmatprep.subr.mxu0 %v751
  %1208 = vmatpush1.msra.mxu0 %v750
  %1209 = vmatprep.subr.mxu0 %v755
  %1210 = vmatpush1.msra.mxu0 %v754
  %1211 = vmatprep.subr.mxu0 %v759
  %1212 = vmatpush1.msra.mxu0 %v758
  %1213 = vmatprep.subr.mxu0 %v763
  %1214 = vmatpush1.msra.mxu0 %v762
  %1215 = vmatprep.subr.mxu0 %v767
  %1216 = vmatpush1.msra.mxu0 %v766
  %1217 = vmatprep.subr.mxu0 %v771
  %1218 = vmatpush1.msra.mxu0 %v770
  %1219 = vmatprep.subr.mxu0 %v775
  %1220 = vmatpush1.msra.mxu0 %v774
  %1221 = vmatprep.subr.mxu0 0.0
  %1222 = vmatpush1.msra.mxu0 0.0
  %1223 = vmatprep.subr.mxu0 0.0
  %1224 = vmatpush1.msra.mxu0 0.0
  %1225 = vmatprep.subr.mxu0 0.0
  %1226 = vmatpush1.msra.mxu0 0.0
  %1227 = vmatprep.subr.mxu0 0.0
  %1228 = vmatpush1.msra.mxu0 0.0
  %1229 = vmatprep.subr.mxu0 0.0
  %1230 = vmatpush1.msra.mxu0 0.0
  %1231 = vmatprep.subr.mxu0 0.0
  %1232 = vmatpush1.msra.mxu0 0.0
  %1233 = vmatprep.subr.mxu0 0.0
  %1234 = vmatpush1.msra.mxu0 0.0
  %1235 = vmatprep.subr.mxu0 0.0
  %1236 = vmatpush1.msra.mxu0 0.0
  %1237 = vmatprep.subr.mxu0 0.0
  %1238 = vmatpush1.msra.mxu0 0.0
  %1239 = vmatprep.subr.mxu0 0.0
  %1240 = vmatpush1.msra.mxu0 0.0
  %1241 = vmatprep.subr.mxu0 0.0
  %1242 = vmatpush1.msra.mxu0 0.0
  %1243 = vmatprep.subr.mxu0 0.0
  %1244 = vmatpush1.msra.mxu0 0.0
  %1245 = vmatprep.subr.mxu0 0.0
  %1246 = vmatpush1.msra.mxu0 0.0
  %1247 = vmatprep.subr.mxu0 0.0
  %1248 = vmatpush1.msra.mxu0 0.0
  %1249 = vmatprep.subr.mxu0 0.0
  %1250 = vmatpush1.msra.mxu0 0.0
  %1251 = vmatprep.subr.mxu0 0.0
  %1252 = vmatpush1.msra.mxu0 0.0
  %1253 = vmatprep.subr.mxu0 0.0
  %1254 = vmatpush1.msra.mxu0 0.0
  %1255 = vmatprep.subr.mxu0 0.0
  %1256 = vmatpush1.msra.mxu0 0.0
  %1257 = vmatprep.subr.mxu0 0.0
  %1258 = vmatpush1.msra.mxu0 0.0
  %1259 = vmatprep.subr.mxu0 0.0
  %1260 = vmatpush1.msra.mxu0 0.0
  %1261 = vmatprep.subr.mxu0 0.0
  %1262 = vmatpush1.msra.mxu0 0.0
  %1263 = vmatprep.subr.mxu0 0.0
  %1264 = vmatpush1.msra.mxu0 0.0
  %1265 = vmatprep.subr.mxu0 0.0
  %1266 = vmatpush1.msra.mxu0 0.0
  %1267 = vmatprep.subr.mxu0 0.0
  %1268 = vmatpush1.msra.mxu0 0.0
  %1269 = vmatprep.mubr.f32.mxu0 0.0
  %1270 = vmatmul.mubr.f32.gmra.mrb[0].mxu0 %v1132
  %v1271 = vpop.f32.mrb[0].mxu0
  %v1272 = vadd.f32 0.0, %v1271
  %v1273 = vpop.f32.mrb[0].mxu0
  %v1274 = vadd.f32 0.0, %v1273
  %1275 = vdwg.mxu0
  %v1276 = vadd.f32 %v1127, %v1201
  %v1277 = vadd.f32 %v1128, %v1203
  %v1278 = vadd.f32 %v1129, %v1272
  %v1279 = vadd.f32 %v1130, %v1274
  %v1280 = vxor.u32 %v1276, 2147483648
  %v1281 = vxor.u32 %v1277, 2147483648
  %v1282 = vxor.u32 %v1278, 2147483648
  %v1283 = vmul.f32 %v1280, 1.442695
  %v1284 = vpow.pop %v1283
  %v1285 = vmul.f32 %v1281, 1.442695
  %v1286 = vpow.pop %v1285
  %v1287 = vmul.f32 %v1282, 1.442695
  %v1288 = vpow.pop %v1287
  %v1289 = vadd.f32 %v1284, 1.0
  %v1290 = vadd.f32 %v1286, 1.0
  %v1291 = vadd.f32 %v1288, 1.0
  %v1292 = vrcp.pop %v1289
  %v1293 = vmul.f32 1.0, %v1292
  %v1294 = vrcp.pop %v1290
  %v1295 = vmul.f32 1.0, %v1294
  %v1296 = vrcp.pop %v1291
  %v1297 = vmul.f32 1.0, %v1296
  %v1298 = vtanh.pop %v1279
  %v1299 = vmul.f32 %v1295, %v1124
  %v1300 = vmul.f32 %v1293, %v1298
  %v1301 = vadd.f32 %v1299, %v1300
  %v1302 = vtanh.pop %v1301
  %v1303 = vmul.f32 %v1297, %v1302
  %v1304 = vld [vmem:[#allocation2 + $0x60] sm:$0xff]
  %v1305 = vld [vmem:[#allocation2 + $0x68] sm:$0xff]
  %v1306 = vld [vmem:[#allocation2 + $0x70] sm:$0xff]
  %v1307 = vld [vmem:[#allocation2 + $0x78] sm:$0xff]
  %v1309 = vsel %vm776, %v1303, 0
  %1311 = vmatprep.subr.mxu0 %v745
  %1312 = vmatpush1.msra.mxu0 %v744
  %1313 = vmatprep.subr.mxu0 %v749
  %1314 = vmatpush1.msra.mxu0 %v748
  %1315 = vmatprep.subr.mxu0 %v753
  %1316 = vmatpush1.msra.mxu0 %v752
  %1317 = vmatprep.subr.mxu0 %v757
  %1318 = vmatpush1.msra.mxu0 %v756
  %1319 = vmatprep.subr.mxu0 %v761
  %1320 = vmatpush1.msra.mxu0 %v760
  %1321 = vmatprep.subr.mxu0 %v765
  %1322 = vmatpush1.msra.mxu0 %v764
  %1323 = vmatprep.subr.mxu0 %v769
  %1324 = vmatpush1.msra.mxu0 %v768
  %1325 = vmatprep.subr.mxu0 %v773
  %1326 = vmatpush1.msra.mxu0 %v772
  %1327 = vmatprep.subr.mxu0 0.0
  %1328 = vmatpush1.msra.mxu0 0.0
  %1329 = vmatprep.subr.mxu0 0.0
  %1330 = vmatpush1.msra.mxu0 0.0
  %1331 = vmatprep.subr.mxu0 0.0
  %1332 = vmatpush1.msra.mxu0 0.0
  %1333 = vmatprep.subr.mxu0 0.0
  %1334 = vmatpush1.msra.mxu0 0.0
  %1335 = vmatprep.subr.mxu0 0.0
  %1336 = vmatpush1.msra.mxu0 0.0
  %1337 = vmatprep.subr.mxu0 0.0
  %1338 = vmatpush1.msra.mxu0 0.0
  %1339 = vmatprep.subr.mxu0 0.0
  %1340 = vmatpush1.msra.mxu0 0.0
  %1341 = vmatprep.subr.mxu0 0.0
  %1342 = vmatpush1.msra.mxu0 0.0
  %1343 = vmatprep.subr.mxu0 0.0
  %1344 = vmatpush1.msra.mxu0 0.0
  %1345 = vmatprep.subr.mxu0 0.0
  %1346 = vmatpush1.msra.mxu0 0.0
  %1347 = vmatprep.subr.mxu0 0.0
  %1348 = vmatpush1.msra.mxu0 0.0
  %1349 = vmatprep.subr.mxu0 0.0
  %1350 = vmatpush1.msra.mxu0 0.0
  %1351 = vmatprep.subr.mxu0 0.0
  %1352 = vmatpush1.msra.mxu0 0.0
  %1353 = vmatprep.subr.mxu0 0.0
  %1354 = vmatpush1.msra.mxu0 0.0
  %1355 = vmatprep.subr.mxu0 0.0
  %1356 = vmatpush1.msra.mxu0 0.0
  %1357 = vmatprep.subr.mxu0 0.0
  %1358 = vmatpush1.msra.mxu0 0.0
  %1359 = vmatprep.subr.mxu0 0.0
  %1360 = vmatpush1.msra.mxu0 0.0
  %1361 = vmatprep.subr.mxu0 0.0
  %1362 = vmatpush1.msra.mxu0 0.0
  %1363 = vmatprep.subr.mxu0 0.0
  %1364 = vmatpush1.msra.mxu0 0.0
  %1365 = vmatprep.subr.mxu0 0.0
  %1366 = vmatpush1.msra.mxu0 0.0
  %1367 = vmatprep.subr.mxu0 0.0
  %1368 = vmatpush1.msra.mxu0 0.0
  %1369 = vmatprep.subr.mxu0 0.0
  %1370 = vmatpush1.msra.mxu0 0.0
  %1371 = vmatprep.subr.mxu0 0.0
  %1372 = vmatpush1.msra.mxu0 0.0
  %1373 = vmatprep.subr.mxu0 0.0
  %1374 = vmatpush1.msra.mxu0 0.0
  %1375 = vmatprep.mubr.f32.mxu0 0.0
  %1376 = vmatmul.mubr.f32.gmra.mrb[0].mxu0 %v1309
  %v1377 = vpop.f32.mrb[0].mxu0
  %v1378 = vadd.f32 0.0, %v1377
  %v1379 = vpop.f32.mrb[0].mxu0
  %v1380 = vadd.f32 0.0, %v1379
  %1381 = vdwg.mxu0
  %1382 = vmatprep.subr.mxu0 %v747
  %1383 = vmatpush1.msra.mxu0 %v746
  %1384 = vmatprep.subr.mxu0 %v751
  %1385 = vmatpush1.msra.mxu0 %v750
  %1386 = vmatprep.subr.mxu0 %v755
  %1387 = vmatpush1.msra.mxu0 %v754
  %1388 = vmatprep.subr.mxu0 %v759
  %1389 = vmatpush1.msra.mxu0 %v758
  %1390 = vmatprep.subr.mxu0 %v763
  %1391 = vmatpush1.msra.mxu0 %v762
  %1392 = vmatprep.subr.mxu0 %v767
  %1393 = vmatpush1.msra.mxu0 %v766
  %1394 = vmatprep.subr.mxu0 %v771
  %1395 = vmatpush1.msra.mxu0 %v770
  %1396 = vmatprep.subr.mxu0 %v775
  %1397 = vmatpush1.msra.mxu0 %v774
  %1398 = vmatprep.subr.mxu0 0.0
  %1399 = vmatpush1.msra.mxu0 0.0
  %1400 = vmatprep.subr.mxu0 0.0
  %1401 = vmatpush1.msra.mxu0 0.0
  %1402 = vmatprep.subr.mxu0 0.0
  %1403 = vmatpush1.msra.mxu0 0.0
  %1404 = vmatprep.subr.mxu0 0.0
  %1405 = vmatpush1.msra.mxu0 0.0
  %1406 = vmatprep.subr.mxu0 0.0
  %1407 = vmatpush1.msra.mxu0 0.0
  %1408 = vmatprep.subr.mxu0 0.0
  %1409 = vmatpush1.msra.mxu0 0.0
  %1410 = vmatprep.subr.mxu0 0.0
  %1411 = vmatpush1.msra.mxu0 0.0
  %1412 = vmatprep.subr.mxu0 0.0
  %1413 = vmatpush1.msra.mxu0 0.0
  %1414 = vmatprep.subr.mxu0 0.0
  %1415 = vmatpush1.msra.mxu0 0.0
  %1416 = vmatprep.subr.mxu0 0.0
  %1417 = vmatpush1.msra.mxu0 0.0
  %1418 = vmatprep.subr.mxu0 0.0
  %1419 = vmatpush1.msra.mxu0 0.0
  %1420 = vmatprep.subr.mxu0 0.0
  %1421 = vmatpush1.msra.mxu0 0.0
  %1422 = vmatprep.subr.mxu0 0.0
  %1423 = vmatpush1.msra.mxu0 0.0
  %1424 = vmatprep.subr.mxu0 0.0
  %1425 = vmatpush1.msra.mxu0 0.0
  %1426 = vmatprep.subr.mxu0 0.0
  %1427 = vmatpush1.msra.mxu0 0.0
  %1428 = vmatprep.subr.mxu0 0.0
  %1429 = vmatpush1.msra.mxu0 0.0
  %1430 = vmatprep.subr.mxu0 0.0
  %1431 = vmatpush1.msra.mxu0 0.0
  %1432 = vmatprep.subr.mxu0 0.0
  %1433 = vmatpush1.msra.mxu0 0.0
  %1434 = vmatprep.subr.mxu0 0.0
  %1435 = vmatpush1.msra.mxu0 0.0
  %1436 = vmatprep.subr.mxu0 0.0
  %1437 = vmatpush1.msra.mxu0 0.0
  %1438 = vmatprep.subr.mxu0 0.0
  %1439 = vmatpush1.msra.mxu0 0.0
  %1440 = vmatprep.subr.mxu0 0.0
  %1441 = vmatpush1.msra.mxu0 0.0
  %1442 = vmatprep.subr.mxu0 0.0
  %1443 = vmatpush1.msra.mxu0 0.0
  %1444 = vmatprep.subr.mxu0 0.0
  %1445 = vmatpush1.msra.mxu0 0.0
  %1446 = vmatprep.mubr.f32.mxu0 0.0
  %1447 = vmatmul.mubr.f32.gmra.mrb[0].mxu0 %v1309
  %v1448 = vpop.f32.mrb[0].mxu0
  %v1449 = vadd.f32 0.0, %v1448
  %v1450 = vpop.f32.mrb[0].mxu0
  %v1451 = vadd.f32 0.0, %v1450
  %1452 = vdwg.mxu0
  %v1453 = vadd.f32 %v1304, %v1378
  %v1454 = vadd.f32 %v1305, %v1380
  %v1455 = vadd.f32 %v1306, %v1449
  %v1456 = vadd.f32 %v1307, %v1451
  %v1457 = vxor.u32 %v1453, 2147483648
  %v1458 = vxor.u32 %v1454, 2147483648
  %v1459 = vxor.u32 %v1455, 2147483648
  %v1460 = vmul.f32 %v1457, 1.442695
  %v1461 = vpow.pop %v1460
  %v1462 = vmul.f32 %v1458, 1.442695
  %v1463 = vpow.pop %v1462
  %v1464 = vmul.f32 %v1459, 1.442695
  %v1465 = vpow.pop %v1464
  %v1466 = vadd.f32 %v1461, 1.0
  %v1467 = vadd.f32 %v1463, 1.0
  %v1468 = vadd.f32 %v1465, 1.0
  %v1469 = vrcp.pop %v1466
  %v1470 = vmul.f32 1.0, %v1469
  %v1471 = vrcp.pop %v1467
  %v1472 = vmul.f32 1.0, %v1471
  %v1473 = vrcp.pop %v1468
  %v1474 = vmul.f32 1.0, %v1473
  %v1475 = vtanh.pop %v1456
  %v1476 = vmul.f32 %v1472, %v1301
  %v1477 = vmul.f32 %v1470, %v1475
  %v1478 = vadd.f32 %v1476, %v1477
  %v1479 = vtanh.pop %v1478
  %v1480 = vmul.f32 %v1474, %v1479
  %v1481 = vld [vmem:[#allocation2 + $0x80] sm:$0xff]
  %v1482 = vld [vmem:[#allocation2 + $0x88] sm:$0xff]
  %v1483 = vld [vmem:[#allocation2 + $0x90] sm:$0xff]
  %v1484 = vld [vmem:[#allocation2 + $0x98] sm:$0xff]
  %v1486 = vsel %vm776, %v1480, 0
  %1488 = vmatprep.subr.mxu0 %v745
  %1489 = vmatpush1.msra.mxu0 %v744
  %1490 = vmatprep.subr.mxu0 %v749
  %1491 = vmatpush1.msra.mxu0 %v748
  %1492 = vmatprep.subr.mxu0 %v753
  %1493 = vmatpush1.msra.mxu0 %v752
  %1494 = vmatprep.subr.mxu0 %v757
  %1495 = vmatpush1.msra.mxu0 %v756
  %1496 = vmatprep.subr.mxu0 %v761
  %1497 = vmatpush1.msra.mxu0 %v760
  %1498 = vmatprep.subr.mxu0 %v765
  %1499 = vmatpush1.msra.mxu0 %v764
  %1500 = vmatprep.subr.mxu0 %v769
  %1501 = vmatpush1.msra.mxu0 %v768
  %1502 = vmatprep.subr.mxu0 %v773
  %1503 = vmatpush1.msra.mxu0 %v772
  %1504 = vmatprep.subr.mxu0 0.0
  %1505 = vmatpush1.msra.mxu0 0.0
  %1506 = vmatprep.subr.mxu0 0.0
  %1507 = vmatpush1.msra.mxu0 0.0
  %1508 = vmatprep.subr.mxu0 0.0
  %1509 = vmatpush1.msra.mxu0 0.0
  %1510 = vmatprep.subr.mxu0 0.0
  %1511 = vmatpush1.msra.mxu0 0.0
  %1512 = vmatprep.subr.mxu0 0.0
  %1513 = vmatpush1.msra.mxu0 0.0
  %1514 = vmatprep.subr.mxu0 0.0
  %1515 = vmatpush1.msra.mxu0 0.0
  %1516 = vmatprep.subr.mxu0 0.0
  %1517 = vmatpush1.msra.mxu0 0.0
  %1518 = vmatprep.subr.mxu0 0.0
  %1519 = vmatpush1.msra.mxu0 0.0
  %1520 = vmatprep.subr.mxu0 0.0
  %1521 = vmatpush1.msra.mxu0 0.0
  %1522 = vmatprep.subr.mxu0 0.0
  %1523 = vmatpush1.msra.mxu0 0.0
  %1524 = vmatprep.subr.mxu0 0.0
  %1525 = vmatpush1.msra.mxu0 0.0
  %1526 = vmatprep.subr.mxu0 0.0
  %1527 = vmatpush1.msra.mxu0 0.0
  %1528 = vmatprep.subr.mxu0 0.0
  %1529 = vmatpush1.msra.mxu0 0.0
  %1530 = vmatprep.subr.mxu0 0.0
  %1531 = vmatpush1.msra.mxu0 0.0
  %1532 = vmatprep.subr.mxu0 0.0
  %1533 = vmatpush1.msra.mxu0 0.0
  %1534 = vmatprep.subr.mxu0 0.0
  %1535 = vmatpush1.msra.mxu0 0.0
  %1536 = vmatprep.subr.mxu0 0.0
  %1537 = vmatpush1.msra.mxu0 0.0
  %1538 = vmatprep.subr.mxu0 0.0
  %1539 = vmatpush1.msra.mxu0 0.0
  %1540 = vmatprep.subr.mxu0 0.0
  %1541 = vmatpush1.msra.mxu0 0.0
  %1542 = vmatprep.subr.mxu0 0.0
  %1543 = vmatpush1.msra.mxu0 0.0
  %1544 = vmatprep.subr.mxu0 0.0
  %1545 = vmatpush1.msra.mxu0 0.0
  %1546 = vmatprep.subr.mxu0 0.0
  %1547 = vmatpush1.msra.mxu0 0.0
  %1548 = vmatprep.subr.mxu0 0.0
  %1549 = vmatpush1.msra.mxu0 0.0
  %1550 = vmatprep.subr.mxu0 0.0
  %1551 = vmatpush1.msra.mxu0 0.0
  %1552 = vmatprep.mubr.f32.mxu0 0.0
  %1553 = vmatmul.mubr.f32.gmra.mrb[0].mxu0 %v1486
  %v1554 = vpop.f32.mrb[0].mxu0
  %v1555 = vadd.f32 0.0, %v1554
  %v1556 = vpop.f32.mrb[0].mxu0
  %v1557 = vadd.f32 0.0, %v1556
  %1558 = vdwg.mxu0
  %1559 = vmatprep.subr.mxu0 %v747
  %1560 = vmatpush1.msra.mxu0 %v746
  %1561 = vmatprep.subr.mxu0 %v751
  %1562 = vmatpush1.msra.mxu0 %v750
  %1563 = vmatprep.subr.mxu0 %v755
  %1564 = vmatpush1.msra.mxu0 %v754
  %1565 = vmatprep.subr.mxu0 %v759
  %1566 = vmatpush1.msra.mxu0 %v758
  %1567 = vmatprep.subr.mxu0 %v763
  %1568 = vmatpush1.msra.mxu0 %v762
  %1569 = vmatprep.subr.mxu0 %v767
  %1570 = vmatpush1.msra.mxu0 %v766
  %1571 = vmatprep.subr.mxu0 %v771
  %1572 = vmatpush1.msra.mxu0 %v770
  %1573 = vmatprep.subr.mxu0 %v775
  %1574 = vmatpush1.msra.mxu0 %v774
  %1575 = vmatprep.subr.mxu0 0.0
  %1576 = vmatpush1.msra.mxu0 0.0
  %1577 = vmatprep.subr.mxu0 0.0
  %1578 = vmatpush1.msra.mxu0 0.0
  %1579 = vmatprep.subr.mxu0 0.0
  %1580 = vmatpush1.msra.mxu0 0.0
  %1581 = vmatprep.subr.mxu0 0.0
  %1582 = vmatpush1.msra.mxu0 0.0
  %1583 = vmatprep.subr.mxu0 0.0
  %1584 = vmatpush1.msra.mxu0 0.0
  %1585 = vmatprep.subr.mxu0 0.0
  %1586 = vmatpush1.msra.mxu0 0.0
  %1587 = vmatprep.subr.mxu0 0.0
  %1588 = vmatpush1.msra.mxu0 0.0
  %1589 = vmatprep.subr.mxu0 0.0
  %1590 = vmatpush1.msra.mxu0 0.0
  %1591 = vmatprep.subr.mxu0 0.0
  %1592 = vmatpush1.msra.mxu0 0.0
  %1593 = vmatprep.subr.mxu0 0.0
  %1594 = vmatpush1.msra.mxu0 0.0
  %1595 = vmatprep.subr.mxu0 0.0
  %1596 = vmatpush1.msra.mxu0 0.0
  %1597 = vmatprep.subr.mxu0 0.0
  %1598 = vmatpush1.msra.mxu0 0.0
  %1599 = vmatprep.subr.mxu0 0.0
  %1600 = vmatpush1.msra.mxu0 0.0
  %1601 = vmatprep.subr.mxu0 0.0
  %1602 = vmatpush1.msra.mxu0 0.0
  %1603 = vmatprep.subr.mxu0 0.0
  %1604 = vmatpush1.msra.mxu0 0.0
  %1605 = vmatprep.subr.mxu0 0.0
  %1606 = vmatpush1.msra.mxu0 0.0
  %1607 = vmatprep.subr.mxu0 0.0
  %1608 = vmatpush1.msra.mxu0 0.0
  %1609 = vmatprep.subr.mxu0 0.0
  %1610 = vmatpush1.msra.mxu0 0.0
  %1611 = vmatprep.subr.mxu0 0.0
  %1612 = vmatpush1.msra.mxu0 0.0
  %1613 = vmatprep.subr.mxu0 0.0
  %1614 = vmatpush1.msra.mxu0 0.0
  %1615 = vmatprep.subr.mxu0 0.0
  %1616 = vmatpush1.msra.mxu0 0.0
  %1617 = vmatprep.subr.mxu0 0.0
  %1618 = vmatpush1.msra.mxu0 0.0
  %1619 = vmatprep.subr.mxu0 0.0
  %1620 = vmatpush1.msra.mxu0 0.0
  %1621 = vmatprep.subr.mxu0 0.0
  %1622 = vmatpush1.msra.mxu0 0.0
  %1623 = vmatprep.mubr.f32.mxu0 0.0
  %1624 = vmatmul.mubr.f32.gmra.mrb[0].mxu0 %v1486
  %v1625 = vpop.f32.mrb[0].mxu0
  %v1626 = vadd.f32 0.0, %v1625
  %v1627 = vpop.f32.mrb[0].mxu0
  %v1628 = vadd.f32 0.0, %v1627
  %1629 = vdwg.mxu0
  %v1630 = vadd.f32 %v1481, %v1555
  %v1631 = vadd.f32 %v1482, %v1557
  %v1632 = vadd.f32 %v1483, %v1626
  %v1633 = vadd.f32 %v1484, %v1628
  %v1634 = vxor.u32 %v1630, 2147483648
  %v1635 = vxor.u32 %v1631, 2147483648
  %v1636 = vxor.u32 %v1632, 2147483648
  %v1637 = vmul.f32 %v1634, 1.442695
  %v1638 = vpow.pop %v1637
  %v1639 = vmul.f32 %v1635, 1.442695
  %v1640 = vpow.pop %v1639
  %v1641 = vmul.f32 %v1636, 1.442695
  %v1642 = vpow.pop %v1641
  %v1643 = vadd.f32 %v1638, 1.0
  %v1644 = vadd.f32 %v1640, 1.0
  %v1645 = vadd.f32 %v1642, 1.0
  %v1646 = vrcp.pop %v1643
  %v1647 = vmul.f32 1.0, %v1646
  %v1648 = vrcp.pop %v1644
  %v1649 = vmul.f32 1.0, %v1648
  %v1650 = vrcp.pop %v1645
  %v1651 = vmul.f32 1.0, %v1650
  %v1652 = vtanh.pop %v1633
  %v1653 = vmul.f32 %v1649, %v1478
  %v1654 = vmul.f32 %v1647, %v1652
  %v1655 = vadd.f32 %v1653, %v1654
  %v1656 = vtanh.pop %v1655
  %v1657 = vmul.f32 %v1651, %v1656
  %v1658 = vld [vmem:[#allocation2 + $0xa0] sm:$0xff]
  %v1659 = vld [vmem:[#allocation2 + $0xa8] sm:$0xff]
  %v1660 = vld [vmem:[#allocation2 + $0xb0] sm:$0xff]
  %v1661 = vld [vmem:[#allocation2 + $0xb8] sm:$0xff]
  %v1663 = vsel %vm776, %v1657, 0
  %1665 = vmatprep.subr.mxu0 %v745
  %1666 = vmatpush1.msra.mxu0 %v744
  %1667 = vmatprep.subr.mxu0 %v749
  %1668 = vmatpush1.msra.mxu0 %v748
  %1669 = vmatprep.subr.mxu0 %v753
  %1670 = vmatpush1.msra.mxu0 %v752
  %1671 = vmatprep.subr.mxu0 %v757
  %1672 = vmatpush1.msra.mxu0 %v756
  %1673 = vmatprep.subr.mxu0 %v761
  %1674 = vmatpush1.msra.mxu0 %v760
  %1675 = vmatprep.subr.mxu0 %v765
  %1676 = vmatpush1.msra.mxu0 %v764
  %1677 = vmatprep.subr.mxu0 %v769
  %1678 = vmatpush1.msra.mxu0 %v768
  %1679 = vmatprep.subr.mxu0 %v773
  %1680 = vmatpush1.msra.mxu0 %v772
  %1681 = vmatprep.subr.mxu0 0.0
  %1682 = vmatpush1.msra.mxu0 0.0
  %1683 = vmatprep.subr.mxu0 0.0
  %1684 = vmatpush1.msra.mxu0 0.0
  %1685 = vmatprep.subr.mxu0 0.0
  %1686 = vmatpush1.msra.mxu0 0.0
  %1687 = vmatprep.subr.mxu0 0.0
  %1688 = vmatpush1.msra.mxu0 0.0
  %1689 = vmatprep.subr.mxu0 0.0
  %1690 = vmatpush1.msra.mxu0 0.0
  %1691 = vmatprep.subr.mxu0 0.0
  %1692 = vmatpush1.msra.mxu0 0.0
  %1693 = vmatprep.subr.mxu0 0.0
  %1694 = vmatpush1.msra.mxu0 0.0
  %1695 = vmatprep.subr.mxu0 0.0
  %1696 = vmatpush1.msra.mxu0 0.0
  %1697 = vmatprep.subr.mxu0 0.0
  %1698 = vmatpush1.msra.mxu0 0.0
  %1699 = vmatprep.subr.mxu0 0.0
  %1700 = vmatpush1.msra.mxu0 0.0
  %1701 = vmatprep.subr.mxu0 0.0
  %1702 = vmatpush1.msra.mxu0 0.0
  %1703 = vmatprep.subr.mxu0 0.0
  %1704 = vmatpush1.msra.mxu0 0.0
  %1705 = vmatprep.subr.mxu0 0.0
  %1706 = vmatpush1.msra.mxu0 0.0
  %1707 = vmatprep.subr.mxu0 0.0
  %1708 = vmatpush1.msra.mxu0 0.0
  %1709 = vmatprep.subr.mxu0 0.0
  %1710 = vmatpush1.msra.mxu0 0.0
  %1711 = vmatprep.subr.mxu0 0.0
  %1712 = vmatpush1.msra.mxu0 0.0
  %1713 = vmatprep.subr.mxu0 0.0
  %1714 = vmatpush1.msra.mxu0 0.0
  %1715 = vmatprep.subr.mxu0 0.0
  %1716 = vmatpush1.msra.mxu0 0.0
  %1717 = vmatprep.subr.mxu0 0.0
  %1718 = vmatpush1.msra.mxu0 0.0
  %1719 = vmatprep.subr.mxu0 0.0
  %1720 = vmatpush1.msra.mxu0 0.0
  %1721 = vmatprep.subr.mxu0 0.0
  %1722 = vmatpush1.msra.mxu0 0.0
  %1723 = vmatprep.subr.mxu0 0.0
  %1724 = vmatpush1.msra.mxu0 0.0
  %1725 = vmatprep.subr.mxu0 0.0
  %1726 = vmatpush1.msra.mxu0 0.0
  %1727 = vmatprep.subr.mxu0 0.0
  %1728 = vmatpush1.msra.mxu0 0.0
  %1729 = vmatprep.mubr.f32.mxu0 0.0
  %1730 = vmatmul.mubr.f32.gmra.mrb[0].mxu0 %v1663
  %v1731 = vpop.f32.mrb[0].mxu0
  %v1732 = vadd.f32 0.0, %v1731
  %v1733 = vpop.f32.mrb[0].mxu0
  %v1734 = vadd.f32 0.0, %v1733
  %1735 = vdwg.mxu0
  %1736 = vmatprep.subr.mxu0 %v747
  %1737 = vmatpush1.msra.mxu0 %v746
  %1738 = vmatprep.subr.mxu0 %v751
  %1739 = vmatpush1.msra.mxu0 %v750
  %1740 = vmatprep.subr.mxu0 %v755
  %1741 = vmatpush1.msra.mxu0 %v754
  %1742 = vmatprep.subr.mxu0 %v759
  %1743 = vmatpush1.msra.mxu0 %v758
  %1744 = vmatprep.subr.mxu0 %v763
  %1745 = vmatpush1.msra.mxu0 %v762
  %1746 = vmatprep.subr.mxu0 %v767
  %1747 = vmatpush1.msra.mxu0 %v766
  %1748 = vmatprep.subr.mxu0 %v771
  %1749 = vmatpush1.msra.mxu0 %v770
  %1750 = vmatprep.subr.mxu0 %v775
  %1751 = vmatpush1.msra.mxu0 %v774
  %1752 = vmatprep.subr.mxu0 0.0
  %1753 = vmatpush1.msra.mxu0 0.0
  %1754 = vmatprep.subr.mxu0 0.0
  %1755 = vmatpush1.msra.mxu0 0.0
  %1756 = vmatprep.subr.mxu0 0.0
  %1757 = vmatpush1.msra.mxu0 0.0
  %1758 = vmatprep.subr.mxu0 0.0
  %1759 = vmatpush1.msra.mxu0 0.0
  %1760 = vmatprep.subr.mxu0 0.0
  %1761 = vmatpush1.msra.mxu0 0.0
  %1762 = vmatprep.subr.mxu0 0.0
  %1763 = vmatpush1.msra.mxu0 0.0
  %1764 = vmatprep.subr.mxu0 0.0
  %1765 = vmatpush1.msra.mxu0 0.0
  %1766 = vmatprep.subr.mxu0 0.0
  %1767 = vmatpush1.msra.mxu0 0.0
  %1768 = vmatprep.subr.mxu0 0.0
  %1769 = vmatpush1.msra.mxu0 0.0
  %1770 = vmatprep.subr.mxu0 0.0
  %1771 = vmatpush1.msra.mxu0 0.0
  %1772 = vmatprep.subr.mxu0 0.0
  %1773 = vmatpush1.msra.mxu0 0.0
  %1774 = vmatprep.subr.mxu0 0.0
  %1775 = vmatpush1.msra.mxu0 0.0
  %1776 = vmatprep.subr.mxu0 0.0
  %1777 = vmatpush1.msra.mxu0 0.0
  %1778 = vmatprep.subr.mxu0 0.0
  %1779 = vmatpush1.msra.mxu0 0.0
  %1780 = vmatprep.subr.mxu0 0.0
  %1781 = vmatpush1.msra.mxu0 0.0
  %1782 = vmatprep.subr.mxu0 0.0
  %1783 = vmatpush1.msra.mxu0 0.0
  %1784 = vmatprep.subr.mxu0 0.0
  %1785 = vmatpush1.msra.mxu0 0.0
  %1786 = vmatprep.subr.mxu0 0.0
  %1787 = vmatpush1.msra.mxu0 0.0
  %1788 = vmatprep.subr.mxu0 0.0
  %1789 = vmatpush1.msra.mxu0 0.0
  %1790 = vmatprep.subr.mxu0 0.0
  %1791 = vmatpush1.msra.mxu0 0.0
  %1792 = vmatprep.subr.mxu0 0.0
  %1793 = vmatpush1.msra.mxu0 0.0
  %1794 = vmatprep.subr.mxu0 0.0
  %1795 = vmatpush1.msra.mxu0 0.0
  %1796 = vmatprep.subr.mxu0 0.0
  %1797 = vmatpush1.msra.mxu0 0.0
  %1798 = vmatprep.subr.mxu0 0.0
  %1799 = vmatpush1.msra.mxu0 0.0
  %1800 = vmatprep.mubr.f32.mxu0 0.0
  %1801 = vmatmul.mubr.f32.gmra.mrb[0].mxu0 %v1663
  %v1802 = vpop.f32.mrb[0].mxu0
  %v1803 = vadd.f32 0.0, %v1802
  %v1804 = vpop.f32.mrb[0].mxu0
  %v1805 = vadd.f32 0.0, %v1804
  %1806 = vdwg.mxu0
  %v1807 = vadd.f32 %v1658, %v1732
  %v1808 = vadd.f32 %v1659, %v1734
  %v1809 = vadd.f32 %v1660, %v1803
  %v1810 = vadd.f32 %v1661, %v1805
  %v1811 = vxor.u32 %v1807, 2147483648
  %v1812 = vxor.u32 %v1808, 2147483648
  %v1813 = vxor.u32 %v1809, 2147483648
  %v1814 = vmul.f32 %v1811, 1.442695
  %v1815 = vpow.pop %v1814
  %v1816 = vmul.f32 %v1812, 1.442695
  %v1817 = vpow.pop %v1816
  %v1818 = vmul.f32 %v1813, 1.442695
  %v1819 = vpow.pop %v1818
  %v1820 = vadd.f32 %v1815, 1.0
  %v1821 = vadd.f32 %v1817, 1.0
  %v1822 = vadd.f32 %v1819, 1.0
  %v1823 = vrcp.pop %v1820
  %v1824 = vmul.f32 1.0, %v1823
  %v1825 = vrcp.pop %v1821
  %v1826 = vmul.f32 1.0, %v1825
  %v1827 = vrcp.pop %v1822
  %v1828 = vmul.f32 1.0, %v1827
  %v1829 = vtanh.pop %v1810
  %v1830 = vmul.f32 %v1826, %v1655
  %v1831 = vmul.f32 %v1824, %v1829
  %v1832 = vadd.f32 %v1830, %v1831
  %v1833 = vtanh.pop %v1832
  %v1834 = vmul.f32 %v1828, %v1833
  %v1835 = vld [vmem:[#allocation2 + $0xc0] sm:$0xff]
  %v1836 = vld [vmem:[#allocation2 + $0xc8] sm:$0xff]
  %v1837 = vld [vmem:[#allocation2 + $0xd0] sm:$0xff]
  %v1838 = vld [vmem:[#allocation2 + $0xd8] sm:$0xff]
  %v1840 = vsel %vm776, %v1834, 0
  %1842 = vmatprep.subr.mxu0 %v745
  %1843 = vmatpush1.msra.mxu0 %v744
  %1844 = vmatprep.subr.mxu0 %v749
  %1845 = vmatpush1.msra.mxu0 %v748
  %1846 = vmatprep.subr.mxu0 %v753
  %1847 = vmatpush1.msra.mxu0 %v752
  %1848 = vmatprep.subr.mxu0 %v757
  %1849 = vmatpush1.msra.mxu0 %v756
  %1850 = vmatprep.subr.mxu0 %v761
  %1851 = vmatpush1.msra.mxu0 %v760
  %1852 = vmatprep.subr.mxu0 %v765
  %1853 = vmatpush1.msra.mxu0 %v764
  %1854 = vmatprep.subr.mxu0 %v769
  %1855 = vmatpush1.msra.mxu0 %v768
  %1856 = vmatprep.subr.mxu0 %v773
  %1857 = vmatpush1.msra.mxu0 %v772
  %1858 = vmatprep.subr.mxu0 0.0
  %1859 = vmatpush1.msra.mxu0 0.0
  %1860 = vmatprep.subr.mxu0 0.0
  %1861 = vmatpush1.msra.mxu0 0.0
  %1862 = vmatprep.subr.mxu0 0.0
  %1863 = vmatpush1.msra.mxu0 0.0
  %1864 = vmatprep.subr.mxu0 0.0
  %1865 = vmatpush1.msra.mxu0 0.0
  %1866 = vmatprep.subr.mxu0 0.0
  %1867 = vmatpush1.msra.mxu0 0.0
  %1868 = vmatprep.subr.mxu0 0.0
  %1869 = vmatpush1.msra.mxu0 0.0
  %1870 = vmatprep.subr.mxu0 0.0
  %1871 = vmatpush1.msra.mxu0 0.0
  %1872 = vmatprep.subr.mxu0 0.0
  %1873 = vmatpush1.msra.mxu0 0.0
  %1874 = vmatprep.subr.mxu0 0.0
  %1875 = vmatpush1.msra.mxu0 0.0
  %1876 = vmatprep.subr.mxu0 0.0
  %1877 = vmatpush1.msra.mxu0 0.0
  %1878 = vmatprep.subr.mxu0 0.0
  %1879 = vmatpush1.msra.mxu0 0.0
  %1880 = vmatprep.subr.mxu0 0.0
  %1881 = vmatpush1.msra.mxu0 0.0
  %1882 = vmatprep.subr.mxu0 0.0
  %1883 = vmatpush1.msra.mxu0 0.0
  %1884 = vmatprep.subr.mxu0 0.0
  %1885 = vmatpush1.msra.mxu0 0.0
  %1886 = vmatprep.subr.mxu0 0.0
  %1887 = vmatpush1.msra.mxu0 0.0
  %1888 = vmatprep.subr.mxu0 0.0
  %1889 = vmatpush1.msra.mxu0 0.0
  %1890 = vmatprep.subr.mxu0 0.0
  %1891 = vmatpush1.msra.mxu0 0.0
  %1892 = vmatprep.subr.mxu0 0.0
  %1893 = vmatpush1.msra.mxu0 0.0
  %1894 = vmatprep.subr.mxu0 0.0
  %1895 = vmatpush1.msra.mxu0 0.0
  %1896 = vmatprep.subr.mxu0 0.0
  %1897 = vmatpush1.msra.mxu0 0.0
  %1898 = vmatprep.subr.mxu0 0.0
  %1899 = vmatpush1.msra.mxu0 0.0
  %1900 = vmatprep.subr.mxu0 0.0
  %1901 = vmatpush1.msra.mxu0 0.0
  %1902 = vmatprep.subr.mxu0 0.0
  %1903 = vmatpush1.msra.mxu0 0.0
  %1904 = vmatprep.subr.mxu0 0.0
  %1905 = vmatpush1.msra.mxu0 0.0
  %1906 = vmatprep.mubr.f32.mxu0 0.0
  %1907 = vmatmul.mubr.f32.gmra.mrb[0].mxu0 %v1840
  %v1908 = vpop.f32.mrb[0].mxu0
  %v1909 = vadd.f32 0.0, %v1908
  %v1910 = vpop.f32.mrb[0].mxu0
  %v1911 = vadd.f32 0.0, %v1910
  %1912 = vdwg.mxu0
  %1913 = vmatprep.subr.mxu0 %v747
  %1914 = vmatpush1.msra.mxu0 %v746
  %1915 = vmatprep.subr.mxu0 %v751
  %1916 = vmatpush1.msra.mxu0 %v750
  %1917 = vmatprep.subr.mxu0 %v755
  %1918 = vmatpush1.msra.mxu0 %v754
  %1919 = vmatprep.subr.mxu0 %v759
  %1920 = vmatpush1.msra.mxu0 %v758
  %1921 = vmatprep.subr.mxu0 %v763
  %1922 = vmatpush1.msra.mxu0 %v762
  %1923 = vmatprep.subr.mxu0 %v767
  %1924 = vmatpush1.msra.mxu0 %v766
  %1925 = vmatprep.subr.mxu0 %v771
  %1926 = vmatpush1.msra.mxu0 %v770
  %1927 = vmatprep.subr.mxu0 %v775
  %1928 = vmatpush1.msra.mxu0 %v774
  %1929 = vmatprep.subr.mxu0 0.0
  %1930 = vmatpush1.msra.mxu0 0.0
  %1931 = vmatprep.subr.mxu0 0.0
  %1932 = vmatpush1.msra.mxu0 0.0
  %1933 = vmatprep.subr.mxu0 0.0
  %1934 = vmatpush1.msra.mxu0 0.0
  %1935 = vmatprep.subr.mxu0 0.0
  %1936 = vmatpush1.msra.mxu0 0.0
  %1937 = vmatprep.subr.mxu0 0.0
  %1938 = vmatpush1.msra.mxu0 0.0
  %1939 = vmatprep.subr.mxu0 0.0
  %1940 = vmatpush1.msra.mxu0 0.0
  %1941 = vmatprep.subr.mxu0 0.0
  %1942 = vmatpush1.msra.mxu0 0.0
  %1943 = vmatprep.subr.mxu0 0.0
  %1944 = vmatpush1.msra.mxu0 0.0
  %1945 = vmatprep.subr.mxu0 0.0
  %1946 = vmatpush1.msra.mxu0 0.0
  %1947 = vmatprep.subr.mxu0 0.0
  %1948 = vmatpush1.msra.mxu0 0.0
  %1949 = vmatprep.subr.mxu0 0.0
  %1950 = vmatpush1.msra.mxu0 0.0
  %1951 = vmatprep.subr.mxu0 0.0
  %1952 = vmatpush1.msra.mxu0 0.0
  %1953 = vmatprep.subr.mxu0 0.0
  %1954 = vmatpush1.msra.mxu0 0.0
  %1955 = vmatprep.subr.mxu0 0.0
  %1956 = vmatpush1.msra.mxu0 0.0
  %1957 = vmatprep.subr.mxu0 0.0
  %1958 = vmatpush1.msra.mxu0 0.0
  %1959 = vmatprep.subr.mxu0 0.0
  %1960 = vmatpush1.msra.mxu0 0.0
  %1961 = vmatprep.subr.mxu0 0.0
  %1962 = vmatpush1.msra.mxu0 0.0
  %1963 = vmatprep.subr.mxu0 0.0
  %1964 = vmatpush1.msra.mxu0 0.0
  %1965 = vmatprep.subr.mxu0 0.0
  %1966 = vmatpush1.msra.mxu0 0.0
  %1967 = vmatprep.subr.mxu0 0.0
  %1968 = vmatpush1.msra.mxu0 0.0
  %1969 = vmatprep.subr.mxu0 0.0
  %1970 = vmatpush1.msra.mxu0 0.0
  %1971 = vmatprep.subr.mxu0 0.0
  %1972 = vmatpush1.msra.mxu0 0.0
  %1973 = vmatprep.subr.mxu0 0.0
  %1974 = vmatpush1.msra.mxu0 0.0
  %1975 = vmatprep.subr.mxu0 0.0
  %1976 = vmatpush1.msra.mxu0 0.0
  %1977 = vmatprep.mubr.f32.mxu0 0.0
  %1978 = vmatmul.mubr.f32.gmra.mrb[0].mxu0 %v1840
  %v1979 = vpop.f32.mrb[0].mxu0
  %v1980 = vadd.f32 0.0, %v1979
  %v1981 = vpop.f32.mrb[0].mxu0
  %v1982 = vadd.f32 0.0, %v1981
  %1983 = vdwg.mxu0
  %v1984 = vadd.f32 %v1835, %v1909
  %v1985 = vadd.f32 %v1836, %v1911
  %v1986 = vadd.f32 %v1837, %v1980
  %v1987 = vadd.f32 %v1838, %v1982
  %v1988 = vxor.u32 %v1984, 2147483648
  %v1989 = vxor.u32 %v1985, 2147483648
  %v1990 = vxor.u32 %v1986, 2147483648
  %v1991 = vmul.f32 %v1988, 1.442695
  %v1992 = vpow.pop %v1991
  %v1993 = vmul.f32 %v1989, 1.442695
  %v1994 = vpow.pop %v1993
  %v1995 = vmul.f32 %v1990, 1.442695
  %v1996 = vpow.pop %v1995
  %v1997 = vadd.f32 %v1992, 1.0
  %v1998 = vadd.f32 %v1994, 1.0
  %v1999 = vadd.f32 %v1996, 1.0
  %v2000 = vrcp.pop %v1997
  %v2001 = vmul.f32 1.0, %v2000
  %v2002 = vrcp.pop %v1998
  %v2003 = vmul.f32 1.0, %v2002
  %v2004 = vrcp.pop %v1999
  %v2005 = vmul.f32 1.0, %v2004
  %v2006 = vtanh.pop %v1987
  %v2007 = vmul.f32 %v2003, %v1832
  %v2008 = vmul.f32 %v2001, %v2006
  %v2009 = vadd.f32 %v2007, %v2008
  %v2010 = vtanh.pop %v2009
  %v2011 = vmul.f32 %v2005, %v2010
  %v2012 = vld [vmem:[#allocation2 + $0xe0] sm:$0xff]
  %v2013 = vld [vmem:[#allocation2 + $0xe8] sm:$0xff]
  %v2014 = vld [vmem:[#allocation2 + $0xf0] sm:$0xff]
  %v2015 = vld [vmem:[#allocation2 + $0xf8] sm:$0xff]
  %v2017 = vsel %vm776, %v2011, 0
  %2019 = vmatprep.subr.mxu0 %v745
  %2020 = vmatpush1.msra.mxu0 %v744
  %2021 = vmatprep.subr.mxu0 %v749
  %2022 = vmatpush1.msra.mxu0 %v748
  %2023 = vmatprep.subr.mxu0 %v753
  %2024 = vmatpush1.msra.mxu0 %v752
  %2025 = vmatprep.subr.mxu0 %v757
  %2026 = vmatpush1.msra.mxu0 %v756
  %2027 = vmatprep.subr.mxu0 %v761
  %2028 = vmatpush1.msra.mxu0 %v760
  %2029 = vmatprep.subr.mxu0 %v765
  %2030 = vmatpush1.msra.mxu0 %v764
  %2031 = vmatprep.subr.mxu0 %v769
  %2032 = vmatpush1.msra.mxu0 %v768
  %2033 = vmatprep.subr.mxu0 %v773
  %2034 = vmatpush1.msra.mxu0 %v772
  %2035 = vmatprep.subr.mxu0 0.0
  %2036 = vmatpush1.msra.mxu0 0.0
  %2037 = vmatprep.subr.mxu0 0.0
  %2038 = vmatpush1.msra.mxu0 0.0
  %2039 = vmatprep.subr.mxu0 0.0
  %2040 = vmatpush1.msra.mxu0 0.0
  %2041 = vmatprep.subr.mxu0 0.0
  %2042 = vmatpush1.msra.mxu0 0.0
  %2043 = vmatprep.subr.mxu0 0.0
  %2044 = vmatpush1.msra.mxu0 0.0
  %2045 = vmatprep.subr.mxu0 0.0
  %2046 = vmatpush1.msra.mxu0 0.0
  %2047 = vmatprep.subr.mxu0 0.0
  %2048 = vmatpush1.msra.mxu0 0.0
  %2049 = vmatprep.subr.mxu0 0.0
  %2050 = vmatpush1.msra.mxu0 0.0
  %2051 = vmatprep.subr.mxu0 0.0
  %2052 = vmatpush1.msra.mxu0 0.0
  %2053 = vmatprep.subr.mxu0 0.0
  %2054 = vmatpush1.msra.mxu0 0.0
  %2055 = vmatprep.subr.mxu0 0.0
  %2056 = vmatpush1.msra.mxu0 0.0
  %2057 = vmatprep.subr.mxu0 0.0
  %2058 = vmatpush1.msra.mxu0 0.0
  %2059 = vmatprep.subr.mxu0 0.0
  %2060 = vmatpush1.msra.mxu0 0.0
  %2061 = vmatprep.subr.mxu0 0.0
  %2062 = vmatpush1.msra.mxu0 0.0
  %2063 = vmatprep.subr.mxu0 0.0
  %2064 = vmatpush1.msra.mxu0 0.0
  %2065 = vmatprep.subr.mxu0 0.0
  %2066 = vmatpush1.msra.mxu0 0.0
  %2067 = vmatprep.subr.mxu0 0.0
  %2068 = vmatpush1.msra.mxu0 0.0
  %2069 = vmatprep.subr.mxu0 0.0
  %2070 = vmatpush1.msra.mxu0 0.0
  %2071 = vmatprep.subr.mxu0 0.0
  %2072 = vmatpush1.msra.mxu0 0.0
  %2073 = vmatprep.subr.mxu0 0.0
  %2074 = vmatpush1.msra.mxu0 0.0
  %2075 = vmatprep.subr.mxu0 0.0
  %2076 = vmatpush1.msra.mxu0 0.0
  %2077 = vmatprep.subr.mxu0 0.0
  %2078 = vmatpush1.msra.mxu0 0.0
  %2079 = vmatprep.subr.mxu0 0.0
  %2080 = vmatpush1.msra.mxu0 0.0
  %2081 = vmatprep.subr.mxu0 0.0
  %2082 = vmatpush1.msra.mxu0 0.0
  %2083 = vmatprep.mubr.f32.mxu0 0.0
  %2084 = vmatmul.mubr.f32.gmra.mrb[0].mxu0 %v2017
  %v2085 = vpop.f32.mrb[0].mxu0
  %v2086 = vadd.f32 0.0, %v2085
  %v2087 = vpop.f32.mrb[0].mxu0
  %v2088 = vadd.f32 0.0, %v2087
  %2089 = vdwg.mxu0
  %2090 = vmatprep.subr.mxu0 %v747
  %2091 = vmatpush1.msra.mxu0 %v746
  %2092 = vmatprep.subr.mxu0 %v751
  %2093 = vmatpush1.msra.mxu0 %v750
  %2094 = vmatprep.subr.mxu0 %v755
  %2095 = vmatpush1.msra.mxu0 %v754
  %2096 = vmatprep.subr.mxu0 %v759
  %2097 = vmatpush1.msra.mxu0 %v758
  %2098 = vmatprep.subr.mxu0 %v763
  %2099 = vmatpush1.msra.mxu0 %v762
  %2100 = vmatprep.subr.mxu0 %v767
  %2101 = vmatpush1.msra.mxu0 %v766
  %2102 = vmatprep.subr.mxu0 %v771
  %2103 = vmatpush1.msra.mxu0 %v770
  %2104 = vmatprep.subr.mxu0 %v775
  %2105 = vmatpush1.msra.mxu0 %v774
  %2106 = vmatprep.subr.mxu0 0.0
  %2107 = vmatpush1.msra.mxu0 0.0
  %2108 = vmatprep.subr.mxu0 0.0
  %2109 = vmatpush1.msra.mxu0 0.0
  %2110 = vmatprep.subr.mxu0 0.0
  %2111 = vmatpush1.msra.mxu0 0.0
  %2112 = vmatprep.subr.mxu0 0.0
  %2113 = vmatpush1.msra.mxu0 0.0
  %2114 = vmatprep.subr.mxu0 0.0
  %2115 = vmatpush1.msra.mxu0 0.0
  %2116 = vmatprep.subr.mxu0 0.0
  %2117 = vmatpush1.msra.mxu0 0.0
  %2118 = vmatprep.subr.mxu0 0.0
  %2119 = vmatpush1.msra.mxu0 0.0
  %2120 = vmatprep.subr.mxu0 0.0
  %2121 = vmatpush1.msra.mxu0 0.0
  %2122 = vmatprep.subr.mxu0 0.0
  %2123 = vmatpush1.msra.mxu0 0.0
  %2124 = vmatprep.subr.mxu0 0.0
  %2125 = vmatpush1.msra.mxu0 0.0
  %2126 = vmatprep.subr.mxu0 0.0
  %2127 = vmatpush1.msra.mxu0 0.0
  %2128 = vmatprep.subr.mxu0 0.0
  %2129 = vmatpush1.msra.mxu0 0.0
  %2130 = vmatprep.subr.mxu0 0.0
  %2131 = vmatpush1.msra.mxu0 0.0
  %2132 = vmatprep.subr.mxu0 0.0
  %2133 = vmatpush1.msra.mxu0 0.0
  %2134 = vmatprep.subr.mxu0 0.0
  %2135 = vmatpush1.msra.mxu0 0.0
  %2136 = vmatprep.subr.mxu0 0.0
  %2137 = vmatpush1.msra.mxu0 0.0
  %2138 = vmatprep.subr.mxu0 0.0
  %2139 = vmatpush1.msra.mxu0 0.0
  %2140 = vmatprep.subr.mxu0 0.0
  %2141 = vmatpush1.msra.mxu0 0.0
  %2142 = vmatprep.subr.mxu0 0.0
  %2143 = vmatpush1.msra.mxu0 0.0
  %2144 = vmatprep.subr.mxu0 0.0
  %2145 = vmatpush1.msra.mxu0 0.0
  %2146 = vmatprep.subr.mxu0 0.0
  %2147 = vmatpush1.msra.mxu0 0.0
  %2148 = vmatprep.subr.mxu0 0.0
  %2149 = vmatpush1.msra.mxu0 0.0
  %2150 = vmatprep.subr.mxu0 0.0
  %2151 = vmatpush1.msra.mxu0 0.0
  %2152 = vmatprep.subr.mxu0 0.0
  %2153 = vmatpush1.msra.mxu0 0.0
  %2154 = vmatprep.mubr.f32.mxu0 0.0
  %2155 = vmatmul.mubr.f32.gmra.mrb[0].mxu0 %v2017
  %v2156 = vpop.f32.mrb[0].mxu0
  %v2157 = vadd.f32 0.0, %v2156
  %v2158 = vpop.f32.mrb[0].mxu0
  %v2159 = vadd.f32 0.0, %v2158
  %2160 = vdwg.mxu0
  %v2161 = vadd.f32 %v2012, %v2086
  %v2162 = vadd.f32 %v2013, %v2088
  %v2163 = vadd.f32 %v2014, %v2157
  %v2164 = vadd.f32 %v2015, %v2159
  %v2165 = vxor.u32 %v2161, 2147483648
  %v2166 = vxor.u32 %v2162, 2147483648
  %v2167 = vxor.u32 %v2163, 2147483648
  %v2168 = vmul.f32 %v2165, 1.442695
  %v2169 = vpow.pop %v2168
  %v2170 = vmul.f32 %v2166, 1.442695
  %v2171 = vpow.pop %v2170
  %v2172 = vmul.f32 %v2167, 1.442695
  %v2173 = vpow.pop %v2172
  %v2174 = vadd.f32 %v2169, 1.0
  %v2175 = vadd.f32 %v2171, 1.0
  %v2176 = vadd.f32 %v2173, 1.0
  %v2177 = vrcp.pop %v2174
  %v2178 = vmul.f32 1.0, %v2177
  %v2179 = vrcp.pop %v2175
  %v2180 = vmul.f32 1.0, %v2179
  %v2181 = vrcp.pop %v2176
  %v2182 = vmul.f32 1.0, %v2181
  %v2183 = vtanh.pop %v2164
  %v2184 = vmul.f32 %v2180, %v2009
  %v2185 = vmul.f32 %v2178, %v2183
  %v2186 = vadd.f32 %v2184, %v2185
  %v2187 = vtanh.pop %v2186
  %v2188 = vmul.f32 %v2182, %v2187
  %v2189 = vld [vmem:[#allocation2 + $0x100] sm:$0xff]
  %v2190 = vld [vmem:[#allocation2 + $0x108] sm:$0xff]
  %v2191 = vld [vmem:[#allocation2 + $0x110] sm:$0xff]
  %v2192 = vld [vmem:[#allocation2 + $0x118] sm:$0xff]
  %v2194 = vsel %vm776, %v2188, 0
  %2196 = vmatprep.subr.mxu0 %v745
  %2197 = vmatpush1.msra.mxu0 %v744
  %2198 = vmatprep.subr.mxu0 %v749
  %2199 = vmatpush1.msra.mxu0 %v748
  %2200 = vmatprep.subr.mxu0 %v753
  %2201 = vmatpush1.msra.mxu0 %v752
  %2202 = vmatprep.subr.mxu0 %v757
  %2203 = vmatpush1.msra.mxu0 %v756
  %2204 = vmatprep.subr.mxu0 %v761
  %2205 = vmatpush1.msra.mxu0 %v760
  %2206 = vmatprep.subr.mxu0 %v765
  %2207 = vmatpush1.msra.mxu0 %v764
  %2208 = vmatprep.subr.mxu0 %v769
  %2209 = vmatpush1.msra.mxu0 %v768
  %2210 = vmatprep.subr.mxu0 %v773
  %2211 = vmatpush1.msra.mxu0 %v772
  %2212 = vmatprep.subr.mxu0 0.0
  %2213 = vmatpush1.msra.mxu0 0.0
  %2214 = vmatprep.subr.mxu0 0.0
  %2215 = vmatpush1.msra.mxu0 0.0
  %2216 = vmatprep.subr.mxu0 0.0
  %2217 = vmatpush1.msra.mxu0 0.0
  %2218 = vmatprep.subr.mxu0 0.0
  %2219 = vmatpush1.msra.mxu0 0.0
  %2220 = vmatprep.subr.mxu0 0.0
  %2221 = vmatpush1.msra.mxu0 0.0
  %2222 = vmatprep.subr.mxu0 0.0
  %2223 = vmatpush1.msra.mxu0 0.0
  %2224 = vmatprep.subr.mxu0 0.0
  %2225 = vmatpush1.msra.mxu0 0.0
  %2226 = vmatprep.subr.mxu0 0.0
  %2227 = vmatpush1.msra.mxu0 0.0
  %2228 = vmatprep.subr.mxu0 0.0
  %2229 = vmatpush1.msra.mxu0 0.0
  %2230 = vmatprep.subr.mxu0 0.0
  %2231 = vmatpush1.msra.mxu0 0.0
  %2232 = vmatprep.subr.mxu0 0.0
  %2233 = vmatpush1.msra.mxu0 0.0
  %2234 = vmatprep.subr.mxu0 0.0
  %2235 = vmatpush1.msra.mxu0 0.0
  %2236 = vmatprep.subr.mxu0 0.0
  %2237 = vmatpush1.msra.mxu0 0.0
  %2238 = vmatprep.subr.mxu0 0.0
  %2239 = vmatpush1.msra.mxu0 0.0
  %2240 = vmatprep.subr.mxu0 0.0
  %2241 = vmatpush1.msra.mxu0 0.0
  %2242 = vmatprep.subr.mxu0 0.0
  %2243 = vmatpush1.msra.mxu0 0.0
  %2244 = vmatprep.subr.mxu0 0.0
  %2245 = vmatpush1.msra.mxu0 0.0
  %2246 = vmatprep.subr.mxu0 0.0
  %2247 = vmatpush1.msra.mxu0 0.0
  %2248 = vmatprep.subr.mxu0 0.0
  %2249 = vmatpush1.msra.mxu0 0.0
  %2250 = vmatprep.subr.mxu0 0.0
  %2251 = vmatpush1.msra.mxu0 0.0
  %2252 = vmatprep.subr.mxu0 0.0
  %2253 = vmatpush1.msra.mxu0 0.0
  %2254 = vmatprep.subr.mxu0 0.0
  %2255 = vmatpush1.msra.mxu0 0.0
  %2256 = vmatprep.subr.mxu0 0.0
  %2257 = vmatpush1.msra.mxu0 0.0
  %2258 = vmatprep.subr.mxu0 0.0
  %2259 = vmatpush1.msra.mxu0 0.0
  %2260 = vmatprep.mubr.f32.mxu0 0.0
  %2261 = vmatmul.mubr.f32.gmra.mrb[0].mxu0 %v2194
  %v2262 = vpop.f32.mrb[0].mxu0
  %v2263 = vadd.f32 0.0, %v2262
  %v2264 = vpop.f32.mrb[0].mxu0
  %v2265 = vadd.f32 0.0, %v2264
  %2266 = vdwg.mxu0
  %2267 = vmatprep.subr.mxu0 %v747
  %2268 = vmatpush1.msra.mxu0 %v746
  %2269 = vmatprep.subr.mxu0 %v751
  %2270 = vmatpush1.msra.mxu0 %v750
  %2271 = vmatprep.subr.mxu0 %v755
  %2272 = vmatpush1.msra.mxu0 %v754
  %2273 = vmatprep.subr.mxu0 %v759
  %2274 = vmatpush1.msra.mxu0 %v758
  %2275 = vmatprep.subr.mxu0 %v763
  %2276 = vmatpush1.msra.mxu0 %v762
  %2277 = vmatprep.subr.mxu0 %v767
  %2278 = vmatpush1.msra.mxu0 %v766
  %2279 = vmatprep.subr.mxu0 %v771
  %2280 = vmatpush1.msra.mxu0 %v770
  %2281 = vmatprep.subr.mxu0 %v775
  %2282 = vmatpush1.msra.mxu0 %v774
  %2283 = vmatprep.subr.mxu0 0.0
  %2284 = vmatpush1.msra.mxu0 0.0
  %2285 = vmatprep.subr.mxu0 0.0
  %2286 = vmatpush1.msra.mxu0 0.0
  %2287 = vmatprep.subr.mxu0 0.0
  %2288 = vmatpush1.msra.mxu0 0.0
  %2289 = vmatprep.subr.mxu0 0.0
  %2290 = vmatpush1.msra.mxu0 0.0
  %2291 = vmatprep.subr.mxu0 0.0
  %2292 = vmatpush1.msra.mxu0 0.0
  %2293 = vmatprep.subr.mxu0 0.0
  %2294 = vmatpush1.msra.mxu0 0.0
  %2295 = vmatprep.subr.mxu0 0.0
  %2296 = vmatpush1.msra.mxu0 0.0
  %2297 = vmatprep.subr.mxu0 0.0
  %2298 = vmatpush1.msra.mxu0 0.0
  %2299 = vmatprep.subr.mxu0 0.0
  %2300 = vmatpush1.msra.mxu0 0.0
  %2301 = vmatprep.subr.mxu0 0.0
  %2302 = vmatpush1.msra.mxu0 0.0
  %2303 = vmatprep.subr.mxu0 0.0
  %2304 = vmatpush1.msra.mxu0 0.0
  %2305 = vmatprep.subr.mxu0 0.0
  %2306 = vmatpush1.msra.mxu0 0.0
  %2307 = vmatprep.subr.mxu0 0.0
  %2308 = vmatpush1.msra.mxu0 0.0
  %2309 = vmatprep.subr.mxu0 0.0
  %2310 = vmatpush1.msra.mxu0 0.0
  %2311 = vmatprep.subr.mxu0 0.0
  %2312 = vmatpush1.msra.mxu0 0.0
  %2313 = vmatprep.subr.mxu0 0.0
  %2314 = vmatpush1.msra.mxu0 0.0
  %2315 = vmatprep.subr.mxu0 0.0
  %2316 = vmatpush1.msra.mxu0 0.0
  %2317 = vmatprep.subr.mxu0 0.0
  %2318 = vmatpush1.msra.mxu0 0.0
  %2319 = vmatprep.subr.mxu0 0.0
  %2320 = vmatpush1.msra.mxu0 0.0
  %2321 = vmatprep.subr.mxu0 0.0
  %2322 = vmatpush1.msra.mxu0 0.0
  %2323 = vmatprep.subr.mxu0 0.0
  %2324 = vmatpush1.msra.mxu0 0.0
  %2325 = vmatprep.subr.mxu0 0.0
  %2326 = vmatpush1.msra.mxu0 0.0
  %2327 = vmatprep.subr.mxu0 0.0
  %2328 = vmatpush1.msra.mxu0 0.0
  %2329 = vmatprep.subr.mxu0 0.0
  %2330 = vmatpush1.msra.mxu0 0.0
  %2331 = vmatprep.mubr.f32.mxu0 0.0
  %2332 = vmatmul.mubr.f32.gmra.mrb[0].mxu0 %v2194
  %v2333 = vpop.f32.mrb[0].mxu0
  %v2334 = vadd.f32 0.0, %v2333
  %v2335 = vpop.f32.mrb[0].mxu0
  %v2336 = vadd.f32 0.0, %v2335
  %2337 = vdwg.mxu0
  %v2338 = vadd.f32 %v2189, %v2263
  %v2339 = vadd.f32 %v2190, %v2265
  %v2340 = vadd.f32 %v2191, %v2334
  %v2341 = vadd.f32 %v2192, %v2336
  %v2342 = vxor.u32 %v2338, 2147483648
  %v2343 = vxor.u32 %v2339, 2147483648
  %v2344 = vxor.u32 %v2340, 2147483648
  %v2345 = vmul.f32 %v2342, 1.442695
  %v2346 = vpow.pop %v2345
  %v2347 = vmul.f32 %v2343, 1.442695
  %v2348 = vpow.pop %v2347
  %v2349 = vmul.f32 %v2344, 1.442695
  %v2350 = vpow.pop %v2349
  %v2351 = vadd.f32 %v2346, 1.0
  %v2352 = vadd.f32 %v2348, 1.0
  %v2353 = vadd.f32 %v2350, 1.0
  %v2354 = vrcp.pop %v2351
  %v2355 = vmul.f32 1.0, %v2354
  %v2356 = vrcp.pop %v2352
  %v2357 = vmul.f32 1.0, %v2356
  %v2358 = vrcp.pop %v2353
  %v2359 = vmul.f32 1.0, %v2358
  %v2360 = vtanh.pop %v2341
  %v2361 = vmul.f32 %v2357, %v2186
  %v2362 = vmul.f32 %v2355, %v2360
  %v2363 = vadd.f32 %v2361, %v2362
  %v2364 = vtanh.pop %v2363
  %v2365 = vmul.f32 %v2359, %v2364
  %v2366 = vld [vmem:[#allocation2 + $0x120] sm:$0xff]
  %v2367 = vld [vmem:[#allocation2 + $0x128] sm:$0xff]
  %v2368 = vld [vmem:[#allocation2 + $0x130] sm:$0xff]
  %v2369 = vld [vmem:[#allocation2 + $0x138] sm:$0xff]
  %v2371 = vsel %vm776, %v2365, 0
  %2373 = vmatprep.subr.mxu0 %v745
  %2374 = vmatpush1.msra.mxu0 %v744
  %2375 = vmatprep.subr.mxu0 %v749
  %2376 = vmatpush1.msra.mxu0 %v748
  %2377 = vmatprep.subr.mxu0 %v753
  %2378 = vmatpush1.msra.mxu0 %v752
  %2379 = vmatprep.subr.mxu0 %v757
  %2380 = vmatpush1.msra.mxu0 %v756
  %2381 = vmatprep.subr.mxu0 %v761
  %2382 = vmatpush1.msra.mxu0 %v760
  %2383 = vmatprep.subr.mxu0 %v765
  %2384 = vmatpush1.msra.mxu0 %v764
  %2385 = vmatprep.subr.mxu0 %v769
  %2386 = vmatpush1.msra.mxu0 %v768
  %2387 = vmatprep.subr.mxu0 %v773
  %2388 = vmatpush1.msra.mxu0 %v772
  %2389 = vmatprep.subr.mxu0 0.0
  %2390 = vmatpush1.msra.mxu0 0.0
  %2391 = vmatprep.subr.mxu0 0.0
  %2392 = vmatpush1.msra.mxu0 0.0
  %2393 = vmatprep.subr.mxu0 0.0
  %2394 = vmatpush1.msra.mxu0 0.0
  %2395 = vmatprep.subr.mxu0 0.0
  %2396 = vmatpush1.msra.mxu0 0.0
  %2397 = vmatprep.subr.mxu0 0.0
  %2398 = vmatpush1.msra.mxu0 0.0
  %2399 = vmatprep.subr.mxu0 0.0
  %2400 = vmatpush1.msra.mxu0 0.0
  %2401 = vmatprep.subr.mxu0 0.0
  %2402 = vmatpush1.msra.mxu0 0.0
  %2403 = vmatprep.subr.mxu0 0.0
  %2404 = vmatpush1.msra.mxu0 0.0
  %2405 = vmatprep.subr.mxu0 0.0
  %2406 = vmatpush1.msra.mxu0 0.0
  %2407 = vmatprep.subr.mxu0 0.0
  %2408 = vmatpush1.msra.mxu0 0.0
  %2409 = vmatprep.subr.mxu0 0.0
  %2410 = vmatpush1.msra.mxu0 0.0
  %2411 = vmatprep.subr.mxu0 0.0
  %2412 = vmatpush1.msra.mxu0 0.0
  %2413 = vmatprep.subr.mxu0 0.0
  %2414 = vmatpush1.msra.mxu0 0.0
  %2415 = vmatprep.subr.mxu0 0.0
  %2416 = vmatpush1.msra.mxu0 0.0
  %2417 = vmatprep.subr.mxu0 0.0
  %2418 = vmatpush1.msra.mxu0 0.0
  %2419 = vmatprep.subr.mxu0 0.0
  %2420 = vmatpush1.msra.mxu0 0.0
  %2421 = vmatprep.subr.mxu0 0.0
  %2422 = vmatpush1.msra.mxu0 0.0
  %2423 = vmatprep.subr.mxu0 0.0
  %2424 = vmatpush1.msra.mxu0 0.0
  %2425 = vmatprep.subr.mxu0 0.0
  %2426 = vmatpush1.msra.mxu0 0.0
  %2427 = vmatprep.subr.mxu0 0.0
  %2428 = vmatpush1.msra.mxu0 0.0
  %2429 = vmatprep.subr.mxu0 0.0
  %2430 = vmatpush1.msra.mxu0 0.0
  %2431 = vmatprep.subr.mxu0 0.0
  %2432 = vmatpush1.msra.mxu0 0.0
  %2433 = vmatprep.subr.mxu0 0.0
  %2434 = vmatpush1.msra.mxu0 0.0
  %2435 = vmatprep.subr.mxu0 0.0
  %2436 = vmatpush1.msra.mxu0 0.0
  %2437 = vmatprep.mubr.f32.mxu0 0.0
  %2438 = vmatmul.mubr.f32.gmra.mrb[0].mxu0 %v2371
  %v2439 = vpop.f32.mrb[0].mxu0
  %v2440 = vadd.f32 0.0, %v2439
  %v2441 = vpop.f32.mrb[0].mxu0
  %v2442 = vadd.f32 0.0, %v2441
  %2443 = vdwg.mxu0
  %2444 = vmatprep.subr.mxu0 %v747
  %2445 = vmatpush1.msra.mxu0 %v746
  %2446 = vmatprep.subr.mxu0 %v751
  %2447 = vmatpush1.msra.mxu0 %v750
  %2448 = vmatprep.subr.mxu0 %v755
  %2449 = vmatpush1.msra.mxu0 %v754
  %2450 = vmatprep.subr.mxu0 %v759
  %2451 = vmatpush1.msra.mxu0 %v758
  %2452 = vmatprep.subr.mxu0 %v763
  %2453 = vmatpush1.msra.mxu0 %v762
  %2454 = vmatprep.subr.mxu0 %v767
  %2455 = vmatpush1.msra.mxu0 %v766
  %2456 = vmatprep.subr.mxu0 %v771
  %2457 = vmatpush1.msra.mxu0 %v770
  %2458 = vmatprep.subr.mxu0 %v775
  %2459 = vmatpush1.msra.mxu0 %v774
  %2460 = vmatprep.subr.mxu0 0.0
  %2461 = vmatpush1.msra.mxu0 0.0
  %2462 = vmatprep.subr.mxu0 0.0
  %2463 = vmatpush1.msra.mxu0 0.0
  %2464 = vmatprep.subr.mxu0 0.0
  %2465 = vmatpush1.msra.mxu0 0.0
  %2466 = vmatprep.subr.mxu0 0.0
  %2467 = vmatpush1.msra.mxu0 0.0
  %2468 = vmatprep.subr.mxu0 0.0
  %2469 = vmatpush1.msra.mxu0 0.0
  %2470 = vmatprep.subr.mxu0 0.0
  %2471 = vmatpush1.msra.mxu0 0.0
  %2472 = vmatprep.subr.mxu0 0.0
  %2473 = vmatpush1.msra.mxu0 0.0
  %2474 = vmatprep.subr.mxu0 0.0
  %2475 = vmatpush1.msra.mxu0 0.0
  %2476 = vmatprep.subr.mxu0 0.0
  %2477 = vmatpush1.msra.mxu0 0.0
  %2478 = vmatprep.subr.mxu0 0.0
  %2479 = vmatpush1.msra.mxu0 0.0
  %2480 = vmatprep.subr.mxu0 0.0
  %2481 = vmatpush1.msra.mxu0 0.0
  %2482 = vmatprep.subr.mxu0 0.0
  %2483 = vmatpush1.msra.mxu0 0.0
  %2484 = vmatprep.subr.mxu0 0.0
  %2485 = vmatpush1.msra.mxu0 0.0
  %2486 = vmatprep.subr.mxu0 0.0
  %2487 = vmatpush1.msra.mxu0 0.0
  %2488 = vmatprep.subr.mxu0 0.0
  %2489 = vmatpush1.msra.mxu0 0.0
  %2490 = vmatprep.subr.mxu0 0.0
  %2491 = vmatpush1.msra.mxu0 0.0
  %2492 = vmatprep.subr.mxu0 0.0
  %2493 = vmatpush1.msra.mxu0 0.0
  %2494 = vmatprep.subr.mxu0 0.0
  %2495 = vmatpush1.msra.mxu0 0.0
  %2496 = vmatprep.subr.mxu0 0.0
  %2497 = vmatpush1.msra.mxu0 0.0
  %2498 = vmatprep.subr.mxu0 0.0
  %2499 = vmatpush1.msra.mxu0 0.0
  %2500 = vmatprep.subr.mxu0 0.0
  %2501 = vmatpush1.msra.mxu0 0.0
  %2502 = vmatprep.subr.mxu0 0.0
  %2503 = vmatpush1.msra.mxu0 0.0
  %2504 = vmatprep.subr.mxu0 0.0
  %2505 = vmatpush1.msra.mxu0 0.0
  %2506 = vmatprep.subr.mxu0 0.0
  %2507 = vmatpush1.msra.mxu0 0.0
  %2508 = vmatprep.mubr.f32.mxu0 0.0
  %2509 = vmatmul.mubr.f32.gmra.mrb[0].mxu0 %v2371
  %v2510 = vpop.f32.mrb[0].mxu0
  %v2511 = vadd.f32 0.0, %v2510
  %v2512 = vpop.f32.mrb[0].mxu0
  %v2513 = vadd.f32 0.0, %v2512
  %2514 = vdwg.mxu0
  %v2515 = vadd.f32 %v2366, %v2440
  %v2516 = vadd.f32 %v2367, %v2442
  %v2517 = vadd.f32 %v2368, %v2511
  %v2518 = vadd.f32 %v2369, %v2513
  %v2519 = vxor.u32 %v2515, 2147483648
  %v2520 = vxor.u32 %v2516, 2147483648
  %v2521 = vxor.u32 %v2517, 2147483648
  %v2522 = vmul.f32 %v2519, 1.442695
  %v2523 = vpow.pop %v2522
  %v2524 = vmul.f32 %v2520, 1.442695
  %v2525 = vpow.pop %v2524
  %v2526 = vmul.f32 %v2521, 1.442695
  %v2527 = vpow.pop %v2526
  %v2528 = vadd.f32 %v2523, 1.0
  %v2529 = vadd.f32 %v2525, 1.0
  %v2530 = vadd.f32 %v2527, 1.0
  %v2531 = vrcp.pop %v2528
  %v2532 = vmul.f32 1.0, %v2531
  %v2533 = vrcp.pop %v2529
  %v2534 = vmul.f32 1.0, %v2533
  %v2535 = vrcp.pop %v2530
  %v2536 = vmul.f32 1.0, %v2535
  %v2537 = vtanh.pop %v2518
  %v2538 = vmul.f32 %v2534, %v2363
  %v2539 = vmul.f32 %v2532, %v2537
  %v2540 = vadd.f32 %v2538, %v2539
  %v2541 = vtanh.pop %v2540
  %v2542 = vmul.f32 %v2536, %v2541
  %v2543 = vld [vmem:[#allocation2 + $0x140] sm:$0xff]
  %v2544 = vld [vmem:[#allocation2 + $0x148] sm:$0xff]
  %v2545 = vld [vmem:[#allocation2 + $0x150] sm:$0xff]
  %v2546 = vld [vmem:[#allocation2 + $0x158] sm:$0xff]
  %v2548 = vsel %vm776, %v2542, 0
  %2550 = vmatprep.subr.mxu0 %v745
  %2551 = vmatpush1.msra.mxu0 %v744
  %2552 = vmatprep.subr.mxu0 %v749
  %2553 = vmatpush1.msra.mxu0 %v748
  %2554 = vmatprep.subr.mxu0 %v753
  %2555 = vmatpush1.msra.mxu0 %v752
  %2556 = vmatprep.subr.mxu0 %v757
  %2557 = vmatpush1.msra.mxu0 %v756
  %2558 = vmatprep.subr.mxu0 %v761
  %2559 = vmatpush1.msra.mxu0 %v760
  %2560 = vmatprep.subr.mxu0 %v765
  %2561 = vmatpush1.msra.mxu0 %v764
  %2562 = vmatprep.subr.mxu0 %v769
  %2563 = vmatpush1.msra.mxu0 %v768
  %2564 = vmatprep.subr.mxu0 %v773
  %2565 = vmatpush1.msra.mxu0 %v772
  %2566 = vmatprep.subr.mxu0 0.0
  %2567 = vmatpush1.msra.mxu0 0.0
  %2568 = vmatprep.subr.mxu0 0.0
  %2569 = vmatpush1.msra.mxu0 0.0
  %2570 = vmatprep.subr.mxu0 0.0
  %2571 = vmatpush1.msra.mxu0 0.0
  %2572 = vmatprep.subr.mxu0 0.0
  %2573 = vmatpush1.msra.mxu0 0.0
  %2574 = vmatprep.subr.mxu0 0.0
  %2575 = vmatpush1.msra.mxu0 0.0
  %2576 = vmatprep.subr.mxu0 0.0
  %2577 = vmatpush1.msra.mxu0 0.0
  %2578 = vmatprep.subr.mxu0 0.0
  %2579 = vmatpush1.msra.mxu0 0.0
  %2580 = vmatprep.subr.mxu0 0.0
  %2581 = vmatpush1.msra.mxu0 0.0
  %2582 = vmatprep.subr.mxu0 0.0
  %2583 = vmatpush1.msra.mxu0 0.0
  %2584 = vmatprep.subr.mxu0 0.0
  %2585 = vmatpush1.msra.mxu0 0.0
  %2586 = vmatprep.subr.mxu0 0.0
  %2587 = vmatpush1.msra.mxu0 0.0
  %2588 = vmatprep.subr.mxu0 0.0
  %2589 = vmatpush1.msra.mxu0 0.0
  %2590 = vmatprep.subr.mxu0 0.0
  %2591 = vmatpush1.msra.mxu0 0.0
  %2592 = vmatprep.subr.mxu0 0.0
  %2593 = vmatpush1.msra.mxu0 0.0
  %2594 = vmatprep.subr.mxu0 0.0
  %2595 = vmatpush1.msra.mxu0 0.0
  %2596 = vmatprep.subr.mxu0 0.0
  %2597 = vmatpush1.msra.mxu0 0.0
  %2598 = vmatprep.subr.mxu0 0.0
  %2599 = vmatpush1.msra.mxu0 0.0
  %2600 = vmatprep.subr.mxu0 0.0
  %2601 = vmatpush1.msra.mxu0 0.0
  %2602 = vmatprep.subr.mxu0 0.0
  %2603 = vmatpush1.msra.mxu0 0.0
  %2604 = vmatprep.subr.mxu0 0.0
  %2605 = vmatpush1.msra.mxu0 0.0
  %2606 = vmatprep.subr.mxu0 0.0
  %2607 = vmatpush1.msra.mxu0 0.0
  %2608 = vmatprep.subr.mxu0 0.0
  %2609 = vmatpush1.msra.mxu0 0.0
  %2610 = vmatprep.subr.mxu0 0.0
  %2611 = vmatpush1.msra.mxu0 0.0
  %2612 = vmatprep.subr.mxu0 0.0
  %2613 = vmatpush1.msra.mxu0 0.0
  %2614 = vmatprep.mubr.f32.mxu0 0.0
  %2615 = vmatmul.mubr.f32.gmra.mrb[0].mxu0 %v2548
  %v2616 = vpop.f32.mrb[0].mxu0
  %v2617 = vadd.f32 0.0, %v2616
  %v2618 = vpop.f32.mrb[0].mxu0
  %v2619 = vadd.f32 0.0, %v2618
  %2620 = vdwg.mxu0
  %2621 = vmatprep.subr.mxu0 %v747
  %2622 = vmatpush1.msra.mxu0 %v746
  %2623 = vmatprep.subr.mxu0 %v751
  %2624 = vmatpush1.msra.mxu0 %v750
  %2625 = vmatprep.subr.mxu0 %v755
  %2626 = vmatpush1.msra.mxu0 %v754
  %2627 = vmatprep.subr.mxu0 %v759
  %2628 = vmatpush1.msra.mxu0 %v758
  %2629 = vmatprep.subr.mxu0 %v763
  %2630 = vmatpush1.msra.mxu0 %v762
  %2631 = vmatprep.subr.mxu0 %v767
  %2632 = vmatpush1.msra.mxu0 %v766
  %2633 = vmatprep.subr.mxu0 %v771
  %2634 = vmatpush1.msra.mxu0 %v770
  %2635 = vmatprep.subr.mxu0 %v775
  %2636 = vmatpush1.msra.mxu0 %v774
  %2637 = vmatprep.subr.mxu0 0.0
  %2638 = vmatpush1.msra.mxu0 0.0
  %2639 = vmatprep.subr.mxu0 0.0
  %2640 = vmatpush1.msra.mxu0 0.0
  %2641 = vmatprep.subr.mxu0 0.0
  %2642 = vmatpush1.msra.mxu0 0.0
  %2643 = vmatprep.subr.mxu0 0.0
  %2644 = vmatpush1.msra.mxu0 0.0
  %2645 = vmatprep.subr.mxu0 0.0
  %2646 = vmatpush1.msra.mxu0 0.0
  %2647 = vmatprep.subr.mxu0 0.0
  %2648 = vmatpush1.msra.mxu0 0.0
  %2649 = vmatprep.subr.mxu0 0.0
  %2650 = vmatpush1.msra.mxu0 0.0
  %2651 = vmatprep.subr.mxu0 0.0
  %2652 = vmatpush1.msra.mxu0 0.0
  %2653 = vmatprep.subr.mxu0 0.0
  %2654 = vmatpush1.msra.mxu0 0.0
  %2655 = vmatprep.subr.mxu0 0.0
  %2656 = vmatpush1.msra.mxu0 0.0
  %2657 = vmatprep.subr.mxu0 0.0
  %2658 = vmatpush1.msra.mxu0 0.0
  %2659 = vmatprep.subr.mxu0 0.0
  %2660 = vmatpush1.msra.mxu0 0.0
  %2661 = vmatprep.subr.mxu0 0.0
  %2662 = vmatpush1.msra.mxu0 0.0
  %2663 = vmatprep.subr.mxu0 0.0
  %2664 = vmatpush1.msra.mxu0 0.0
  %2665 = vmatprep.subr.mxu0 0.0
  %2666 = vmatpush1.msra.mxu0 0.0
  %2667 = vmatprep.subr.mxu0 0.0
  %2668 = vmatpush1.msra.mxu0 0.0
  %2669 = vmatprep.subr.mxu0 0.0
  %2670 = vmatpush1.msra.mxu0 0.0
  %2671 = vmatprep.subr.mxu0 0.0
  %2672 = vmatpush1.msra.mxu0 0.0
  %2673 = vmatprep.subr.mxu0 0.0
  %2674 = vmatpush1.msra.mxu0 0.0
  %2675 = vmatprep.subr.mxu0 0.0
  %2676 = vmatpush1.msra.mxu0 0.0
  %2677 = vmatprep.subr.mxu0 0.0
  %2678 = vmatpush1.msra.mxu0 0.0
  %2679 = vmatprep.subr.mxu0 0.0
  %2680 = vmatpush1.msra.mxu0 0.0
  %2681 = vmatprep.subr.mxu0 0.0
  %2682 = vmatpush1.msra.mxu0 0.0
  %2683 = vmatprep.subr.mxu0 0.0
  %2684 = vmatpush1.msra.mxu0 0.0
  %2685 = vmatprep.mubr.f32.mxu0 0.0
  %2686 = vmatmul.mubr.f32.gmra.mrb[0].mxu0 %v2548
  %v2687 = vpop.f32.mrb[0].mxu0
  %v2688 = vadd.f32 0.0, %v2687
  %v2689 = vpop.f32.mrb[0].mxu0
  %v2690 = vadd.f32 0.0, %v2689
  %2691 = vdwg.mxu0
  %v2692 = vadd.f32 %v2543, %v2617
  %v2693 = vadd.f32 %v2544, %v2619
  %v2694 = vadd.f32 %v2545, %v2688
  %v2695 = vadd.f32 %v2546, %v2690
  %v2696 = vxor.u32 %v2692, 2147483648
  %v2697 = vxor.u32 %v2693, 2147483648
  %v2698 = vxor.u32 %v2694, 2147483648
  %v2699 = vmul.f32 %v2696, 1.442695
  %v2700 = vpow.pop %v2699
  %v2701 = vmul.f32 %v2697, 1.442695
  %v2702 = vpow.pop %v2701
  %v2703 = vmul.f32 %v2698, 1.442695
  %v2704 = vpow.pop %v2703
  %v2705 = vadd.f32 %v2700, 1.0
  %v2706 = vadd.f32 %v2702, 1.0
  %v2707 = vadd.f32 %v2704, 1.0
  %v2708 = vrcp.pop %v2705
  %v2709 = vmul.f32 1.0, %v2708
  %v2710 = vrcp.pop %v2706
  %v2711 = vmul.f32 1.0, %v2710
  %v2712 = vrcp.pop %v2707
  %v2713 = vmul.f32 1.0, %v2712
  %v2714 = vtanh.pop %v2695
  %v2715 = vmul.f32 %v2711, %v2540
  %v2716 = vmul.f32 %v2709, %v2714
  %v2717 = vadd.f32 %v2715, %v2716
  %v2718 = vtanh.pop %v2717
  %v2719 = vmul.f32 %v2713, %v2718
  %v2720 = vld [vmem:[#allocation2 + $0x160] sm:$0xff]
  %v2721 = vld [vmem:[#allocation2 + $0x168] sm:$0xff]
  %v2722 = vld [vmem:[#allocation2 + $0x170] sm:$0xff]
  %v2723 = vld [vmem:[#allocation2 + $0x178] sm:$0xff]
  %v2725 = vsel %vm776, %v2719, 0
  %2727 = vmatprep.subr.mxu0 %v745
  %2728 = vmatpush1.msra.mxu0 %v744
  %2729 = vmatprep.subr.mxu0 %v749
  %2730 = vmatpush1.msra.mxu0 %v748
  %2731 = vmatprep.subr.mxu0 %v753
  %2732 = vmatpush1.msra.mxu0 %v752
  %2733 = vmatprep.subr.mxu0 %v757
  %2734 = vmatpush1.msra.mxu0 %v756
  %2735 = vmatprep.subr.mxu0 %v761
  %2736 = vmatpush1.msra.mxu0 %v760
  %2737 = vmatprep.subr.mxu0 %v765
  %2738 = vmatpush1.msra.mxu0 %v764
  %2739 = vmatprep.subr.mxu0 %v769
  %2740 = vmatpush1.msra.mxu0 %v768
  %2741 = vmatprep.subr.mxu0 %v773
  %2742 = vmatpush1.msra.mxu0 %v772
  %2743 = vmatprep.subr.mxu0 0.0
  %2744 = vmatpush1.msra.mxu0 0.0
  %2745 = vmatprep.subr.mxu0 0.0
  %2746 = vmatpush1.msra.mxu0 0.0
  %2747 = vmatprep.subr.mxu0 0.0
  %2748 = vmatpush1.msra.mxu0 0.0
  %2749 = vmatprep.subr.mxu0 0.0
  %2750 = vmatpush1.msra.mxu0 0.0
  %2751 = vmatprep.subr.mxu0 0.0
  %2752 = vmatpush1.msra.mxu0 0.0
  %2753 = vmatprep.subr.mxu0 0.0
  %2754 = vmatpush1.msra.mxu0 0.0
  %2755 = vmatprep.subr.mxu0 0.0
  %2756 = vmatpush1.msra.mxu0 0.0
  %2757 = vmatprep.subr.mxu0 0.0
  %2758 = vmatpush1.msra.mxu0 0.0
  %2759 = vmatprep.subr.mxu0 0.0
  %2760 = vmatpush1.msra.mxu0 0.0
  %2761 = vmatprep.subr.mxu0 0.0
  %2762 = vmatpush1.msra.mxu0 0.0
  %2763 = vmatprep.subr.mxu0 0.0
  %2764 = vmatpush1.msra.mxu0 0.0
  %2765 = vmatprep.subr.mxu0 0.0
  %2766 = vmatpush1.msra.mxu0 0.0
  %2767 = vmatprep.subr.mxu0 0.0
  %2768 = vmatpush1.msra.mxu0 0.0
  %2769 = vmatprep.subr.mxu0 0.0
  %2770 = vmatpush1.msra.mxu0 0.0
  %2771 = vmatprep.subr.mxu0 0.0
  %2772 = vmatpush1.msra.mxu0 0.0
  %2773 = vmatprep.subr.mxu0 0.0
  %2774 = vmatpush1.msra.mxu0 0.0
  %2775 = vmatprep.subr.mxu0 0.0
  %2776 = vmatpush1.msra.mxu0 0.0
  %2777 = vmatprep.subr.mxu0 0.0
  %2778 = vmatpush1.msra.mxu0 0.0
  %2779 = vmatprep.subr.mxu0 0.0
  %2780 = vmatpush1.msra.mxu0 0.0
  %2781 = vmatprep.subr.mxu0 0.0
  %2782 = vmatpush1.msra.mxu0 0.0
  %2783 = vmatprep.subr.mxu0 0.0
  %2784 = vmatpush1.msra.mxu0 0.0
  %2785 = vmatprep.subr.mxu0 0.0
  %2786 = vmatpush1.msra.mxu0 0.0
  %2787 = vmatprep.subr.mxu0 0.0
  %2788 = vmatpush1.msra.mxu0 0.0
  %2789 = vmatprep.subr.mxu0 0.0
  %2790 = vmatpush1.msra.mxu0 0.0
  %2791 = vmatprep.mubr.f32.mxu0 0.0
  %2792 = vmatmul.mubr.f32.gmra.mrb[0].mxu0 %v2725
  %v2793 = vpop.f32.mrb[0].mxu0
  %v2794 = vadd.f32 0.0, %v2793
  %v2795 = vpop.f32.mrb[0].mxu0
  %v2796 = vadd.f32 0.0, %v2795
  %2797 = vdwg.mxu0
  %2798 = vmatprep.subr.mxu0 %v747
  %2799 = vmatpush1.msra.mxu0 %v746
  %2800 = vmatprep.subr.mxu0 %v751
  %2801 = vmatpush1.msra.mxu0 %v750
  %2802 = vmatprep.subr.mxu0 %v755
  %2803 = vmatpush1.msra.mxu0 %v754
  %2804 = vmatprep.subr.mxu0 %v759
  %2805 = vmatpush1.msra.mxu0 %v758
  %2806 = vmatprep.subr.mxu0 %v763
  %2807 = vmatpush1.msra.mxu0 %v762
  %2808 = vmatprep.subr.mxu0 %v767
  %2809 = vmatpush1.msra.mxu0 %v766
  %2810 = vmatprep.subr.mxu0 %v771
  %2811 = vmatpush1.msra.mxu0 %v770
  %2812 = vmatprep.subr.mxu0 %v775
  %2813 = vmatpush1.msra.mxu0 %v774
  %2814 = vmatprep.subr.mxu0 0.0
  %2815 = vmatpush1.msra.mxu0 0.0
  %2816 = vmatprep.subr.mxu0 0.0
  %2817 = vmatpush1.msra.mxu0 0.0
  %2818 = vmatprep.subr.mxu0 0.0
  %2819 = vmatpush1.msra.mxu0 0.0
  %2820 = vmatprep.subr.mxu0 0.0
  %2821 = vmatpush1.msra.mxu0 0.0
  %2822 = vmatprep.subr.mxu0 0.0
  %2823 = vmatpush1.msra.mxu0 0.0
  %2824 = vmatprep.subr.mxu0 0.0
  %2825 = vmatpush1.msra.mxu0 0.0
  %2826 = vmatprep.subr.mxu0 0.0
  %2827 = vmatpush1.msra.mxu0 0.0
  %2828 = vmatprep.subr.mxu0 0.0
  %2829 = vmatpush1.msra.mxu0 0.0
  %2830 = vmatprep.subr.mxu0 0.0
  %2831 = vmatpush1.msra.mxu0 0.0
  %2832 = vmatprep.subr.mxu0 0.0
  %2833 = vmatpush1.msra.mxu0 0.0
  %2834 = vmatprep.subr.mxu0 0.0
  %2835 = vmatpush1.msra.mxu0 0.0
  %2836 = vmatprep.subr.mxu0 0.0
  %2837 = vmatpush1.msra.mxu0 0.0
  %2838 = vmatprep.subr.mxu0 0.0
  %2839 = vmatpush1.msra.mxu0 0.0
  %2840 = vmatprep.subr.mxu0 0.0
  %2841 = vmatpush1.msra.mxu0 0.0
  %2842 = vmatprep.subr.mxu0 0.0
  %2843 = vmatpush1.msra.mxu0 0.0
  %2844 = vmatprep.subr.mxu0 0.0
  %2845 = vmatpush1.msra.mxu0 0.0
  %2846 = vmatprep.subr.mxu0 0.0
  %2847 = vmatpush1.msra.mxu0 0.0
  %2848 = vmatprep.subr.mxu0 0.0
  %2849 = vmatpush1.msra.mxu0 0.0
  %2850 = vmatprep.subr.mxu0 0.0
  %2851 = vmatpush1.msra.mxu0 0.0
  %2852 = vmatprep.subr.mxu0 0.0
  %2853 = vmatpush1.msra.mxu0 0.0
  %2854 = vmatprep.subr.mxu0 0.0
  %2855 = vmatpush1.msra.mxu0 0.0
  %2856 = vmatprep.subr.mxu0 0.0
  %2857 = vmatpush1.msra.mxu0 0.0
  %2858 = vmatprep.subr.mxu0 0.0
  %2859 = vmatpush1.msra.mxu0 0.0
  %2860 = vmatprep.subr.mxu0 0.0
  %2861 = vmatpush1.msra.mxu0 0.0
  %2862 = vmatprep.mubr.f32.mxu0 0.0
  %2863 = vmatmul.mubr.f32.gmra.mrb[0].mxu0 %v2725
  %v2864 = vpop.f32.mrb[0].mxu0
  %v2865 = vadd.f32 0.0, %v2864
  %v2866 = vpop.f32.mrb[0].mxu0
  %v2867 = vadd.f32 0.0, %v2866
  %2868 = vdwg.mxu0
  %v2869 = vadd.f32 %v2720, %v2794
  %v2870 = vadd.f32 %v2721, %v2796
  %v2871 = vadd.f32 %v2722, %v2865
  %v2872 = vadd.f32 %v2723, %v2867
  %v2873 = vxor.u32 %v2869, 2147483648
  %v2874 = vxor.u32 %v2870, 2147483648
  %v2875 = vxor.u32 %v2871, 2147483648
  %v2876 = vmul.f32 %v2873, 1.442695
  %v2877 = vpow.pop %v2876
  %v2878 = vmul.f32 %v2874, 1.442695
  %v2879 = vpow.pop %v2878
  %v2880 = vmul.f32 %v2875, 1.442695
  %v2881 = vpow.pop %v2880
  %v2882 = vadd.f32 %v2877, 1.0
  %v2883 = vadd.f32 %v2879, 1.0
  %v2884 = vadd.f32 %v2881, 1.0
  %v2885 = vrcp.pop %v2882
  %v2886 = vmul.f32 1.0, %v2885
  %v2887 = vrcp.pop %v2883
  %v2888 = vmul.f32 1.0, %v2887
  %v2889 = vrcp.pop %v2884
  %v2890 = vmul.f32 1.0, %v2889
  %v2891 = vtanh.pop %v2872
  %v2892 = vmul.f32 %v2888, %v2717
  %v2893 = vmul.f32 %v2886, %v2891
  %v2894 = vadd.f32 %v2892, %v2893
  %v2895 = vtanh.pop %v2894
  %v2896 = vmul.f32 %v2890, %v2895
  %v2897 = vld [vmem:[#allocation2 + $0x180] sm:$0xff]
  %v2898 = vld [vmem:[#allocation2 + $0x188] sm:$0xff]
  %v2899 = vld [vmem:[#allocation2 + $0x190] sm:$0xff]
  %v2900 = vld [vmem:[#allocation2 + $0x198] sm:$0xff]
  %v2902 = vsel %vm776, %v2896, 0
  %2904 = vmatprep.subr.mxu0 %v745
  %2905 = vmatpush1.msra.mxu0 %v744
  %2906 = vmatprep.subr.mxu0 %v749
  %2907 = vmatpush1.msra.mxu0 %v748
  %2908 = vmatprep.subr.mxu0 %v753
  %2909 = vmatpush1.msra.mxu0 %v752
  %2910 = vmatprep.subr.mxu0 %v757
  %2911 = vmatpush1.msra.mxu0 %v756
  %2912 = vmatprep.subr.mxu0 %v761
  %2913 = vmatpush1.msra.mxu0 %v760
  %2914 = vmatprep.subr.mxu0 %v765
  %2915 = vmatpush1.msra.mxu0 %v764
  %2916 = vmatprep.subr.mxu0 %v769
  %2917 = vmatpush1.msra.mxu0 %v768
  %2918 = vmatprep.subr.mxu0 %v773
  %2919 = vmatpush1.msra.mxu0 %v772
  %2920 = vmatprep.subr.mxu0 0.0
  %2921 = vmatpush1.msra.mxu0 0.0
  %2922 = vmatprep.subr.mxu0 0.0
  %2923 = vmatpush1.msra.mxu0 0.0
  %2924 = vmatprep.subr.mxu0 0.0
  %2925 = vmatpush1.msra.mxu0 0.0
  %2926 = vmatprep.subr.mxu0 0.0
  %2927 = vmatpush1.msra.mxu0 0.0
  %2928 = vmatprep.subr.mxu0 0.0
  %2929 = vmatpush1.msra.mxu0 0.0
  %2930 = vmatprep.subr.mxu0 0.0
  %2931 = vmatpush1.msra.mxu0 0.0
  %2932 = vmatprep.subr.mxu0 0.0
  %2933 = vmatpush1.msra.mxu0 0.0
  %2934 = vmatprep.subr.mxu0 0.0
  %2935 = vmatpush1.msra.mxu0 0.0
  %2936 = vmatprep.subr.mxu0 0.0
  %2937 = vmatpush1.msra.mxu0 0.0
  %2938 = vmatprep.subr.mxu0 0.0
  %2939 = vmatpush1.msra.mxu0 0.0
  %2940 = vmatprep.subr.mxu0 0.0
  %2941 = vmatpush1.msra.mxu0 0.0
  %2942 = vmatprep.subr.mxu0 0.0
  %2943 = vmatpush1.msra.mxu0 0.0
  %2944 = vmatprep.subr.mxu0 0.0
  %2945 = vmatpush1.msra.mxu0 0.0
  %2946 = vmatprep.subr.mxu0 0.0
  %2947 = vmatpush1.msra.mxu0 0.0
  %2948 = vmatprep.subr.mxu0 0.0
  %2949 = vmatpush1.msra.mxu0 0.0
  %2950 = vmatprep.subr.mxu0 0.0
  %2951 = vmatpush1.msra.mxu0 0.0
  %2952 = vmatprep.subr.mxu0 0.0
  %2953 = vmatpush1.msra.mxu0 0.0
  %2954 = vmatprep.subr.mxu0 0.0
  %2955 = vmatpush1.msra.mxu0 0.0
  %2956 = vmatprep.subr.mxu0 0.0
  %2957 = vmatpush1.msra.mxu0 0.0
  %2958 = vmatprep.subr.mxu0 0.0
  %2959 = vmatpush1.msra.mxu0 0.0
  %2960 = vmatprep.subr.mxu0 0.0
  %2961 = vmatpush1.msra.mxu0 0.0
  %2962 = vmatprep.subr.mxu0 0.0
  %2963 = vmatpush1.msra.mxu0 0.0
  %2964 = vmatprep.subr.mxu0 0.0
  %2965 = vmatpush1.msra.mxu0 0.0
  %2966 = vmatprep.subr.mxu0 0.0
  %2967 = vmatpush1.msra.mxu0 0.0
  %2968 = vmatprep.mubr.f32.mxu0 0.0
  %2969 = vmatmul.mubr.f32.gmra.mrb[0].mxu0 %v2902
  %v2970 = vpop.f32.mrb[0].mxu0
  %v2971 = vadd.f32 0.0, %v2970
  %v2972 = vpop.f32.mrb[0].mxu0
  %v2973 = vadd.f32 0.0, %v2972
  %2974 = vdwg.mxu0
  %2975 = vmatprep.subr.mxu0 %v747
  %2976 = vmatpush1.msra.mxu0 %v746
  %2977 = vmatprep.subr.mxu0 %v751
  %2978 = vmatpush1.msra.mxu0 %v750
  %2979 = vmatprep.subr.mxu0 %v755
  %2980 = vmatpush1.msra.mxu0 %v754
  %2981 = vmatprep.subr.mxu0 %v759
  %2982 = vmatpush1.msra.mxu0 %v758
  %2983 = vmatprep.subr.mxu0 %v763
  %2984 = vmatpush1.msra.mxu0 %v762
  %2985 = vmatprep.subr.mxu0 %v767
  %2986 = vmatpush1.msra.mxu0 %v766
  %2987 = vmatprep.subr.mxu0 %v771
  %2988 = vmatpush1.msra.mxu0 %v770
  %2989 = vmatprep.subr.mxu0 %v775
  %2990 = vmatpush1.msra.mxu0 %v774
  %2991 = vmatprep.subr.mxu0 0.0
  %2992 = vmatpush1.msra.mxu0 0.0
  %2993 = vmatprep.subr.mxu0 0.0
  %2994 = vmatpush1.msra.mxu0 0.0
  %2995 = vmatprep.subr.mxu0 0.0
  %2996 = vmatpush1.msra.mxu0 0.0
  %2997 = vmatprep.subr.mxu0 0.0
  %2998 = vmatpush1.msra.mxu0 0.0
  %2999 = vmatprep.subr.mxu0 0.0
  %3000 = vmatpush1.msra.mxu0 0.0
  %3001 = vmatprep.subr.mxu0 0.0
  %3002 = vmatpush1.msra.mxu0 0.0
  %3003 = vmatprep.subr.mxu0 0.0
  %3004 = vmatpush1.msra.mxu0 0.0
  %3005 = vmatprep.subr.mxu0 0.0
  %3006 = vmatpush1.msra.mxu0 0.0
  %3007 = vmatprep.subr.mxu0 0.0
  %3008 = vmatpush1.msra.mxu0 0.0
  %3009 = vmatprep.subr.mxu0 0.0
  %3010 = vmatpush1.msra.mxu0 0.0
  %3011 = vmatprep.subr.mxu0 0.0
  %3012 = vmatpush1.msra.mxu0 0.0
  %3013 = vmatprep.subr.mxu0 0.0
  %3014 = vmatpush1.msra.mxu0 0.0
  %3015 = vmatprep.subr.mxu0 0.0
  %3016 = vmatpush1.msra.mxu0 0.0
  %3017 = vmatprep.subr.mxu0 0.0
  %3018 = vmatpush1.msra.mxu0 0.0
  %3019 = vmatprep.subr.mxu0 0.0
  %3020 = vmatpush1.msra.mxu0 0.0
  %3021 = vmatprep.subr.mxu0 0.0
  %3022 = vmatpush1.msra.mxu0 0.0
  %3023 = vmatprep.subr.mxu0 0.0
  %3024 = vmatpush1.msra.mxu0 0.0
  %3025 = vmatprep.subr.mxu0 0.0
  %3026 = vmatpush1.msra.mxu0 0.0
  %3027 = vmatprep.subr.mxu0 0.0
  %3028 = vmatpush1.msra.mxu0 0.0
  %3029 = vmatprep.subr.mxu0 0.0
  %3030 = vmatpush1.msra.mxu0 0.0
  %3031 = vmatprep.subr.mxu0 0.0
  %3032 = vmatpush1.msra.mxu0 0.0
  %3033 = vmatprep.subr.mxu0 0.0
  %3034 = vmatpush1.msra.mxu0 0.0
  %3035 = vmatprep.subr.mxu0 0.0
  %3036 = vmatpush1.msra.mxu0 0.0
  %3037 = vmatprep.subr.mxu0 0.0
  %3038 = vmatpush1.msra.mxu0 0.0
  %3039 = vmatprep.mubr.f32.mxu0 0.0
  %3040 = vmatmul.mubr.f32.gmra.mrb[0].mxu0 %v2902
  %v3041 = vpop.f32.mrb[0].mxu0
  %v3042 = vadd.f32 0.0, %v3041
  %v3043 = vpop.f32.mrb[0].mxu0
  %v3044 = vadd.f32 0.0, %v3043
  %3045 = vdwg.mxu0
  %v3046 = vadd.f32 %v2897, %v2971
  %v3047 = vadd.f32 %v2898, %v2973
  %v3048 = vadd.f32 %v2899, %v3042
  %v3049 = vadd.f32 %v2900, %v3044
  %v3050 = vxor.u32 %v3046, 2147483648
  %v3051 = vxor.u32 %v3047, 2147483648
  %v3052 = vxor.u32 %v3048, 2147483648
  %v3053 = vmul.f32 %v3050, 1.442695
  %v3054 = vpow.pop %v3053
  %v3055 = vmul.f32 %v3051, 1.442695
  %v3056 = vpow.pop %v3055
  %v3057 = vmul.f32 %v3052, 1.442695
  %v3058 = vpow.pop %v3057
  %v3059 = vadd.f32 %v3054, 1.0
  %v3060 = vadd.f32 %v3056, 1.0
  %v3061 = vadd.f32 %v3058, 1.0
  %v3062 = vrcp.pop %v3059
  %v3063 = vmul.f32 1.0, %v3062
  %v3064 = vrcp.pop %v3060
  %v3065 = vmul.f32 1.0, %v3064
  %v3066 = vrcp.pop %v3061
  %v3067 = vmul.f32 1.0, %v3066
  %v3068 = vtanh.pop %v3049
  %v3069 = vmul.f32 %v3065, %v2894
  %v3070 = vmul.f32 %v3063, %v3068
  %v3071 = vadd.f32 %v3069, %v3070
  %v3072 = vtanh.pop %v3071
  %v3073 = vmul.f32 %v3067, %v3072
  %v3074 = vld [vmem:[#allocation2 + $0x1a0] sm:$0xff]
  %v3075 = vld [vmem:[#allocation2 + $0x1a8] sm:$0xff]
  %v3076 = vld [vmem:[#allocation2 + $0x1b0] sm:$0xff]
  %v3077 = vld [vmem:[#allocation2 + $0x1b8] sm:$0xff]
  %v3079 = vsel %vm776, %v3073, 0
  %3081 = vmatprep.subr.mxu0 %v745
  %3082 = vmatpush1.msra.mxu0 %v744
  %3083 = vmatprep.subr.mxu0 %v749
  %3084 = vmatpush1.msra.mxu0 %v748
  %3085 = vmatprep.subr.mxu0 %v753
  %3086 = vmatpush1.msra.mxu0 %v752
  %3087 = vmatprep.subr.mxu0 %v757
  %3088 = vmatpush1.msra.mxu0 %v756
  %3089 = vmatprep.subr.mxu0 %v761
  %3090 = vmatpush1.msra.mxu0 %v760
  %3091 = vmatprep.subr.mxu0 %v765
  %3092 = vmatpush1.msra.mxu0 %v764
  %3093 = vmatprep.subr.mxu0 %v769
  %3094 = vmatpush1.msra.mxu0 %v768
  %3095 = vmatprep.subr.mxu0 %v773
  %3096 = vmatpush1.msra.mxu0 %v772
  %3097 = vmatprep.subr.mxu0 0.0
  %3098 = vmatpush1.msra.mxu0 0.0
  %3099 = vmatprep.subr.mxu0 0.0
  %3100 = vmatpush1.msra.mxu0 0.0
  %3101 = vmatprep.subr.mxu0 0.0
  %3102 = vmatpush1.msra.mxu0 0.0
  %3103 = vmatprep.subr.mxu0 0.0
  %3104 = vmatpush1.msra.mxu0 0.0
  %3105 = vmatprep.subr.mxu0 0.0
  %3106 = vmatpush1.msra.mxu0 0.0
  %3107 = vmatprep.subr.mxu0 0.0
  %3108 = vmatpush1.msra.mxu0 0.0
  %3109 = vmatprep.subr.mxu0 0.0
  %3110 = vmatpush1.msra.mxu0 0.0
  %3111 = vmatprep.subr.mxu0 0.0
  %3112 = vmatpush1.msra.mxu0 0.0
  %3113 = vmatprep.subr.mxu0 0.0
  %3114 = vmatpush1.msra.mxu0 0.0
  %3115 = vmatprep.subr.mxu0 0.0
  %3116 = vmatpush1.msra.mxu0 0.0
  %3117 = vmatprep.subr.mxu0 0.0
  %3118 = vmatpush1.msra.mxu0 0.0
  %3119 = vmatprep.subr.mxu0 0.0
  %3120 = vmatpush1.msra.mxu0 0.0
  %3121 = vmatprep.subr.mxu0 0.0
  %3122 = vmatpush1.msra.mxu0 0.0
  %3123 = vmatprep.subr.mxu0 0.0
  %3124 = vmatpush1.msra.mxu0 0.0
  %3125 = vmatprep.subr.mxu0 0.0
  %3126 = vmatpush1.msra.mxu0 0.0
  %3127 = vmatprep.subr.mxu0 0.0
  %3128 = vmatpush1.msra.mxu0 0.0
  %3129 = vmatprep.subr.mxu0 0.0
  %3130 = vmatpush1.msra.mxu0 0.0
  %3131 = vmatprep.subr.mxu0 0.0
  %3132 = vmatpush1.msra.mxu0 0.0
  %3133 = vmatprep.subr.mxu0 0.0
  %3134 = vmatpush1.msra.mxu0 0.0
  %3135 = vmatprep.subr.mxu0 0.0
  %3136 = vmatpush1.msra.mxu0 0.0
  %3137 = vmatprep.subr.mxu0 0.0
  %3138 = vmatpush1.msra.mxu0 0.0
  %3139 = vmatprep.subr.mxu0 0.0
  %3140 = vmatpush1.msra.mxu0 0.0
  %3141 = vmatprep.subr.mxu0 0.0
  %3142 = vmatpush1.msra.mxu0 0.0
  %3143 = vmatprep.subr.mxu0 0.0
  %3144 = vmatpush1.msra.mxu0 0.0
  %3145 = vmatprep.mubr.f32.mxu0 0.0
  %3146 = vmatmul.mubr.f32.gmra.mrb[0].mxu0 %v3079
  %v3147 = vpop.f32.mrb[0].mxu0
  %v3148 = vadd.f32 0.0, %v3147
  %v3149 = vpop.f32.mrb[0].mxu0
  %v3150 = vadd.f32 0.0, %v3149
  %3151 = vdwg.mxu0
  %3152 = vmatprep.subr.mxu0 %v747
  %3153 = vmatpush1.msra.mxu0 %v746
  %3154 = vmatprep.subr.mxu0 %v751
  %3155 = vmatpush1.msra.mxu0 %v750
  %3156 = vmatprep.subr.mxu0 %v755
  %3157 = vmatpush1.msra.mxu0 %v754
  %3158 = vmatprep.subr.mxu0 %v759
  %3159 = vmatpush1.msra.mxu0 %v758
  %3160 = vmatprep.subr.mxu0 %v763
  %3161 = vmatpush1.msra.mxu0 %v762
  %3162 = vmatprep.subr.mxu0 %v767
  %3163 = vmatpush1.msra.mxu0 %v766
  %3164 = vmatprep.subr.mxu0 %v771
  %3165 = vmatpush1.msra.mxu0 %v770
  %3166 = vmatprep.subr.mxu0 %v775
  %3167 = vmatpush1.msra.mxu0 %v774
  %3168 = vmatprep.subr.mxu0 0.0
  %3169 = vmatpush1.msra.mxu0 0.0
  %3170 = vmatprep.subr.mxu0 0.0
  %3171 = vmatpush1.msra.mxu0 0.0
  %3172 = vmatprep.subr.mxu0 0.0
  %3173 = vmatpush1.msra.mxu0 0.0
  %3174 = vmatprep.subr.mxu0 0.0
  %3175 = vmatpush1.msra.mxu0 0.0
  %3176 = vmatprep.subr.mxu0 0.0
  %3177 = vmatpush1.msra.mxu0 0.0
  %3178 = vmatprep.subr.mxu0 0.0
  %3179 = vmatpush1.msra.mxu0 0.0
  %3180 = vmatprep.subr.mxu0 0.0
  %3181 = vmatpush1.msra.mxu0 0.0
  %3182 = vmatprep.subr.mxu0 0.0
  %3183 = vmatpush1.msra.mxu0 0.0
  %3184 = vmatprep.subr.mxu0 0.0
  %3185 = vmatpush1.msra.mxu0 0.0
  %3186 = vmatprep.subr.mxu0 0.0
  %3187 = vmatpush1.msra.mxu0 0.0
  %3188 = vmatprep.subr.mxu0 0.0
  %3189 = vmatpush1.msra.mxu0 0.0
  %3190 = vmatprep.subr.mxu0 0.0
  %3191 = vmatpush1.msra.mxu0 0.0
  %3192 = vmatprep.subr.mxu0 0.0
  %3193 = vmatpush1.msra.mxu0 0.0
  %3194 = vmatprep.subr.mxu0 0.0
  %3195 = vmatpush1.msra.mxu0 0.0
  %3196 = vmatprep.subr.mxu0 0.0
  %3197 = vmatpush1.msra.mxu0 0.0
  %3198 = vmatprep.subr.mxu0 0.0
  %3199 = vmatpush1.msra.mxu0 0.0
  %3200 = vmatprep.subr.mxu0 0.0
  %3201 = vmatpush1.msra.mxu0 0.0
  %3202 = vmatprep.subr.mxu0 0.0
  %3203 = vmatpush1.msra.mxu0 0.0
  %3204 = vmatprep.subr.mxu0 0.0
  %3205 = vmatpush1.msra.mxu0 0.0
  %3206 = vmatprep.subr.mxu0 0.0
  %3207 = vmatpush1.msra.mxu0 0.0
  %3208 = vmatprep.subr.mxu0 0.0
  %3209 = vmatpush1.msra.mxu0 0.0
  %3210 = vmatprep.subr.mxu0 0.0
  %3211 = vmatpush1.msra.mxu0 0.0
  %3212 = vmatprep.subr.mxu0 0.0
  %3213 = vmatpush1.msra.mxu0 0.0
  %3214 = vmatprep.subr.mxu0 0.0
  %3215 = vmatpush1.msra.mxu0 0.0
  %3216 = vmatprep.mubr.f32.mxu0 0.0
  %3217 = vmatmul.mubr.f32.gmra.mrb[0].mxu0 %v3079
  %v3218 = vpop.f32.mrb[0].mxu0
  %v3219 = vadd.f32 0.0, %v3218
  %v3220 = vpop.f32.mrb[0].mxu0
  %v3221 = vadd.f32 0.0, %v3220
  %3222 = vdwg.mxu0
  %v3223 = vadd.f32 %v3074, %v3148
  %v3224 = vadd.f32 %v3075, %v3150
  %v3225 = vadd.f32 %v3076, %v3219
  %v3226 = vadd.f32 %v3077, %v3221
  %v3227 = vxor.u32 %v3223, 2147483648
  %v3228 = vxor.u32 %v3224, 2147483648
  %v3229 = vxor.u32 %v3225, 2147483648
  %v3230 = vmul.f32 %v3227, 1.442695
  %v3231 = vpow.pop %v3230
  %v3232 = vmul.f32 %v3228, 1.442695
  %v3233 = vpow.pop %v3232
  %v3234 = vmul.f32 %v3229, 1.442695
  %v3235 = vpow.pop %v3234
  %v3236 = vadd.f32 %v3231, 1.0
  %v3237 = vadd.f32 %v3233, 1.0
  %v3238 = vadd.f32 %v3235, 1.0
  %v3239 = vrcp.pop %v3236
  %v3240 = vmul.f32 1.0, %v3239
  %v3241 = vrcp.pop %v3237
  %v3242 = vmul.f32 1.0, %v3241
  %v3243 = vrcp.pop %v3238
  %v3244 = vmul.f32 1.0, %v3243
  %v3245 = vtanh.pop %v3226
  %v3246 = vmul.f32 %v3242, %v3071
  %v3247 = vmul.f32 %v3240, %v3245
  %v3248 = vadd.f32 %v3246, %v3247
  %v3249 = vtanh.pop %v3248
  %v3250 = vmul.f32 %v3244, %v3249
  %v3251 = vld [vmem:[#allocation2 + $0x1c0] sm:$0xff]
  %v3252 = vld [vmem:[#allocation2 + $0x1c8] sm:$0xff]
  %v3253 = vld [vmem:[#allocation2 + $0x1d0] sm:$0xff]
  %v3254 = vld [vmem:[#allocation2 + $0x1d8] sm:$0xff]
  %v3256 = vsel %vm776, %v3250, 0
  %3258 = vmatprep.subr.mxu0 %v745
  %3259 = vmatpush1.msra.mxu0 %v744
  %3260 = vmatprep.subr.mxu0 %v749
  %3261 = vmatpush1.msra.mxu0 %v748
  %3262 = vmatprep.subr.mxu0 %v753
  %3263 = vmatpush1.msra.mxu0 %v752
  %3264 = vmatprep.subr.mxu0 %v757
  %3265 = vmatpush1.msra.mxu0 %v756
  %3266 = vmatprep.subr.mxu0 %v761
  %3267 = vmatpush1.msra.mxu0 %v760
  %3268 = vmatprep.subr.mxu0 %v765
  %3269 = vmatpush1.msra.mxu0 %v764
  %3270 = vmatprep.subr.mxu0 %v769
  %3271 = vmatpush1.msra.mxu0 %v768
  %3272 = vmatprep.subr.mxu0 %v773
  %3273 = vmatpush1.msra.mxu0 %v772
  %3274 = vmatprep.subr.mxu0 0.0
  %3275 = vmatpush1.msra.mxu0 0.0
  %3276 = vmatprep.subr.mxu0 0.0
  %3277 = vmatpush1.msra.mxu0 0.0
  %3278 = vmatprep.subr.mxu0 0.0
  %3279 = vmatpush1.msra.mxu0 0.0
  %3280 = vmatprep.subr.mxu0 0.0
  %3281 = vmatpush1.msra.mxu0 0.0
  %3282 = vmatprep.subr.mxu0 0.0
  %3283 = vmatpush1.msra.mxu0 0.0
  %3284 = vmatprep.subr.mxu0 0.0
  %3285 = vmatpush1.msra.mxu0 0.0
  %3286 = vmatprep.subr.mxu0 0.0
  %3287 = vmatpush1.msra.mxu0 0.0
  %3288 = vmatprep.subr.mxu0 0.0
  %3289 = vmatpush1.msra.mxu0 0.0
  %3290 = vmatprep.subr.mxu0 0.0
  %3291 = vmatpush1.msra.mxu0 0.0
  %3292 = vmatprep.subr.mxu0 0.0
  %3293 = vmatpush1.msra.mxu0 0.0
  %3294 = vmatprep.subr.mxu0 0.0
  %3295 = vmatpush1.msra.mxu0 0.0
  %3296 = vmatprep.subr.mxu0 0.0
  %3297 = vmatpush1.msra.mxu0 0.0
  %3298 = vmatprep.subr.mxu0 0.0
  %3299 = vmatpush1.msra.mxu0 0.0
  %3300 = vmatprep.subr.mxu0 0.0
  %3301 = vmatpush1.msra.mxu0 0.0
  %3302 = vmatprep.subr.mxu0 0.0
  %3303 = vmatpush1.msra.mxu0 0.0
  %3304 = vmatprep.subr.mxu0 0.0
  %3305 = vmatpush1.msra.mxu0 0.0
  %3306 = vmatprep.subr.mxu0 0.0
  %3307 = vmatpush1.msra.mxu0 0.0
  %3308 = vmatprep.subr.mxu0 0.0
  %3309 = vmatpush1.msra.mxu0 0.0
  %3310 = vmatprep.subr.mxu0 0.0
  %3311 = vmatpush1.msra.mxu0 0.0
  %3312 = vmatprep.subr.mxu0 0.0
  %3313 = vmatpush1.msra.mxu0 0.0
  %3314 = vmatprep.subr.mxu0 0.0
  %3315 = vmatpush1.msra.mxu0 0.0
  %3316 = vmatprep.subr.mxu0 0.0
  %3317 = vmatpush1.msra.mxu0 0.0
  %3318 = vmatprep.subr.mxu0 0.0
  %3319 = vmatpush1.msra.mxu0 0.0
  %3320 = vmatprep.subr.mxu0 0.0
  %3321 = vmatpush1.msra.mxu0 0.0
  %3322 = vmatprep.mubr.f32.mxu0 0.0
  %3323 = vmatmul.mubr.f32.gmra.mrb[0].mxu0 %v3256
  %v3324 = vpop.f32.mrb[0].mxu0
  %v3325 = vadd.f32 0.0, %v3324
  %v3326 = vpop.f32.mrb[0].mxu0
  %v3327 = vadd.f32 0.0, %v3326
  %3328 = vdwg.mxu0
  %3329 = vmatprep.subr.mxu0 %v747
  %3330 = vmatpush1.msra.mxu0 %v746
  %3331 = vmatprep.subr.mxu0 %v751
  %3332 = vmatpush1.msra.mxu0 %v750
  %3333 = vmatprep.subr.mxu0 %v755
  %3334 = vmatpush1.msra.mxu0 %v754
  %3335 = vmatprep.subr.mxu0 %v759
  %3336 = vmatpush1.msra.mxu0 %v758
  %3337 = vmatprep.subr.mxu0 %v763
  %3338 = vmatpush1.msra.mxu0 %v762
  %3339 = vmatprep.subr.mxu0 %v767
  %3340 = vmatpush1.msra.mxu0 %v766
  %3341 = vmatprep.subr.mxu0 %v771
  %3342 = vmatpush1.msra.mxu0 %v770
  %3343 = vmatprep.subr.mxu0 %v775
  %3344 = vmatpush1.msra.mxu0 %v774
  %3345 = vmatprep.subr.mxu0 0.0
  %3346 = vmatpush1.msra.mxu0 0.0
  %3347 = vmatprep.subr.mxu0 0.0
  %3348 = vmatpush1.msra.mxu0 0.0
  %3349 = vmatprep.subr.mxu0 0.0
  %3350 = vmatpush1.msra.mxu0 0.0
  %3351 = vmatprep.subr.mxu0 0.0
  %3352 = vmatpush1.msra.mxu0 0.0
  %3353 = vmatprep.subr.mxu0 0.0
  %3354 = vmatpush1.msra.mxu0 0.0
  %3355 = vmatprep.subr.mxu0 0.0
  %3356 = vmatpush1.msra.mxu0 0.0
  %3357 = vmatprep.subr.mxu0 0.0
  %3358 = vmatpush1.msra.mxu0 0.0
  %3359 = vmatprep.subr.mxu0 0.0
  %3360 = vmatpush1.msra.mxu0 0.0
  %3361 = vmatprep.subr.mxu0 0.0
  %3362 = vmatpush1.msra.mxu0 0.0
  %3363 = vmatprep.subr.mxu0 0.0
  %3364 = vmatpush1.msra.mxu0 0.0
  %3365 = vmatprep.subr.mxu0 0.0
  %3366 = vmatpush1.msra.mxu0 0.0
  %3367 = vmatprep.subr.mxu0 0.0
  %3368 = vmatpush1.msra.mxu0 0.0
  %3369 = vmatprep.subr.mxu0 0.0
  %3370 = vmatpush1.msra.mxu0 0.0
  %3371 = vmatprep.subr.mxu0 0.0
  %3372 = vmatpush1.msra.mxu0 0.0
  %3373 = vmatprep.subr.mxu0 0.0
  %3374 = vmatpush1.msra.mxu0 0.0
  %3375 = vmatprep.subr.mxu0 0.0
  %3376 = vmatpush1.msra.mxu0 0.0
  %3377 = vmatprep.subr.mxu0 0.0
  %3378 = vmatpush1.msra.mxu0 0.0
  %3379 = vmatprep.subr.mxu0 0.0
  %3380 = vmatpush1.msra.mxu0 0.0
  %3381 = vmatprep.subr.mxu0 0.0
  %3382 = vmatpush1.msra.mxu0 0.0
  %3383 = vmatprep.subr.mxu0 0.0
  %3384 = vmatpush1.msra.mxu0 0.0
  %3385 = vmatprep.subr.mxu0 0.0
  %3386 = vmatpush1.msra.mxu0 0.0
  %3387 = vmatprep.subr.mxu0 0.0
  %3388 = vmatpush1.msra.mxu0 0.0
  %3389 = vmatprep.subr.mxu0 0.0
  %3390 = vmatpush1.msra.mxu0 0.0
  %3391 = vmatprep.subr.mxu0 0.0
  %3392 = vmatpush1.msra.mxu0 0.0
  %3393 = vmatprep.mubr.f32.mxu0 0.0
  %3394 = vmatmul.mubr.f32.gmra.mrb[0].mxu0 %v3256
  %v3395 = vpop.f32.mrb[0].mxu0
  %v3396 = vadd.f32 0.0, %v3395
  %v3397 = vpop.f32.mrb[0].mxu0
  %v3398 = vadd.f32 0.0, %v3397
  %3399 = vdwg.mxu0
  %v3400 = vadd.f32 %v3251, %v3325
  %v3401 = vadd.f32 %v3252, %v3327
  %v3402 = vadd.f32 %v3253, %v3396
  %v3403 = vadd.f32 %v3254, %v3398
  %v3404 = vxor.u32 %v3400, 2147483648
  %v3405 = vxor.u32 %v3401, 2147483648
  %v3406 = vxor.u32 %v3402, 2147483648
  %v3407 = vmul.f32 %v3404, 1.442695
  %v3408 = vpow.pop %v3407
  %v3409 = vmul.f32 %v3405, 1.442695
  %v3410 = vpow.pop %v3409
  %v3411 = vmul.f32 %v3406, 1.442695
  %v3412 = vpow.pop %v3411
  %v3413 = vadd.f32 %v3408, 1.0
  %v3414 = vadd.f32 %v3410, 1.0
  %v3415 = vadd.f32 %v3412, 1.0
  %v3416 = vrcp.pop %v3413
  %v3417 = vmul.f32 1.0, %v3416
  %v3418 = vrcp.pop %v3414
  %v3419 = vmul.f32 1.0, %v3418
  %v3420 = vrcp.pop %v3415
  %v3421 = vmul.f32 1.0, %v3420
  %v3422 = vtanh.pop %v3403
  %v3423 = vmul.f32 %v3419, %v3248
  %v3424 = vmul.f32 %v3417, %v3422
  %v3425 = vadd.f32 %v3423, %v3424
  %v3426 = vtanh.pop %v3425
  %v3427 = vmul.f32 %v3421, %v3426
  %v3428 = vld [vmem:[#allocation2 + $0x1e0] sm:$0xff]
  %v3429 = vld [vmem:[#allocation2 + $0x1e8] sm:$0xff]
  %v3430 = vld [vmem:[#allocation2 + $0x1f0] sm:$0xff]
  %v3431 = vld [vmem:[#allocation2 + $0x1f8] sm:$0xff]
  %v3433 = vsel %vm776, %v3427, 0
  %3435 = vmatprep.subr.mxu0 %v745
  %3436 = vmatpush1.msra.mxu0 %v744
  %3437 = vmatprep.subr.mxu0 %v749
  %3438 = vmatpush1.msra.mxu0 %v748
  %3439 = vmatprep.subr.mxu0 %v753
  %3440 = vmatpush1.msra.mxu0 %v752
  %3441 = vmatprep.subr.mxu0 %v757
  %3442 = vmatpush1.msra.mxu0 %v756
  %3443 = vmatprep.subr.mxu0 %v761
  %3444 = vmatpush1.msra.mxu0 %v760
  %3445 = vmatprep.subr.mxu0 %v765
  %3446 = vmatpush1.msra.mxu0 %v764
  %3447 = vmatprep.subr.mxu0 %v769
  %3448 = vmatpush1.msra.mxu0 %v768
  %3449 = vmatprep.subr.mxu0 %v773
  %3450 = vmatpush1.msra.mxu0 %v772
  %3451 = vmatprep.subr.mxu0 0.0
  %3452 = vmatpush1.msra.mxu0 0.0
  %3453 = vmatprep.subr.mxu0 0.0
  %3454 = vmatpush1.msra.mxu0 0.0
  %3455 = vmatprep.subr.mxu0 0.0
  %3456 = vmatpush1.msra.mxu0 0.0
  %3457 = vmatprep.subr.mxu0 0.0
  %3458 = vmatpush1.msra.mxu0 0.0
  %3459 = vmatprep.subr.mxu0 0.0
  %3460 = vmatpush1.msra.mxu0 0.0
  %3461 = vmatprep.subr.mxu0 0.0
  %3462 = vmatpush1.msra.mxu0 0.0
  %3463 = vmatprep.subr.mxu0 0.0
  %3464 = vmatpush1.msra.mxu0 0.0
  %3465 = vmatprep.subr.mxu0 0.0
  %3466 = vmatpush1.msra.mxu0 0.0
  %3467 = vmatprep.subr.mxu0 0.0
  %3468 = vmatpush1.msra.mxu0 0.0
  %3469 = vmatprep.subr.mxu0 0.0
  %3470 = vmatpush1.msra.mxu0 0.0
  %3471 = vmatprep.subr.mxu0 0.0
  %3472 = vmatpush1.msra.mxu0 0.0
  %3473 = vmatprep.subr.mxu0 0.0
  %3474 = vmatpush1.msra.mxu0 0.0
  %3475 = vmatprep.subr.mxu0 0.0
  %3476 = vmatpush1.msra.mxu0 0.0
  %3477 = vmatprep.subr.mxu0 0.0
  %3478 = vmatpush1.msra.mxu0 0.0
  %3479 = vmatprep.subr.mxu0 0.0
  %3480 = vmatpush1.msra.mxu0 0.0
  %3481 = vmatprep.subr.mxu0 0.0
  %3482 = vmatpush1.msra.mxu0 0.0
  %3483 = vmatprep.subr.mxu0 0.0
  %3484 = vmatpush1.msra.mxu0 0.0
  %3485 = vmatprep.subr.mxu0 0.0
  %3486 = vmatpush1.msra.mxu0 0.0
  %3487 = vmatprep.subr.mxu0 0.0
  %3488 = vmatpush1.msra.mxu0 0.0
  %3489 = vmatprep.subr.mxu0 0.0
  %3490 = vmatpush1.msra.mxu0 0.0
  %3491 = vmatprep.subr.mxu0 0.0
  %3492 = vmatpush1.msra.mxu0 0.0
  %3493 = vmatprep.subr.mxu0 0.0
  %3494 = vmatpush1.msra.mxu0 0.0
  %3495 = vmatprep.subr.mxu0 0.0
  %3496 = vmatpush1.msra.mxu0 0.0
  %3497 = vmatprep.subr.mxu0 0.0
  %3498 = vmatpush1.msra.mxu0 0.0
  %3499 = vmatprep.mubr.f32.mxu0 0.0
  %3500 = vmatmul.mubr.f32.gmra.mrb[0].mxu0 %v3433
  %v3501 = vpop.f32.mrb[0].mxu0
  %v3502 = vadd.f32 0.0, %v3501
  %v3503 = vpop.f32.mrb[0].mxu0
  %v3504 = vadd.f32 0.0, %v3503
  %3505 = vdwg.mxu0
  %3506 = vmatprep.subr.mxu0 %v747
  %3507 = vmatpush1.msra.mxu0 %v746
  %3508 = vmatprep.subr.mxu0 %v751
  %3509 = vmatpush1.msra.mxu0 %v750
  %3510 = vmatprep.subr.mxu0 %v755
  %3511 = vmatpush1.msra.mxu0 %v754
  %3512 = vmatprep.subr.mxu0 %v759
  %3513 = vmatpush1.msra.mxu0 %v758
  %3514 = vmatprep.subr.mxu0 %v763
  %3515 = vmatpush1.msra.mxu0 %v762
  %3516 = vmatprep.subr.mxu0 %v767
  %3517 = vmatpush1.msra.mxu0 %v766
  %3518 = vmatprep.subr.mxu0 %v771
  %3519 = vmatpush1.msra.mxu0 %v770
  %3520 = vmatprep.subr.mxu0 %v775
  %3521 = vmatpush1.msra.mxu0 %v774
  %3522 = vmatprep.subr.mxu0 0.0
  %3523 = vmatpush1.msra.mxu0 0.0
  %3524 = vmatprep.subr.mxu0 0.0
  %3525 = vmatpush1.msra.mxu0 0.0
  %3526 = vmatprep.subr.mxu0 0.0
  %3527 = vmatpush1.msra.mxu0 0.0
  %3528 = vmatprep.subr.mxu0 0.0
  %3529 = vmatpush1.msra.mxu0 0.0
  %3530 = vmatprep.subr.mxu0 0.0
  %3531 = vmatpush1.msra.mxu0 0.0
  %3532 = vmatprep.subr.mxu0 0.0
  %3533 = vmatpush1.msra.mxu0 0.0
  %3534 = vmatprep.subr.mxu0 0.0
  %3535 = vmatpush1.msra.mxu0 0.0
  %3536 = vmatprep.subr.mxu0 0.0
  %3537 = vmatpush1.msra.mxu0 0.0
  %3538 = vmatprep.subr.mxu0 0.0
  %3539 = vmatpush1.msra.mxu0 0.0
  %3540 = vmatprep.subr.mxu0 0.0
  %3541 = vmatpush1.msra.mxu0 0.0
  %3542 = vmatprep.subr.mxu0 0.0
  %3543 = vmatpush1.msra.mxu0 0.0
  %3544 = vmatprep.subr.mxu0 0.0
  %3545 = vmatpush1.msra.mxu0 0.0
  %3546 = vmatprep.subr.mxu0 0.0
  %3547 = vmatpush1.msra.mxu0 0.0
  %3548 = vmatprep.subr.mxu0 0.0
  %3549 = vmatpush1.msra.mxu0 0.0
  %3550 = vmatprep.subr.mxu0 0.0
  %3551 = vmatpush1.msra.mxu0 0.0
  %3552 = vmatprep.subr.mxu0 0.0
  %3553 = vmatpush1.msra.mxu0 0.0
  %3554 = vmatprep.subr.mxu0 0.0
  %3555 = vmatpush1.msra.mxu0 0.0
  %3556 = vmatprep.subr.mxu0 0.0
  %3557 = vmatpush1.msra.mxu0 0.0
  %3558 = vmatprep.subr.mxu0 0.0
  %3559 = vmatpush1.msra.mxu0 0.0
  %3560 = vmatprep.subr.mxu0 0.0
  %3561 = vmatpush1.msra.mxu0 0.0
  %3562 = vmatprep.subr.mxu0 0.0
  %3563 = vmatpush1.msra.mxu0 0.0
  %3564 = vmatprep.subr.mxu0 0.0
  %3565 = vmatpush1.msra.mxu0 0.0
  %3566 = vmatprep.subr.mxu0 0.0
  %3567 = vmatpush1.msra.mxu0 0.0
  %3568 = vmatprep.subr.mxu0 0.0
  %3569 = vmatpush1.msra.mxu0 0.0
  %3570 = vmatprep.mubr.f32.mxu0 0.0
  %3571 = vmatmul.mubr.f32.gmra.mrb[0].mxu0 %v3433
  %v3572 = vpop.f32.mrb[0].mxu0
  %v3573 = vadd.f32 0.0, %v3572
  %v3574 = vpop.f32.mrb[0].mxu0
  %v3575 = vadd.f32 0.0, %v3574
  %3576 = vdwg.mxu0
  %v3577 = vadd.f32 %v3428, %v3502
  %v3578 = vadd.f32 %v3429, %v3504
  %v3579 = vadd.f32 %v3430, %v3573
  %v3580 = vadd.f32 %v3431, %v3575
  %v3581 = vxor.u32 %v3577, 2147483648
  %v3582 = vxor.u32 %v3578, 2147483648
  %v3583 = vxor.u32 %v3579, 2147483648
  %v3584 = vmul.f32 %v3581, 1.442695
  %v3585 = vpow.pop %v3584
  %v3586 = vmul.f32 %v3582, 1.442695
  %v3587 = vpow.pop %v3586
  %v3588 = vmul.f32 %v3583, 1.442695
  %v3589 = vpow.pop %v3588
  %v3590 = vadd.f32 %v3585, 1.0
  %v3591 = vadd.f32 %v3587, 1.0
  %v3592 = vadd.f32 %v3589, 1.0
  %v3593 = vrcp.pop %v3590
  %v3594 = vmul.f32 1.0, %v3593
  %v3595 = vrcp.pop %v3591
  %v3596 = vmul.f32 1.0, %v3595
  %v3597 = vrcp.pop %v3592
  %v3598 = vmul.f32 1.0, %v3597
  %v3599 = vtanh.pop %v3580
  %v3600 = vmul.f32 %v3596, %v3425
  %v3601 = vmul.f32 %v3594, %v3599
  %v3602 = vadd.f32 %v3600, %v3601
  %v3603 = vtanh.pop %v3602
  %v3604 = vmul.f32 %v3598, %v3603
  %v3605 = vld [vmem:[#allocation2 + $0x200] sm:$0xff]
  %v3606 = vld [vmem:[#allocation2 + $0x208] sm:$0xff]
  %v3607 = vld [vmem:[#allocation2 + $0x210] sm:$0xff]
  %v3608 = vld [vmem:[#allocation2 + $0x218] sm:$0xff]
  %v3610 = vsel %vm776, %v3604, 0
  %3612 = vmatprep.subr.mxu0 %v745
  %3613 = vmatpush1.msra.mxu0 %v744
  %3614 = vmatprep.subr.mxu0 %v749
  %3615 = vmatpush1.msra.mxu0 %v748
  %3616 = vmatprep.subr.mxu0 %v753
  %3617 = vmatpush1.msra.mxu0 %v752
  %3618 = vmatprep.subr.mxu0 %v757
  %3619 = vmatpush1.msra.mxu0 %v756
  %3620 = vmatprep.subr.mxu0 %v761
  %3621 = vmatpush1.msra.mxu0 %v760
  %3622 = vmatprep.subr.mxu0 %v765
  %3623 = vmatpush1.msra.mxu0 %v764
  %3624 = vmatprep.subr.mxu0 %v769
  %3625 = vmatpush1.msra.mxu0 %v768
  %3626 = vmatprep.subr.mxu0 %v773
  %3627 = vmatpush1.msra.mxu0 %v772
  %3628 = vmatprep.subr.mxu0 0.0
  %3629 = vmatpush1.msra.mxu0 0.0
  %3630 = vmatprep.subr.mxu0 0.0
  %3631 = vmatpush1.msra.mxu0 0.0
  %3632 = vmatprep.subr.mxu0 0.0
  %3633 = vmatpush1.msra.mxu0 0.0
  %3634 = vmatprep.subr.mxu0 0.0
  %3635 = vmatpush1.msra.mxu0 0.0
  %3636 = vmatprep.subr.mxu0 0.0
  %3637 = vmatpush1.msra.mxu0 0.0
  %3638 = vmatprep.subr.mxu0 0.0
  %3639 = vmatpush1.msra.mxu0 0.0
  %3640 = vmatprep.subr.mxu0 0.0
  %3641 = vmatpush1.msra.mxu0 0.0
  %3642 = vmatprep.subr.mxu0 0.0
  %3643 = vmatpush1.msra.mxu0 0.0
  %3644 = vmatprep.subr.mxu0 0.0
  %3645 = vmatpush1.msra.mxu0 0.0
  %3646 = vmatprep.subr.mxu0 0.0
  %3647 = vmatpush1.msra.mxu0 0.0
  %3648 = vmatprep.subr.mxu0 0.0
  %3649 = vmatpush1.msra.mxu0 0.0
  %3650 = vmatprep.subr.mxu0 0.0
  %3651 = vmatpush1.msra.mxu0 0.0
  %3652 = vmatprep.subr.mxu0 0.0
  %3653 = vmatpush1.msra.mxu0 0.0
  %3654 = vmatprep.subr.mxu0 0.0
  %3655 = vmatpush1.msra.mxu0 0.0
  %3656 = vmatprep.subr.mxu0 0.0
  %3657 = vmatpush1.msra.mxu0 0.0
  %3658 = vmatprep.subr.mxu0 0.0
  %3659 = vmatpush1.msra.mxu0 0.0
  %3660 = vmatprep.subr.mxu0 0.0
  %3661 = vmatpush1.msra.mxu0 0.0
  %3662 = vmatprep.subr.mxu0 0.0
  %3663 = vmatpush1.msra.mxu0 0.0
  %3664 = vmatprep.subr.mxu0 0.0
  %3665 = vmatpush1.msra.mxu0 0.0
  %3666 = vmatprep.subr.mxu0 0.0
  %3667 = vmatpush1.msra.mxu0 0.0
  %3668 = vmatprep.subr.mxu0 0.0
  %3669 = vmatpush1.msra.mxu0 0.0
  %3670 = vmatprep.subr.mxu0 0.0
  %3671 = vmatpush1.msra.mxu0 0.0
  %3672 = vmatprep.subr.mxu0 0.0
  %3673 = vmatpush1.msra.mxu0 0.0
  %3674 = vmatprep.subr.mxu0 0.0
  %3675 = vmatpush1.msra.mxu0 0.0
  %3676 = vmatprep.mubr.f32.mxu0 0.0
  %3677 = vmatmul.mubr.f32.gmra.mrb[0].mxu0 %v3610
  %v3678 = vpop.f32.mrb[0].mxu0
  %v3679 = vadd.f32 0.0, %v3678
  %v3680 = vpop.f32.mrb[0].mxu0
  %v3681 = vadd.f32 0.0, %v3680
  %3682 = vdwg.mxu0
  %3683 = vmatprep.subr.mxu0 %v747
  %3684 = vmatpush1.msra.mxu0 %v746
  %3685 = vmatprep.subr.mxu0 %v751
  %3686 = vmatpush1.msra.mxu0 %v750
  %3687 = vmatprep.subr.mxu0 %v755
  %3688 = vmatpush1.msra.mxu0 %v754
  %3689 = vmatprep.subr.mxu0 %v759
  %3690 = vmatpush1.msra.mxu0 %v758
  %3691 = vmatprep.subr.mxu0 %v763
  %3692 = vmatpush1.msra.mxu0 %v762
  %3693 = vmatprep.subr.mxu0 %v767
  %3694 = vmatpush1.msra.mxu0 %v766
  %3695 = vmatprep.subr.mxu0 %v771
  %3696 = vmatpush1.msra.mxu0 %v770
  %3697 = vmatprep.subr.mxu0 %v775
  %3698 = vmatpush1.msra.mxu0 %v774
  %3699 = vmatprep.subr.mxu0 0.0
  %3700 = vmatpush1.msra.mxu0 0.0
  %3701 = vmatprep.subr.mxu0 0.0
  %3702 = vmatpush1.msra.mxu0 0.0
  %3703 = vmatprep.subr.mxu0 0.0
  %3704 = vmatpush1.msra.mxu0 0.0
  %3705 = vmatprep.subr.mxu0 0.0
  %3706 = vmatpush1.msra.mxu0 0.0
  %3707 = vmatprep.subr.mxu0 0.0
  %3708 = vmatpush1.msra.mxu0 0.0
  %3709 = vmatprep.subr.mxu0 0.0
  %3710 = vmatpush1.msra.mxu0 0.0
  %3711 = vmatprep.subr.mxu0 0.0
  %3712 = vmatpush1.msra.mxu0 0.0
  %3713 = vmatprep.subr.mxu0 0.0
  %3714 = vmatpush1.msra.mxu0 0.0
  %3715 = vmatprep.subr.mxu0 0.0
  %3716 = vmatpush1.msra.mxu0 0.0
  %3717 = vmatprep.subr.mxu0 0.0
  %3718 = vmatpush1.msra.mxu0 0.0
  %3719 = vmatprep.subr.mxu0 0.0
  %3720 = vmatpush1.msra.mxu0 0.0
  %3721 = vmatprep.subr.mxu0 0.0
  %3722 = vmatpush1.msra.mxu0 0.0
  %3723 = vmatprep.subr.mxu0 0.0
  %3724 = vmatpush1.msra.mxu0 0.0
  %3725 = vmatprep.subr.mxu0 0.0
  %3726 = vmatpush1.msra.mxu0 0.0
  %3727 = vmatprep.subr.mxu0 0.0
  %3728 = vmatpush1.msra.mxu0 0.0
  %3729 = vmatprep.subr.mxu0 0.0
  %3730 = vmatpush1.msra.mxu0 0.0
  %3731 = vmatprep.subr.mxu0 0.0
  %3732 = vmatpush1.msra.mxu0 0.0
  %3733 = vmatprep.subr.mxu0 0.0
  %3734 = vmatpush1.msra.mxu0 0.0
  %3735 = vmatprep.subr.mxu0 0.0
  %3736 = vmatpush1.msra.mxu0 0.0
  %3737 = vmatprep.subr.mxu0 0.0
  %3738 = vmatpush1.msra.mxu0 0.0
  %3739 = vmatprep.subr.mxu0 0.0
  %3740 = vmatpush1.msra.mxu0 0.0
  %3741 = vmatprep.subr.mxu0 0.0
  %3742 = vmatpush1.msra.mxu0 0.0
  %3743 = vmatprep.subr.mxu0 0.0
  %3744 = vmatpush1.msra.mxu0 0.0
  %3745 = vmatprep.subr.mxu0 0.0
  %3746 = vmatpush1.msra.mxu0 0.0
  %3747 = vmatprep.mubr.f32.mxu0 0.0
  %3748 = vmatmul.mubr.f32.gmra.mrb[0].mxu0 %v3610
  %v3749 = vpop.f32.mrb[0].mxu0
  %v3750 = vadd.f32 0.0, %v3749
  %v3751 = vpop.f32.mrb[0].mxu0
  %v3752 = vadd.f32 0.0, %v3751
  %3753 = vdwg.mxu0
  %v3754 = vadd.f32 %v3605, %v3679
  %v3755 = vadd.f32 %v3606, %v3681
  %v3756 = vadd.f32 %v3607, %v3750
  %v3757 = vadd.f32 %v3608, %v3752
  %v3758 = vxor.u32 %v3754, 2147483648
  %v3759 = vxor.u32 %v3755, 2147483648
  %v3760 = vxor.u32 %v3756, 2147483648
  %v3761 = vmul.f32 %v3758, 1.442695
  %v3762 = vpow.pop %v3761
  %v3763 = vmul.f32 %v3759, 1.442695
  %v3764 = vpow.pop %v3763
  %v3765 = vmul.f32 %v3760, 1.442695
  %v3766 = vpow.pop %v3765
  %v3767 = vadd.f32 %v3762, 1.0
  %v3768 = vadd.f32 %v3764, 1.0
  %v3769 = vadd.f32 %v3766, 1.0
  %v3770 = vrcp.pop %v3767
  %v3771 = vmul.f32 1.0, %v3770
  %v3772 = vrcp.pop %v3768
  %v3773 = vmul.f32 1.0, %v3772
  %v3774 = vrcp.pop %v3769
  %v3775 = vmul.f32 1.0, %v3774
  %v3776 = vtanh.pop %v3757
  %v3777 = vmul.f32 %v3773, %v3602
  %v3778 = vmul.f32 %v3771, %v3776
  %v3779 = vadd.f32 %v3777, %v3778
  %v3780 = vtanh.pop %v3779
  %v3781 = vmul.f32 %v3775, %v3780
  %v3782 = vld [vmem:[#allocation2 + $0x220] sm:$0xff]
  %v3783 = vld [vmem:[#allocation2 + $0x228] sm:$0xff]
  %v3784 = vld [vmem:[#allocation2 + $0x230] sm:$0xff]
  %v3785 = vld [vmem:[#allocation2 + $0x238] sm:$0xff]
  %v3787 = vsel %vm776, %v3781, 0
  %3789 = vmatprep.subr.mxu0 %v745
  %3790 = vmatpush1.msra.mxu0 %v744
  %3791 = vmatprep.subr.mxu0 %v749
  %3792 = vmatpush1.msra.mxu0 %v748
  %3793 = vmatprep.subr.mxu0 %v753
  %3794 = vmatpush1.msra.mxu0 %v752
  %3795 = vmatprep.subr.mxu0 %v757
  %3796 = vmatpush1.msra.mxu0 %v756
  %3797 = vmatprep.subr.mxu0 %v761
  %3798 = vmatpush1.msra.mxu0 %v760
  %3799 = vmatprep.subr.mxu0 %v765
  %3800 = vmatpush1.msra.mxu0 %v764
  %3801 = vmatprep.subr.mxu0 %v769
  %3802 = vmatpush1.msra.mxu0 %v768
  %3803 = vmatprep.subr.mxu0 %v773
  %3804 = vmatpush1.msra.mxu0 %v772
  %3805 = vmatprep.subr.mxu0 0.0
  %3806 = vmatpush1.msra.mxu0 0.0
  %3807 = vmatprep.subr.mxu0 0.0
  %3808 = vmatpush1.msra.mxu0 0.0
  %3809 = vmatprep.subr.mxu0 0.0
  %3810 = vmatpush1.msra.mxu0 0.0
  %3811 = vmatprep.subr.mxu0 0.0
  %3812 = vmatpush1.msra.mxu0 0.0
  %3813 = vmatprep.subr.mxu0 0.0
  %3814 = vmatpush1.msra.mxu0 0.0
  %3815 = vmatprep.subr.mxu0 0.0
  %3816 = vmatpush1.msra.mxu0 0.0
  %3817 = vmatprep.subr.mxu0 0.0
  %3818 = vmatpush1.msra.mxu0 0.0
  %3819 = vmatprep.subr.mxu0 0.0
  %3820 = vmatpush1.msra.mxu0 0.0
  %3821 = vmatprep.subr.mxu0 0.0
  %3822 = vmatpush1.msra.mxu0 0.0
  %3823 = vmatprep.subr.mxu0 0.0
  %3824 = vmatpush1.msra.mxu0 0.0
  %3825 = vmatprep.subr.mxu0 0.0
  %3826 = vmatpush1.msra.mxu0 0.0
  %3827 = vmatprep.subr.mxu0 0.0
  %3828 = vmatpush1.msra.mxu0 0.0
  %3829 = vmatprep.subr.mxu0 0.0
  %3830 = vmatpush1.msra.mxu0 0.0
  %3831 = vmatprep.subr.mxu0 0.0
  %3832 = vmatpush1.msra.mxu0 0.0
  %3833 = vmatprep.subr.mxu0 0.0
  %3834 = vmatpush1.msra.mxu0 0.0
  %3835 = vmatprep.subr.mxu0 0.0
  %3836 = vmatpush1.msra.mxu0 0.0
  %3837 = vmatprep.subr.mxu0 0.0
  %3838 = vmatpush1.msra.mxu0 0.0
  %3839 = vmatprep.subr.mxu0 0.0
  %3840 = vmatpush1.msra.mxu0 0.0
  %3841 = vmatprep.subr.mxu0 0.0
  %3842 = vmatpush1.msra.mxu0 0.0
  %3843 = vmatprep.subr.mxu0 0.0
  %3844 = vmatpush1.msra.mxu0 0.0
  %3845 = vmatprep.subr.mxu0 0.0
  %3846 = vmatpush1.msra.mxu0 0.0
  %3847 = vmatprep.subr.mxu0 0.0
  %3848 = vmatpush1.msra.mxu0 0.0
  %3849 = vmatprep.subr.mxu0 0.0
  %3850 = vmatpush1.msra.mxu0 0.0
  %3851 = vmatprep.subr.mxu0 0.0
  %3852 = vmatpush1.msra.mxu0 0.0
  %3853 = vmatprep.mubr.f32.mxu0 0.0
  %3854 = vmatmul.mubr.f32.gmra.mrb[0].mxu0 %v3787
  %v3855 = vpop.f32.mrb[0].mxu0
  %v3856 = vadd.f32 0.0, %v3855
  %v3857 = vpop.f32.mrb[0].mxu0
  %v3858 = vadd.f32 0.0, %v3857
  %3859 = vdwg.mxu0
  %3860 = vmatprep.subr.mxu0 %v747
  %3861 = vmatpush1.msra.mxu0 %v746
  %3862 = vmatprep.subr.mxu0 %v751
  %3863 = vmatpush1.msra.mxu0 %v750
  %3864 = vmatprep.subr.mxu0 %v755
  %3865 = vmatpush1.msra.mxu0 %v754
  %3866 = vmatprep.subr.mxu0 %v759
  %3867 = vmatpush1.msra.mxu0 %v758
  %3868 = vmatprep.subr.mxu0 %v763
  %3869 = vmatpush1.msra.mxu0 %v762
  %3870 = vmatprep.subr.mxu0 %v767
  %3871 = vmatpush1.msra.mxu0 %v766
  %3872 = vmatprep.subr.mxu0 %v771
  %3873 = vmatpush1.msra.mxu0 %v770
  %3874 = vmatprep.subr.mxu0 %v775
  %3875 = vmatpush1.msra.mxu0 %v774
  %3876 = vmatprep.subr.mxu0 0.0
  %3877 = vmatpush1.msra.mxu0 0.0
  %3878 = vmatprep.subr.mxu0 0.0
  %3879 = vmatpush1.msra.mxu0 0.0
  %3880 = vmatprep.subr.mxu0 0.0
  %3881 = vmatpush1.msra.mxu0 0.0
  %3882 = vmatprep.subr.mxu0 0.0
  %3883 = vmatpush1.msra.mxu0 0.0
  %3884 = vmatprep.subr.mxu0 0.0
  %3885 = vmatpush1.msra.mxu0 0.0
  %3886 = vmatprep.subr.mxu0 0.0
  %3887 = vmatpush1.msra.mxu0 0.0
  %3888 = vmatprep.subr.mxu0 0.0
  %3889 = vmatpush1.msra.mxu0 0.0
  %3890 = vmatprep.subr.mxu0 0.0
  %3891 = vmatpush1.msra.mxu0 0.0
  %3892 = vmatprep.subr.mxu0 0.0
  %3893 = vmatpush1.msra.mxu0 0.0
  %3894 = vmatprep.subr.mxu0 0.0
  %3895 = vmatpush1.msra.mxu0 0.0
  %3896 = vmatprep.subr.mxu0 0.0
  %3897 = vmatpush1.msra.mxu0 0.0
  %3898 = vmatprep.subr.mxu0 0.0
  %3899 = vmatpush1.msra.mxu0 0.0
  %3900 = vmatprep.subr.mxu0 0.0
  %3901 = vmatpush1.msra.mxu0 0.0
  %3902 = vmatprep.subr.mxu0 0.0
  %3903 = vmatpush1.msra.mxu0 0.0
  %3904 = vmatprep.subr.mxu0 0.0
  %3905 = vmatpush1.msra.mxu0 0.0
  %3906 = vmatprep.subr.mxu0 0.0
  %3907 = vmatpush1.msra.mxu0 0.0
  %3908 = vmatprep.subr.mxu0 0.0
  %3909 = vmatpush1.msra.mxu0 0.0
  %3910 = vmatprep.subr.mxu0 0.0
  %3911 = vmatpush1.msra.mxu0 0.0
  %3912 = vmatprep.subr.mxu0 0.0
  %3913 = vmatpush1.msra.mxu0 0.0
  %3914 = vmatprep.subr.mxu0 0.0
  %3915 = vmatpush1.msra.mxu0 0.0
  %3916 = vmatprep.subr.mxu0 0.0
  %3917 = vmatpush1.msra.mxu0 0.0
  %3918 = vmatprep.subr.mxu0 0.0
  %3919 = vmatpush1.msra.mxu0 0.0
  %3920 = vmatprep.subr.mxu0 0.0
  %3921 = vmatpush1.msra.mxu0 0.0
  %3922 = vmatprep.subr.mxu0 0.0
  %3923 = vmatpush1.msra.mxu0 0.0
  %3924 = vmatprep.mubr.f32.mxu0 0.0
  %3925 = vmatmul.mubr.f32.gmra.mrb[0].mxu0 %v3787
  %v3926 = vpop.f32.mrb[0].mxu0
  %v3927 = vadd.f32 0.0, %v3926
  %v3928 = vpop.f32.mrb[0].mxu0
  %v3929 = vadd.f32 0.0, %v3928
  %3930 = vdwg.mxu0
  %v3931 = vadd.f32 %v3782, %v3856
  %v3932 = vadd.f32 %v3783, %v3858
  %v3933 = vadd.f32 %v3784, %v3927
  %v3934 = vadd.f32 %v3785, %v3929
  %v3935 = vxor.u32 %v3931, 2147483648
  %v3936 = vxor.u32 %v3932, 2147483648
  %v3937 = vxor.u32 %v3933, 2147483648
  %v3938 = vmul.f32 %v3935, 1.442695
  %v3939 = vpow.pop %v3938
  %v3940 = vmul.f32 %v3936, 1.442695
  %v3941 = vpow.pop %v3940
  %v3942 = vmul.f32 %v3937, 1.442695
  %v3943 = vpow.pop %v3942
  %v3944 = vadd.f32 %v3939, 1.0
  %v3945 = vadd.f32 %v3941, 1.0
  %v3946 = vadd.f32 %v3943, 1.0
  %v3947 = vrcp.pop %v3944
  %v3948 = vmul.f32 1.0, %v3947
  %v3949 = vrcp.pop %v3945
  %v3950 = vmul.f32 1.0, %v3949
  %v3951 = vrcp.pop %v3946
  %v3952 = vmul.f32 1.0, %v3951
  %v3953 = vtanh.pop %v3934
  %v3954 = vmul.f32 %v3950, %v3779
  %v3955 = vmul.f32 %v3948, %v3953
  %v3956 = vadd.f32 %v3954, %v3955
  %v3957 = vtanh.pop %v3956
  %v3958 = vmul.f32 %v3952, %v3957
  %v3959 = vld [vmem:[#allocation2 + $0x240] sm:$0xff]
  %v3960 = vld [vmem:[#allocation2 + $0x248] sm:$0xff]
  %v3961 = vld [vmem:[#allocation2 + $0x250] sm:$0xff]
  %v3962 = vld [vmem:[#allocation2 + $0x258] sm:$0xff]
  %v3964 = vsel %vm776, %v3958, 0
  %3966 = vmatprep.subr.mxu0 %v745
  %3967 = vmatpush1.msra.mxu0 %v744
  %3968 = vmatprep.subr.mxu0 %v749
  %3969 = vmatpush1.msra.mxu0 %v748
  %3970 = vmatprep.subr.mxu0 %v753
  %3971 = vmatpush1.msra.mxu0 %v752
  %3972 = vmatprep.subr.mxu0 %v757
  %3973 = vmatpush1.msra.mxu0 %v756
  %3974 = vmatprep.subr.mxu0 %v761
  %3975 = vmatpush1.msra.mxu0 %v760
  %3976 = vmatprep.subr.mxu0 %v765
  %3977 = vmatpush1.msra.mxu0 %v764
  %3978 = vmatprep.subr.mxu0 %v769
  %3979 = vmatpush1.msra.mxu0 %v768
  %3980 = vmatprep.subr.mxu0 %v773
  %3981 = vmatpush1.msra.mxu0 %v772
  %3982 = vmatprep.subr.mxu0 0.0
  %3983 = vmatpush1.msra.mxu0 0.0
  %3984 = vmatprep.subr.mxu0 0.0
  %3985 = vmatpush1.msra.mxu0 0.0
  %3986 = vmatprep.subr.mxu0 0.0
  %3987 = vmatpush1.msra.mxu0 0.0
  %3988 = vmatprep.subr.mxu0 0.0
  %3989 = vmatpush1.msra.mxu0 0.0
  %3990 = vmatprep.subr.mxu0 0.0
  %3991 = vmatpush1.msra.mxu0 0.0
  %3992 = vmatprep.subr.mxu0 0.0
  %3993 = vmatpush1.msra.mxu0 0.0
  %3994 = vmatprep.subr.mxu0 0.0
  %3995 = vmatpush1.msra.mxu0 0.0
  %3996 = vmatprep.subr.mxu0 0.0
  %3997 = vmatpush1.msra.mxu0 0.0
  %3998 = vmatprep.subr.mxu0 0.0
  %3999 = vmatpush1.msra.mxu0 0.0
  %4000 = vmatprep.subr.mxu0 0.0
  %4001 = vmatpush1.msra.mxu0 0.0
  %4002 = vmatprep.subr.mxu0 0.0
  %4003 = vmatpush1.msra.mxu0 0.0
  %4004 = vmatprep.subr.mxu0 0.0
  %4005 = vmatpush1.msra.mxu0 0.0
  %4006 = vmatprep.subr.mxu0 0.0
  %4007 = vmatpush1.msra.mxu0 0.0
  %4008 = vmatprep.subr.mxu0 0.0
  %4009 = vmatpush1.msra.mxu0 0.0
  %4010 = vmatprep.subr.mxu0 0.0
  %4011 = vmatpush1.msra.mxu0 0.0
  %4012 = vmatprep.subr.mxu0 0.0
  %4013 = vmatpush1.msra.mxu0 0.0
  %4014 = vmatprep.subr.mxu0 0.0
  %4015 = vmatpush1.msra.mxu0 0.0
  %4016 = vmatprep.subr.mxu0 0.0
  %4017 = vmatpush1.msra.mxu0 0.0
  %4018 = vmatprep.subr.mxu0 0.0
  %4019 = vmatpush1.msra.mxu0 0.0
  %4020 = vmatprep.subr.mxu0 0.0
  %4021 = vmatpush1.msra.mxu0 0.0
  %4022 = vmatprep.subr.mxu0 0.0
  %4023 = vmatpush1.msra.mxu0 0.0
  %4024 = vmatprep.subr.mxu0 0.0
  %4025 = vmatpush1.msra.mxu0 0.0
  %4026 = vmatprep.subr.mxu0 0.0
  %4027 = vmatpush1.msra.mxu0 0.0
  %4028 = vmatprep.subr.mxu0 0.0
  %4029 = vmatpush1.msra.mxu0 0.0
  %4030 = vmatprep.mubr.f32.mxu0 0.0
  %4031 = vmatmul.mubr.f32.gmra.mrb[0].mxu0 %v3964
  %v4032 = vpop.f32.mrb[0].mxu0
  %v4033 = vadd.f32 0.0, %v4032
  %v4034 = vpop.f32.mrb[0].mxu0
  %v4035 = vadd.f32 0.0, %v4034
  %4036 = vdwg.mxu0
  %4037 = vmatprep.subr.mxu0 %v747
  %4038 = vmatpush1.msra.mxu0 %v746
  %4039 = vmatprep.subr.mxu0 %v751
  %4040 = vmatpush1.msra.mxu0 %v750
  %4041 = vmatprep.subr.mxu0 %v755
  %4042 = vmatpush1.msra.mxu0 %v754
  %4043 = vmatprep.subr.mxu0 %v759
  %4044 = vmatpush1.msra.mxu0 %v758
  %4045 = vmatprep.subr.mxu0 %v763
  %4046 = vmatpush1.msra.mxu0 %v762
  %4047 = vmatprep.subr.mxu0 %v767
  %4048 = vmatpush1.msra.mxu0 %v766
  %4049 = vmatprep.subr.mxu0 %v771
  %4050 = vmatpush1.msra.mxu0 %v770
  %4051 = vmatprep.subr.mxu0 %v775
  %4052 = vmatpush1.msra.mxu0 %v774
  %4053 = vmatprep.subr.mxu0 0.0
  %4054 = vmatpush1.msra.mxu0 0.0
  %4055 = vmatprep.subr.mxu0 0.0
  %4056 = vmatpush1.msra.mxu0 0.0
  %4057 = vmatprep.subr.mxu0 0.0
  %4058 = vmatpush1.msra.mxu0 0.0
  %4059 = vmatprep.subr.mxu0 0.0
  %4060 = vmatpush1.msra.mxu0 0.0
  %4061 = vmatprep.subr.mxu0 0.0
  %4062 = vmatpush1.msra.mxu0 0.0
  %4063 = vmatprep.subr.mxu0 0.0
  %4064 = vmatpush1.msra.mxu0 0.0
  %4065 = vmatprep.subr.mxu0 0.0
  %4066 = vmatpush1.msra.mxu0 0.0
  %4067 = vmatprep.subr.mxu0 0.0
  %4068 = vmatpush1.msra.mxu0 0.0
  %4069 = vmatprep.subr.mxu0 0.0
  %4070 = vmatpush1.msra.mxu0 0.0
  %4071 = vmatprep.subr.mxu0 0.0
  %4072 = vmatpush1.msra.mxu0 0.0
  %4073 = vmatprep.subr.mxu0 0.0
  %4074 = vmatpush1.msra.mxu0 0.0
  %4075 = vmatprep.subr.mxu0 0.0
  %4076 = vmatpush1.msra.mxu0 0.0
  %4077 = vmatprep.subr.mxu0 0.0
  %4078 = vmatpush1.msra.mxu0 0.0
  %4079 = vmatprep.subr.mxu0 0.0
  %4080 = vmatpush1.msra.mxu0 0.0
  %4081 = vmatprep.subr.mxu0 0.0
  %4082 = vmatpush1.msra.mxu0 0.0
  %4083 = vmatprep.subr.mxu0 0.0
  %4084 = vmatpush1.msra.mxu0 0.0
  %4085 = vmatprep.subr.mxu0 0.0
  %4086 = vmatpush1.msra.mxu0 0.0
  %4087 = vmatprep.subr.mxu0 0.0
  %4088 = vmatpush1.msra.mxu0 0.0
  %4089 = vmatprep.subr.mxu0 0.0
  %4090 = vmatpush1.msra.mxu0 0.0
  %4091 = vmatprep.subr.mxu0 0.0
  %4092 = vmatpush1.msra.mxu0 0.0
  %4093 = vmatprep.subr.mxu0 0.0
  %4094 = vmatpush1.msra.mxu0 0.0
  %4095 = vmatprep.subr.mxu0 0.0
  %4096 = vmatpush1.msra.mxu0 0.0
  %4097 = vmatprep.subr.mxu0 0.0
  %4098 = vmatpush1.msra.mxu0 0.0
  %4099 = vmatprep.subr.mxu0 0.0
  %4100 = vmatpush1.msra.mxu0 0.0
  %4101 = vmatprep.mubr.f32.mxu0 0.0
  %4102 = vmatmul.mubr.f32.gmra.mrb[0].mxu0 %v3964
  %v4103 = vpop.f32.mrb[0].mxu0
  %v4104 = vadd.f32 0.0, %v4103
  %v4105 = vpop.f32.mrb[0].mxu0
  %v4106 = vadd.f32 0.0, %v4105
  %4107 = vdwg.mxu0
  %v4108 = vadd.f32 %v3959, %v4033
  %v4109 = vadd.f32 %v3960, %v4035
  %v4110 = vadd.f32 %v3961, %v4104
  %v4111 = vadd.f32 %v3962, %v4106
  %v4112 = vxor.u32 %v4108, 2147483648
  %v4113 = vxor.u32 %v4109, 2147483648
  %v4114 = vxor.u32 %v4110, 2147483648
  %v4115 = vmul.f32 %v4112, 1.442695
  %v4116 = vpow.pop %v4115
  %v4117 = vmul.f32 %v4113, 1.442695
  %v4118 = vpow.pop %v4117
  %v4119 = vmul.f32 %v4114, 1.442695
  %v4120 = vpow.pop %v4119
  %v4121 = vadd.f32 %v4116, 1.0
  %v4122 = vadd.f32 %v4118, 1.0
  %v4123 = vadd.f32 %v4120, 1.0
  %v4124 = vrcp.pop %v4121
  %v4125 = vmul.f32 1.0, %v4124
  %v4126 = vrcp.pop %v4122
  %v4127 = vmul.f32 1.0, %v4126
  %v4128 = vrcp.pop %v4123
  %v4129 = vmul.f32 1.0, %v4128
  %v4130 = vtanh.pop %v4111
  %v4131 = vmul.f32 %v4127, %v3956
  %v4132 = vmul.f32 %v4125, %v4130
  %v4133 = vadd.f32 %v4131, %v4132
  %v4134 = vtanh.pop %v4133
  %v4135 = vmul.f32 %v4129, %v4134
  %v4136 = vld [vmem:[#allocation2 + $0x260] sm:$0xff]
  %v4137 = vld [vmem:[#allocation2 + $0x268] sm:$0xff]
  %v4138 = vld [vmem:[#allocation2 + $0x270] sm:$0xff]
  %v4139 = vld [vmem:[#allocation2 + $0x278] sm:$0xff]
  %v4141 = vsel %vm776, %v4135, 0
  %4143 = vmatprep.subr.mxu0 %v745
  %4144 = vmatpush1.msra.mxu0 %v744
  %4145 = vmatprep.subr.mxu0 %v749
  %4146 = vmatpush1.msra.mxu0 %v748
  %4147 = vmatprep.subr.mxu0 %v753
  %4148 = vmatpush1.msra.mxu0 %v752
  %4149 = vmatprep.subr.mxu0 %v757
  %4150 = vmatpush1.msra.mxu0 %v756
  %4151 = vmatprep.subr.mxu0 %v761
  %4152 = vmatpush1.msra.mxu0 %v760
  %4153 = vmatprep.subr.mxu0 %v765
  %4154 = vmatpush1.msra.mxu0 %v764
  %4155 = vmatprep.subr.mxu0 %v769
  %4156 = vmatpush1.msra.mxu0 %v768
  %4157 = vmatprep.subr.mxu0 %v773
  %4158 = vmatpush1.msra.mxu0 %v772
  %4159 = vmatprep.subr.mxu0 0.0
  %4160 = vmatpush1.msra.mxu0 0.0
  %4161 = vmatprep.subr.mxu0 0.0
  %4162 = vmatpush1.msra.mxu0 0.0
  %4163 = vmatprep.subr.mxu0 0.0
  %4164 = vmatpush1.msra.mxu0 0.0
  %4165 = vmatprep.subr.mxu0 0.0
  %4166 = vmatpush1.msra.mxu0 0.0
  %4167 = vmatprep.subr.mxu0 0.0
  %4168 = vmatpush1.msra.mxu0 0.0
  %4169 = vmatprep.subr.mxu0 0.0
  %4170 = vmatpush1.msra.mxu0 0.0
  %4171 = vmatprep.subr.mxu0 0.0
  %4172 = vmatpush1.msra.mxu0 0.0
  %4173 = vmatprep.subr.mxu0 0.0
  %4174 = vmatpush1.msra.mxu0 0.0
  %4175 = vmatprep.subr.mxu0 0.0
  %4176 = vmatpush1.msra.mxu0 0.0
  %4177 = vmatprep.subr.mxu0 0.0
  %4178 = vmatpush1.msra.mxu0 0.0
  %4179 = vmatprep.subr.mxu0 0.0
  %4180 = vmatpush1.msra.mxu0 0.0
  %4181 = vmatprep.subr.mxu0 0.0
  %4182 = vmatpush1.msra.mxu0 0.0
  %4183 = vmatprep.subr.mxu0 0.0
  %4184 = vmatpush1.msra.mxu0 0.0
  %4185 = vmatprep.subr.mxu0 0.0
  %4186 = vmatpush1.msra.mxu0 0.0
  %4187 = vmatprep.subr.mxu0 0.0
  %4188 = vmatpush1.msra.mxu0 0.0
  %4189 = vmatprep.subr.mxu0 0.0
  %4190 = vmatpush1.msra.mxu0 0.0
  %4191 = vmatprep.subr.mxu0 0.0
  %4192 = vmatpush1.msra.mxu0 0.0
  %4193 = vmatprep.subr.mxu0 0.0
  %4194 = vmatpush1.msra.mxu0 0.0
  %4195 = vmatprep.subr.mxu0 0.0
  %4196 = vmatpush1.msra.mxu0 0.0
  %4197 = vmatprep.subr.mxu0 0.0
  %4198 = vmatpush1.msra.mxu0 0.0
  %4199 = vmatprep.subr.mxu0 0.0
  %4200 = vmatpush1.msra.mxu0 0.0
  %4201 = vmatprep.subr.mxu0 0.0
  %4202 = vmatpush1.msra.mxu0 0.0
  %4203 = vmatprep.subr.mxu0 0.0
  %4204 = vmatpush1.msra.mxu0 0.0
  %4205 = vmatprep.subr.mxu0 0.0
  %4206 = vmatpush1.msra.mxu0 0.0
  %4207 = vmatprep.mubr.f32.mxu0 0.0
  %4208 = vmatmul.mubr.f32.gmra.mrb[0].mxu0 %v4141
  %v4209 = vpop.f32.mrb[0].mxu0
  %v4210 = vadd.f32 0.0, %v4209
  %v4211 = vpop.f32.mrb[0].mxu0
  %v4212 = vadd.f32 0.0, %v4211
  %4213 = vdwg.mxu0
  %4214 = vmatprep.subr.mxu0 %v747
  %4215 = vmatpush1.msra.mxu0 %v746
  %4216 = vmatprep.subr.mxu0 %v751
  %4217 = vmatpush1.msra.mxu0 %v750
  %4218 = vmatprep.subr.mxu0 %v755
  %4219 = vmatpush1.msra.mxu0 %v754
  %4220 = vmatprep.subr.mxu0 %v759
  %4221 = vmatpush1.msra.mxu0 %v758
  %4222 = vmatprep.subr.mxu0 %v763
  %4223 = vmatpush1.msra.mxu0 %v762
  %4224 = vmatprep.subr.mxu0 %v767
  %4225 = vmatpush1.msra.mxu0 %v766
  %4226 = vmatprep.subr.mxu0 %v771
  %4227 = vmatpush1.msra.mxu0 %v770
  %4228 = vmatprep.subr.mxu0 %v775
  %4229 = vmatpush1.msra.mxu0 %v774
  %4230 = vmatprep.subr.mxu0 0.0
  %4231 = vmatpush1.msra.mxu0 0.0
  %4232 = vmatprep.subr.mxu0 0.0
  %4233 = vmatpush1.msra.mxu0 0.0
  %4234 = vmatprep.subr.mxu0 0.0
  %4235 = vmatpush1.msra.mxu0 0.0
  %4236 = vmatprep.subr.mxu0 0.0
  %4237 = vmatpush1.msra.mxu0 0.0
  %4238 = vmatprep.subr.mxu0 0.0
  %4239 = vmatpush1.msra.mxu0 0.0
  %4240 = vmatprep.subr.mxu0 0.0
  %4241 = vmatpush1.msra.mxu0 0.0
  %4242 = vmatprep.subr.mxu0 0.0
  %4243 = vmatpush1.msra.mxu0 0.0
  %4244 = vmatprep.subr.mxu0 0.0
  %4245 = vmatpush1.msra.mxu0 0.0
  %4246 = vmatprep.subr.mxu0 0.0
  %4247 = vmatpush1.msra.mxu0 0.0
  %4248 = vmatprep.subr.mxu0 0.0
  %4249 = vmatpush1.msra.mxu0 0.0
  %4250 = vmatprep.subr.mxu0 0.0
  %4251 = vmatpush1.msra.mxu0 0.0
  %4252 = vmatprep.subr.mxu0 0.0
  %4253 = vmatpush1.msra.mxu0 0.0
  %4254 = vmatprep.subr.mxu0 0.0
  %4255 = vmatpush1.msra.mxu0 0.0
  %4256 = vmatprep.subr.mxu0 0.0
  %4257 = vmatpush1.msra.mxu0 0.0
  %4258 = vmatprep.subr.mxu0 0.0
  %4259 = vmatpush1.msra.mxu0 0.0
  %4260 = vmatprep.subr.mxu0 0.0
  %4261 = vmatpush1.msra.mxu0 0.0
  %4262 = vmatprep.subr.mxu0 0.0
  %4263 = vmatpush1.msra.mxu0 0.0
  %4264 = vmatprep.subr.mxu0 0.0
  %4265 = vmatpush1.msra.mxu0 0.0
  %4266 = vmatprep.subr.mxu0 0.0
  %4267 = vmatpush1.msra.mxu0 0.0
  %4268 = vmatprep.subr.mxu0 0.0
  %4269 = vmatpush1.msra.mxu0 0.0
  %4270 = vmatprep.subr.mxu0 0.0
  %4271 = vmatpush1.msra.mxu0 0.0
  %4272 = vmatprep.subr.mxu0 0.0
  %4273 = vmatpush1.msra.mxu0 0.0
  %4274 = vmatprep.subr.mxu0 0.0
  %4275 = vmatpush1.msra.mxu0 0.0
  %4276 = vmatprep.subr.mxu0 0.0
  %4277 = vmatpush1.msra.mxu0 0.0
  %4278 = vmatprep.mubr.f32.mxu0 0.0
  %4279 = vmatmul.mubr.f32.gmra.mrb[0].mxu0 %v4141
  %v4280 = vpop.f32.mrb[0].mxu0
  %v4281 = vadd.f32 0.0, %v4280
  %v4282 = vpop.f32.mrb[0].mxu0
  %v4283 = vadd.f32 0.0, %v4282
  %4284 = vdwg.mxu0
  %v4285 = vadd.f32 %v4136, %v4210
  %v4286 = vadd.f32 %v4137, %v4212
  %v4287 = vadd.f32 %v4138, %v4281
  %v4288 = vadd.f32 %v4139, %v4283
  %v4289 = vxor.u32 %v4285, 2147483648
  %v4290 = vxor.u32 %v4286, 2147483648
  %v4291 = vxor.u32 %v4287, 2147483648
  %v4292 = vmul.f32 %v4289, 1.442695
  %v4293 = vpow.pop %v4292
  %v4294 = vmul.f32 %v4290, 1.442695
  %v4295 = vpow.pop %v4294
  %v4296 = vmul.f32 %v4291, 1.442695
  %v4297 = vpow.pop %v4296
  %v4298 = vadd.f32 %v4293, 1.0
  %v4299 = vadd.f32 %v4295, 1.0
  %v4300 = vadd.f32 %v4297, 1.0
  %v4301 = vrcp.pop %v4298
  %v4302 = vmul.f32 1.0, %v4301
  %v4303 = vrcp.pop %v4299
  %v4304 = vmul.f32 1.0, %v4303
  %v4305 = vrcp.pop %v4300
  %v4306 = vmul.f32 1.0, %v4305
  %v4307 = vtanh.pop %v4288
  %v4308 = vmul.f32 %v4304, %v4133
  %v4309 = vmul.f32 %v4302, %v4307
  %v4310 = vadd.f32 %v4308, %v4309
  %v4311 = vtanh.pop %v4310
  %v4312 = vmul.f32 %v4306, %v4311
  %v4313 = vld [vmem:[#allocation2 + $0x280] sm:$0xff]
  %v4314 = vld [vmem:[#allocation2 + $0x288] sm:$0xff]
  %v4315 = vld [vmem:[#allocation2 + $0x290] sm:$0xff]
  %v4316 = vld [vmem:[#allocation2 + $0x298] sm:$0xff]
  %v4318 = vsel %vm776, %v4312, 0
  %4320 = vmatprep.subr.mxu0 %v745
  %4321 = vmatpush1.msra.mxu0 %v744
  %4322 = vmatprep.subr.mxu0 %v749
  %4323 = vmatpush1.msra.mxu0 %v748
  %4324 = vmatprep.subr.mxu0 %v753
  %4325 = vmatpush1.msra.mxu0 %v752
  %4326 = vmatprep.subr.mxu0 %v757
  %4327 = vmatpush1.msra.mxu0 %v756
  %4328 = vmatprep.subr.mxu0 %v761
  %4329 = vmatpush1.msra.mxu0 %v760
  %4330 = vmatprep.subr.mxu0 %v765
  %4331 = vmatpush1.msra.mxu0 %v764
  %4332 = vmatprep.subr.mxu0 %v769
  %4333 = vmatpush1.msra.mxu0 %v768
  %4334 = vmatprep.subr.mxu0 %v773
  %4335 = vmatpush1.msra.mxu0 %v772
  %4336 = vmatprep.subr.mxu0 0.0
  %4337 = vmatpush1.msra.mxu0 0.0
  %4338 = vmatprep.subr.mxu0 0.0
  %4339 = vmatpush1.msra.mxu0 0.0
  %4340 = vmatprep.subr.mxu0 0.0
  %4341 = vmatpush1.msra.mxu0 0.0
  %4342 = vmatprep.subr.mxu0 0.0
  %4343 = vmatpush1.msra.mxu0 0.0
  %4344 = vmatprep.subr.mxu0 0.0
  %4345 = vmatpush1.msra.mxu0 0.0
  %4346 = vmatprep.subr.mxu0 0.0
  %4347 = vmatpush1.msra.mxu0 0.0
  %4348 = vmatprep.subr.mxu0 0.0
  %4349 = vmatpush1.msra.mxu0 0.0
  %4350 = vmatprep.subr.mxu0 0.0
  %4351 = vmatpush1.msra.mxu0 0.0
  %4352 = vmatprep.subr.mxu0 0.0
  %4353 = vmatpush1.msra.mxu0 0.0
  %4354 = vmatprep.subr.mxu0 0.0
  %4355 = vmatpush1.msra.mxu0 0.0
  %4356 = vmatprep.subr.mxu0 0.0
  %4357 = vmatpush1.msra.mxu0 0.0
  %4358 = vmatprep.subr.mxu0 0.0
  %4359 = vmatpush1.msra.mxu0 0.0
  %4360 = vmatprep.subr.mxu0 0.0
  %4361 = vmatpush1.msra.mxu0 0.0
  %4362 = vmatprep.subr.mxu0 0.0
  %4363 = vmatpush1.msra.mxu0 0.0
  %4364 = vmatprep.subr.mxu0 0.0
  %4365 = vmatpush1.msra.mxu0 0.0
  %4366 = vmatprep.subr.mxu0 0.0
  %4367 = vmatpush1.msra.mxu0 0.0
  %4368 = vmatprep.subr.mxu0 0.0
  %4369 = vmatpush1.msra.mxu0 0.0
  %4370 = vmatprep.subr.mxu0 0.0
  %4371 = vmatpush1.msra.mxu0 0.0
  %4372 = vmatprep.subr.mxu0 0.0
  %4373 = vmatpush1.msra.mxu0 0.0
  %4374 = vmatprep.subr.mxu0 0.0
  %4375 = vmatpush1.msra.mxu0 0.0
  %4376 = vmatprep.subr.mxu0 0.0
  %4377 = vmatpush1.msra.mxu0 0.0
  %4378 = vmatprep.subr.mxu0 0.0
  %4379 = vmatpush1.msra.mxu0 0.0
  %4380 = vmatprep.subr.mxu0 0.0
  %4381 = vmatpush1.msra.mxu0 0.0
  %4382 = vmatprep.subr.mxu0 0.0
  %4383 = vmatpush1.msra.mxu0 0.0
  %4384 = vmatprep.mubr.f32.mxu0 0.0
  %4385 = vmatmul.mubr.f32.gmra.mrb[0].mxu0 %v4318
  %v4386 = vpop.f32.mrb[0].mxu0
  %v4387 = vadd.f32 0.0, %v4386
  %v4388 = vpop.f32.mrb[0].mxu0
  %v4389 = vadd.f32 0.0, %v4388
  %4390 = vdwg.mxu0
  %4391 = vmatprep.subr.mxu0 %v747
  %4392 = vmatpush1.msra.mxu0 %v746
  %4393 = vmatprep.subr.mxu0 %v751
  %4394 = vmatpush1.msra.mxu0 %v750
  %4395 = vmatprep.subr.mxu0 %v755
  %4396 = vmatpush1.msra.mxu0 %v754
  %4397 = vmatprep.subr.mxu0 %v759
  %4398 = vmatpush1.msra.mxu0 %v758
  %4399 = vmatprep.subr.mxu0 %v763
  %4400 = vmatpush1.msra.mxu0 %v762
  %4401 = vmatprep.subr.mxu0 %v767
  %4402 = vmatpush1.msra.mxu0 %v766
  %4403 = vmatprep.subr.mxu0 %v771
  %4404 = vmatpush1.msra.mxu0 %v770
  %4405 = vmatprep.subr.mxu0 %v775
  %4406 = vmatpush1.msra.mxu0 %v774
  %4407 = vmatprep.subr.mxu0 0.0
  %4408 = vmatpush1.msra.mxu0 0.0
  %4409 = vmatprep.subr.mxu0 0.0
  %4410 = vmatpush1.msra.mxu0 0.0
  %4411 = vmatprep.subr.mxu0 0.0
  %4412 = vmatpush1.msra.mxu0 0.0
  %4413 = vmatprep.subr.mxu0 0.0
  %4414 = vmatpush1.msra.mxu0 0.0
  %4415 = vmatprep.subr.mxu0 0.0
  %4416 = vmatpush1.msra.mxu0 0.0
  %4417 = vmatprep.subr.mxu0 0.0
  %4418 = vmatpush1.msra.mxu0 0.0
  %4419 = vmatprep.subr.mxu0 0.0
  %4420 = vmatpush1.msra.mxu0 0.0
  %4421 = vmatprep.subr.mxu0 0.0
  %4422 = vmatpush1.msra.mxu0 0.0
  %4423 = vmatprep.subr.mxu0 0.0
  %4424 = vmatpush1.msra.mxu0 0.0
  %4425 = vmatprep.subr.mxu0 0.0
  %4426 = vmatpush1.msra.mxu0 0.0
  %4427 = vmatprep.subr.mxu0 0.0
  %4428 = vmatpush1.msra.mxu0 0.0
  %4429 = vmatprep.subr.mxu0 0.0
  %4430 = vmatpush1.msra.mxu0 0.0
  %4431 = vmatprep.subr.mxu0 0.0
  %4432 = vmatpush1.msra.mxu0 0.0
  %4433 = vmatprep.subr.mxu0 0.0
  %4434 = vmatpush1.msra.mxu0 0.0
  %4435 = vmatprep.subr.mxu0 0.0
  %4436 = vmatpush1.msra.mxu0 0.0
  %4437 = vmatprep.subr.mxu0 0.0
  %4438 = vmatpush1.msra.mxu0 0.0
  %4439 = vmatprep.subr.mxu0 0.0
  %4440 = vmatpush1.msra.mxu0 0.0
  %4441 = vmatprep.subr.mxu0 0.0
  %4442 = vmatpush1.msra.mxu0 0.0
  %4443 = vmatprep.subr.mxu0 0.0
  %4444 = vmatpush1.msra.mxu0 0.0
  %4445 = vmatprep.subr.mxu0 0.0
  %4446 = vmatpush1.msra.mxu0 0.0
  %4447 = vmatprep.subr.mxu0 0.0
  %4448 = vmatpush1.msra.mxu0 0.0
  %4449 = vmatprep.subr.mxu0 0.0
  %4450 = vmatpush1.msra.mxu0 0.0
  %4451 = vmatprep.subr.mxu0 0.0
  %4452 = vmatpush1.msra.mxu0 0.0
  %4453 = vmatprep.subr.mxu0 0.0
  %4454 = vmatpush1.msra.mxu0 0.0
  %4455 = vmatprep.mubr.f32.mxu0 0.0
  %4456 = vmatmul.mubr.f32.gmra.mrb[0].mxu0 %v4318
  %v4457 = vpop.f32.mrb[0].mxu0
  %v4458 = vadd.f32 0.0, %v4457
  %v4459 = vpop.f32.mrb[0].mxu0
  %v4460 = vadd.f32 0.0, %v4459
  %4461 = vdwg.mxu0
  %v4462 = vadd.f32 %v4313, %v4387
  %v4463 = vadd.f32 %v4314, %v4389
  %v4464 = vadd.f32 %v4315, %v4458
  %v4465 = vadd.f32 %v4316, %v4460
  %v4466 = vxor.u32 %v4462, 2147483648
  %v4467 = vxor.u32 %v4463, 2147483648
  %v4468 = vxor.u32 %v4464, 2147483648
  %v4469 = vmul.f32 %v4466, 1.442695
  %v4470 = vpow.pop %v4469
  %v4471 = vmul.f32 %v4467, 1.442695
  %v4472 = vpow.pop %v4471
  %v4473 = vmul.f32 %v4468, 1.442695
  %v4474 = vpow.pop %v4473
  %v4475 = vadd.f32 %v4470, 1.0
  %v4476 = vadd.f32 %v4472, 1.0
  %v4477 = vadd.f32 %v4474, 1.0
  %v4478 = vrcp.pop %v4475
  %v4479 = vmul.f32 1.0, %v4478
  %v4480 = vrcp.pop %v4476
  %v4481 = vmul.f32 1.0, %v4480
  %v4482 = vrcp.pop %v4477
  %v4483 = vmul.f32 1.0, %v4482
  %v4484 = vtanh.pop %v4465
  %v4485 = vmul.f32 %v4481, %v4310
  %v4486 = vmul.f32 %v4479, %v4484
  %v4487 = vadd.f32 %v4485, %v4486
  %v4488 = vtanh.pop %v4487
  %v4489 = vmul.f32 %v4483, %v4488
  %v4490 = vld [vmem:[#allocation2 + $0x2a0] sm:$0xff]
  %v4491 = vld [vmem:[#allocation2 + $0x2a8] sm:$0xff]
  %v4492 = vld [vmem:[#allocation2 + $0x2b0] sm:$0xff]
  %v4493 = vld [vmem:[#allocation2 + $0x2b8] sm:$0xff]
  %v4495 = vsel %vm776, %v4489, 0
  %4497 = vmatprep.subr.mxu0 %v745
  %4498 = vmatpush1.msra.mxu0 %v744
  %4499 = vmatprep.subr.mxu0 %v749
  %4500 = vmatpush1.msra.mxu0 %v748
  %4501 = vmatprep.subr.mxu0 %v753
  %4502 = vmatpush1.msra.mxu0 %v752
  %4503 = vmatprep.subr.mxu0 %v757
  %4504 = vmatpush1.msra.mxu0 %v756
  %4505 = vmatprep.subr.mxu0 %v761
  %4506 = vmatpush1.msra.mxu0 %v760
  %4507 = vmatprep.subr.mxu0 %v765
  %4508 = vmatpush1.msra.mxu0 %v764
  %4509 = vmatprep.subr.mxu0 %v769
  %4510 = vmatpush1.msra.mxu0 %v768
  %4511 = vmatprep.subr.mxu0 %v773
  %4512 = vmatpush1.msra.mxu0 %v772
  %4513 = vmatprep.subr.mxu0 0.0
  %4514 = vmatpush1.msra.mxu0 0.0
  %4515 = vmatprep.subr.mxu0 0.0
  %4516 = vmatpush1.msra.mxu0 0.0
  %4517 = vmatprep.subr.mxu0 0.0
  %4518 = vmatpush1.msra.mxu0 0.0
  %4519 = vmatprep.subr.mxu0 0.0
  %4520 = vmatpush1.msra.mxu0 0.0
  %4521 = vmatprep.subr.mxu0 0.0
  %4522 = vmatpush1.msra.mxu0 0.0
  %4523 = vmatprep.subr.mxu0 0.0
  %4524 = vmatpush1.msra.mxu0 0.0
  %4525 = vmatprep.subr.mxu0 0.0
  %4526 = vmatpush1.msra.mxu0 0.0
  %4527 = vmatprep.subr.mxu0 0.0
  %4528 = vmatpush1.msra.mxu0 0.0
  %4529 = vmatprep.subr.mxu0 0.0
  %4530 = vmatpush1.msra.mxu0 0.0
  %4531 = vmatprep.subr.mxu0 0.0
  %4532 = vmatpush1.msra.mxu0 0.0
  %4533 = vmatprep.subr.mxu0 0.0
  %4534 = vmatpush1.msra.mxu0 0.0
  %4535 = vmatprep.subr.mxu0 0.0
  %4536 = vmatpush1.msra.mxu0 0.0
  %4537 = vmatprep.subr.mxu0 0.0
  %4538 = vmatpush1.msra.mxu0 0.0
  %4539 = vmatprep.subr.mxu0 0.0
  %4540 = vmatpush1.msra.mxu0 0.0
  %4541 = vmatprep.subr.mxu0 0.0
  %4542 = vmatpush1.msra.mxu0 0.0
  %4543 = vmatprep.subr.mxu0 0.0
  %4544 = vmatpush1.msra.mxu0 0.0
  %4545 = vmatprep.subr.mxu0 0.0
  %4546 = vmatpush1.msra.mxu0 0.0
  %4547 = vmatprep.subr.mxu0 0.0
  %4548 = vmatpush1.msra.mxu0 0.0
  %4549 = vmatprep.subr.mxu0 0.0
  %4550 = vmatpush1.msra.mxu0 0.0
  %4551 = vmatprep.subr.mxu0 0.0
  %4552 = vmatpush1.msra.mxu0 0.0
  %4553 = vmatprep.subr.mxu0 0.0
  %4554 = vmatpush1.msra.mxu0 0.0
  %4555 = vmatprep.subr.mxu0 0.0
  %4556 = vmatpush1.msra.mxu0 0.0
  %4557 = vmatprep.subr.mxu0 0.0
  %4558 = vmatpush1.msra.mxu0 0.0
  %4559 = vmatprep.subr.mxu0 0.0
  %4560 = vmatpush1.msra.mxu0 0.0
  %4561 = vmatprep.mubr.f32.mxu0 0.0
  %4562 = vmatmul.mubr.f32.gmra.mrb[0].mxu0 %v4495
  %v4563 = vpop.f32.mrb[0].mxu0
  %v4564 = vadd.f32 0.0, %v4563
  %v4565 = vpop.f32.mrb[0].mxu0
  %v4566 = vadd.f32 0.0, %v4565
  %4567 = vdwg.mxu0
  %4568 = vmatprep.subr.mxu0 %v747
  %4569 = vmatpush1.msra.mxu0 %v746
  %4570 = vmatprep.subr.mxu0 %v751
  %4571 = vmatpush1.msra.mxu0 %v750
  %4572 = vmatprep.subr.mxu0 %v755
  %4573 = vmatpush1.msra.mxu0 %v754
  %4574 = vmatprep.subr.mxu0 %v759
  %4575 = vmatpush1.msra.mxu0 %v758
  %4576 = vmatprep.subr.mxu0 %v763
  %4577 = vmatpush1.msra.mxu0 %v762
  %4578 = vmatprep.subr.mxu0 %v767
  %4579 = vmatpush1.msra.mxu0 %v766
  %4580 = vmatprep.subr.mxu0 %v771
  %4581 = vmatpush1.msra.mxu0 %v770
  %4582 = vmatprep.subr.mxu0 %v775
  %4583 = vmatpush1.msra.mxu0 %v774
  %4584 = vmatprep.subr.mxu0 0.0
  %4585 = vmatpush1.msra.mxu0 0.0
  %4586 = vmatprep.subr.mxu0 0.0
  %4587 = vmatpush1.msra.mxu0 0.0
  %4588 = vmatprep.subr.mxu0 0.0
  %4589 = vmatpush1.msra.mxu0 0.0
  %4590 = vmatprep.subr.mxu0 0.0
  %4591 = vmatpush1.msra.mxu0 0.0
  %4592 = vmatprep.subr.mxu0 0.0
  %4593 = vmatpush1.msra.mxu0 0.0
  %4594 = vmatprep.subr.mxu0 0.0
  %4595 = vmatpush1.msra.mxu0 0.0
  %4596 = vmatprep.subr.mxu0 0.0
  %4597 = vmatpush1.msra.mxu0 0.0
  %4598 = vmatprep.subr.mxu0 0.0
  %4599 = vmatpush1.msra.mxu0 0.0
  %4600 = vmatprep.subr.mxu0 0.0
  %4601 = vmatpush1.msra.mxu0 0.0
  %4602 = vmatprep.subr.mxu0 0.0
  %4603 = vmatpush1.msra.mxu0 0.0
  %4604 = vmatprep.subr.mxu0 0.0
  %4605 = vmatpush1.msra.mxu0 0.0
  %4606 = vmatprep.subr.mxu0 0.0
  %4607 = vmatpush1.msra.mxu0 0.0
  %4608 = vmatprep.subr.mxu0 0.0
  %4609 = vmatpush1.msra.mxu0 0.0
  %4610 = vmatprep.subr.mxu0 0.0
  %4611 = vmatpush1.msra.mxu0 0.0
  %4612 = vmatprep.subr.mxu0 0.0
  %4613 = vmatpush1.msra.mxu0 0.0
  %4614 = vmatprep.subr.mxu0 0.0
  %4615 = vmatpush1.msra.mxu0 0.0
  %4616 = vmatprep.subr.mxu0 0.0
  %4617 = vmatpush1.msra.mxu0 0.0
  %4618 = vmatprep.subr.mxu0 0.0
  %4619 = vmatpush1.msra.mxu0 0.0
  %4620 = vmatprep.subr.mxu0 0.0
  %4621 = vmatpush1.msra.mxu0 0.0
  %4622 = vmatprep.subr.mxu0 0.0
  %4623 = vmatpush1.msra.mxu0 0.0
  %4624 = vmatprep.subr.mxu0 0.0
  %4625 = vmatpush1.msra.mxu0 0.0
  %4626 = vmatprep.subr.mxu0 0.0
  %4627 = vmatpush1.msra.mxu0 0.0
  %4628 = vmatprep.subr.mxu0 0.0
  %4629 = vmatpush1.msra.mxu0 0.0
  %4630 = vmatprep.subr.mxu0 0.0
  %4631 = vmatpush1.msra.mxu0 0.0
  %4632 = vmatprep.mubr.f32.mxu0 0.0
  %4633 = vmatmul.mubr.f32.gmra.mrb[0].mxu0 %v4495
  %v4634 = vpop.f32.mrb[0].mxu0
  %v4635 = vadd.f32 0.0, %v4634
  %v4636 = vpop.f32.mrb[0].mxu0
  %v4637 = vadd.f32 0.0, %v4636
  %4638 = vdwg.mxu0
  %v4639 = vadd.f32 %v4490, %v4564
  %v4640 = vadd.f32 %v4491, %v4566
  %v4641 = vadd.f32 %v4492, %v4635
  %v4642 = vadd.f32 %v4493, %v4637
  %v4643 = vxor.u32 %v4639, 2147483648
  %v4644 = vxor.u32 %v4640, 2147483648
  %v4645 = vxor.u32 %v4641, 2147483648
  %v4646 = vmul.f32 %v4643, 1.442695
  %v4647 = vpow.pop %v4646
  %v4648 = vmul.f32 %v4644, 1.442695
  %v4649 = vpow.pop %v4648
  %v4650 = vmul.f32 %v4645, 1.442695
  %v4651 = vpow.pop %v4650
  %v4652 = vadd.f32 %v4647, 1.0
  %v4653 = vadd.f32 %v4649, 1.0
  %v4654 = vadd.f32 %v4651, 1.0
  %v4655 = vrcp.pop %v4652
  %v4656 = vmul.f32 1.0, %v4655
  %v4657 = vrcp.pop %v4653
  %v4658 = vmul.f32 1.0, %v4657
  %v4659 = vrcp.pop %v4654
  %v4660 = vmul.f32 1.0, %v4659
  %v4661 = vtanh.pop %v4642
  %v4662 = vmul.f32 %v4658, %v4487
  %v4663 = vmul.f32 %v4656, %v4661
  %v4664 = vadd.f32 %v4662, %v4663
  %v4665 = vtanh.pop %v4664
  %v4666 = vmul.f32 %v4660, %v4665
  %v4667 = vld [vmem:[#allocation2 + $0x2c0] sm:$0xff]
  %v4668 = vld [vmem:[#allocation2 + $0x2c8] sm:$0xff]
  %v4669 = vld [vmem:[#allocation2 + $0x2d0] sm:$0xff]
  %v4670 = vld [vmem:[#allocation2 + $0x2d8] sm:$0xff]
  %v4672 = vsel %vm776, %v4666, 0
  %4674 = vmatprep.subr.mxu0 %v745
  %4675 = vmatpush1.msra.mxu0 %v744
  %4676 = vmatprep.subr.mxu0 %v749
  %4677 = vmatpush1.msra.mxu0 %v748
  %4678 = vmatprep.subr.mxu0 %v753
  %4679 = vmatpush1.msra.mxu0 %v752
  %4680 = vmatprep.subr.mxu0 %v757
  %4681 = vmatpush1.msra.mxu0 %v756
  %4682 = vmatprep.subr.mxu0 %v761
  %4683 = vmatpush1.msra.mxu0 %v760
  %4684 = vmatprep.subr.mxu0 %v765
  %4685 = vmatpush1.msra.mxu0 %v764
  %4686 = vmatprep.subr.mxu0 %v769
  %4687 = vmatpush1.msra.mxu0 %v768
  %4688 = vmatprep.subr.mxu0 %v773
  %4689 = vmatpush1.msra.mxu0 %v772
  %4690 = vmatprep.subr.mxu0 0.0
  %4691 = vmatpush1.msra.mxu0 0.0
  %4692 = vmatprep.subr.mxu0 0.0
  %4693 = vmatpush1.msra.mxu0 0.0
  %4694 = vmatprep.subr.mxu0 0.0
  %4695 = vmatpush1.msra.mxu0 0.0
  %4696 = vmatprep.subr.mxu0 0.0
  %4697 = vmatpush1.msra.mxu0 0.0
  %4698 = vmatprep.subr.mxu0 0.0
  %4699 = vmatpush1.msra.mxu0 0.0
  %4700 = vmatprep.subr.mxu0 0.0
  %4701 = vmatpush1.msra.mxu0 0.0
  %4702 = vmatprep.subr.mxu0 0.0
  %4703 = vmatpush1.msra.mxu0 0.0
  %4704 = vmatprep.subr.mxu0 0.0
  %4705 = vmatpush1.msra.mxu0 0.0
  %4706 = vmatprep.subr.mxu0 0.0
  %4707 = vmatpush1.msra.mxu0 0.0
  %4708 = vmatprep.subr.mxu0 0.0
  %4709 = vmatpush1.msra.mxu0 0.0
  %4710 = vmatprep.subr.mxu0 0.0
  %4711 = vmatpush1.msra.mxu0 0.0
  %4712 = vmatprep.subr.mxu0 0.0
  %4713 = vmatpush1.msra.mxu0 0.0
  %4714 = vmatprep.subr.mxu0 0.0
  %4715 = vmatpush1.msra.mxu0 0.0
  %4716 = vmatprep.subr.mxu0 0.0
  %4717 = vmatpush1.msra.mxu0 0.0
  %4718 = vmatprep.subr.mxu0 0.0
  %4719 = vmatpush1.msra.mxu0 0.0
  %4720 = vmatprep.subr.mxu0 0.0
  %4721 = vmatpush1.msra.mxu0 0.0
  %4722 = vmatprep.subr.mxu0 0.0
  %4723 = vmatpush1.msra.mxu0 0.0
  %4724 = vmatprep.subr.mxu0 0.0
  %4725 = vmatpush1.msra.mxu0 0.0
  %4726 = vmatprep.subr.mxu0 0.0
  %4727 = vmatpush1.msra.mxu0 0.0
  %4728 = vmatprep.subr.mxu0 0.0
  %4729 = vmatpush1.msra.mxu0 0.0
  %4730 = vmatprep.subr.mxu0 0.0
  %4731 = vmatpush1.msra.mxu0 0.0
  %4732 = vmatprep.subr.mxu0 0.0
  %4733 = vmatpush1.msra.mxu0 0.0
  %4734 = vmatprep.subr.mxu0 0.0
  %4735 = vmatpush1.msra.mxu0 0.0
  %4736 = vmatprep.subr.mxu0 0.0
  %4737 = vmatpush1.msra.mxu0 0.0
  %4738 = vmatprep.mubr.f32.mxu0 0.0
  %4739 = vmatmul.mubr.f32.gmra.mrb[0].mxu0 %v4672
  %v4740 = vpop.f32.mrb[0].mxu0
  %v4741 = vadd.f32 0.0, %v4740
  %v4742 = vpop.f32.mrb[0].mxu0
  %v4743 = vadd.f32 0.0, %v4742
  %4744 = vdwg.mxu0
  %4745 = vmatprep.subr.mxu0 %v747
  %4746 = vmatpush1.msra.mxu0 %v746
  %4747 = vmatprep.subr.mxu0 %v751
  %4748 = vmatpush1.msra.mxu0 %v750
  %4749 = vmatprep.subr.mxu0 %v755
  %4750 = vmatpush1.msra.mxu0 %v754
  %4751 = vmatprep.subr.mxu0 %v759
  %4752 = vmatpush1.msra.mxu0 %v758
  %4753 = vmatprep.subr.mxu0 %v763
  %4754 = vmatpush1.msra.mxu0 %v762
  %4755 = vmatprep.subr.mxu0 %v767
  %4756 = vmatpush1.msra.mxu0 %v766
  %4757 = vmatprep.subr.mxu0 %v771
  %4758 = vmatpush1.msra.mxu0 %v770
  %4759 = vmatprep.subr.mxu0 %v775
  %4760 = vmatpush1.msra.mxu0 %v774
  %4761 = vmatprep.subr.mxu0 0.0
  %4762 = vmatpush1.msra.mxu0 0.0
  %4763 = vmatprep.subr.mxu0 0.0
  %4764 = vmatpush1.msra.mxu0 0.0
  %4765 = vmatprep.subr.mxu0 0.0
  %4766 = vmatpush1.msra.mxu0 0.0
  %4767 = vmatprep.subr.mxu0 0.0
  %4768 = vmatpush1.msra.mxu0 0.0
  %4769 = vmatprep.subr.mxu0 0.0
  %4770 = vmatpush1.msra.mxu0 0.0
  %4771 = vmatprep.subr.mxu0 0.0
  %4772 = vmatpush1.msra.mxu0 0.0
  %4773 = vmatprep.subr.mxu0 0.0
  %4774 = vmatpush1.msra.mxu0 0.0
  %4775 = vmatprep.subr.mxu0 0.0
  %4776 = vmatpush1.msra.mxu0 0.0
  %4777 = vmatprep.subr.mxu0 0.0
  %4778 = vmatpush1.msra.mxu0 0.0
  %4779 = vmatprep.subr.mxu0 0.0
  %4780 = vmatpush1.msra.mxu0 0.0
  %4781 = vmatprep.subr.mxu0 0.0
  %4782 = vmatpush1.msra.mxu0 0.0
  %4783 = vmatprep.subr.mxu0 0.0
  %4784 = vmatpush1.msra.mxu0 0.0
  %4785 = vmatprep.subr.mxu0 0.0
  %4786 = vmatpush1.msra.mxu0 0.0
  %4787 = vmatprep.subr.mxu0 0.0
  %4788 = vmatpush1.msra.mxu0 0.0
  %4789 = vmatprep.subr.mxu0 0.0
  %4790 = vmatpush1.msra.mxu0 0.0
  %4791 = vmatprep.subr.mxu0 0.0
  %4792 = vmatpush1.msra.mxu0 0.0
  %4793 = vmatprep.subr.mxu0 0.0
  %4794 = vmatpush1.msra.mxu0 0.0
  %4795 = vmatprep.subr.mxu0 0.0
  %4796 = vmatpush1.msra.mxu0 0.0
  %4797 = vmatprep.subr.mxu0 0.0
  %4798 = vmatpush1.msra.mxu0 0.0
  %4799 = vmatprep.subr.mxu0 0.0
  %4800 = vmatpush1.msra.mxu0 0.0
  %4801 = vmatprep.subr.mxu0 0.0
  %4802 = vmatpush1.msra.mxu0 0.0
  %4803 = vmatprep.subr.mxu0 0.0
  %4804 = vmatpush1.msra.mxu0 0.0
  %4805 = vmatprep.subr.mxu0 0.0
  %4806 = vmatpush1.msra.mxu0 0.0
  %4807 = vmatprep.subr.mxu0 0.0
  %4808 = vmatpush1.msra.mxu0 0.0
  %4809 = vmatprep.mubr.f32.mxu0 0.0
  %4810 = vmatmul.mubr.f32.gmra.mrb[0].mxu0 %v4672
  %v4811 = vpop.f32.mrb[0].mxu0
  %v4812 = vadd.f32 0.0, %v4811
  %v4813 = vpop.f32.mrb[0].mxu0
  %v4814 = vadd.f32 0.0, %v4813
  %4815 = vdwg.mxu0
  %v4816 = vadd.f32 %v4667, %v4741
  %v4817 = vadd.f32 %v4668, %v4743
  %v4818 = vadd.f32 %v4669, %v4812
  %v4819 = vadd.f32 %v4670, %v4814
  %v4820 = vxor.u32 %v4816, 2147483648
  %v4821 = vxor.u32 %v4817, 2147483648
  %v4822 = vxor.u32 %v4818, 2147483648
  %v4823 = vmul.f32 %v4820, 1.442695
  %v4824 = vpow.pop %v4823
  %v4825 = vmul.f32 %v4821, 1.442695
  %v4826 = vpow.pop %v4825
  %v4827 = vmul.f32 %v4822, 1.442695
  %v4828 = vpow.pop %v4827
  %v4829 = vadd.f32 %v4824, 1.0
  %v4830 = vadd.f32 %v4826, 1.0
  %v4831 = vadd.f32 %v4828, 1.0
  %v4832 = vrcp.pop %v4829
  %v4833 = vmul.f32 1.0, %v4832
  %v4834 = vrcp.pop %v4830
  %v4835 = vmul.f32 1.0, %v4834
  %v4836 = vrcp.pop %v4831
  %v4837 = vmul.f32 1.0, %v4836
  %v4838 = vtanh.pop %v4819
  %v4839 = vmul.f32 %v4835, %v4664
  %v4840 = vmul.f32 %v4833, %v4838
  %v4841 = vadd.f32 %v4839, %v4840
  %v4842 = vtanh.pop %v4841
  %v4843 = vmul.f32 %v4837, %v4842
  %v4844 = vld [vmem:[#allocation2 + $0x2e0] sm:$0xff]
  %v4845 = vld [vmem:[#allocation2 + $0x2e8] sm:$0xff]
  %v4846 = vld [vmem:[#allocation2 + $0x2f0] sm:$0xff]
  %v4847 = vld [vmem:[#allocation2 + $0x2f8] sm:$0xff]
  %v4849 = vsel %vm776, %v4843, 0
  %4851 = vmatprep.subr.mxu0 %v745
  %4852 = vmatpush1.msra.mxu0 %v744
  %4853 = vmatprep.subr.mxu0 %v749
  %4854 = vmatpush1.msra.mxu0 %v748
  %4855 = vmatprep.subr.mxu0 %v753
  %4856 = vmatpush1.msra.mxu0 %v752
  %4857 = vmatprep.subr.mxu0 %v757
  %4858 = vmatpush1.msra.mxu0 %v756
  %4859 = vmatprep.subr.mxu0 %v761
  %4860 = vmatpush1.msra.mxu0 %v760
  %4861 = vmatprep.subr.mxu0 %v765
  %4862 = vmatpush1.msra.mxu0 %v764
  %4863 = vmatprep.subr.mxu0 %v769
  %4864 = vmatpush1.msra.mxu0 %v768
  %4865 = vmatprep.subr.mxu0 %v773
  %4866 = vmatpush1.msra.mxu0 %v772
  %4867 = vmatprep.subr.mxu0 0.0
  %4868 = vmatpush1.msra.mxu0 0.0
  %4869 = vmatprep.subr.mxu0 0.0
  %4870 = vmatpush1.msra.mxu0 0.0
  %4871 = vmatprep.subr.mxu0 0.0
  %4872 = vmatpush1.msra.mxu0 0.0
  %4873 = vmatprep.subr.mxu0 0.0
  %4874 = vmatpush1.msra.mxu0 0.0
  %4875 = vmatprep.subr.mxu0 0.0
  %4876 = vmatpush1.msra.mxu0 0.0
  %4877 = vmatprep.subr.mxu0 0.0
  %4878 = vmatpush1.msra.mxu0 0.0
  %4879 = vmatprep.subr.mxu0 0.0
  %4880 = vmatpush1.msra.mxu0 0.0
  %4881 = vmatprep.subr.mxu0 0.0
  %4882 = vmatpush1.msra.mxu0 0.0
  %4883 = vmatprep.subr.mxu0 0.0
  %4884 = vmatpush1.msra.mxu0 0.0
  %4885 = vmatprep.subr.mxu0 0.0
  %4886 = vmatpush1.msra.mxu0 0.0
  %4887 = vmatprep.subr.mxu0 0.0
  %4888 = vmatpush1.msra.mxu0 0.0
  %4889 = vmatprep.subr.mxu0 0.0
  %4890 = vmatpush1.msra.mxu0 0.0
  %4891 = vmatprep.subr.mxu0 0.0
  %4892 = vmatpush1.msra.mxu0 0.0
  %4893 = vmatprep.subr.mxu0 0.0
  %4894 = vmatpush1.msra.mxu0 0.0
  %4895 = vmatprep.subr.mxu0 0.0
  %4896 = vmatpush1.msra.mxu0 0.0
  %4897 = vmatprep.subr.mxu0 0.0
  %4898 = vmatpush1.msra.mxu0 0.0
  %4899 = vmatprep.subr.mxu0 0.0
  %4900 = vmatpush1.msra.mxu0 0.0
  %4901 = vmatprep.subr.mxu0 0.0
  %4902 = vmatpush1.msra.mxu0 0.0
  %4903 = vmatprep.subr.mxu0 0.0
  %4904 = vmatpush1.msra.mxu0 0.0
  %4905 = vmatprep.subr.mxu0 0.0
  %4906 = vmatpush1.msra.mxu0 0.0
  %4907 = vmatprep.subr.mxu0 0.0
  %4908 = vmatpush1.msra.mxu0 0.0
  %4909 = vmatprep.subr.mxu0 0.0
  %4910 = vmatpush1.msra.mxu0 0.0
  %4911 = vmatprep.subr.mxu0 0.0
  %4912 = vmatpush1.msra.mxu0 0.0
  %4913 = vmatprep.subr.mxu0 0.0
  %4914 = vmatpush1.msra.mxu0 0.0
  %4915 = vmatprep.mubr.f32.mxu0 0.0
  %4916 = vmatmul.mubr.f32.gmra.mrb[0].mxu0 %v4849
  %v4917 = vpop.f32.mrb[0].mxu0
  %v4918 = vadd.f32 0.0, %v4917
  %v4919 = vpop.f32.mrb[0].mxu0
  %v4920 = vadd.f32 0.0, %v4919
  %4921 = vdwg.mxu0
  %4922 = vmatprep.subr.mxu0 %v747
  %4923 = vmatpush1.msra.mxu0 %v746
  %4924 = vmatprep.subr.mxu0 %v751
  %4925 = vmatpush1.msra.mxu0 %v750
  %4926 = vmatprep.subr.mxu0 %v755
  %4927 = vmatpush1.msra.mxu0 %v754
  %4928 = vmatprep.subr.mxu0 %v759
  %4929 = vmatpush1.msra.mxu0 %v758
  %4930 = vmatprep.subr.mxu0 %v763
  %4931 = vmatpush1.msra.mxu0 %v762
  %4932 = vmatprep.subr.mxu0 %v767
  %4933 = vmatpush1.msra.mxu0 %v766
  %4934 = vmatprep.subr.mxu0 %v771
  %4935 = vmatpush1.msra.mxu0 %v770
  %4936 = vmatprep.subr.mxu0 %v775
  %4937 = vmatpush1.msra.mxu0 %v774
  %4938 = vmatprep.subr.mxu0 0.0
  %4939 = vmatpush1.msra.mxu0 0.0
  %4940 = vmatprep.subr.mxu0 0.0
  %4941 = vmatpush1.msra.mxu0 0.0
  %4942 = vmatprep.subr.mxu0 0.0
  %4943 = vmatpush1.msra.mxu0 0.0
  %4944 = vmatprep.subr.mxu0 0.0
  %4945 = vmatpush1.msra.mxu0 0.0
  %4946 = vmatprep.subr.mxu0 0.0
  %4947 = vmatpush1.msra.mxu0 0.0
  %4948 = vmatprep.subr.mxu0 0.0
  %4949 = vmatpush1.msra.mxu0 0.0
  %4950 = vmatprep.subr.mxu0 0.0
  %4951 = vmatpush1.msra.mxu0 0.0
  %4952 = vmatprep.subr.mxu0 0.0
  %4953 = vmatpush1.msra.mxu0 0.0
  %4954 = vmatprep.subr.mxu0 0.0
  %4955 = vmatpush1.msra.mxu0 0.0
  %4956 = vmatprep.subr.mxu0 0.0
  %4957 = vmatpush1.msra.mxu0 0.0
  %4958 = vmatprep.subr.mxu0 0.0
  %4959 = vmatpush1.msra.mxu0 0.0
  %4960 = vmatprep.subr.mxu0 0.0
  %4961 = vmatpush1.msra.mxu0 0.0
  %4962 = vmatprep.subr.mxu0 0.0
  %4963 = vmatpush1.msra.mxu0 0.0
  %4964 = vmatprep.subr.mxu0 0.0
  %4965 = vmatpush1.msra.mxu0 0.0
  %4966 = vmatprep.subr.mxu0 0.0
  %4967 = vmatpush1.msra.mxu0 0.0
  %4968 = vmatprep.subr.mxu0 0.0
  %4969 = vmatpush1.msra.mxu0 0.0
  %4970 = vmatprep.subr.mxu0 0.0
  %4971 = vmatpush1.msra.mxu0 0.0
  %4972 = vmatprep.subr.mxu0 0.0
  %4973 = vmatpush1.msra.mxu0 0.0
  %4974 = vmatprep.subr.mxu0 0.0
  %4975 = vmatpush1.msra.mxu0 0.0
  %4976 = vmatprep.subr.mxu0 0.0
  %4977 = vmatpush1.msra.mxu0 0.0
  %4978 = vmatprep.subr.mxu0 0.0
  %4979 = vmatpush1.msra.mxu0 0.0
  %4980 = vmatprep.subr.mxu0 0.0
  %4981 = vmatpush1.msra.mxu0 0.0
  %4982 = vmatprep.subr.mxu0 0.0
  %4983 = vmatpush1.msra.mxu0 0.0
  %4984 = vmatprep.subr.mxu0 0.0
  %4985 = vmatpush1.msra.mxu0 0.0
  %4986 = vmatprep.mubr.f32.mxu0 0.0
  %4987 = vmatmul.mubr.f32.gmra.mrb[0].mxu0 %v4849
  %v4988 = vpop.f32.mrb[0].mxu0
  %v4989 = vadd.f32 0.0, %v4988
  %v4990 = vpop.f32.mrb[0].mxu0
  %v4991 = vadd.f32 0.0, %v4990
  %4992 = vdwg.mxu0
  %v4993 = vadd.f32 %v4844, %v4918
  %v4994 = vadd.f32 %v4845, %v4920
  %v4995 = vadd.f32 %v4846, %v4989
  %v4996 = vadd.f32 %v4847, %v4991
  %v4997 = vxor.u32 %v4993, 2147483648
  %v4998 = vxor.u32 %v4994, 2147483648
  %v4999 = vxor.u32 %v4995, 2147483648
  %v5000 = vmul.f32 %v4997, 1.442695
  %v5001 = vpow.pop %v5000
  %v5002 = vmul.f32 %v4998, 1.442695
  %v5003 = vpow.pop %v5002
  %v5004 = vmul.f32 %v4999, 1.442695
  %v5005 = vpow.pop %v5004
  %v5006 = vadd.f32 %v5001, 1.0
  %v5007 = vadd.f32 %v5003, 1.0
  %v5008 = vadd.f32 %v5005, 1.0
  %v5009 = vrcp.pop %v5006
  %v5010 = vmul.f32 1.0, %v5009
  %v5011 = vrcp.pop %v5007
  %v5012 = vmul.f32 1.0, %v5011
  %v5013 = vrcp.pop %v5008
  %v5014 = vmul.f32 1.0, %v5013
  %v5015 = vtanh.pop %v4996
  %v5016 = vmul.f32 %v5012, %v4841
  %v5017 = vmul.f32 %v5010, %v5015
  %v5018 = vadd.f32 %v5016, %v5017
  %v5019 = vtanh.pop %v5018
  %v5020 = vmul.f32 %v5014, %v5019
  %v5021 = vld [vmem:[#allocation2 + $0x300] sm:$0xff]
  %v5022 = vld [vmem:[#allocation2 + $0x308] sm:$0xff]
  %v5023 = vld [vmem:[#allocation2 + $0x310] sm:$0xff]
  %v5024 = vld [vmem:[#allocation2 + $0x318] sm:$0xff]
  %v5026 = vsel %vm776, %v5020, 0
  %5028 = vmatprep.subr.mxu0 %v745
  %5029 = vmatpush1.msra.mxu0 %v744
  %5030 = vmatprep.subr.mxu0 %v749
  %5031 = vmatpush1.msra.mxu0 %v748
  %5032 = vmatprep.subr.mxu0 %v753
  %5033 = vmatpush1.msra.mxu0 %v752
  %5034 = vmatprep.subr.mxu0 %v757
  %5035 = vmatpush1.msra.mxu0 %v756
  %5036 = vmatprep.subr.mxu0 %v761
  %5037 = vmatpush1.msra.mxu0 %v760
  %5038 = vmatprep.subr.mxu0 %v765
  %5039 = vmatpush1.msra.mxu0 %v764
  %5040 = vmatprep.subr.mxu0 %v769
  %5041 = vmatpush1.msra.mxu0 %v768
  %5042 = vmatprep.subr.mxu0 %v773
  %5043 = vmatpush1.msra.mxu0 %v772
  %5044 = vmatprep.subr.mxu0 0.0
  %5045 = vmatpush1.msra.mxu0 0.0
  %5046 = vmatprep.subr.mxu0 0.0
  %5047 = vmatpush1.msra.mxu0 0.0
  %5048 = vmatprep.subr.mxu0 0.0
  %5049 = vmatpush1.msra.mxu0 0.0
  %5050 = vmatprep.subr.mxu0 0.0
  %5051 = vmatpush1.msra.mxu0 0.0
  %5052 = vmatprep.subr.mxu0 0.0
  %5053 = vmatpush1.msra.mxu0 0.0
  %5054 = vmatprep.subr.mxu0 0.0
  %5055 = vmatpush1.msra.mxu0 0.0
  %5056 = vmatprep.subr.mxu0 0.0
  %5057 = vmatpush1.msra.mxu0 0.0
  %5058 = vmatprep.subr.mxu0 0.0
  %5059 = vmatpush1.msra.mxu0 0.0
  %5060 = vmatprep.subr.mxu0 0.0
  %5061 = vmatpush1.msra.mxu0 0.0
  %5062 = vmatprep.subr.mxu0 0.0
  %5063 = vmatpush1.msra.mxu0 0.0
  %5064 = vmatprep.subr.mxu0 0.0
  %5065 = vmatpush1.msra.mxu0 0.0
  %5066 = vmatprep.subr.mxu0 0.0
  %5067 = vmatpush1.msra.mxu0 0.0
  %5068 = vmatprep.subr.mxu0 0.0
  %5069 = vmatpush1.msra.mxu0 0.0
  %5070 = vmatprep.subr.mxu0 0.0
  %5071 = vmatpush1.msra.mxu0 0.0
  %5072 = vmatprep.subr.mxu0 0.0
  %5073 = vmatpush1.msra.mxu0 0.0
  %5074 = vmatprep.subr.mxu0 0.0
  %5075 = vmatpush1.msra.mxu0 0.0
  %5076 = vmatprep.subr.mxu0 0.0
  %5077 = vmatpush1.msra.mxu0 0.0
  %5078 = vmatprep.subr.mxu0 0.0
  %5079 = vmatpush1.msra.mxu0 0.0
  %5080 = vmatprep.subr.mxu0 0.0
  %5081 = vmatpush1.msra.mxu0 0.0
  %5082 = vmatprep.subr.mxu0 0.0
  %5083 = vmatpush1.msra.mxu0 0.0
  %5084 = vmatprep.subr.mxu0 0.0
  %5085 = vmatpush1.msra.mxu0 0.0
  %5086 = vmatprep.subr.mxu0 0.0
  %5087 = vmatpush1.msra.mxu0 0.0
  %5088 = vmatprep.subr.mxu0 0.0
  %5089 = vmatpush1.msra.mxu0 0.0
  %5090 = vmatprep.subr.mxu0 0.0
  %5091 = vmatpush1.msra.mxu0 0.0
  %5092 = vmatprep.mubr.f32.mxu0 0.0
  %5093 = vmatmul.mubr.f32.gmra.mrb[0].mxu0 %v5026
  %v5094 = vpop.f32.mrb[0].mxu0
  %v5095 = vadd.f32 0.0, %v5094
  %v5096 = vpop.f32.mrb[0].mxu0
  %v5097 = vadd.f32 0.0, %v5096
  %5098 = vdwg.mxu0
  %5099 = vmatprep.subr.mxu0 %v747
  %5100 = vmatpush1.msra.mxu0 %v746
  %5101 = vmatprep.subr.mxu0 %v751
  %5102 = vmatpush1.msra.mxu0 %v750
  %5103 = vmatprep.subr.mxu0 %v755
  %5104 = vmatpush1.msra.mxu0 %v754
  %5105 = vmatprep.subr.mxu0 %v759
  %5106 = vmatpush1.msra.mxu0 %v758
  %5107 = vmatprep.subr.mxu0 %v763
  %5108 = vmatpush1.msra.mxu0 %v762
  %5109 = vmatprep.subr.mxu0 %v767
  %5110 = vmatpush1.msra.mxu0 %v766
  %5111 = vmatprep.subr.mxu0 %v771
  %5112 = vmatpush1.msra.mxu0 %v770
  %5113 = vmatprep.subr.mxu0 %v775
  %5114 = vmatpush1.msra.mxu0 %v774
  %5115 = vmatprep.subr.mxu0 0.0
  %5116 = vmatpush1.msra.mxu0 0.0
  %5117 = vmatprep.subr.mxu0 0.0
  %5118 = vmatpush1.msra.mxu0 0.0
  %5119 = vmatprep.subr.mxu0 0.0
  %5120 = vmatpush1.msra.mxu0 0.0
  %5121 = vmatprep.subr.mxu0 0.0
  %5122 = vmatpush1.msra.mxu0 0.0
  %5123 = vmatprep.subr.mxu0 0.0
  %5124 = vmatpush1.msra.mxu0 0.0
  %5125 = vmatprep.subr.mxu0 0.0
  %5126 = vmatpush1.msra.mxu0 0.0
  %5127 = vmatprep.subr.mxu0 0.0
  %5128 = vmatpush1.msra.mxu0 0.0
  %5129 = vmatprep.subr.mxu0 0.0
  %5130 = vmatpush1.msra.mxu0 0.0
  %5131 = vmatprep.subr.mxu0 0.0
  %5132 = vmatpush1.msra.mxu0 0.0
  %5133 = vmatprep.subr.mxu0 0.0
  %5134 = vmatpush1.msra.mxu0 0.0
  %5135 = vmatprep.subr.mxu0 0.0
  %5136 = vmatpush1.msra.mxu0 0.0
  %5137 = vmatprep.subr.mxu0 0.0
  %5138 = vmatpush1.msra.mxu0 0.0
  %5139 = vmatprep.subr.mxu0 0.0
  %5140 = vmatpush1.msra.mxu0 0.0
  %5141 = vmatprep.subr.mxu0 0.0
  %5142 = vmatpush1.msra.mxu0 0.0
  %5143 = vmatprep.subr.mxu0 0.0
  %5144 = vmatpush1.msra.mxu0 0.0
  %5145 = vmatprep.subr.mxu0 0.0
  %5146 = vmatpush1.msra.mxu0 0.0
  %5147 = vmatprep.subr.mxu0 0.0
  %5148 = vmatpush1.msra.mxu0 0.0
  %5149 = vmatprep.subr.mxu0 0.0
  %5150 = vmatpush1.msra.mxu0 0.0
  %5151 = vmatprep.subr.mxu0 0.0
  %5152 = vmatpush1.msra.mxu0 0.0
  %5153 = vmatprep.subr.mxu0 0.0
  %5154 = vmatpush1.msra.mxu0 0.0
  %5155 = vmatprep.subr.mxu0 0.0
  %5156 = vmatpush1.msra.mxu0 0.0
  %5157 = vmatprep.subr.mxu0 0.0
  %5158 = vmatpush1.msra.mxu0 0.0
  %5159 = vmatprep.subr.mxu0 0.0
  %5160 = vmatpush1.msra.mxu0 0.0
  %5161 = vmatprep.subr.mxu0 0.0
  %5162 = vmatpush1.msra.mxu0 0.0
  %5163 = vmatprep.mubr.f32.mxu0 0.0
  %5164 = vmatmul.mubr.f32.gmra.mrb[0].mxu0 %v5026
  %v5165 = vpop.f32.mrb[0].mxu0
  %v5166 = vadd.f32 0.0, %v5165
  %v5167 = vpop.f32.mrb[0].mxu0
  %v5168 = vadd.f32 0.0, %v5167
  %5169 = vdwg.mxu0
  %v5170 = vadd.f32 %v5021, %v5095
  %v5171 = vadd.f32 %v5022, %v5097
  %v5172 = vadd.f32 %v5023, %v5166
  %v5173 = vadd.f32 %v5024, %v5168
  %v5174 = vxor.u32 %v5170, 2147483648
  %v5175 = vxor.u32 %v5171, 2147483648
  %v5176 = vxor.u32 %v5172, 2147483648
  %v5177 = vmul.f32 %v5174, 1.442695
  %v5178 = vpow.pop %v5177
  %v5179 = vmul.f32 %v5175, 1.442695
  %v5180 = vpow.pop %v5179
  %v5181 = vmul.f32 %v5176, 1.442695
  %v5182 = vpow.pop %v5181
  %v5183 = vadd.f32 %v5178, 1.0
  %v5184 = vadd.f32 %v5180, 1.0
  %v5185 = vadd.f32 %v5182, 1.0
  %v5186 = vrcp.pop %v5183
  %v5187 = vmul.f32 1.0, %v5186
  %v5188 = vrcp.pop %v5184
  %v5189 = vmul.f32 1.0, %v5188
  %v5190 = vrcp.pop %v5185
  %v5191 = vmul.f32 1.0, %v5190
  %v5192 = vtanh.pop %v5173
  %v5193 = vmul.f32 %v5189, %v5018
  %v5194 = vmul.f32 %v5187, %v5192
  %v5195 = vadd.f32 %v5193, %v5194
  %v5196 = vtanh.pop %v5195
  %v5197 = vmul.f32 %v5191, %v5196
  %v5198 = vld [vmem:[#allocation2 + $0x320] sm:$0xff]
  %v5199 = vld [vmem:[#allocation2 + $0x328] sm:$0xff]
  %v5200 = vld [vmem:[#allocation2 + $0x330] sm:$0xff]
  %v5201 = vld [vmem:[#allocation2 + $0x338] sm:$0xff]
  %v5203 = vsel %vm776, %v5197, 0
  %5205 = vmatprep.subr.mxu0 %v745
  %5206 = vmatpush1.msra.mxu0 %v744
  %5207 = vmatprep.subr.mxu0 %v749
  %5208 = vmatpush1.msra.mxu0 %v748
  %5209 = vmatprep.subr.mxu0 %v753
  %5210 = vmatpush1.msra.mxu0 %v752
  %5211 = vmatprep.subr.mxu0 %v757
  %5212 = vmatpush1.msra.mxu0 %v756
  %5213 = vmatprep.subr.mxu0 %v761
  %5214 = vmatpush1.msra.mxu0 %v760
  %5215 = vmatprep.subr.mxu0 %v765
  %5216 = vmatpush1.msra.mxu0 %v764
  %5217 = vmatprep.subr.mxu0 %v769
  %5218 = vmatpush1.msra.mxu0 %v768
  %5219 = vmatprep.subr.mxu0 %v773
  %5220 = vmatpush1.msra.mxu0 %v772
  %5221 = vmatprep.subr.mxu0 0.0
  %5222 = vmatpush1.msra.mxu0 0.0
  %5223 = vmatprep.subr.mxu0 0.0
  %5224 = vmatpush1.msra.mxu0 0.0
  %5225 = vmatprep.subr.mxu0 0.0
  %5226 = vmatpush1.msra.mxu0 0.0
  %5227 = vmatprep.subr.mxu0 0.0
  %5228 = vmatpush1.msra.mxu0 0.0
  %5229 = vmatprep.subr.mxu0 0.0
  %5230 = vmatpush1.msra.mxu0 0.0
  %5231 = vmatprep.subr.mxu0 0.0
  %5232 = vmatpush1.msra.mxu0 0.0
  %5233 = vmatprep.subr.mxu0 0.0
  %5234 = vmatpush1.msra.mxu0 0.0
  %5235 = vmatprep.subr.mxu0 0.0
  %5236 = vmatpush1.msra.mxu0 0.0
  %5237 = vmatprep.subr.mxu0 0.0
  %5238 = vmatpush1.msra.mxu0 0.0
  %5239 = vmatprep.subr.mxu0 0.0
  %5240 = vmatpush1.msra.mxu0 0.0
  %5241 = vmatprep.subr.mxu0 0.0
  %5242 = vmatpush1.msra.mxu0 0.0
  %5243 = vmatprep.subr.mxu0 0.0
  %5244 = vmatpush1.msra.mxu0 0.0
  %5245 = vmatprep.subr.mxu0 0.0
  %5246 = vmatpush1.msra.mxu0 0.0
  %5247 = vmatprep.subr.mxu0 0.0
  %5248 = vmatpush1.msra.mxu0 0.0
  %5249 = vmatprep.subr.mxu0 0.0
  %5250 = vmatpush1.msra.mxu0 0.0
  %5251 = vmatprep.subr.mxu0 0.0
  %5252 = vmatpush1.msra.mxu0 0.0
  %5253 = vmatprep.subr.mxu0 0.0
  %5254 = vmatpush1.msra.mxu0 0.0
  %5255 = vmatprep.subr.mxu0 0.0
  %5256 = vmatpush1.msra.mxu0 0.0
  %5257 = vmatprep.subr.mxu0 0.0
  %5258 = vmatpush1.msra.mxu0 0.0
  %5259 = vmatprep.subr.mxu0 0.0
  %5260 = vmatpush1.msra.mxu0 0.0
  %5261 = vmatprep.subr.mxu0 0.0
  %5262 = vmatpush1.msra.mxu0 0.0
  %5263 = vmatprep.subr.mxu0 0.0
  %5264 = vmatpush1.msra.mxu0 0.0
  %5265 = vmatprep.subr.mxu0 0.0
  %5266 = vmatpush1.msra.mxu0 0.0
  %5267 = vmatprep.subr.mxu0 0.0
  %5268 = vmatpush1.msra.mxu0 0.0
  %5269 = vmatprep.mubr.f32.mxu0 0.0
  %5270 = vmatmul.mubr.f32.gmra.mrb[0].mxu0 %v5203
  %v5271 = vpop.f32.mrb[0].mxu0
  %v5272 = vadd.f32 0.0, %v5271
  %v5273 = vpop.f32.mrb[0].mxu0
  %v5274 = vadd.f32 0.0, %v5273
  %5275 = vdwg.mxu0
  %5276 = vmatprep.subr.mxu0 %v747
  %5277 = vmatpush1.msra.mxu0 %v746
  %5278 = vmatprep.subr.mxu0 %v751
  %5279 = vmatpush1.msra.mxu0 %v750
  %5280 = vmatprep.subr.mxu0 %v755
  %5281 = vmatpush1.msra.mxu0 %v754
  %5282 = vmatprep.subr.mxu0 %v759
  %5283 = vmatpush1.msra.mxu0 %v758
  %5284 = vmatprep.subr.mxu0 %v763
  %5285 = vmatpush1.msra.mxu0 %v762
  %5286 = vmatprep.subr.mxu0 %v767
  %5287 = vmatpush1.msra.mxu0 %v766
  %5288 = vmatprep.subr.mxu0 %v771
  %5289 = vmatpush1.msra.mxu0 %v770
  %5290 = vmatprep.subr.mxu0 %v775
  %5291 = vmatpush1.msra.mxu0 %v774
  %5292 = vmatprep.subr.mxu0 0.0
  %5293 = vmatpush1.msra.mxu0 0.0
  %5294 = vmatprep.subr.mxu0 0.0
  %5295 = vmatpush1.msra.mxu0 0.0
  %5296 = vmatprep.subr.mxu0 0.0
  %5297 = vmatpush1.msra.mxu0 0.0
  %5298 = vmatprep.subr.mxu0 0.0
  %5299 = vmatpush1.msra.mxu0 0.0
  %5300 = vmatprep.subr.mxu0 0.0
  %5301 = vmatpush1.msra.mxu0 0.0
  %5302 = vmatprep.subr.mxu0 0.0
  %5303 = vmatpush1.msra.mxu0 0.0
  %5304 = vmatprep.subr.mxu0 0.0
  %5305 = vmatpush1.msra.mxu0 0.0
  %5306 = vmatprep.subr.mxu0 0.0
  %5307 = vmatpush1.msra.mxu0 0.0
  %5308 = vmatprep.subr.mxu0 0.0
  %5309 = vmatpush1.msra.mxu0 0.0
  %5310 = vmatprep.subr.mxu0 0.0
  %5311 = vmatpush1.msra.mxu0 0.0
  %5312 = vmatprep.subr.mxu0 0.0
  %5313 = vmatpush1.msra.mxu0 0.0
  %5314 = vmatprep.subr.mxu0 0.0
  %5315 = vmatpush1.msra.mxu0 0.0
  %5316 = vmatprep.subr.mxu0 0.0
  %5317 = vmatpush1.msra.mxu0 0.0
  %5318 = vmatprep.subr.mxu0 0.0
  %5319 = vmatpush1.msra.mxu0 0.0
  %5320 = vmatprep.subr.mxu0 0.0
  %5321 = vmatpush1.msra.mxu0 0.0
  %5322 = vmatprep.subr.mxu0 0.0
  %5323 = vmatpush1.msra.mxu0 0.0
  %5324 = vmatprep.subr.mxu0 0.0
  %5325 = vmatpush1.msra.mxu0 0.0
  %5326 = vmatprep.subr.mxu0 0.0
  %5327 = vmatpush1.msra.mxu0 0.0
  %5328 = vmatprep.subr.mxu0 0.0
  %5329 = vmatpush1.msra.mxu0 0.0
  %5330 = vmatprep.subr.mxu0 0.0
  %5331 = vmatpush1.msra.mxu0 0.0
  %5332 = vmatprep.subr.mxu0 0.0
  %5333 = vmatpush1.msra.mxu0 0.0
  %5334 = vmatprep.subr.mxu0 0.0
  %5335 = vmatpush1.msra.mxu0 0.0
  %5336 = vmatprep.subr.mxu0 0.0
  %5337 = vmatpush1.msra.mxu0 0.0
  %5338 = vmatprep.subr.mxu0 0.0
  %5339 = vmatpush1.msra.mxu0 0.0
  %5340 = vmatprep.mubr.f32.mxu0 0.0
  %5341 = vmatmul.mubr.f32.gmra.mrb[0].mxu0 %v5203
  %v5342 = vpop.f32.mrb[0].mxu0
  %v5343 = vadd.f32 0.0, %v5342
  %v5344 = vpop.f32.mrb[0].mxu0
  %v5345 = vadd.f32 0.0, %v5344
  %5346 = vdwg.mxu0
  %v5347 = vadd.f32 %v5198, %v5272
  %v5348 = vadd.f32 %v5199, %v5274
  %v5349 = vadd.f32 %v5200, %v5343
  %v5350 = vadd.f32 %v5201, %v5345
  %v5351 = vxor.u32 %v5347, 2147483648
  %v5352 = vxor.u32 %v5348, 2147483648
  %v5353 = vxor.u32 %v5349, 2147483648
  %v5354 = vmul.f32 %v5351, 1.442695
  %v5355 = vpow.pop %v5354
  %v5356 = vmul.f32 %v5352, 1.442695
  %v5357 = vpow.pop %v5356
  %v5358 = vmul.f32 %v5353, 1.442695
  %v5359 = vpow.pop %v5358
  %v5360 = vadd.f32 %v5355, 1.0
  %v5361 = vadd.f32 %v5357, 1.0
  %v5362 = vadd.f32 %v5359, 1.0
  %v5363 = vrcp.pop %v5360
  %v5364 = vmul.f32 1.0, %v5363
  %v5365 = vrcp.pop %v5361
  %v5366 = vmul.f32 1.0, %v5365
  %v5367 = vrcp.pop %v5362
  %v5368 = vmul.f32 1.0, %v5367
  %v5369 = vtanh.pop %v5350
  %v5370 = vmul.f32 %v5366, %v5195
  %v5371 = vmul.f32 %v5364, %v5369
  %v5372 = vadd.f32 %v5370, %v5371
  %v5373 = vtanh.pop %v5372
  %v5374 = vmul.f32 %v5368, %v5373
  %v5375 = vld [vmem:[#allocation2 + $0x340] sm:$0xff]
  %v5376 = vld [vmem:[#allocation2 + $0x348] sm:$0xff]
  %v5377 = vld [vmem:[#allocation2 + $0x350] sm:$0xff]
  %v5378 = vld [vmem:[#allocation2 + $0x358] sm:$0xff]
  %v5380 = vsel %vm776, %v5374, 0
  %5382 = vmatprep.subr.mxu0 %v745
  %5383 = vmatpush1.msra.mxu0 %v744
  %5384 = vmatprep.subr.mxu0 %v749
  %5385 = vmatpush1.msra.mxu0 %v748
  %5386 = vmatprep.subr.mxu0 %v753
  %5387 = vmatpush1.msra.mxu0 %v752
  %5388 = vmatprep.subr.mxu0 %v757
  %5389 = vmatpush1.msra.mxu0 %v756
  %5390 = vmatprep.subr.mxu0 %v761
  %5391 = vmatpush1.msra.mxu0 %v760
  %5392 = vmatprep.subr.mxu0 %v765
  %5393 = vmatpush1.msra.mxu0 %v764
  %5394 = vmatprep.subr.mxu0 %v769
  %5395 = vmatpush1.msra.mxu0 %v768
  %5396 = vmatprep.subr.mxu0 %v773
  %5397 = vmatpush1.msra.mxu0 %v772
  %5398 = vmatprep.subr.mxu0 0.0
  %5399 = vmatpush1.msra.mxu0 0.0
  %5400 = vmatprep.subr.mxu0 0.0
  %5401 = vmatpush1.msra.mxu0 0.0
  %5402 = vmatprep.subr.mxu0 0.0
  %5403 = vmatpush1.msra.mxu0 0.0
  %5404 = vmatprep.subr.mxu0 0.0
  %5405 = vmatpush1.msra.mxu0 0.0
  %5406 = vmatprep.subr.mxu0 0.0
  %5407 = vmatpush1.msra.mxu0 0.0
  %5408 = vmatprep.subr.mxu0 0.0
  %5409 = vmatpush1.msra.mxu0 0.0
  %5410 = vmatprep.subr.mxu0 0.0
  %5411 = vmatpush1.msra.mxu0 0.0
  %5412 = vmatprep.subr.mxu0 0.0
  %5413 = vmatpush1.msra.mxu0 0.0
  %5414 = vmatprep.subr.mxu0 0.0
  %5415 = vmatpush1.msra.mxu0 0.0
  %5416 = vmatprep.subr.mxu0 0.0
  %5417 = vmatpush1.msra.mxu0 0.0
  %5418 = vmatprep.subr.mxu0 0.0
  %5419 = vmatpush1.msra.mxu0 0.0
  %5420 = vmatprep.subr.mxu0 0.0
  %5421 = vmatpush1.msra.mxu0 0.0
  %5422 = vmatprep.subr.mxu0 0.0
  %5423 = vmatpush1.msra.mxu0 0.0
  %5424 = vmatprep.subr.mxu0 0.0
  %5425 = vmatpush1.msra.mxu0 0.0
  %5426 = vmatprep.subr.mxu0 0.0
  %5427 = vmatpush1.msra.mxu0 0.0
  %5428 = vmatprep.subr.mxu0 0.0
  %5429 = vmatpush1.msra.mxu0 0.0
  %5430 = vmatprep.subr.mxu0 0.0
  %5431 = vmatpush1.msra.mxu0 0.0
  %5432 = vmatprep.subr.mxu0 0.0
  %5433 = vmatpush1.msra.mxu0 0.0
  %5434 = vmatprep.subr.mxu0 0.0
  %5435 = vmatpush1.msra.mxu0 0.0
  %5436 = vmatprep.subr.mxu0 0.0
  %5437 = vmatpush1.msra.mxu0 0.0
  %5438 = vmatprep.subr.mxu0 0.0
  %5439 = vmatpush1.msra.mxu0 0.0
  %5440 = vmatprep.subr.mxu0 0.0
  %5441 = vmatpush1.msra.mxu0 0.0
  %5442 = vmatprep.subr.mxu0 0.0
  %5443 = vmatpush1.msra.mxu0 0.0
  %5444 = vmatprep.subr.mxu0 0.0
  %5445 = vmatpush1.msra.mxu0 0.0
  %5446 = vmatprep.mubr.f32.mxu0 0.0
  %5447 = vmatmul.mubr.f32.gmra.mrb[0].mxu0 %v5380
  %v5448 = vpop.f32.mrb[0].mxu0
  %v5449 = vadd.f32 0.0, %v5448
  %v5450 = vpop.f32.mrb[0].mxu0
  %v5451 = vadd.f32 0.0, %v5450
  %5452 = vdwg.mxu0
  %5453 = vmatprep.subr.mxu0 %v747
  %5454 = vmatpush1.msra.mxu0 %v746
  %5455 = vmatprep.subr.mxu0 %v751
  %5456 = vmatpush1.msra.mxu0 %v750
  %5457 = vmatprep.subr.mxu0 %v755
  %5458 = vmatpush1.msra.mxu0 %v754
  %5459 = vmatprep.subr.mxu0 %v759
  %5460 = vmatpush1.msra.mxu0 %v758
  %5461 = vmatprep.subr.mxu0 %v763
  %5462 = vmatpush1.msra.mxu0 %v762
  %5463 = vmatprep.subr.mxu0 %v767
  %5464 = vmatpush1.msra.mxu0 %v766
  %5465 = vmatprep.subr.mxu0 %v771
  %5466 = vmatpush1.msra.mxu0 %v770
  %5467 = vmatprep.subr.mxu0 %v775
  %5468 = vmatpush1.msra.mxu0 %v774
  %5469 = vmatprep.subr.mxu0 0.0
  %5470 = vmatpush1.msra.mxu0 0.0
  %5471 = vmatprep.subr.mxu0 0.0
  %5472 = vmatpush1.msra.mxu0 0.0
  %5473 = vmatprep.subr.mxu0 0.0
  %5474 = vmatpush1.msra.mxu0 0.0
  %5475 = vmatprep.subr.mxu0 0.0
  %5476 = vmatpush1.msra.mxu0 0.0
  %5477 = vmatprep.subr.mxu0 0.0
  %5478 = vmatpush1.msra.mxu0 0.0
  %5479 = vmatprep.subr.mxu0 0.0
  %5480 = vmatpush1.msra.mxu0 0.0
  %5481 = vmatprep.subr.mxu0 0.0
  %5482 = vmatpush1.msra.mxu0 0.0
  %5483 = vmatprep.subr.mxu0 0.0
  %5484 = vmatpush1.msra.mxu0 0.0
  %5485 = vmatprep.subr.mxu0 0.0
  %5486 = vmatpush1.msra.mxu0 0.0
  %5487 = vmatprep.subr.mxu0 0.0
  %5488 = vmatpush1.msra.mxu0 0.0
  %5489 = vmatprep.subr.mxu0 0.0
  %5490 = vmatpush1.msra.mxu0 0.0
  %5491 = vmatprep.subr.mxu0 0.0
  %5492 = vmatpush1.msra.mxu0 0.0
  %5493 = vmatprep.subr.mxu0 0.0
  %5494 = vmatpush1.msra.mxu0 0.0
  %5495 = vmatprep.subr.mxu0 0.0
  %5496 = vmatpush1.msra.mxu0 0.0
  %5497 = vmatprep.subr.mxu0 0.0
  %5498 = vmatpush1.msra.mxu0 0.0
  %5499 = vmatprep.subr.mxu0 0.0
  %5500 = vmatpush1.msra.mxu0 0.0
  %5501 = vmatprep.subr.mxu0 0.0
  %5502 = vmatpush1.msra.mxu0 0.0
  %5503 = vmatprep.subr.mxu0 0.0
  %5504 = vmatpush1.msra.mxu0 0.0
  %5505 = vmatprep.subr.mxu0 0.0
  %5506 = vmatpush1.msra.mxu0 0.0
  %5507 = vmatprep.subr.mxu0 0.0
  %5508 = vmatpush1.msra.mxu0 0.0
  %5509 = vmatprep.subr.mxu0 0.0
  %5510 = vmatpush1.msra.mxu0 0.0
  %5511 = vmatprep.subr.mxu0 0.0
  %5512 = vmatpush1.msra.mxu0 0.0
  %5513 = vmatprep.subr.mxu0 0.0
  %5514 = vmatpush1.msra.mxu0 0.0
  %5515 = vmatprep.subr.mxu0 0.0
  %5516 = vmatpush1.msra.mxu0 0.0
  %5517 = vmatprep.mubr.f32.mxu0 0.0
  %5518 = vmatmul.mubr.f32.gmra.mrb[0].mxu0 %v5380
  %v5519 = vpop.f32.mrb[0].mxu0
  %v5520 = vadd.f32 0.0, %v5519
  %v5521 = vpop.f32.mrb[0].mxu0
  %v5522 = vadd.f32 0.0, %v5521
  %5523 = vdwg.mxu0
  %v5524 = vadd.f32 %v5375, %v5449
  %v5525 = vadd.f32 %v5376, %v5451
  %v5526 = vadd.f32 %v5377, %v5520
  %v5527 = vadd.f32 %v5378, %v5522
  %v5528 = vxor.u32 %v5524, 2147483648
  %v5529 = vxor.u32 %v5525, 2147483648
  %v5530 = vxor.u32 %v5526, 2147483648
  %v5531 = vmul.f32 %v5528, 1.442695
  %v5532 = vpow.pop %v5531
  %v5533 = vmul.f32 %v5529, 1.442695
  %v5534 = vpow.pop %v5533
  %v5535 = vmul.f32 %v5530, 1.442695
  %v5536 = vpow.pop %v5535
  %v5537 = vadd.f32 %v5532, 1.0
  %v5538 = vadd.f32 %v5534, 1.0
  %v5539 = vadd.f32 %v5536, 1.0
  %v5540 = vrcp.pop %v5537
  %v5541 = vmul.f32 1.0, %v5540
  %v5542 = vrcp.pop %v5538
  %v5543 = vmul.f32 1.0, %v5542
  %v5544 = vrcp.pop %v5539
  %v5545 = vmul.f32 1.0, %v5544
  %v5546 = vtanh.pop %v5527
  %v5547 = vmul.f32 %v5543, %v5372
  %v5548 = vmul.f32 %v5541, %v5546
  %v5549 = vadd.f32 %v5547, %v5548
  %v5550 = vtanh.pop %v5549
  %v5551 = vmul.f32 %v5545, %v5550
  %v5552 = vld [vmem:[#allocation2 + $0x360] sm:$0xff]
  %v5553 = vld [vmem:[#allocation2 + $0x368] sm:$0xff]
  %v5554 = vld [vmem:[#allocation2 + $0x370] sm:$0xff]
  %v5555 = vld [vmem:[#allocation2 + $0x378] sm:$0xff]
  %v5557 = vsel %vm776, %v5551, 0
  %5559 = vmatprep.subr.mxu0 %v745
  %5560 = vmatpush1.msra.mxu0 %v744
  %5561 = vmatprep.subr.mxu0 %v749
  %5562 = vmatpush1.msra.mxu0 %v748
  %5563 = vmatprep.subr.mxu0 %v753
  %5564 = vmatpush1.msra.mxu0 %v752
  %5565 = vmatprep.subr.mxu0 %v757
  %5566 = vmatpush1.msra.mxu0 %v756
  %5567 = vmatprep.subr.mxu0 %v761
  %5568 = vmatpush1.msra.mxu0 %v760
  %5569 = vmatprep.subr.mxu0 %v765
  %5570 = vmatpush1.msra.mxu0 %v764
  %5571 = vmatprep.subr.mxu0 %v769
  %5572 = vmatpush1.msra.mxu0 %v768
  %5573 = vmatprep.subr.mxu0 %v773
  %5574 = vmatpush1.msra.mxu0 %v772
  %5575 = vmatprep.subr.mxu0 0.0
  %5576 = vmatpush1.msra.mxu0 0.0
  %5577 = vmatprep.subr.mxu0 0.0
  %5578 = vmatpush1.msra.mxu0 0.0
  %5579 = vmatprep.subr.mxu0 0.0
  %5580 = vmatpush1.msra.mxu0 0.0
  %5581 = vmatprep.subr.mxu0 0.0
  %5582 = vmatpush1.msra.mxu0 0.0
  %5583 = vmatprep.subr.mxu0 0.0
  %5584 = vmatpush1.msra.mxu0 0.0
  %5585 = vmatprep.subr.mxu0 0.0
  %5586 = vmatpush1.msra.mxu0 0.0
  %5587 = vmatprep.subr.mxu0 0.0
  %5588 = vmatpush1.msra.mxu0 0.0
  %5589 = vmatprep.subr.mxu0 0.0
  %5590 = vmatpush1.msra.mxu0 0.0
  %5591 = vmatprep.subr.mxu0 0.0
  %5592 = vmatpush1.msra.mxu0 0.0
  %5593 = vmatprep.subr.mxu0 0.0
  %5594 = vmatpush1.msra.mxu0 0.0
  %5595 = vmatprep.subr.mxu0 0.0
  %5596 = vmatpush1.msra.mxu0 0.0
  %5597 = vmatprep.subr.mxu0 0.0
  %5598 = vmatpush1.msra.mxu0 0.0
  %5599 = vmatprep.subr.mxu0 0.0
  %5600 = vmatpush1.msra.mxu0 0.0
  %5601 = vmatprep.subr.mxu0 0.0
  %5602 = vmatpush1.msra.mxu0 0.0
  %5603 = vmatprep.subr.mxu0 0.0
  %5604 = vmatpush1.msra.mxu0 0.0
  %5605 = vmatprep.subr.mxu0 0.0
  %5606 = vmatpush1.msra.mxu0 0.0
  %5607 = vmatprep.subr.mxu0 0.0
  %5608 = vmatpush1.msra.mxu0 0.0
  %5609 = vmatprep.subr.mxu0 0.0
  %5610 = vmatpush1.msra.mxu0 0.0
  %5611 = vmatprep.subr.mxu0 0.0
  %5612 = vmatpush1.msra.mxu0 0.0
  %5613 = vmatprep.subr.mxu0 0.0
  %5614 = vmatpush1.msra.mxu0 0.0
  %5615 = vmatprep.subr.mxu0 0.0
  %5616 = vmatpush1.msra.mxu0 0.0
  %5617 = vmatprep.subr.mxu0 0.0
  %5618 = vmatpush1.msra.mxu0 0.0
  %5619 = vmatprep.subr.mxu0 0.0
  %5620 = vmatpush1.msra.mxu0 0.0
  %5621 = vmatprep.subr.mxu0 0.0
  %5622 = vmatpush1.msra.mxu0 0.0
  %5623 = vmatprep.mubr.f32.mxu0 0.0
  %5624 = vmatmul.mubr.f32.gmra.mrb[0].mxu0 %v5557
  %v5625 = vpop.f32.mrb[0].mxu0
  %v5626 = vadd.f32 0.0, %v5625
  %v5627 = vpop.f32.mrb[0].mxu0
  %v5628 = vadd.f32 0.0, %v5627
  %5629 = vdwg.mxu0
  %5630 = vmatprep.subr.mxu0 %v747
  %5631 = vmatpush1.msra.mxu0 %v746
  %5632 = vmatprep.subr.mxu0 %v751
  %5633 = vmatpush1.msra.mxu0 %v750
  %5634 = vmatprep.subr.mxu0 %v755
  %5635 = vmatpush1.msra.mxu0 %v754
  %5636 = vmatprep.subr.mxu0 %v759
  %5637 = vmatpush1.msra.mxu0 %v758
  %5638 = vmatprep.subr.mxu0 %v763
  %5639 = vmatpush1.msra.mxu0 %v762
  %5640 = vmatprep.subr.mxu0 %v767
  %5641 = vmatpush1.msra.mxu0 %v766
  %5642 = vmatprep.subr.mxu0 %v771
  %5643 = vmatpush1.msra.mxu0 %v770
  %5644 = vmatprep.subr.mxu0 %v775
  %5645 = vmatpush1.msra.mxu0 %v774
  %5646 = vmatprep.subr.mxu0 0.0
  %5647 = vmatpush1.msra.mxu0 0.0
  %5648 = vmatprep.subr.mxu0 0.0
  %5649 = vmatpush1.msra.mxu0 0.0
  %5650 = vmatprep.subr.mxu0 0.0
  %5651 = vmatpush1.msra.mxu0 0.0
  %5652 = vmatprep.subr.mxu0 0.0
  %5653 = vmatpush1.msra.mxu0 0.0
  %5654 = vmatprep.subr.mxu0 0.0
  %5655 = vmatpush1.msra.mxu0 0.0
  %5656 = vmatprep.subr.mxu0 0.0
  %5657 = vmatpush1.msra.mxu0 0.0
  %5658 = vmatprep.subr.mxu0 0.0
  %5659 = vmatpush1.msra.mxu0 0.0
  %5660 = vmatprep.subr.mxu0 0.0
  %5661 = vmatpush1.msra.mxu0 0.0
  %5662 = vmatprep.subr.mxu0 0.0
  %5663 = vmatpush1.msra.mxu0 0.0
  %5664 = vmatprep.subr.mxu0 0.0
  %5665 = vmatpush1.msra.mxu0 0.0
  %5666 = vmatprep.subr.mxu0 0.0
  %5667 = vmatpush1.msra.mxu0 0.0
  %5668 = vmatprep.subr.mxu0 0.0
  %5669 = vmatpush1.msra.mxu0 0.0
  %5670 = vmatprep.subr.mxu0 0.0
  %5671 = vmatpush1.msra.mxu0 0.0
  %5672 = vmatprep.subr.mxu0 0.0
  %5673 = vmatpush1.msra.mxu0 0.0
  %5674 = vmatprep.subr.mxu0 0.0
  %5675 = vmatpush1.msra.mxu0 0.0
  %5676 = vmatprep.subr.mxu0 0.0
  %5677 = vmatpush1.msra.mxu0 0.0
  %5678 = vmatprep.subr.mxu0 0.0
  %5679 = vmatpush1.msra.mxu0 0.0
  %5680 = vmatprep.subr.mxu0 0.0
  %5681 = vmatpush1.msra.mxu0 0.0
  %5682 = vmatprep.subr.mxu0 0.0
  %5683 = vmatpush1.msra.mxu0 0.0
  %5684 = vmatprep.subr.mxu0 0.0
  %5685 = vmatpush1.msra.mxu0 0.0
  %5686 = vmatprep.subr.mxu0 0.0
  %5687 = vmatpush1.msra.mxu0 0.0
  %5688 = vmatprep.subr.mxu0 0.0
  %5689 = vmatpush1.msra.mxu0 0.0
  %5690 = vmatprep.subr.mxu0 0.0
  %5691 = vmatpush1.msra.mxu0 0.0
  %5692 = vmatprep.subr.mxu0 0.0
  %5693 = vmatpush1.msra.mxu0 0.0
  %5694 = vmatprep.mubr.f32.mxu0 0.0
  %5695 = vmatmul.mubr.f32.gmra.mrb[0].mxu0 %v5557
  %v5696 = vpop.f32.mrb[0].mxu0
  %v5697 = vadd.f32 0.0, %v5696
  %v5698 = vpop.f32.mrb[0].mxu0
  %v5699 = vadd.f32 0.0, %v5698
  %5700 = vdwg.mxu0
  %v5701 = vadd.f32 %v5552, %v5626
  %v5702 = vadd.f32 %v5553, %v5628
  %v5703 = vadd.f32 %v5554, %v5697
  %v5704 = vadd.f32 %v5555, %v5699
  %v5705 = vxor.u32 %v5701, 2147483648
  %v5706 = vxor.u32 %v5702, 2147483648
  %v5707 = vxor.u32 %v5703, 2147483648
  %v5708 = vmul.f32 %v5705, 1.442695
  %v5709 = vpow.pop %v5708
  %v5710 = vmul.f32 %v5706, 1.442695
  %v5711 = vpow.pop %v5710
  %v5712 = vmul.f32 %v5707, 1.442695
  %v5713 = vpow.pop %v5712
  %v5714 = vadd.f32 %v5709, 1.0
  %v5715 = vadd.f32 %v5711, 1.0
  %v5716 = vadd.f32 %v5713, 1.0
  %v5717 = vrcp.pop %v5714
  %v5718 = vmul.f32 1.0, %v5717
  %v5719 = vrcp.pop %v5715
  %v5720 = vmul.f32 1.0, %v5719
  %v5721 = vrcp.pop %v5716
  %v5722 = vmul.f32 1.0, %v5721
  %v5723 = vtanh.pop %v5704
  %v5724 = vmul.f32 %v5720, %v5549
  %v5725 = vmul.f32 %v5718, %v5723
  %v5726 = vadd.f32 %v5724, %v5725
  %v5727 = vtanh.pop %v5726
  %v5728 = vmul.f32 %v5722, %v5727
  %v5729 = vld [vmem:[%s3] sm:$0xff]
  %v5730 = vld [vmem:[%s3 + $0x8] sm:$0xff]
  %v5731 = vld [vmem:[%s3 + $0x10] sm:$0xff]
  %v5732 = vld [vmem:[%s3 + $0x18] sm:$0xff]
  %v5733 = vld [vmem:[%s3 + $0x20] sm:$0xff]
  %v5734 = vld [vmem:[%s3 + $0x28] sm:$0xff]
  %v5735 = vld [vmem:[%s3 + $0x30] sm:$0xff]
  %v5736 = vld [vmem:[%s3 + $0x38] sm:$0xff]
  %v5737 = vld [vmem:[%s4] sm:$0x1]
  %v5739 = vlaneseq
  %v5740 = vshrl.u32 %v5739, 7
  %v5741 = vsub.s32 0, %v5740
  %v5742 = vrot.slane %v5737, %v5741
  %v5745 = vsel %vm776, %v5728, 0
  %5747 = vmatprep.subr.mxu0 0.0
  %5748 = vmatpush1.msra.mxu0 %v5729
  %5749 = vmatprep.subr.mxu0 0.0
  %5750 = vmatpush1.msra.mxu0 %v5730
  %5751 = vmatprep.subr.mxu0 0.0
  %5752 = vmatpush1.msra.mxu0 %v5731
  %5753 = vmatprep.subr.mxu0 0.0
  %5754 = vmatpush1.msra.mxu0 %v5732
  %5755 = vmatprep.subr.mxu0 0.0
  %5756 = vmatpush1.msra.mxu0 %v5733
  %5757 = vmatprep.subr.mxu0 0.0
  %5758 = vmatpush1.msra.mxu0 %v5734
  %5759 = vmatprep.subr.mxu0 0.0
  %5760 = vmatpush1.msra.mxu0 %v5735
  %5761 = vmatprep.subr.mxu0 0.0
  %5762 = vmatpush1.msra.mxu0 %v5736
  %5763 = vmatprep.subr.mxu0 0.0
  %5764 = vmatpush1.msra.mxu0 0.0
  %5765 = vmatprep.subr.mxu0 0.0
  %5766 = vmatpush1.msra.mxu0 0.0
  %5767 = vmatprep.subr.mxu0 0.0
  %5768 = vmatpush1.msra.mxu0 0.0
  %5769 = vmatprep.subr.mxu0 0.0
  %5770 = vmatpush1.msra.mxu0 0.0
  %5771 = vmatprep.subr.mxu0 0.0
  %5772 = vmatpush1.msra.mxu0 0.0
  %5773 = vmatprep.subr.mxu0 0.0
  %5774 = vmatpush1.msra.mxu0 0.0
  %5775 = vmatprep.subr.mxu0 0.0
  %5776 = vmatpush1.msra.mxu0 0.0
  %5777 = vmatprep.subr.mxu0 0.0
  %5778 = vmatpush1.msra.mxu0 0.0
  %5779 = vmatprep.subr.mxu0 0.0
  %5780 = vmatpush1.msra.mxu0 0.0
  %5781 = vmatprep.subr.mxu0 0.0
  %5782 = vmatpush1.msra.mxu0 0.0
  %5783 = vmatprep.subr.mxu0 0.0
  %5784 = vmatpush1.msra.mxu0 0.0
  %5785 = vmatprep.subr.mxu0 0.0
  %5786 = vmatpush1.msra.mxu0 0.0
  %5787 = vmatprep.subr.mxu0 0.0
  %5788 = vmatpush1.msra.mxu0 0.0
  %5789 = vmatprep.subr.mxu0 0.0
  %5790 = vmatpush1.msra.mxu0 0.0
  %5791 = vmatprep.subr.mxu0 0.0
  %5792 = vmatpush1.msra.mxu0 0.0
  %5793 = vmatprep.subr.mxu0 0.0
  %5794 = vmatpush1.msra.mxu0 0.0
  %5795 = vmatprep.subr.mxu0 0.0
  %5796 = vmatpush1.msra.mxu0 0.0
  %5797 = vmatprep.subr.mxu0 0.0
  %5798 = vmatpush1.msra.mxu0 0.0
  %5799 = vmatprep.subr.mxu0 0.0
  %5800 = vmatpush1.msra.mxu0 0.0
  %5801 = vmatprep.subr.mxu0 0.0
  %5802 = vmatpush1.msra.mxu0 0.0
  %5803 = vmatprep.subr.mxu0 0.0
  %5804 = vmatpush1.msra.mxu0 0.0
  %5805 = vmatprep.subr.mxu0 0.0
  %5806 = vmatpush1.msra.mxu0 0.0
  %5807 = vmatprep.subr.mxu0 0.0
  %5808 = vmatpush1.msra.mxu0 0.0
  %5809 = vmatprep.subr.mxu0 0.0
  %5810 = vmatpush1.msra.mxu0 0.0
  %5811 = vmatprep.mubr.f32.mxu0 0.0
  %5812 = vmatmul.mubr.f32.gmra.mrb[0].mxu0 %v5745
  %v5813 = vpop.f32.mrb[0].mxu0
  %v5814 = vadd.f32 %v5742, %v5813
  %v5815 = vpop.f32.mrb[0].mxu0
  %5816 = vdwg.mxu0
  %v5817 = vlaneseq
  %v5818 = vand.u32 %v5817, 127
  %vm5819 = vcmp.lt.s32.totalorder %v5818, 10
  %v5820 = vsel %vm5819, %v5814, -1e+30
  %5821 = vmax.xlane.f32.xlu0 %v5820
  %v5822 = vpop.xlane.xlu0 %5821
  %v5823 = vsub.f32 %v5820, %v5822
  %v5824 = vmul.f32 %v5823, 1.442695
  %v5825 = vpow.pop %v5824
  %5826 = vadd.xlane.f32.xlu0 %v5825
  %v5827 = vpop.xlane.xlu0 %5826
  %v5828 = vlog2.pop %v5827
  %v5829 = vmul.f32 %v5828, 0.6931472
  %v5830 = vsub.f32 %v5823, %v5829
  %5831 = vst [vmem:[%s5] sm:$0xff] %v5830
  // Predicated region
  $region22: #{rnn_forward.1} parent=0 // pred_check
    _
  $region23: #{rnn_forward.1} parent=0 // pred_check_branch
    %5833 = sbr.rel (0) target = $region25
  $region24: #{rnn_forward.1} parent=0 // pred_region
    _
  $region25: #{rnn_forward.1} parent=0 // pred_fallthru
    _
  // Predicated region
  $region26: #{rnn_forward.1} parent=0 // pred_check
    _
  $region27: #{rnn_forward.1} parent=0 // pred_check_branch
    %5835 = sbr.rel (0) target = $region29
  $region28: #{rnn_forward.1} parent=0 // pred_region
    _
  $region29: #{rnn_forward.1} parent=0 // pred_fallthru
    _

</llo_original>
